<compile_context>
chip_gen: v6e
topology: v6e:2x2x1
jax: 0.10.0
libtpu: 0.0.40
codegen_flags: <defaults>
</compile_context>

<pallas_src>
import functools
import math

import jax
import jax.numpy as jnp
from jax.experimental import pallas as pl
from jax.experimental.pallas import tpu as pltpu

D_MODEL = 128
NHEAD = 4
NUM_LAYERS = 2          # nn.TransformerEncoder default is 6; reduced for the smoke test
DIM_FF = 2048           # nn.TransformerEncoderLayer default
VOCAB = 32
LN_EPS = 1e-5
FF_CHUNK = 512          # dim_ff tile: caps the live (T, dim_ff) f32 FFN intermediate
VMEM_LIMIT = 48 * 1024 * 1024   # explicit scoped-VMEM limit (> 32 MiB default, < v7x 64 MiB)


# -----------------------------------------------------------------------------
# Fused Conv2d(3x3, pad=1) + ReLU + MaxPool2d(2) kernel (NHWC, batch-tiled).
# The 1-pixel halo lives in a zeroed VMEM scratch (stored once per step); taps
# are loaded straight from that ref and grouped on K so the MXU contraction is
# taps_per_group * Cin instead of Cin.
# -----------------------------------------------------------------------------
def _conv3x3_relu_pool_kernel(x_ref, w_ref, b_ref, o_ref, xpad_scr, *, taps_per_group):
    # x_ref   : (BT, H, W, Cin)          bf16
    # w_ref   : (G, taps_per_group*Cin, Cout)  bf16 (taps regrouped, (dy,dx,cin) order)
    # b_ref   : (1, Cout)                f32
    # o_ref   : (BT, H//2, W//2, Cout)   bf16
    # xpad_scr: (BT, H+2, W+2, Cin)      f32 zero-halo scratch
    bt, H, W, cin = x_ref.shape
    cout = w_ref.shape[-1]
    rows = bt * H * W
    bf16 = jnp.bfloat16

    # Zero halo + store the interior once.  The scratch is re-zeroed every grid
    # step (not only at program_id==0) so megacore sharding of the parallel
    # batch axis can never observe an uninitialized halo.
    xpad_scr[...] = jnp.zeros_like(xpad_scr)
    xpad_scr[:, 1:H + 1, 1:W + 1, :] = x_ref[...].astype(jnp.float32)

    acc = jnp.zeros((rows, cout), jnp.float32)
    ngroups = 9 // taps_per_group
    for g in range(ngroups):
        taps = []
        for i in range(taps_per_group):
            dy, dx = divmod(g * taps_per_group + i, 3)
            taps.append(xpad_scr[:, dy:dy + H, dx:dx + W, :].reshape(rows, cin))
        patch = taps[0] if len(taps) == 1 else jnp.concatenate(taps, axis=-1)
        acc = acc + jnp.dot(patch.astype(bf16), w_ref[g],
                            preferred_element_type=jnp.float32)
    acc = jnp.maximum(acc + b_ref[...], 0.0)                  # bias + ReLU (f32)

    # 2x2 max-pool entirely on live values.
    a = acc.reshape(bt * (H // 2), 2, W, cout)
    row_max = jnp.maximum(a[:, 0, :, :], a[:, 1, :, :])       # pool over the H pair
    r = row_max.reshape(bt * (H // 2) * (W // 2), 2, cout)
    pooled = jnp.maximum(r[:, 0, :], r[:, 1, :])              # pool over the W pair
    o_ref[...] = pooled.reshape(bt, H // 2, W // 2, cout).astype(o_ref.dtype)


def _pick_bt(n, h, w, target_rows):
    bt = max(1, min(n, target_rows // max(1, h * w)))
    if n >= 2 and n // bt < 2:          # >= 2 grid steps: pipelining + 2 TCs on v7x
        bt = max(1, n // 2)
    while n % bt:
        bt -= 1
    return bt


def conv3x3_relu_pool(x_nhwc, w, b, *, taps_per_group, target_rows=512):
    # TODO(synk): for very large H,W additionally tile over image rows (1-row halo)
    # so the per-step block stays well under v7x's 64 MiB VMEM.
    n, h, wd, cin = x_nhwc.shape
    cout = w.shape[-1]
    ho, wo = h // 2, wd // 2
    bt = _pick_bt(n, h, wd, target_rows)
    groups = 9 // taps_per_group
    wg = w.reshape(groups, taps_per_group * cin, cout)        # (dy, dx, cin) tap order
    kernel = functools.partial(_conv3x3_relu_pool_kernel, taps_per_group=taps_per_group)
    return pl.pallas_call(
        kernel,
        out_shape=jax.ShapeDtypeStruct((n, ho, wo, cout), jnp.bfloat16),
        grid=(n // bt,),
        in_specs=[
            pl.BlockSpec((bt, h, wd, cin), lambda i: (i, 0, 0, 0)),
            pl.BlockSpec((groups, taps_per_group * cin, cout), lambda i: (0, 0, 0)),
            pl.BlockSpec((1, cout), lambda i: (0, 0)),
        ],
        out_specs=pl.BlockSpec((bt, ho, wo, cout), lambda i: (i, 0, 0, 0)),
        scratch_shapes=[pltpu.VMEM((bt, h + 2, wd + 2, cin), jnp.float32)],
        compiler_params=pltpu.CompilerParams(
            dimension_semantics=("parallel",),                # batch axis shards across TCs
            vmem_limit_bytes=VMEM_LIMIT),
    )(x_nhwc, wg, b)


# -----------------------------------------------------------------------------
# Whole transformer stack (pos add + num_layers encoder layers + final Linear)
# as a single pallas_call with grid=(batch_tiles, num_layers).  Per-layer weights
# are stacked on a leading axis and streamed by the BlockSpec pipeline; the
# per-tile (T, E) activation stays resident in a VMEM scratch for all layers.
# -----------------------------------------------------------------------------
def _layernorm(x, g, b, eps):
    mu = jnp.mean(x, axis=-1, keepdims=True)
    xc = x - mu
    var = jnp.mean(xc * xc, axis=-1, keepdims=True)
    return xc * jax.lax.rsqrt(var + eps) * g + b


def _encoder_stack_kernel(x_ref, pos_ref,
                          wqkv_ref, bqkv_ref, wo_ref, bo_ref,
                          g1_ref, be1_ref, wf1_ref, bf1_ref,
                          wf2_ref, bf2_ref, g2_ref, be2_ref,
                          wfc_ref, bfc_ref,
                          o_ref, x_scr, *, nhead, eps, ff_chunk):
    bn, s, e = x_ref.shape
    t = bn * s
    dh = e // nhead
    bf16 = jnp.bfloat16
    layer = pl.program_id(1)

    @pl.when(layer == 0)
    def _():
        # pos_encoder add: reproduces PyTorch's (S,N,C)+(1,S,C) broadcast, which
        # requires N == S and indexes the positional row by the *batch* index
        # (numerically inert here because the parameter is zero-initialized).
        x_scr[...] = (x_ref[...].astype(jnp.float32) + pos_ref[...]).reshape(t, e)

    x = x_scr[...]                                                    # (T, E) f32

    # ---- self attention: packed QKV matmul + head-batched einsums ----
    # NOTE: 1/sqrt(dh) is folded into the Q columns of w_qkv/b_qkv at init time.
    qkv = jnp.dot(x.astype(bf16), wqkv_ref[0],
                  preferred_element_type=jnp.float32) + bqkv_ref[0]   # (T, 3E)

    def to_heads(col0):
        # (T, E) lane-chunks -> (nhead*bn, s, dh): heads stacked on the leading
        # (row) axis so all heads run in one batched einsum (no per-head loop,
        # no 4-D transpose).
        return jnp.concatenate(
            [qkv[:, col0 + h * dh: col0 + (h + 1) * dh] for h in range(nhead)],
            axis=0).reshape(nhead * bn, s, dh).astype(bf16)

    q = to_heads(0)
    k = to_heads(e)
    v = to_heads(2 * e)
    logits = jnp.einsum('bqd,bkd->bqk', q, k,
                        preferred_element_type=jnp.float32)           # (H*BN, S, S)
    logits = logits - jnp.max(logits, axis=-1, keepdims=True)
    p = jnp.exp(logits)
    p = p / jnp.sum(p, axis=-1, keepdims=True)                        # exact softmax
    ctx = jnp.einsum('bqk,bkd->bqd', p.astype(bf16), v,
                     preferred_element_type=jnp.float32)              # (H*BN, S, Dh)
    # heads back onto the lane axis (head-major, PyTorch concat order) -> one Wo matmul
    ctx = ctx.reshape(nhead, t, dh)
    ctx_cat = jnp.concatenate([ctx[h] for h in range(nhead)], axis=-1)  # (T, E)
    attn = jnp.dot(ctx_cat.astype(bf16), wo_ref[0],
                   preferred_element_type=jnp.float32) + bo_ref[0]

    # ---- residual + LayerNorm1 (post-norm, f32 statistics) ----
    h1 = _layernorm(x + attn, g1_ref[0], be1_ref[0], eps)

    # ---- feed-forward (ReLU), chunked over dim_ff so the live f32 intermediate
    #      is capped at (T, ff_chunk); bf16 MXU operands, f32 accumulation ----
    dim_ff = wf1_ref.shape[-1]
    h1b = h1.astype(bf16)
    f = jnp.zeros((t, e), jnp.float32)
    for c0 in range(0, dim_ff, ff_chunk):
        fc = jnp.dot(h1b, wf1_ref[0, :, c0:c0 + ff_chunk],
                     preferred_element_type=jnp.float32)
        fc = jnp.maximum(fc + bf1_ref[0, :, c0:c0 + ff_chunk], 0.0)
        f = f + jnp.dot(fc.astype(bf16), wf2_ref[0, c0:c0 + ff_chunk, :],
                        preferred_element_type=jnp.float32)
    f = f + bf2_ref[0]

    # ---- residual + LayerNorm2; activation stays resident in VMEM ----
    out = _layernorm(h1 + f, g2_ref[0], be2_ref[0], eps)
    x_scr[...] = out

    # ---- fused final Linear(d_model, vocab), lane-dense (vocab padded to 128) ----
    @pl.when(layer == pl.num_programs(1) - 1)
    def _():
        logits_out = jnp.dot(out.astype(bf16), wfc_ref[...],
                             preferred_element_type=jnp.float32) + bfc_ref[...]
        o_ref[...] = logits_out.reshape(bn, s, -1)


def fused_encoder_fc(xb, pos, enc, fc_w, fc_b, *, nhead, n_tiles):
    n, s, e = xb.shape
    num_layers, _, three_e = enc['w_qkv'].shape
    dim_ff = enc['w_ff1'].shape[-1]
    vpad = fc_w.shape[-1]
    bn = n // n_tiles
    ff_chunk = FF_CHUNK if dim_ff % FF_CHUNK == 0 else dim_ff

    tok = lambda ti, l: (ti, 0, 0)               # per batch-tile, layer-invariant
    per_layer = lambda ti, l: (l, 0, 0)          # per-layer stacked weights
    full2 = lambda ti, l: (0, 0)

    kernel = functools.partial(_encoder_stack_kernel, nhead=nhead, eps=LN_EPS,
                               ff_chunk=ff_chunk)
    return pl.pallas_call(
        kernel,
        out_shape=jax.ShapeDtypeStruct((n, s, vpad), jnp.float32),
        grid=(n_tiles, num_layers),
        in_specs=[
            pl.BlockSpec((bn, s, e), tok),              # tokens (bf16, read at layer 0)
            pl.BlockSpec((bn, 1, e), tok),              # positional rows (by batch idx)
            pl.BlockSpec((1, e, three_e), per_layer),   # w_qkv (Q columns pre-scaled)
            pl.BlockSpec((1, 1, three_e), per_layer),   # b_qkv
            pl.BlockSpec((1, e, e), per_layer),         # w_o
            pl.BlockSpec((1, 1, e), per_layer),         # b_o
            pl.BlockSpec((1, 1, e), per_layer),         # ln1_g
            pl.BlockSpec((1, 1, e), per_layer),         # ln1_b
            pl.BlockSpec((1, e, dim_ff), per_layer),    # w_ff1
            pl.BlockSpec((1, 1, dim_ff), per_layer),    # b_ff1
            pl.BlockSpec((1, dim_ff, e), per_layer),    # w_ff2
            pl.BlockSpec((1, 1, e), per_layer),         # b_ff2
            pl.BlockSpec((1, 1, e), per_layer),         # ln2_g
            pl.BlockSpec((1, 1, e), per_layer),         # ln2_b
            pl.BlockSpec((e, vpad), full2),             # fc_w (bf16, lane-padded)
            pl.BlockSpec((1, vpad), full2),             # fc_b (f32, lane-padded)
        ],
        out_specs=pl.BlockSpec((bn, s, vpad), tok),
        scratch_shapes=[pltpu.VMEM((bn * s, e), jnp.float32)],   # resident activation
        compiler_params=pltpu.CompilerParams(
            dimension_semantics=("parallel", "arbitrary"),       # tiles || , layers seq.
            vmem_limit_bytes=VMEM_LIMIT),
    )(xb, pos, enc['w_qkv'], enc['b_qkv'], enc['w_o'], enc['b_o'],
      enc['ln1_g'], enc['ln1_b'], enc['w_ff1'], enc['b_ff1'],
      enc['w_ff2'], enc['b_ff2'], enc['ln2_g'], enc['ln2_b'],
      fc_w, fc_b)


# -----------------------------------------------------------------------------
# Full forward pass (glue = one input transpose/cast, a pure reshape to tokens,
# and a tiny logits transpose/slice at the end).
# -----------------------------------------------------------------------------
def transformer_recognizer_forward(x_nchw, params):
    # NCHW -> NHWC (channels on the 128-lane axis); cast to bf16 once — the conv
    # MXU operands are bf16 anyway and this halves all activation HBM traffic.
    x = jnp.transpose(x_nchw, (0, 2, 3, 1)).astype(jnp.bfloat16)
    x = conv3x3_relu_pool(x, params['conv1_w'], params['conv1_b'],
                          taps_per_group=9)      # full im2col: K = 27
    x = conv3x3_relu_pool(x, params['conv2_w'], params['conv2_b'],
                          taps_per_group=3)      # per-dy group: K = 192
    n, hq, wq, c = x.shape
    s = hq * wq

    # flatten(2).permute(2,0,1) of the NCHW feature map == this pure reshape of the
    # NHWC map into batch-major tokens (token index = h*Wq + w); no data movement.
    xb = x.reshape(n, s, c)

    # pos_encoder add uses torch broadcasting (S,N,C)+(1,S,C): requires N == S and
    # picks the positional row by the batch index (zero parameter, so inert).
    assert n == s, "reference module's pos_encoder broadcast requires N == S"
    pos = params['pos_encoder'][0, :s, :][:, None, :]                 # (N, 1, C)

    # Pad the classifier to a lane-dense 128-wide kernel output; padded columns are
    # sliced off below.
    vocab = params['fc_w'].shape[1]
    vpad = ((vocab + 127) // 128) * 128
    fc_w = jnp.pad(params['fc_w'], ((0, 0), (0, vpad - vocab)))
    fc_b = jnp.pad(params['fc_b'], ((0, 0), (0, vpad - vocab)))

    # TODO(synk): for very large batches also cap tokens-per-tile; 2 tiles is the
    # minimum that lets v7x's two TensorCores both work.
    n_tiles = 2 if (n % 2 == 0 and n >= 2) else 1
    logits = fused_encoder_fc(xb, pos, params['enc'], fc_w, fc_b,
                              nhead=NHEAD, n_tiles=n_tiles)
    # Back to the PyTorch (S, N, vocab) convention (tiny tensor; done in XLA).
    return jnp.transpose(logits, (1, 0, 2))[:, :, :vocab]


# -----------------------------------------------------------------------------
# Deterministic parameter initialization (shapes follow the nn.Module __init__).
# Matmul weights are stored pre-transposed to "x @ W" layout and in bf16 (MXU
# operands); biases / LayerNorm params stay f32.  Per-layer encoder weights are
# stacked on a leading axis for the layer-gridded fused kernel.  The attention
# 1/sqrt(dh) scale is folded into the Q columns of w_qkv / b_qkv.
# -----------------------------------------------------------------------------
def init_params(key, *, vocab_size, d_model, nhead, num_layers, dim_ff):
    keys = jax.random.split(key, 8 + num_layers)
    bf16 = jnp.bfloat16
    dh = d_model // nhead
    q_scale = 1.0 / math.sqrt(dh)

    def w(k, shape, scale=0.02, dtype=jnp.float32):
        return (scale * jax.random.normal(k, shape)).astype(dtype)

    params = dict(
        conv1_w=w(keys[0], (3, 3, 3, 64), dtype=bf16),        # (kh, kw, cin, cout)
        conv1_b=w(keys[1], (1, 64), 0.01),
        conv2_w=w(keys[2], (3, 3, 64, d_model), dtype=bf16),
        conv2_b=w(keys[3], (1, d_model), 0.01),
        pos_encoder=jnp.zeros((1, 4096, d_model), jnp.float32),  # torch.zeros init
        fc_w=w(keys[4], (d_model, vocab_size), dtype=bf16),
        fc_b=w(keys[5], (1, vocab_size), 0.01),
    )

    def qkv_w(k):
        m = 0.02 * jax.random.normal(k, (d_model, 3 * d_model))
        m = m.at[:, :d_model].multiply(q_scale)     # fold 1/sqrt(dh) into Q columns
        return m.astype(bf16)

    def qkv_b(k):
        m = 0.01 * jax.random.normal(k, (1, 3 * d_model))
        return m.at[:, :d_model].multiply(q_scale)  # fold 1/sqrt(dh) into Q bias

    lkeys = [jax.random.split(keys[8 + l], 8) for l in range(num_layers)]
    params['enc'] = dict(
        w_qkv=jnp.stack([qkv_w(k[0]) for k in lkeys]),
        b_qkv=jnp.stack([qkv_b(k[1]) for k in lkeys]),
        w_o=jnp.stack([w(k[2], (d_model, d_model), dtype=bf16) for k in lkeys]),
        b_o=jnp.stack([w(k[3], (1, d_model), 0.01) for k in lkeys]),
        ln1_g=jnp.ones((num_layers, 1, d_model), jnp.float32),
        ln1_b=jnp.zeros((num_layers, 1, d_model), jnp.float32),
        w_ff1=jnp.stack([w(k[4], (d_model, dim_ff), dtype=bf16) for k in lkeys]),
        b_ff1=jnp.stack([w(k[5], (1, dim_ff), 0.01) for k in lkeys]),
        w_ff2=jnp.stack([w(k[6], (dim_ff, d_model), dtype=bf16) for k in lkeys]),
        b_ff2=jnp.stack([w(k[7], (1, d_model), 0.01) for k in lkeys]),
        ln2_g=jnp.ones((num_layers, 1, d_model), jnp.float32),
        ln2_b=jnp.zeros((num_layers, 1, d_model), jnp.float32),
    )
    return params


if __name__ == "__main__":
    key = jax.random.PRNGKey(0)
    k_x, k_p = jax.random.split(key)

    # batch=4, 3x8x8 image -> conv output (4, 2, 2, 128) -> S = 4 tokens
    # (N == S so the module's pos_encoder broadcast is well-defined, as in PyTorch).
    batch, height, width = 4, 8, 8
    x = jax.random.normal(k_x, (batch, 3, height, width), dtype=jnp.float32)

    params = init_params(k_p, vocab_size=VOCAB, d_model=D_MODEL, nhead=NHEAD,
                         num_layers=NUM_LAYERS, dim_ff=DIM_FF)

    fwd = jax.jit(transformer_recognizer_forward)
    out = jax.block_until_ready(fwd(x, params))

    seq = (height // 4) * (width // 4)
    assert out.shape == (seq, batch, VOCAB), out.shape
    assert out.dtype == jnp.float32
    assert bool(jnp.all(jnp.isfinite(out)))
    print("KERNEL_OK")
</pallas_src>

<mosaic_0001>
module attributes {stable_mosaic.version = 11 : i64} {
  func.func @_conv3x3_relu_pool_kernel(%arg0: i32, %arg1: memref<2x8x8x3xbf16, #tpu.memory_space<vmem>>, %arg2: memref<1x27x64xbf16, #tpu.memory_space<vmem>>, %arg3: memref<1x64xf32, #tpu.memory_space<vmem>>, %arg4: memref<2x4x4x64xbf16, #tpu.memory_space<vmem>>, %arg5: memref<2x10x10x3xf32, #tpu.memory_space<vmem>>) attributes {dimension_semantics = [#tpu.dimension_semantics<parallel>], iteration_bounds = array<i64: 2>, scalar_prefetch = 0 : i64, scratch_operands = 1 : i64, tpu.core_type = #tpu.core_type<tc>, window_params = [{transform_indices = @transform_0, window_bounds = array<i64: 2, 8, 8, 3>}, {pipeline_mode = #tpu.pipeline_mode<synchronous>, transform_indices = @transform_1, window_bounds = array<i64: 1, 27, 64>}, {pipeline_mode = #tpu.pipeline_mode<synchronous>, transform_indices = @transform_2, window_bounds = array<i64: 1, 64>}, {transform_indices = @transform_3, window_bounds = array<i64: 2, 4, 4, 64>}]} {
    %cst = arith.constant 0.000000e+00 : f32
    %0 = vector.broadcast %cst : f32 to vector<2x10x10x3xf32>
    %c0 = arith.constant 0 : index
    %c0_0 = arith.constant 0 : index
    %c0_1 = arith.constant 0 : index
    %c0_2 = arith.constant 0 : index
    %1 = vector.load %arg5[%c0, %c0_0, %c0_1, %c0_2] : memref<2x10x10x3xf32, #tpu.memory_space<vmem>>, vector<2x10x10x3xf32>
    tpu.vector_store %arg5[%c0, %c0_0, %c0_1, %c0_2], %0 {strides = array<i32>} : memref<2x10x10x3xf32, #tpu.memory_space<vmem>>, vector<2x10x10x3xf32>,
    %c0_3 = arith.constant 0 : index
    %c0_4 = arith.constant 0 : index
    %c0_5 = arith.constant 0 : index
    %c0_6 = arith.constant 0 : index
    %2 = vector.load %arg1[%c0_3, %c0_4, %c0_5, %c0_6] : memref<2x8x8x3xbf16, #tpu.memory_space<vmem>>, vector<2x8x8x3xbf16>
    %3 = arith.extf %2 : vector<2x8x8x3xbf16> to vector<2x8x8x3xf32>
    %c0_7 = arith.constant 0 : index
    %c1 = arith.constant 1 : index
    %c1_8 = arith.constant 1 : index
    %c0_9 = arith.constant 0 : index
    %4 = vector.load %arg5[%c0_7, %c1, %c1_8, %c0_9] : memref<2x10x10x3xf32, #tpu.memory_space<vmem>>, vector<2x8x8x3xf32>
    tpu.vector_store %arg5[%c0_7, %c1, %c1_8, %c0_9], %3 {strides = array<i32>} : memref<2x10x10x3xf32, #tpu.memory_space<vmem>>, vector<2x8x8x3xf32>,
    %cst_10 = arith.constant 0.000000e+00 : f32
    %5 = vector.broadcast %cst_10 : f32 to vector<128x64xf32>
    %c0_11 = arith.constant 0 : index
    %c0_12 = arith.constant 0 : index
    %c0_13 = arith.constant 0 : index
    %c0_14 = arith.constant 0 : index
    %6 = vector.load %arg5[%c0_11, %c0_12, %c0_13, %c0_14] : memref<2x10x10x3xf32, #tpu.memory_space<vmem>>, vector<2x8x8x3xf32>
    %7 = vector.shape_cast %6 : vector<2x8x8x3xf32> to vector<128x3xf32>
    %c0_15 = arith.constant 0 : index
    %c0_16 = arith.constant 0 : index
    %c1_17 = arith.constant 1 : index
    %c0_18 = arith.constant 0 : index
    %8 = vector.load %arg5[%c0_15, %c0_16, %c1_17, %c0_18] : memref<2x10x10x3xf32, #tpu.memory_space<vmem>>, vector<2x8x8x3xf32>
    %9 = vector.shape_cast %8 : vector<2x8x8x3xf32> to vector<128x3xf32>
    %c0_19 = arith.constant 0 : index
    %c0_20 = arith.constant 0 : index
    %c2 = arith.constant 2 : index
    %c0_21 = arith.constant 0 : index
    %10 = vector.load %arg5[%c0_19, %c0_20, %c2, %c0_21] : memref<2x10x10x3xf32, #tpu.memory_space<vmem>>, vector<2x8x8x3xf32>
    %11 = vector.shape_cast %10 : vector<2x8x8x3xf32> to vector<128x3xf32>
    %c0_22 = arith.constant 0 : index
    %c1_23 = arith.constant 1 : index
    %c0_24 = arith.constant 0 : index
    %c0_25 = arith.constant 0 : index
    %12 = vector.load %arg5[%c0_22, %c1_23, %c0_24, %c0_25] : memref<2x10x10x3xf32, #tpu.memory_space<vmem>>, vector<2x8x8x3xf32>
    %13 = vector.shape_cast %12 : vector<2x8x8x3xf32> to vector<128x3xf32>
    %c0_26 = arith.constant 0 : index
    %c1_27 = arith.constant 1 : index
    %c1_28 = arith.constant 1 : index
    %c0_29 = arith.constant 0 : index
    %14 = vector.load %arg5[%c0_26, %c1_27, %c1_28, %c0_29] : memref<2x10x10x3xf32, #tpu.memory_space<vmem>>, vector<2x8x8x3xf32>
    %15 = vector.shape_cast %14 : vector<2x8x8x3xf32> to vector<128x3xf32>
    %c0_30 = arith.constant 0 : index
    %c1_31 = arith.constant 1 : index
    %c2_32 = arith.constant 2 : index
    %c0_33 = arith.constant 0 : index
    %16 = vector.load %arg5[%c0_30, %c1_31, %c2_32, %c0_33] : memref<2x10x10x3xf32, #tpu.memory_space<vmem>>, vector<2x8x8x3xf32>
    %17 = vector.shape_cast %16 : vector<2x8x8x3xf32> to vector<128x3xf32>
    %c0_34 = arith.constant 0 : index
    %c2_35 = arith.constant 2 : index
    %c0_36 = arith.constant 0 : index
    %c0_37 = arith.constant 0 : index
    %18 = vector.load %arg5[%c0_34, %c2_35, %c0_36, %c0_37] : memref<2x10x10x3xf32, #tpu.memory_space<vmem>>, vector<2x8x8x3xf32>
    %19 = vector.shape_cast %18 : vector<2x8x8x3xf32> to vector<128x3xf32>
    %c0_38 = arith.constant 0 : index
    %c2_39 = arith.constant 2 : index
    %c1_40 = arith.constant 1 : index
    %c0_41 = arith.constant 0 : index
    %20 = vector.load %arg5[%c0_38, %c2_39, %c1_40, %c0_41] : memref<2x10x10x3xf32, #tpu.memory_space<vmem>>, vector<2x8x8x3xf32>
    %21 = vector.shape_cast %20 : vector<2x8x8x3xf32> to vector<128x3xf32>
    %c0_42 = arith.constant 0 : index
    %c2_43 = arith.constant 2 : index
    %c2_44 = arith.constant 2 : index
    %c0_45 = arith.constant 0 : index
    %22 = vector.load %arg5[%c0_42, %c2_43, %c2_44, %c0_45] : memref<2x10x10x3xf32, #tpu.memory_space<vmem>>, vector<2x8x8x3xf32>
    %23 = vector.shape_cast %22 : vector<2x8x8x3xf32> to vector<128x3xf32>
    %24 = tpu.concatenate %7, %9, %11, %13, %15, %17, %19, %21, %23 in 1 : vector<128x3xf32>, vector<128x3xf32>, vector<128x3xf32>, vector<128x3xf32>, vector<128x3xf32>, vector<128x3xf32>, vector<128x3xf32>, vector<128x3xf32>, vector<128x3xf32> -> vector<128x27xf32>
    %25 = arith.truncf %24 : vector<128x27xf32> to vector<128x27xbf16>
    %c0_46 = arith.constant 0 : index
    %c0_47 = arith.constant 0 : index
    %c0_48 = arith.constant 0 : index
    %26 = vector.load %arg2[%c0_46, %c0_47, %c0_48] : memref<1x27x64xbf16, #tpu.memory_space<vmem>>, vector<1x27x64xbf16>
    %27 = vector.shape_cast %26 : vector<1x27x64xbf16> to vector<27x64xbf16>
    %cst_49 = arith.constant dense<0.000000e+00> : vector<128x64xf32>
    %28 = tpu.matmul %25, %27, %cst_49 {dimension_numbers = #tpu.dot_dimension_numbers<[1], [0], [0], [1], [0, 0, 1, 1], [], []>} : vector<128x27xbf16>, vector<27x64xbf16>, vector<128x64xf32> -> vector<128x64xf32>
    %29 = arith.addf %5, %28 : vector<128x64xf32>
    %c0_50 = arith.constant 0 : index
    %c0_51 = arith.constant 0 : index
    %30 = vector.load %arg3[%c0_50, %c0_51] : memref<1x64xf32, #tpu.memory_space<vmem>>, vector<1x64xf32>
    %31 = vector.broadcast %30 : vector<1x64xf32> to vector<128x64xf32>
    %32 = arith.addf %29, %31 : vector<128x64xf32>
    %cst_52 = arith.constant 0.000000e+00 : f32
    %33 = vector.broadcast %cst_52 : f32 to vector<128x64xf32>
    %34 = arith.maximumf %32, %33 : vector<128x64xf32>
    %35 = vector.shape_cast %34 : vector<128x64xf32> to vector<8x2x8x64xf32>
    %36 = vector.extract_strided_slice %35 {offsets = [0, 0, 0, 0], sizes = [8, 1, 8, 64], strides = [1, 1, 1, 1]} : vector<8x2x8x64xf32> to vector<8x1x8x64xf32>
    %37 = vector.shape_cast %36 : vector<8x1x8x64xf32> to vector<8x8x64xf32>
    %38 = vector.extract_strided_slice %35 {offsets = [0, 1, 0, 0], sizes = [8, 1, 8, 64], strides = [1, 1, 1, 1]} : vector<8x2x8x64xf32> to vector<8x1x8x64xf32>
    %39 = vector.shape_cast %38 : vector<8x1x8x64xf32> to vector<8x8x64xf32>
    %40 = arith.maximumf %37, %39 : vector<8x8x64xf32>
    %41 = vector.shape_cast %40 : vector<8x8x64xf32> to vector<32x2x64xf32>
    %42 = vector.extract_strided_slice %41 {offsets = [0, 0, 0], sizes = [32, 1, 64], strides = [1, 1, 1]} : vector<32x2x64xf32> to vector<32x1x64xf32>
    %43 = vector.shape_cast %42 : vector<32x1x64xf32> to vector<32x64xf32>
    %44 = vector.extract_strided_slice %41 {offsets = [0, 1, 0], sizes = [32, 1, 64], strides = [1, 1, 1]} : vector<32x2x64xf32> to vector<32x1x64xf32>
    %45 = vector.shape_cast %44 : vector<32x1x64xf32> to vector<32x64xf32>
    %46 = arith.maximumf %43, %45 : vector<32x64xf32>
    %47 = vector.shape_cast %46 : vector<32x64xf32> to vector<2x4x4x64xf32>
    %48 = arith.truncf %47 : vector<2x4x4x64xf32> to vector<2x4x4x64xbf16>
    %c0_53 = arith.constant 0 : index
    %c0_54 = arith.constant 0 : index
    %c0_55 = arith.constant 0 : index
    %c0_56 = arith.constant 0 : index
    %49 = vector.load %arg4[%c0_53, %c0_54, %c0_55, %c0_56] : memref<2x4x4x64xbf16, #tpu.memory_space<vmem>>, vector<2x4x4x64xbf16>
    tpu.vector_store %arg4[%c0_53, %c0_54, %c0_55, %c0_56], %48 {strides = array<i32>} : memref<2x4x4x64xbf16, #tpu.memory_space<vmem>>, vector<2x4x4x64xbf16>,
    return
  }
  func.func @transform_0(%arg0: i32) -> (i32, i32, i32, i32) {
    %c0_i32 = arith.constant 0 : i32
    %c0_i32_0 = arith.constant 0 : i32
    %c0_i32_1 = arith.constant 0 : i32
    %c0_i32_2 = arith.constant 0 : i32
    return %arg0, %c0_i32, %c0_i32_0, %c0_i32_1 : i32, i32, i32, i32
  }
  func.func @transform_1(%arg0: i32) -> (i32, i32, i32) {
    %c0_i32 = arith.constant 0 : i32
    %c0_i32_0 = arith.constant 0 : i32
    %c0_i32_1 = arith.constant 0 : i32
    %c0_i32_2 = arith.constant 0 : i32
    return %c0_i32, %c0_i32_0, %c0_i32_1 : i32, i32, i32
  }
  func.func @transform_2(%arg0: i32) -> (i32, i32) {
    %c0_i32 = arith.constant 0 : i32
    %c0_i32_0 = arith.constant 0 : i32
    %c0_i32_1 = arith.constant 0 : i32
    return %c0_i32, %c0_i32_0 : i32, i32
  }
  func.func @transform_3(%arg0: i32) -> (i32, i32, i32, i32) {
    %c0_i32 = arith.constant 0 : i32
    %c0_i32_0 = arith.constant 0 : i32
    %c0_i32_1 = arith.constant 0 : i32
    %c0_i32_2 = arith.constant 0 : i32
    return %arg0, %c0_i32, %c0_i32_0, %c0_i32_1 : i32, i32, i32, i32
  }
}

module attributes {stable_mosaic.version = 11 : i64} {
  func.func @_conv3x3_relu_pool_kernel(%arg0: i32, %arg1: memref<2x4x4x64xbf16, #tpu.memory_space<vmem>>, %arg2: memref<3x192x128xbf16, #tpu.memory_space<vmem>>, %arg3: memref<1x128xf32, #tpu.memory_space<vmem>>, %arg4: memref<2x2x2x128xbf16, #tpu.memory_space<vmem>>, %arg5: memref<2x6x6x64xf32, #tpu.memory_space<vmem>>) attributes {dimension_semantics = [#tpu.dimension_semantics<parallel>], iteration_bounds = array<i64: 2>, scalar_prefetch = 0 : i64, scratch_operands = 1 : i64, tpu.core_type = #tpu.core_type<tc>, window_params = [{transform_indices = @transform_0, window_bounds = array<i64: 2, 4, 4, 64>}, {pipeline_mode = #tpu.pipeline_mode<synchronous>, transform_indices = @transform_1, window_bounds = array<i64: 3, 192, 128>}, {pipeline_mode = #tpu.pipeline_mode<synchronous>, transform_indices = @transform_2, window_bounds = array<i64: 1, 128>}, {transform_indices = @transform_3, window_bounds = array<i64: 2, 2, 2, 128>}]} {
    %cst = arith.constant 0.000000e+00 : f32
    %0 = vector.broadcast %cst : f32 to vector<2x6x6x64xf32>
    %c0 = arith.constant 0 : index
    %c0_0 = arith.constant 0 : index
    %c0_1 = arith.constant 0 : index
    %c0_2 = arith.constant 0 : index
    %1 = vector.load %arg5[%c0, %c0_0, %c0_1, %c0_2] : memref<2x6x6x64xf32, #tpu.memory_space<vmem>>, vector<2x6x6x64xf32>
    tpu.vector_store %arg5[%c0, %c0_0, %c0_1, %c0_2], %0 {strides = array<i32>} : memref<2x6x6x64xf32, #tpu.memory_space<vmem>>, vector<2x6x6x64xf32>,
    %c0_3 = arith.constant 0 : index
    %c0_4 = arith.constant 0 : index
    %c0_5 = arith.constant 0 : index
    %c0_6 = arith.constant 0 : index
    %2 = vector.load %arg1[%c0_3, %c0_4, %c0_5, %c0_6] : memref<2x4x4x64xbf16, #tpu.memory_space<vmem>>, vector<2x4x4x64xbf16>
    %3 = arith.extf %2 : vector<2x4x4x64xbf16> to vector<2x4x4x64xf32>
    %c0_7 = arith.constant 0 : index
    %c1 = arith.constant 1 : index
    %c1_8 = arith.constant 1 : index
    %c0_9 = arith.constant 0 : index
    %4 = vector.load %arg5[%c0_7, %c1, %c1_8, %c0_9] : memref<2x6x6x64xf32, #tpu.memory_space<vmem>>, vector<2x4x4x64xf32>
    tpu.vector_store %arg5[%c0_7, %c1, %c1_8, %c0_9], %3 {strides = array<i32>} : memref<2x6x6x64xf32, #tpu.memory_space<vmem>>, vector<2x4x4x64xf32>,
    %cst_10 = arith.constant 0.000000e+00 : f32
    %5 = vector.broadcast %cst_10 : f32 to vector<32x128xf32>
    %c0_11 = arith.constant 0 : index
    %c0_12 = arith.constant 0 : index
    %c0_13 = arith.constant 0 : index
    %c0_14 = arith.constant 0 : index
    %6 = vector.load %arg5[%c0_11, %c0_12, %c0_13, %c0_14] : memref<2x6x6x64xf32, #tpu.memory_space<vmem>>, vector<2x4x4x64xf32>
    %7 = vector.shape_cast %6 : vector<2x4x4x64xf32> to vector<32x64xf32>
    %c0_15 = arith.constant 0 : index
    %c0_16 = arith.constant 0 : index
    %c1_17 = arith.constant 1 : index
    %c0_18 = arith.constant 0 : index
    %8 = vector.load %arg5[%c0_15, %c0_16, %c1_17, %c0_18] : memref<2x6x6x64xf32, #tpu.memory_space<vmem>>, vector<2x4x4x64xf32>
    %9 = vector.shape_cast %8 : vector<2x4x4x64xf32> to vector<32x64xf32>
    %c0_19 = arith.constant 0 : index
    %c0_20 = arith.constant 0 : index
    %c2 = arith.constant 2 : index
    %c0_21 = arith.constant 0 : index
    %10 = vector.load %arg5[%c0_19, %c0_20, %c2, %c0_21] : memref<2x6x6x64xf32, #tpu.memory_space<vmem>>, vector<2x4x4x64xf32>
    %11 = vector.shape_cast %10 : vector<2x4x4x64xf32> to vector<32x64xf32>
    %12 = tpu.concatenate %7, %9, %11 in 1 : vector<32x64xf32>, vector<32x64xf32>, vector<32x64xf32> -> vector<32x192xf32>
    %13 = arith.truncf %12 : vector<32x192xf32> to vector<32x192xbf16>
    %c0_22 = arith.constant 0 : index
    %c0_23 = arith.constant 0 : index
    %c0_24 = arith.constant 0 : index
    %14 = vector.load %arg2[%c0_22, %c0_23, %c0_24] : memref<3x192x128xbf16, #tpu.memory_space<vmem>>, vector<1x192x128xbf16>
    %15 = vector.shape_cast %14 : vector<1x192x128xbf16> to vector<192x128xbf16>
    %cst_25 = arith.constant dense<0.000000e+00> : vector<32x128xf32>
    %16 = tpu.matmul %13, %15, %cst_25 {dimension_numbers = #tpu.dot_dimension_numbers<[1], [0], [0], [1], [0, 0, 1, 1], [], []>} : vector<32x192xbf16>, vector<192x128xbf16>, vector<32x128xf32> -> vector<32x128xf32>
    %17 = arith.addf %5, %16 : vector<32x128xf32>
    %c0_26 = arith.constant 0 : index
    %c1_27 = arith.constant 1 : index
    %c0_28 = arith.constant 0 : index
    %c0_29 = arith.constant 0 : index
    %18 = vector.load %arg5[%c0_26, %c1_27, %c0_28, %c0_29] : memref<2x6x6x64xf32, #tpu.memory_space<vmem>>, vector<2x4x4x64xf32>
    %19 = vector.shape_cast %18 : vector<2x4x4x64xf32> to vector<32x64xf32>
    %c0_30 = arith.constant 0 : index
    %c1_31 = arith.constant 1 : index
    %c1_32 = arith.constant 1 : index
    %c0_33 = arith.constant 0 : index
    %20 = vector.load %arg5[%c0_30, %c1_31, %c1_32, %c0_33] : memref<2x6x6x64xf32, #tpu.memory_space<vmem>>, vector<2x4x4x64xf32>
    %21 = vector.shape_cast %20 : vector<2x4x4x64xf32> to vector<32x64xf32>
    %c0_34 = arith.constant 0 : index
    %c1_35 = arith.constant 1 : index
    %c2_36 = arith.constant 2 : index
    %c0_37 = arith.constant 0 : index
    %22 = vector.load %arg5[%c0_34, %c1_35, %c2_36, %c0_37] : memref<2x6x6x64xf32, #tpu.memory_space<vmem>>, vector<2x4x4x64xf32>
    %23 = vector.shape_cast %22 : vector<2x4x4x64xf32> to vector<32x64xf32>
    %24 = tpu.concatenate %19, %21, %23 in 1 : vector<32x64xf32>, vector<32x64xf32>, vector<32x64xf32> -> vector<32x192xf32>
    %25 = arith.truncf %24 : vector<32x192xf32> to vector<32x192xbf16>
    %c1_38 = arith.constant 1 : index
    %c0_39 = arith.constant 0 : index
    %c0_40 = arith.constant 0 : index
    %26 = vector.load %arg2[%c1_38, %c0_39, %c0_40] : memref<3x192x128xbf16, #tpu.memory_space<vmem>>, vector<1x192x128xbf16>
    %27 = vector.shape_cast %26 : vector<1x192x128xbf16> to vector<192x128xbf16>
    %cst_41 = arith.constant dense<0.000000e+00> : vector<32x128xf32>
    %28 = tpu.matmul %25, %27, %cst_41 {dimension_numbers = #tpu.dot_dimension_numbers<[1], [0], [0], [1], [0, 0, 1, 1], [], []>} : vector<32x192xbf16>, vector<192x128xbf16>, vector<32x128xf32> -> vector<32x128xf32>
    %29 = arith.addf %17, %28 : vector<32x128xf32>
    %c0_42 = arith.constant 0 : index
    %c2_43 = arith.constant 2 : index
    %c0_44 = arith.constant 0 : index
    %c0_45 = arith.constant 0 : index
    %30 = vector.load %arg5[%c0_42, %c2_43, %c0_44, %c0_45] : memref<2x6x6x64xf32, #tpu.memory_space<vmem>>, vector<2x4x4x64xf32>
    %31 = vector.shape_cast %30 : vector<2x4x4x64xf32> to vector<32x64xf32>
    %c0_46 = arith.constant 0 : index
    %c2_47 = arith.constant 2 : index
    %c1_48 = arith.constant 1 : index
    %c0_49 = arith.constant 0 : index
    %32 = vector.load %arg5[%c0_46, %c2_47, %c1_48, %c0_49] : memref<2x6x6x64xf32, #tpu.memory_space<vmem>>, vector<2x4x4x64xf32>
    %33 = vector.shape_cast %32 : vector<2x4x4x64xf32> to vector<32x64xf32>
    %c0_50 = arith.constant 0 : index
    %c2_51 = arith.constant 2 : index
    %c2_52 = arith.constant 2 : index
    %c0_53 = arith.constant 0 : index
    %34 = vector.load %arg5[%c0_50, %c2_51, %c2_52, %c0_53] : memref<2x6x6x64xf32, #tpu.memory_space<vmem>>, vector<2x4x4x64xf32>
    %35 = vector.shape_cast %34 : vector<2x4x4x64xf32> to vector<32x64xf32>
    %36 = tpu.concatenate %31, %33, %35 in 1 : vector<32x64xf32>, vector<32x64xf32>, vector<32x64xf32> -> vector<32x192xf32>
    %37 = arith.truncf %36 : vector<32x192xf32> to vector<32x192xbf16>
    %c2_54 = arith.constant 2 : index
    %c0_55 = arith.constant 0 : index
    %c0_56 = arith.constant 0 : index
    %38 = vector.load %arg2[%c2_54, %c0_55, %c0_56] : memref<3x192x128xbf16, #tpu.memory_space<vmem>>, vector<1x192x128xbf16>
    %39 = vector.shape_cast %38 : vector<1x192x128xbf16> to vector<192x128xbf16>
    %cst_57 = arith.constant dense<0.000000e+00> : vector<32x128xf32>
    %40 = tpu.matmul %37, %39, %cst_57 {dimension_numbers = #tpu.dot_dimension_numbers<[1], [0], [0], [1], [0, 0, 1, 1], [], []>} : vector<32x192xbf16>, vector<192x128xbf16>, vector<32x128xf32> -> vector<32x128xf32>
    %41 = arith.addf %29, %40 : vector<32x128xf32>
    %c0_58 = arith.constant 0 : index
    %c0_59 = arith.constant 0 : index
    %42 = vector.load %arg3[%c0_58, %c0_59] : memref<1x128xf32, #tpu.memory_space<vmem>>, vector<1x128xf32>
    %43 = vector.broadcast %42 : vector<1x128xf32> to vector<32x128xf32>
    %44 = arith.addf %41, %43 : vector<32x128xf32>
    %cst_60 = arith.constant 0.000000e+00 : f32
    %45 = vector.broadcast %cst_60 : f32 to vector<32x128xf32>
    %46 = arith.maximumf %44, %45 : vector<32x128xf32>
    %47 = vector.shape_cast %46 : vector<32x128xf32> to vector<4x2x4x128xf32>
    %48 = vector.extract_strided_slice %47 {offsets = [0, 0, 0, 0], sizes = [4, 1, 4, 128], strides = [1, 1, 1, 1]} : vector<4x2x4x128xf32> to vector<4x1x4x128xf32>
    %49 = vector.shape_cast %48 : vector<4x1x4x128xf32> to vector<4x4x128xf32>
    %50 = vector.extract_strided_slice %47 {offsets = [0, 1, 0, 0], sizes = [4, 1, 4, 128], strides = [1, 1, 1, 1]} : vector<4x2x4x128xf32> to vector<4x1x4x128xf32>
    %51 = vector.shape_cast %50 : vector<4x1x4x128xf32> to vector<4x4x128xf32>
    %52 = arith.maximumf %49, %51 : vector<4x4x128xf32>
    %53 = vector.shape_cast %52 : vector<4x4x128xf32> to vector<8x2x128xf32>
    %54 = vector.extract_strided_slice %53 {offsets = [0, 0, 0], sizes = [8, 1, 128], strides = [1, 1, 1]} : vector<8x2x128xf32> to vector<8x1x128xf32>
    %55 = vector.shape_cast %54 : vector<8x1x128xf32> to vector<8x128xf32>
    %56 = vector.extract_strided_slice %53 {offsets = [0, 1, 0], sizes = [8, 1, 128], strides = [1, 1, 1]} : vector<8x2x128xf32> to vector<8x1x128xf32>
    %57 = vector.shape_cast %56 : vector<8x1x128xf32> to vector<8x128xf32>
    %58 = arith.maximumf %55, %57 : vector<8x128xf32>
    %59 = vector.shape_cast %58 : vector<8x128xf32> to vector<2x2x2x128xf32>
    %60 = arith.truncf %59 : vector<2x2x2x128xf32> to vector<2x2x2x128xbf16>
    %c0_61 = arith.constant 0 : index
    %c0_62 = arith.constant 0 : index
    %c0_63 = arith.constant 0 : index
    %c0_64 = arith.constant 0 : index
    %61 = vector.load %arg4[%c0_61, %c0_62, %c0_63, %c0_64] : memref<2x2x2x128xbf16, #tpu.memory_space<vmem>>, vector<2x2x2x128xbf16>
    tpu.vector_store %arg4[%c0_61, %c0_62, %c0_63, %c0_64], %60 {strides = array<i32>} : memref<2x2x2x128xbf16, #tpu.memory_space<vmem>>, vector<2x2x2x128xbf16>,
    return
  }
  func.func @transform_0(%arg0: i32) -> (i32, i32, i32, i32) {
    %c0_i32 = arith.constant 0 : i32
    %c0_i32_0 = arith.constant 0 : i32
    %c0_i32_1 = arith.constant 0 : i32
    %c0_i32_2 = arith.constant 0 : i32
    return %arg0, %c0_i32, %c0_i32_0, %c0_i32_1 : i32, i32, i32, i32
  }
  func.func @transform_1(%arg0: i32) -> (i32, i32, i32) {
    %c0_i32 = arith.constant 0 : i32
    %c0_i32_0 = arith.constant 0 : i32
    %c0_i32_1 = arith.constant 0 : i32
    %c0_i32_2 = arith.constant 0 : i32
    return %c0_i32, %c0_i32_0, %c0_i32_1 : i32, i32, i32
  }
  func.func @transform_2(%arg0: i32) -> (i32, i32) {
    %c0_i32 = arith.constant 0 : i32
    %c0_i32_0 = arith.constant 0 : i32
    %c0_i32_1 = arith.constant 0 : i32
    return %c0_i32, %c0_i32_0 : i32, i32
  }
  func.func @transform_3(%arg0: i32) -> (i32, i32, i32, i32) {
    %c0_i32 = arith.constant 0 : i32
    %c0_i32_0 = arith.constant 0 : i32
    %c0_i32_1 = arith.constant 0 : i32
    %c0_i32_2 = arith.constant 0 : i32
    return %arg0, %c0_i32, %c0_i32_0, %c0_i32_1 : i32, i32, i32, i32
  }
}

module attributes {stable_mosaic.version = 11 : i64} {
  func.func @_encoder_stack_kernel(%arg0: i32, %arg1: i32, %arg2: memref<2x4x128xbf16, #tpu.memory_space<vmem>>, %arg3: memref<2x1x128xf32, #tpu.memory_space<vmem>>, %arg4: memref<1x128x384xbf16, #tpu.memory_space<vmem>>, %arg5: memref<1x1x384xf32, #tpu.memory_space<vmem>>, %arg6: memref<1x128x128xbf16, #tpu.memory_space<vmem>>, %arg7: memref<1x1x128xf32, #tpu.memory_space<vmem>>, %arg8: memref<1x1x128xf32, #tpu.memory_space<vmem>>, %arg9: memref<1x1x128xf32, #tpu.memory_space<vmem>>, %arg10: memref<1x128x2048xbf16, #tpu.memory_space<vmem>>, %arg11: memref<1x1x2048xf32, #tpu.memory_space<vmem>>, %arg12: memref<1x2048x128xbf16, #tpu.memory_space<vmem>>, %arg13: memref<1x1x128xf32, #tpu.memory_space<vmem>>, %arg14: memref<1x1x128xf32, #tpu.memory_space<vmem>>, %arg15: memref<1x1x128xf32, #tpu.memory_space<vmem>>, %arg16: memref<128x128xbf16, #tpu.memory_space<vmem>>, %arg17: memref<1x128xf32, #tpu.memory_space<vmem>>, %arg18: memref<2x4x128xf32, #tpu.memory_space<vmem>>, %arg19: memref<8x128xf32, #tpu.memory_space<vmem>>) attributes {dimension_semantics = [#tpu.dimension_semantics<parallel>, #tpu.dimension_semantics<arbitrary>], iteration_bounds = array<i64: 2, 2>, scalar_prefetch = 0 : i64, scratch_operands = 1 : i64, tpu.core_type = #tpu.core_type<tc>, window_params = [{transform_indices = @transform_0, window_bounds = array<i64: 2, 4, 128>}, {transform_indices = @transform_1, window_bounds = array<i64: 2, 1, 128>}, {transform_indices = @transform_2, window_bounds = array<i64: 1, 128, 384>}, {transform_indices = @transform_3, window_bounds = array<i64: 1, 1, 384>}, {transform_indices = @transform_4, window_bounds = array<i64: 1, 128, 128>}, {transform_indices = @transform_5, window_bounds = array<i64: 1, 1, 128>}, {transform_indices = @transform_6, window_bounds = array<i64: 1, 1, 128>}, {transform_indices = @transform_7, window_bounds = array<i64: 1, 1, 128>}, {transform_indices = @transform_8, window_bounds = array<i64: 1, 128, 2048>}, {transform_indices = @transform_9, window_bounds = array<i64: 1, 1, 2048>}, {transform_indices = @transform_10, window_bounds = array<i64: 1, 2048, 128>}, {transform_indices = @transform_11, window_bounds = array<i64: 1, 1, 128>}, {transform_indices = @transform_12, window_bounds = array<i64: 1, 1, 128>}, {transform_indices = @transform_13, window_bounds = array<i64: 1, 1, 128>}, {pipeline_mode = #tpu.pipeline_mode<synchronous>, transform_indices = @transform_14, window_bounds = array<i64: 128, 128>}, {pipeline_mode = #tpu.pipeline_mode<synchronous>, transform_indices = @transform_15, window_bounds = array<i64: 1, 128>}, {transform_indices = @transform_16, window_bounds = array<i64: 2, 4, 128>}]} {
    %c0_i32 = arith.constant 0 : i32
    %0 = arith.cmpi eq, %arg1, %c0_i32 : i32
    %1 = arith.extui %0 : i1 to i32
    %c0_i32_0 = arith.constant 0 : i32
    %2 = arith.cmpi ne, %1, %c0_i32_0 : i32
    scf.if %2 {
      %c0_93 = arith.constant 0 : index
      %c0_94 = arith.constant 0 : index
      %c0_95 = arith.constant 0 : index
      %179 = vector.load %arg2[%c0_93, %c0_94, %c0_95] : memref<2x4x128xbf16, #tpu.memory_space<vmem>>, vector<2x4x128xbf16>
      %180 = arith.extf %179 : vector<2x4x128xbf16> to vector<2x4x128xf32>
      %c0_96 = arith.constant 0 : index
      %c0_97 = arith.constant 0 : index
      %c0_98 = arith.constant 0 : index
      %181 = vector.load %arg3[%c0_96, %c0_97, %c0_98] : memref<2x1x128xf32, #tpu.memory_space<vmem>>, vector<2x1x128xf32>
      %182 = vector.broadcast %181 : vector<2x1x128xf32> to vector<2x4x128xf32>
      %183 = arith.addf %180, %182 : vector<2x4x128xf32>
      %184 = vector.shape_cast %183 : vector<2x4x128xf32> to vector<8x128xf32>
      %c0_99 = arith.constant 0 : index
      %c0_100 = arith.constant 0 : index
      %185 = vector.load %arg19[%c0_99, %c0_100] : memref<8x128xf32, #tpu.memory_space<vmem>>, vector<8x128xf32>
      tpu.vector_store %arg19[%c0_99, %c0_100], %184 {strides = array<i32>} : memref<8x128xf32, #tpu.memory_space<vmem>>, vector<8x128xf32>,
    } else {
    }
    %c0 = arith.constant 0 : index
    %c0_1 = arith.constant 0 : index
    %3 = vector.load %arg19[%c0, %c0_1] : memref<8x128xf32, #tpu.memory_space<vmem>>, vector<8x128xf32>
    %4 = arith.truncf %3 : vector<8x128xf32> to vector<8x128xbf16>
    %c0_2 = arith.constant 0 : index
    %c0_3 = arith.constant 0 : index
    %c0_4 = arith.constant 0 : index
    %5 = vector.load %arg4[%c0_2, %c0_3, %c0_4] : memref<1x128x384xbf16, #tpu.memory_space<vmem>>, vector<1x128x384xbf16>
    %6 = vector.shape_cast %5 : vector<1x128x384xbf16> to vector<128x384xbf16>
    %cst = arith.constant dense<0.000000e+00> : vector<8x384xf32>
    %7 = tpu.matmul %4, %6, %cst {dimension_numbers = #tpu.dot_dimension_numbers<[1], [0], [0], [1], [0, 0, 1, 1], [], []>} : vector<8x128xbf16>, vector<128x384xbf16>, vector<8x384xf32> -> vector<8x384xf32>
    %c0_5 = arith.constant 0 : index
    %c0_6 = arith.constant 0 : index
    %c0_7 = arith.constant 0 : index
    %8 = vector.load %arg5[%c0_5, %c0_6, %c0_7] : memref<1x1x384xf32, #tpu.memory_space<vmem>>, vector<1x1x384xf32>
    %9 = vector.shape_cast %8 : vector<1x1x384xf32> to vector<1x384xf32>
    %10 = vector.broadcast %9 : vector<1x384xf32> to vector<8x384xf32>
    %11 = arith.addf %7, %10 : vector<8x384xf32>
    %12 = vector.extract_strided_slice %11 {offsets = [0, 0], sizes = [8, 32], strides = [1, 1]} : vector<8x384xf32> to vector<8x32xf32>
    %13 = vector.extract_strided_slice %11 {offsets = [0, 32], sizes = [8, 32], strides = [1, 1]} : vector<8x384xf32> to vector<8x32xf32>
    %14 = vector.extract_strided_slice %11 {offsets = [0, 64], sizes = [8, 32], strides = [1, 1]} : vector<8x384xf32> to vector<8x32xf32>
    %15 = vector.extract_strided_slice %11 {offsets = [0, 96], sizes = [8, 32], strides = [1, 1]} : vector<8x384xf32> to vector<8x32xf32>
    %16 = tpu.concatenate %12, %13, %14, %15 in 0 : vector<8x32xf32>, vector<8x32xf32>, vector<8x32xf32>, vector<8x32xf32> -> vector<32x32xf32>
    %17 = vector.shape_cast %16 : vector<32x32xf32> to vector<8x4x32xf32>
    %18 = arith.truncf %17 : vector<8x4x32xf32> to vector<8x4x32xbf16>
    %19 = vector.extract_strided_slice %11 {offsets = [0, 128], sizes = [8, 32], strides = [1, 1]} : vector<8x384xf32> to vector<8x32xf32>
    %20 = vector.extract_strided_slice %11 {offsets = [0, 160], sizes = [8, 32], strides = [1, 1]} : vector<8x384xf32> to vector<8x32xf32>
    %21 = vector.extract_strided_slice %11 {offsets = [0, 192], sizes = [8, 32], strides = [1, 1]} : vector<8x384xf32> to vector<8x32xf32>
    %22 = vector.extract_strided_slice %11 {offsets = [0, 224], sizes = [8, 32], strides = [1, 1]} : vector<8x384xf32> to vector<8x32xf32>
    %23 = tpu.concatenate %19, %20, %21, %22 in 0 : vector<8x32xf32>, vector<8x32xf32>, vector<8x32xf32>, vector<8x32xf32> -> vector<32x32xf32>
    %24 = vector.shape_cast %23 : vector<32x32xf32> to vector<8x4x32xf32>
    %25 = arith.truncf %24 : vector<8x4x32xf32> to vector<8x4x32xbf16>
    %26 = vector.extract_strided_slice %11 {offsets = [0, 256], sizes = [8, 32], strides = [1, 1]} : vector<8x384xf32> to vector<8x32xf32>
    %27 = vector.extract_strided_slice %11 {offsets = [0, 288], sizes = [8, 32], strides = [1, 1]} : vector<8x384xf32> to vector<8x32xf32>
    %28 = vector.extract_strided_slice %11 {offsets = [0, 320], sizes = [8, 32], strides = [1, 1]} : vector<8x384xf32> to vector<8x32xf32>
    %29 = vector.extract_strided_slice %11 {offsets = [0, 352], sizes = [8, 32], strides = [1, 1]} : vector<8x384xf32> to vector<8x32xf32>
    %30 = tpu.concatenate %26, %27, %28, %29 in 0 : vector<8x32xf32>, vector<8x32xf32>, vector<8x32xf32>, vector<8x32xf32> -> vector<32x32xf32>
    %31 = vector.shape_cast %30 : vector<32x32xf32> to vector<8x4x32xf32>
    %32 = arith.truncf %31 : vector<8x4x32xf32> to vector<8x4x32xbf16>
    "tpu.trace_start"() <{level = 10 : i32, message = "bqd,bkd->bqk"}> : () -> ()
    %cst_8 = arith.constant dense<0.000000e+00> : vector<8x4x4xf32>
    %33 = tpu.matmul %18, %25, %cst_8 {dimension_numbers = #tpu.dot_dimension_numbers<[2], [2], [1], [1], [0, 0, 0, 1, 1, 1], [0], [0]>} : vector<8x4x32xbf16>, vector<8x4x32xbf16>, vector<8x4x4xf32> -> vector<8x4x4xf32>
    "tpu.trace_stop"() : () -> ()
    %cst_9 = arith.constant dense<0xFF800000> : vector<8x4xf32>
    %34 = vector.multi_reduction <maximumf>, %33, %cst_9 [2] : vector<8x4x4xf32> to vector<8x4xf32>
    %35 = vector.shape_cast %34 : vector<8x4xf32> to vector<8x4x1xf32>
    %36 = vector.broadcast %35 : vector<8x4x1xf32> to vector<8x4x4xf32>
    %37 = arith.subf %33, %36 : vector<8x4x4xf32>
    %38 = math.exp %37 : vector<8x4x4xf32>
    %cst_10 = arith.constant dense<0.000000e+00> : vector<8x4xf32>
    %39 = vector.multi_reduction <add>, %38, %cst_10 [2] : vector<8x4x4xf32> to vector<8x4xf32>
    %40 = vector.shape_cast %39 : vector<8x4xf32> to vector<8x4x1xf32>
    %41 = vector.broadcast %40 : vector<8x4x1xf32> to vector<8x4x4xf32>
    %42 = arith.divf %38, %41 : vector<8x4x4xf32>
    %43 = arith.truncf %42 : vector<8x4x4xf32> to vector<8x4x4xbf16>
    "tpu.trace_start"() <{level = 10 : i32, message = "bqk,bkd->bqd"}> : () -> ()
    %cst_11 = arith.constant dense<0.000000e+00> : vector<8x4x32xf32>
    %44 = tpu.matmul %43, %32, %cst_11 {dimension_numbers = #tpu.dot_dimension_numbers<[2], [1], [1], [2], [0, 0, 0, 1, 1, 2], [0], [0]>} : vector<8x4x4xbf16>, vector<8x4x32xbf16>, vector<8x4x32xf32> -> vector<8x4x32xf32>
    "tpu.trace_stop"() : () -> ()
    %45 = vector.shape_cast %44 : vector<8x4x32xf32> to vector<4x8x32xf32>
    %46 = vector.extract_strided_slice %45 {offsets = [0, 0, 0], sizes = [1, 8, 32], strides = [1, 1, 1]} : vector<4x8x32xf32> to vector<1x8x32xf32>
    %47 = vector.shape_cast %46 : vector<1x8x32xf32> to vector<8x32xf32>
    %48 = vector.extract_strided_slice %45 {offsets = [1, 0, 0], sizes = [1, 8, 32], strides = [1, 1, 1]} : vector<4x8x32xf32> to vector<1x8x32xf32>
    %49 = vector.shape_cast %48 : vector<1x8x32xf32> to vector<8x32xf32>
    %50 = vector.extract_strided_slice %45 {offsets = [2, 0, 0], sizes = [1, 8, 32], strides = [1, 1, 1]} : vector<4x8x32xf32> to vector<1x8x32xf32>
    %51 = vector.shape_cast %50 : vector<1x8x32xf32> to vector<8x32xf32>
    %52 = vector.extract_strided_slice %45 {offsets = [3, 0, 0], sizes = [1, 8, 32], strides = [1, 1, 1]} : vector<4x8x32xf32> to vector<1x8x32xf32>
    %53 = vector.shape_cast %52 : vector<1x8x32xf32> to vector<8x32xf32>
    %54 = tpu.concatenate %47, %49, %51, %53 in 1 : vector<8x32xf32>, vector<8x32xf32>, vector<8x32xf32>, vector<8x32xf32> -> vector<8x128xf32>
    %55 = arith.truncf %54 : vector<8x128xf32> to vector<8x128xbf16>
    %c0_12 = arith.constant 0 : index
    %c0_13 = arith.constant 0 : index
    %c0_14 = arith.constant 0 : index
    %56 = vector.load %arg6[%c0_12, %c0_13, %c0_14] : memref<1x128x128xbf16, #tpu.memory_space<vmem>>, vector<1x128x128xbf16>
    %57 = vector.shape_cast %56 : vector<1x128x128xbf16> to vector<128x128xbf16>
    %cst_15 = arith.constant dense<0.000000e+00> : vector<8x128xf32>
    %58 = tpu.matmul %55, %57, %cst_15 {dimension_numbers = #tpu.dot_dimension_numbers<[1], [0], [0], [1], [0, 0, 1, 1], [], []>} : vector<8x128xbf16>, vector<128x128xbf16>, vector<8x128xf32> -> vector<8x128xf32>
    %c0_16 = arith.constant 0 : index
    %c0_17 = arith.constant 0 : index
    %c0_18 = arith.constant 0 : index
    %59 = vector.load %arg7[%c0_16, %c0_17, %c0_18] : memref<1x1x128xf32, #tpu.memory_space<vmem>>, vector<1x1x128xf32>
    %60 = vector.shape_cast %59 : vector<1x1x128xf32> to vector<1x128xf32>
    %61 = vector.broadcast %60 : vector<1x128xf32> to vector<8x128xf32>
    %62 = arith.addf %58, %61 : vector<8x128xf32>
    %63 = arith.addf %3, %62 : vector<8x128xf32>
    %c0_19 = arith.constant 0 : index
    %c0_20 = arith.constant 0 : index
    %c0_21 = arith.constant 0 : index
    %64 = vector.load %arg8[%c0_19, %c0_20, %c0_21] : memref<1x1x128xf32, #tpu.memory_space<vmem>>, vector<1x1x128xf32>
    %65 = vector.shape_cast %64 : vector<1x1x128xf32> to vector<1x128xf32>
    %c0_22 = arith.constant 0 : index
    %c0_23 = arith.constant 0 : index
    %c0_24 = arith.constant 0 : index
    %66 = vector.load %arg9[%c0_22, %c0_23, %c0_24] : memref<1x1x128xf32, #tpu.memory_space<vmem>>, vector<1x1x128xf32>
    %67 = vector.shape_cast %66 : vector<1x1x128xf32> to vector<1x128xf32>
    %cst_25 = arith.constant dense<0.000000e+00> : vector<8xf32>
    %68 = vector.multi_reduction <add>, %63, %cst_25 [1] : vector<8x128xf32> to vector<8xf32>
    %69 = vector.shape_cast %68 : vector<8xf32> to vector<8x1xf32>
    %cst_26 = arith.constant 1.280000e+02 : f32
    %70 = vector.broadcast %cst_26 : f32 to vector<8x1xf32>
    %71 = arith.divf %69, %70 : vector<8x1xf32>
    %72 = vector.broadcast %71 : vector<8x1xf32> to vector<8x128xf32>
    %73 = arith.subf %63, %72 : vector<8x128xf32>
    %74 = arith.mulf %73, %73 : vector<8x128xf32>
    %cst_27 = arith.constant dense<0.000000e+00> : vector<8xf32>
    %75 = vector.multi_reduction <add>, %74, %cst_27 [1] : vector<8x128xf32> to vector<8xf32>
    %76 = vector.shape_cast %75 : vector<8xf32> to vector<8x1xf32>
    %cst_28 = arith.constant 1.280000e+02 : f32
    %77 = vector.broadcast %cst_28 : f32 to vector<8x1xf32>
    %78 = arith.divf %76, %77 : vector<8x1xf32>
    %cst_29 = arith.constant 9.99999974E-6 : f32
    %79 = vector.broadcast %cst_29 : f32 to vector<8x1xf32>
    %80 = arith.addf %78, %79 : vector<8x1xf32>
    %81 = math.rsqrt %80 : vector<8x1xf32>
    %82 = vector.broadcast %81 : vector<8x1xf32> to vector<8x128xf32>
    %83 = arith.mulf %73, %82 : vector<8x128xf32>
    %84 = vector.broadcast %65 : vector<1x128xf32> to vector<8x128xf32>
    %85 = arith.mulf %83, %84 : vector<8x128xf32>
    %86 = vector.broadcast %67 : vector<1x128xf32> to vector<8x128xf32>
    %87 = arith.addf %85, %86 : vector<8x128xf32>
    %88 = arith.truncf %87 : vector<8x128xf32> to vector<8x128xbf16>
    %cst_30 = arith.constant 0.000000e+00 : f32
    %89 = vector.broadcast %cst_30 : f32 to vector<8x128xf32>
    %c0_31 = arith.constant 0 : index
    %c0_32 = arith.constant 0 : index
    %c0_33 = arith.constant 0 : index
    %90 = vector.load %arg10[%c0_31, %c0_32, %c0_33] : memref<1x128x2048xbf16, #tpu.memory_space<vmem>>, vector<1x128x512xbf16>
    %91 = vector.shape_cast %90 : vector<1x128x512xbf16> to vector<128x512xbf16>
    %cst_34 = arith.constant dense<0.000000e+00> : vector<8x512xf32>
    %92 = tpu.matmul %88, %91, %cst_34 {dimension_numbers = #tpu.dot_dimension_numbers<[1], [0], [0], [1], [0, 0, 1, 1], [], []>} : vector<8x128xbf16>, vector<128x512xbf16>, vector<8x512xf32> -> vector<8x512xf32>
    %c0_35 = arith.constant 0 : index
    %c0_36 = arith.constant 0 : index
    %c0_37 = arith.constant 0 : index
    %93 = vector.load %arg11[%c0_35, %c0_36, %c0_37] : memref<1x1x2048xf32, #tpu.memory_space<vmem>>, vector<1x1x512xf32>
    %94 = vector.shape_cast %93 : vector<1x1x512xf32> to vector<1x512xf32>
    %95 = vector.broadcast %94 : vector<1x512xf32> to vector<8x512xf32>
    %96 = arith.addf %92, %95 : vector<8x512xf32>
    %cst_38 = arith.constant 0.000000e+00 : f32
    %97 = vector.broadcast %cst_38 : f32 to vector<8x512xf32>
    %98 = arith.maximumf %96, %97 : vector<8x512xf32>
    %99 = arith.truncf %98 : vector<8x512xf32> to vector<8x512xbf16>
    %c0_39 = arith.constant 0 : index
    %c0_40 = arith.constant 0 : index
    %c0_41 = arith.constant 0 : index
    %100 = vector.load %arg12[%c0_39, %c0_40, %c0_41] : memref<1x2048x128xbf16, #tpu.memory_space<vmem>>, vector<1x512x128xbf16>
    %101 = vector.shape_cast %100 : vector<1x512x128xbf16> to vector<512x128xbf16>
    %cst_42 = arith.constant dense<0.000000e+00> : vector<8x128xf32>
    %102 = tpu.matmul %99, %101, %cst_42 {dimension_numbers = #tpu.dot_dimension_numbers<[1], [0], [0], [1], [0, 0, 1, 1], [], []>} : vector<8x512xbf16>, vector<512x128xbf16>, vector<8x128xf32> -> vector<8x128xf32>
    %103 = arith.addf %89, %102 : vector<8x128xf32>
    %c0_43 = arith.constant 0 : index
    %c0_44 = arith.constant 0 : index
    %c512 = arith.constant 512 : index
    %104 = vector.load %arg10[%c0_43, %c0_44, %c512] : memref<1x128x2048xbf16, #tpu.memory_space<vmem>>, vector<1x128x512xbf16>
    %105 = vector.shape_cast %104 : vector<1x128x512xbf16> to vector<128x512xbf16>
    %cst_45 = arith.constant dense<0.000000e+00> : vector<8x512xf32>
    %106 = tpu.matmul %88, %105, %cst_45 {dimension_numbers = #tpu.dot_dimension_numbers<[1], [0], [0], [1], [0, 0, 1, 1], [], []>} : vector<8x128xbf16>, vector<128x512xbf16>, vector<8x512xf32> -> vector<8x512xf32>
    %c0_46 = arith.constant 0 : index
    %c0_47 = arith.constant 0 : index
    %c512_48 = arith.constant 512 : index
    %107 = vector.load %arg11[%c0_46, %c0_47, %c512_48] : memref<1x1x2048xf32, #tpu.memory_space<vmem>>, vector<1x1x512xf32>
    %108 = vector.shape_cast %107 : vector<1x1x512xf32> to vector<1x512xf32>
    %109 = vector.broadcast %108 : vector<1x512xf32> to vector<8x512xf32>
    %110 = arith.addf %106, %109 : vector<8x512xf32>
    %cst_49 = arith.constant 0.000000e+00 : f32
    %111 = vector.broadcast %cst_49 : f32 to vector<8x512xf32>
    %112 = arith.maximumf %110, %111 : vector<8x512xf32>
    %113 = arith.truncf %112 : vector<8x512xf32> to vector<8x512xbf16>
    %c0_50 = arith.constant 0 : index
    %c512_51 = arith.constant 512 : index
    %c0_52 = arith.constant 0 : index
    %114 = vector.load %arg12[%c0_50, %c512_51, %c0_52] : memref<1x2048x128xbf16, #tpu.memory_space<vmem>>, vector<1x512x128xbf16>
    %115 = vector.shape_cast %114 : vector<1x512x128xbf16> to vector<512x128xbf16>
    %cst_53 = arith.constant dense<0.000000e+00> : vector<8x128xf32>
    %116 = tpu.matmul %113, %115, %cst_53 {dimension_numbers = #tpu.dot_dimension_numbers<[1], [0], [0], [1], [0, 0, 1, 1], [], []>} : vector<8x512xbf16>, vector<512x128xbf16>, vector<8x128xf32> -> vector<8x128xf32>
    %117 = arith.addf %103, %116 : vector<8x128xf32>
    %c0_54 = arith.constant 0 : index
    %c0_55 = arith.constant 0 : index
    %c1024 = arith.constant 1024 : index
    %118 = vector.load %arg10[%c0_54, %c0_55, %c1024] : memref<1x128x2048xbf16, #tpu.memory_space<vmem>>, vector<1x128x512xbf16>
    %119 = vector.shape_cast %118 : vector<1x128x512xbf16> to vector<128x512xbf16>
    %cst_56 = arith.constant dense<0.000000e+00> : vector<8x512xf32>
    %120 = tpu.matmul %88, %119, %cst_56 {dimension_numbers = #tpu.dot_dimension_numbers<[1], [0], [0], [1], [0, 0, 1, 1], [], []>} : vector<8x128xbf16>, vector<128x512xbf16>, vector<8x512xf32> -> vector<8x512xf32>
    %c0_57 = arith.constant 0 : index
    %c0_58 = arith.constant 0 : index
    %c1024_59 = arith.constant 1024 : index
    %121 = vector.load %arg11[%c0_57, %c0_58, %c1024_59] : memref<1x1x2048xf32, #tpu.memory_space<vmem>>, vector<1x1x512xf32>
    %122 = vector.shape_cast %121 : vector<1x1x512xf32> to vector<1x512xf32>
    %123 = vector.broadcast %122 : vector<1x512xf32> to vector<8x512xf32>
    %124 = arith.addf %120, %123 : vector<8x512xf32>
    %cst_60 = arith.constant 0.000000e+00 : f32
    %125 = vector.broadcast %cst_60 : f32 to vector<8x512xf32>
    %126 = arith.maximumf %124, %125 : vector<8x512xf32>
    %127 = arith.truncf %126 : vector<8x512xf32> to vector<8x512xbf16>
    %c0_61 = arith.constant 0 : index
    %c1024_62 = arith.constant 1024 : index
    %c0_63 = arith.constant 0 : index
    %128 = vector.load %arg12[%c0_61, %c1024_62, %c0_63] : memref<1x2048x128xbf16, #tpu.memory_space<vmem>>, vector<1x512x128xbf16>
    %129 = vector.shape_cast %128 : vector<1x512x128xbf16> to vector<512x128xbf16>
    %cst_64 = arith.constant dense<0.000000e+00> : vector<8x128xf32>
    %130 = tpu.matmul %127, %129, %cst_64 {dimension_numbers = #tpu.dot_dimension_numbers<[1], [0], [0], [1], [0, 0, 1, 1], [], []>} : vector<8x512xbf16>, vector<512x128xbf16>, vector<8x128xf32> -> vector<8x128xf32>
    %131 = arith.addf %117, %130 : vector<8x128xf32>
    %c0_65 = arith.constant 0 : index
    %c0_66 = arith.constant 0 : index
    %c1536 = arith.constant 1536 : index
    %132 = vector.load %arg10[%c0_65, %c0_66, %c1536] : memref<1x128x2048xbf16, #tpu.memory_space<vmem>>, vector<1x128x512xbf16>
    %133 = vector.shape_cast %132 : vector<1x128x512xbf16> to vector<128x512xbf16>
    %cst_67 = arith.constant dense<0.000000e+00> : vector<8x512xf32>
    %134 = tpu.matmul %88, %133, %cst_67 {dimension_numbers = #tpu.dot_dimension_numbers<[1], [0], [0], [1], [0, 0, 1, 1], [], []>} : vector<8x128xbf16>, vector<128x512xbf16>, vector<8x512xf32> -> vector<8x512xf32>
    %c0_68 = arith.constant 0 : index
    %c0_69 = arith.constant 0 : index
    %c1536_70 = arith.constant 1536 : index
    %135 = vector.load %arg11[%c0_68, %c0_69, %c1536_70] : memref<1x1x2048xf32, #tpu.memory_space<vmem>>, vector<1x1x512xf32>
    %136 = vector.shape_cast %135 : vector<1x1x512xf32> to vector<1x512xf32>
    %137 = vector.broadcast %136 : vector<1x512xf32> to vector<8x512xf32>
    %138 = arith.addf %134, %137 : vector<8x512xf32>
    %cst_71 = arith.constant 0.000000e+00 : f32
    %139 = vector.broadcast %cst_71 : f32 to vector<8x512xf32>
    %140 = arith.maximumf %138, %139 : vector<8x512xf32>
    %141 = arith.truncf %140 : vector<8x512xf32> to vector<8x512xbf16>
    %c0_72 = arith.constant 0 : index
    %c1536_73 = arith.constant 1536 : index
    %c0_74 = arith.constant 0 : index
    %142 = vector.load %arg12[%c0_72, %c1536_73, %c0_74] : memref<1x2048x128xbf16, #tpu.memory_space<vmem>>, vector<1x512x128xbf16>
    %143 = vector.shape_cast %142 : vector<1x512x128xbf16> to vector<512x128xbf16>
    %cst_75 = arith.constant dense<0.000000e+00> : vector<8x128xf32>
    %144 = tpu.matmul %141, %143, %cst_75 {dimension_numbers = #tpu.dot_dimension_numbers<[1], [0], [0], [1], [0, 0, 1, 1], [], []>} : vector<8x512xbf16>, vector<512x128xbf16>, vector<8x128xf32> -> vector<8x128xf32>
    %145 = arith.addf %131, %144 : vector<8x128xf32>
    %c0_76 = arith.constant 0 : index
    %c0_77 = arith.constant 0 : index
    %c0_78 = arith.constant 0 : index
    %146 = vector.load %arg13[%c0_76, %c0_77, %c0_78] : memref<1x1x128xf32, #tpu.memory_space<vmem>>, vector<1x1x128xf32>
    %147 = vector.shape_cast %146 : vector<1x1x128xf32> to vector<1x128xf32>
    %148 = vector.broadcast %147 : vector<1x128xf32> to vector<8x128xf32>
    %149 = arith.addf %145, %148 : vector<8x128xf32>
    %150 = arith.addf %87, %149 : vector<8x128xf32>
    %c0_79 = arith.constant 0 : index
    %c0_80 = arith.constant 0 : index
    %c0_81 = arith.constant 0 : index
    %151 = vector.load %arg14[%c0_79, %c0_80, %c0_81] : memref<1x1x128xf32, #tpu.memory_space<vmem>>, vector<1x1x128xf32>
    %152 = vector.shape_cast %151 : vector<1x1x128xf32> to vector<1x128xf32>
    %c0_82 = arith.constant 0 : index
    %c0_83 = arith.constant 0 : index
    %c0_84 = arith.constant 0 : index
    %153 = vector.load %arg15[%c0_82, %c0_83, %c0_84] : memref<1x1x128xf32, #tpu.memory_space<vmem>>, vector<1x1x128xf32>
    %154 = vector.shape_cast %153 : vector<1x1x128xf32> to vector<1x128xf32>
    %cst_85 = arith.constant dense<0.000000e+00> : vector<8xf32>
    %155 = vector.multi_reduction <add>, %150, %cst_85 [1] : vector<8x128xf32> to vector<8xf32>
    %156 = vector.shape_cast %155 : vector<8xf32> to vector<8x1xf32>
    %cst_86 = arith.constant 1.280000e+02 : f32
    %157 = vector.broadcast %cst_86 : f32 to vector<8x1xf32>
    %158 = arith.divf %156, %157 : vector<8x1xf32>
    %159 = vector.broadcast %158 : vector<8x1xf32> to vector<8x128xf32>
    %160 = arith.subf %150, %159 : vector<8x128xf32>
    %161 = arith.mulf %160, %160 : vector<8x128xf32>
    %cst_87 = arith.constant dense<0.000000e+00> : vector<8xf32>
    %162 = vector.multi_reduction <add>, %161, %cst_87 [1] : vector<8x128xf32> to vector<8xf32>
    %163 = vector.shape_cast %162 : vector<8xf32> to vector<8x1xf32>
    %cst_88 = arith.constant 1.280000e+02 : f32
    %164 = vector.broadcast %cst_88 : f32 to vector<8x1xf32>
    %165 = arith.divf %163, %164 : vector<8x1xf32>
    %cst_89 = arith.constant 9.99999974E-6 : f32
    %166 = vector.broadcast %cst_89 : f32 to vector<8x1xf32>
    %167 = arith.addf %165, %166 : vector<8x1xf32>
    %168 = math.rsqrt %167 : vector<8x1xf32>
    %169 = vector.broadcast %168 : vector<8x1xf32> to vector<8x128xf32>
    %170 = arith.mulf %160, %169 : vector<8x128xf32>
    %171 = vector.broadcast %152 : vector<1x128xf32> to vector<8x128xf32>
    %172 = arith.mulf %170, %171 : vector<8x128xf32>
    %173 = vector.broadcast %154 : vector<1x128xf32> to vector<8x128xf32>
    %174 = arith.addf %172, %173 : vector<8x128xf32>
    %c0_90 = arith.constant 0 : index
    %c0_91 = arith.constant 0 : index
    %175 = vector.load %arg19[%c0_90, %c0_91] : memref<8x128xf32, #tpu.memory_space<vmem>>, vector<8x128xf32>
    tpu.vector_store %arg19[%c0_90, %c0_91], %174 {strides = array<i32>} : memref<8x128xf32, #tpu.memory_space<vmem>>, vector<8x128xf32>,
    %c1_i32 = arith.constant 1 : i32
    %176 = arith.cmpi eq, %arg1, %c1_i32 : i32
    %177 = arith.extui %176 : i1 to i32
    %c0_i32_92 = arith.constant 0 : i32
    %178 = arith.cmpi ne, %177, %c0_i32_92 : i32
    scf.if %178 {
      %179 = arith.truncf %174 : vector<8x128xf32> to vector<8x128xbf16>
      %c0_93 = arith.constant 0 : index
      %c0_94 = arith.constant 0 : index
      %180 = vector.load %arg16[%c0_93, %c0_94] : memref<128x128xbf16, #tpu.memory_space<vmem>>, vector<128x128xbf16>
      %cst_95 = arith.constant dense<0.000000e+00> : vector<8x128xf32>
      %181 = tpu.matmul %179, %180, %cst_95 {dimension_numbers = #tpu.dot_dimension_numbers<[1], [0], [0], [1], [0, 0, 1, 1], [], []>} : vector<8x128xbf16>, vector<128x128xbf16>, vector<8x128xf32> -> vector<8x128xf32>
      %c0_96 = arith.constant 0 : index
      %c0_97 = arith.constant 0 : index
      %182 = vector.load %arg17[%c0_96, %c0_97] : memref<1x128xf32, #tpu.memory_space<vmem>>, vector<1x128xf32>
      %183 = vector.broadcast %182 : vector<1x128xf32> to vector<8x128xf32>
      %184 = arith.addf %181, %183 : vector<8x128xf32>
      %185 = vector.shape_cast %184 : vector<8x128xf32> to vector<2x4x128xf32>
      %c0_98 = arith.constant 0 : index
      %c0_99 = arith.constant 0 : index
      %c0_100 = arith.constant 0 : index
      %186 = vector.load %arg18[%c0_98, %c0_99, %c0_100] : memref<2x4x128xf32, #tpu.memory_space<vmem>>, vector<2x4x128xf32>
      tpu.vector_store %arg18[%c0_98, %c0_99, %c0_100], %185 {strides = array<i32>} : memref<2x4x128xf32, #tpu.memory_space<vmem>>, vector<2x4x128xf32>,
    } else {
    }
    return
  }
  func.func @transform_0(%arg0: i32, %arg1: i32) -> (i32, i32, i32) {
    %c0_i32 = arith.constant 0 : i32
    %c0_i32_0 = arith.constant 0 : i32
    %c0_i32_1 = arith.constant 0 : i32
    return %arg0, %c0_i32, %c0_i32_0 : i32, i32, i32
  }
  func.func @transform_1(%arg0: i32, %arg1: i32) -> (i32, i32, i32) {
    %c0_i32 = arith.constant 0 : i32
    %c0_i32_0 = arith.constant 0 : i32
    %c0_i32_1 = arith.constant 0 : i32
    return %arg0, %c0_i32, %c0_i32_0 : i32, i32, i32
  }
  func.func @transform_2(%arg0: i32, %arg1: i32) -> (i32, i32, i32) {
    %c0_i32 = arith.constant 0 : i32
    %c0_i32_0 = arith.constant 0 : i32
    %c0_i32_1 = arith.constant 0 : i32
    return %arg1, %c0_i32, %c0_i32_0 : i32, i32, i32
  }
  func.func @transform_3(%arg0: i32, %arg1: i32) -> (i32, i32, i32) {
    %c0_i32 = arith.constant 0 : i32
    %c0_i32_0 = arith.constant 0 : i32
    %c0_i32_1 = arith.constant 0 : i32
    return %arg1, %c0_i32, %c0_i32_0 : i32, i32, i32
  }
  func.func @transform_4(%arg0: i32, %arg1: i32) -> (i32, i32, i32) {
    %c0_i32 = arith.constant 0 : i32
    %c0_i32_0 = arith.constant 0 : i32
    %c0_i32_1 = arith.constant 0 : i32
    return %arg1, %c0_i32, %c0_i32_0 : i32, i32, i32
  }
  func.func @transform_5(%arg0: i32, %arg1: i32) -> (i32, i32, i32) {
    %c0_i32 = arith.constant 0 : i32
    %c0_i32_0 = arith.constant 0 : i32
    %c0_i32_1 = arith.constant 0 : i32
    return %arg1, %c0_i32, %c0_i32_0 : i32, i32, i32
  }
  func.func @transform_6(%arg0: i32, %arg1: i32) -> (i32, i32, i32) {
    %c0_i32 = arith.constant 0 : i32
    %c0_i32_0 = arith.constant 0 : i32
    %c0_i32_1 = arith.constant 0 : i32
    return %arg1, %c0_i32, %c0_i32_0 : i32, i32, i32
  }
  func.func @transform_7(%arg0: i32, %arg1: i32) -> (i32, i32, i32) {
    %c0_i32 = arith.constant 0 : i32
    %c0_i32_0 = arith.constant 0 : i32
    %c0_i32_1 = arith.constant 0 : i32
    return %arg1, %c0_i32, %c0_i32_0 : i32, i32, i32
  }
  func.func @transform_8(%arg0: i32, %arg1: i32) -> (i32, i32, i32) {
    %c0_i32 = arith.constant 0 : i32
    %c0_i32_0 = arith.constant 0 : i32
    %c0_i32_1 = arith.constant 0 : i32
    return %arg1, %c0_i32, %c0_i32_0 : i32, i32, i32
  }
  func.func @transform_9(%arg0: i32, %arg1: i32) -> (i32, i32, i32) {
    %c0_i32 = arith.constant 0 : i32
    %c0_i32_0 = arith.constant 0 : i32
    %c0_i32_1 = arith.constant 0 : i32
    return %arg1, %c0_i32, %c0_i32_0 : i32, i32, i32
  }
  func.func @transform_10(%arg0: i32, %arg1: i32) -> (i32, i32, i32) {
    %c0_i32 = arith.constant 0 : i32
    %c0_i32_0 = arith.constant 0 : i32
    %c0_i32_1 = arith.constant 0 : i32
    return %arg1, %c0_i32, %c0_i32_0 : i32, i32, i32
  }
  func.func @transform_11(%arg0: i32, %arg1: i32) -> (i32, i32, i32) {
    %c0_i32 = arith.constant 0 : i32
    %c0_i32_0 = arith.constant 0 : i32
    %c0_i32_1 = arith.constant 0 : i32
    return %arg1, %c0_i32, %c0_i32_0 : i32, i32, i32
  }
  func.func @transform_12(%arg0: i32, %arg1: i32) -> (i32, i32, i32) {
    %c0_i32 = arith.constant 0 : i32
    %c0_i32_0 = arith.constant 0 : i32
    %c0_i32_1 = arith.constant 0 : i32
    return %arg1, %c0_i32, %c0_i32_0 : i32, i32, i32
  }
  func.func @transform_13(%arg0: i32, %arg1: i32) -> (i32, i32, i32) {
    %c0_i32 = arith.constant 0 : i32
    %c0_i32_0 = arith.constant 0 : i32
    %c0_i32_1 = arith.constant 0 : i32
    return %arg1, %c0_i32, %c0_i32_0 : i32, i32, i32
  }
  func.func @transform_14(%arg0: i32, %arg1: i32) -> (i32, i32) {
    %c0_i32 = arith.constant 0 : i32
    %c0_i32_0 = arith.constant 0 : i32
    %c0_i32_1 = arith.constant 0 : i32
    return %c0_i32, %c0_i32_0 : i32, i32
  }
  func.func @transform_15(%arg0: i32, %arg1: i32) -> (i32, i32) {
    %c0_i32 = arith.constant 0 : i32
    %c0_i32_0 = arith.constant 0 : i32
    %c0_i32_1 = arith.constant 0 : i32
    return %c0_i32, %c0_i32_0 : i32, i32
  }
  func.func @transform_16(%arg0: i32, %arg1: i32) -> (i32, i32, i32) {
    %c0_i32 = arith.constant 0 : i32
    %c0_i32_0 = arith.constant 0 : i32
    %c0_i32_1 = arith.constant 0 : i32
    return %arg0, %c0_i32, %c0_i32_0 : i32, i32, i32
  }
}

</mosaic_0001>

<llo_original>
// kernel: transformer_recognizer_forward.4
$region0: #{transformer_recognizer_forward.4}
  #allocation0 [shape = 'u32[]', space=smem, size = 0x4, offset = 0x4, fixed_abs, tag = 'smem constant byte address 0x4 - core index']
  #allocation1 [shape = 'u32[144,128]{1,0:T(1,128)}', space=vmem, size = 0x12000, scoped, tag = 'internal scratch']
  #allocation2 [shape = 'f32[2,6,6,64]{3,2,1,0:T(8,128)}', space=vmem, size = 0xc000, scoped, tag = 'scratch operand']
  %s0 = inlined_call_operand.vmem [shape: bf16[4,4,4,64], index: 0, kind: input, shape index: {}]
  %s1 = inlined_call_operand.hbm [shape: bf16[3,192,128], index: 1, kind: input, shape index: {}]
  %s2 = inlined_call_operand.hbm [shape: f32[1,128], index: 2, kind: input, shape index: {}]
  %s3 = inlined_call_operand.vmem [shape: bf16[4,2,2,128], index: 3, kind: output, shape index: {}]
  %s4 = sld [smem:[#allocation0]]
  $region53: #{transformer_recognizer_forward.4} parent=0
    _
  %s6 = ssub.s32 1, %s4
  %s7 = scalar_select 0, %s6, %s4
  $region1: #{transformer_recognizer_forward.4} parent=0
    #allocation3 [shape = 'u8[147456]{0}', space=vmem, size = 0x24000, scoped, tag = 'input window, operand 1, single buffered']
    #allocation4 [shape = 's32[2]{0}', space=sflag, size = 0x8, scoped, tag = 'scoped memory for transformer_recognizer_forward.4']
    #allocation5 [shape = 'u8[512]{0}', space=vmem, size = 0x400, scoped, tag = 'input window, operand 2, single buffered']
    #allocation6 [shape = 's32[1]{0}', space=sflag, size = 0x4, scoped, tag = 'scoped memory for transformer_recognizer_forward.4']
    %8 = vsyncpa [#allocation4], 0
    %9 = vsyncpa [#allocation6], 0
    loop: start=0, step=1, limit=4
    $region2: #{transformer_recognizer_forward.4} parent=1 // loop_pre_header
      _
    $region3: #{transformer_recognizer_forward.4} parent=1 // loop_header
      %s11 = sphi 0, %s15
      %p12 = scmp.ge.s32.totalorder %s11, 4
      %s21 = sphi 0, %s23
      %s24 = sphi 0, %s21
      %s25 = sphi 0, %s24
      %s41 = sphi 0, %s25
      %s45 = sphi 0, %s45
      %s47 = sphi 0, %s45
      %s48 = sphi 0, %s47
      %s62 = sphi 0, %s48
      %s66 = sphi 0, %s66
      %s68 = sphi 0, %s66
      %s69 = sphi 0, %s68
      %s83 = sphi 0, %s69
      %s89 = sphi 0, %s91
      %s92 = sphi 0, %s89
      %s93 = sphi 0, %s92
      %s109 = sphi 0, %s93
    $region4: #{transformer_recognizer_forward.4} parent=1 // loop_header_branch
      %14 = sbr.rel (%p12) target = $region8
    $region5: #{transformer_recognizer_forward.4} parent=1 // loop_body
      %s16 = ssub.s32 %s11, 1
      %s17 = ssub.s32 %s11, 2
      %s18 = sadd.s32 %s11, 1
      %s19 = ssub.s32 %s11, %s18
      %p20 = scmp.eq.s32.totalorder %s19, 0
      %s22 = sadd.s32 %s21, 1
      %s23 = scalar_select %p20, %s21, %s22
      %p26 = pneg %p20
      %p27 = scmp.eq.s32.totalorder %s11, 1
      %p28 = por %p26, %p27
      %p29 = scmp.ne.s32.totalorder %s21, %s24
      %p30 = scmp.eq.s32.totalorder %s11, 0
      %p31 = por %p29, %p30
      %p32 = scmp.ne.s32.totalorder %s21, %s24
      %p33 = scmp.eq.s32.totalorder %s16, 1
      %p34 = por %p32, %p33
      %p35 = scmp.ne.s32.totalorder %s24, %s25
      %p36 = scmp.eq.s32.totalorder %s16, 0
      %p37 = por %p35, %p36
      %p38 = scmp.ne.s32.totalorder %s24, %s25
      %p39 = scmp.eq.s32.totalorder %s17, 1
      %p40 = por %p38, %p39
      %p42 = scmp.ne.s32.totalorder %s25, %s41
      %p43 = scmp.eq.s32.totalorder %s17, 0
      %p44 = por %p42, %p43
      %s46 = sadd.s32 %s45, 1
      %p49 = scmp.eq.s32.totalorder %s11, 1
      %p50 = scmp.ne.s32.totalorder %s45, %s47
      %p51 = scmp.eq.s32.totalorder %s11, 0
      %p52 = por %p50, %p51
      %p53 = scmp.ne.s32.totalorder %s45, %s47
      %p54 = scmp.eq.s32.totalorder %s16, 1
      %p55 = por %p53, %p54
      %p56 = scmp.ne.s32.totalorder %s47, %s48
      %p57 = scmp.eq.s32.totalorder %s16, 0
      %p58 = por %p56, %p57
      %p59 = scmp.ne.s32.totalorder %s47, %s48
      %p60 = scmp.eq.s32.totalorder %s17, 1
      %p61 = por %p59, %p60
      %p63 = scmp.ne.s32.totalorder %s48, %s62
      %p64 = scmp.eq.s32.totalorder %s17, 0
      %p65 = por %p63, %p64
      %s67 = sadd.s32 %s66, 1
      %p70 = scmp.eq.s32.totalorder %s11, 1
      %p71 = scmp.ne.s32.totalorder %s66, %s68
      %p72 = scmp.eq.s32.totalorder %s11, 0
      %p73 = por %p71, %p72
      %p74 = scmp.ne.s32.totalorder %s66, %s68
      %p75 = scmp.eq.s32.totalorder %s16, 1
      %p76 = por %p74, %p75
      %p77 = scmp.ne.s32.totalorder %s68, %s69
      %p78 = scmp.eq.s32.totalorder %s16, 0
      %p79 = por %p77, %p78
      %p80 = scmp.ne.s32.totalorder %s68, %s69
      %p81 = scmp.eq.s32.totalorder %s17, 1
      %p82 = por %p80, %p81
      %p84 = scmp.ne.s32.totalorder %s69, %s83
      %p85 = scmp.eq.s32.totalorder %s17, 0
      %p86 = por %p84, %p85
      %s87 = ssub.s32 %s11, %s18
      %p88 = scmp.eq.s32.totalorder %s87, 0
      %s90 = sadd.s32 %s89, 1
      %s91 = scalar_select %p88, %s89, %s90
      %p94 = pneg %p88
      %p95 = scmp.eq.s32.totalorder %s11, 1
      %p96 = por %p94, %p95
      %p97 = scmp.ne.s32.totalorder %s89, %s92
      %p98 = scmp.eq.s32.totalorder %s11, 0
      %p99 = por %p97, %p98
      %p100 = scmp.ne.s32.totalorder %s89, %s92
      %p101 = scmp.eq.s32.totalorder %s16, 1
      %p102 = por %p100, %p101
      %p103 = scmp.ne.s32.totalorder %s92, %s93
      %p104 = scmp.eq.s32.totalorder %s16, 0
      %p105 = por %p103, %p104
      %p106 = scmp.ne.s32.totalorder %s92, %s93
      %p107 = scmp.eq.s32.totalorder %s17, 1
      %p108 = por %p106, %p107
      %p110 = scmp.ne.s32.totalorder %s93, %s109
      %p111 = scmp.eq.s32.totalorder %s17, 0
      %p112 = por %p110, %p111
      %p113 = scmp.le.s32.totalorder 1, %s11
      %p114 = scmp.lt.s32.totalorder %s11, 3
      %p115 = pnand %p113, %p114
      %p116 = pneg %p115
      // Predicated region
      $region9: #{transformer_recognizer_forward.4} parent=5 // pred_check
        _
      $region10: #{transformer_recognizer_forward.4} parent=5 // pred_check_branch
        %118 = sbr.rel (%p115) target = $region12
      $region11: #{transformer_recognizer_forward.4} parent=5 // pred_region
        %s119 = ssub.s32 %s11, 1
        // Predicated region
        $region13: #{transformer_recognizer_forward.4} parent=11 // pred_check
          %p120 = pneg %p58
        $region14: #{transformer_recognizer_forward.4} parent=11 // pred_check_branch
          %122 = sbr.rel (%p120) target = $region16
        $region15: #{transformer_recognizer_forward.4} parent=11 // pred_region
          %s124 = ssub.s32 4608, 4608
          %125 = vsyncadd [#allocation4], %s124
          %s126 = sshll.u32 [#allocation3], 4
          %s127 = int_to_ptr.vmem [resolvable:$true] %s126
          %132 = dma.hbm_to_vmem [thread:$0]  %s1, 4608, %s127, [#allocation4], 64, 64, 4
        $region16: #{transformer_recognizer_forward.4} parent=11 // pred_fallthru
          _
        // Predicated region
        $region17: #{transformer_recognizer_forward.4} parent=11 // pred_check
          %p133 = pneg %p79
        $region18: #{transformer_recognizer_forward.4} parent=11 // pred_check_branch
          %135 = sbr.rel (%p133) target = $region20
        $region19: #{transformer_recognizer_forward.4} parent=11 // pred_region
          %s137 = ssub.s32 16, 16
          %138 = vsyncadd [#allocation6], %s137
          %s140 = sshll.u32 [#allocation5], 4
          %s141 = int_to_ptr.vmem [resolvable:$true] %s140
          %143 = dma.hbm_to_vmem [thread:$0]  %s2, 16, %s141, [#allocation6]
        $region20: #{transformer_recognizer_forward.4} parent=11 // pred_fallthru
          _
      $region12: #{transformer_recognizer_forward.4} parent=5 // pred_fallthru
        _
      %p144 = scmp.lt.s32.totalorder %s11, 2
      // Predicated region
      $region21: #{transformer_recognizer_forward.4} parent=5 // pred_check
        %p145 = pneg %p144
      $region22: #{transformer_recognizer_forward.4} parent=5 // pred_check_branch
        %147 = sbr.rel (%p145) target = $region24
      $region23: #{transformer_recognizer_forward.4} parent=5 // pred_region
        // Predicated region
        $region25: #{transformer_recognizer_forward.4} parent=23 // pred_check
          %p148 = pneg %p31
        $region26: #{transformer_recognizer_forward.4} parent=23 // pred_check_branch
          %150 = sbr.rel (%p148) target = $region28
        $region27: #{transformer_recognizer_forward.4} parent=23 // pred_region
          %s151 = smul.u32 2, %s11
          %p152 = scmp.lt.s32.totalorder %s151, 3
          %s153 = scalar_select %p152, %s151, 3
          %s154 = smul.addr %s153, 4
          %s155 = smul.addr %s154, 2
          %s156 = scalar_lea.vmem %s0, %s155
          %s157 = smul.u32 2, %s11
        $region28: #{transformer_recognizer_forward.4} parent=23 // pred_fallthru
          _
      $region24: #{transformer_recognizer_forward.4} parent=5 // pred_fallthru
        _
      %p158 = scmp.le.s32.totalorder 1, %s11
      %p159 = scmp.lt.s32.totalorder %s11, 3
      %p160 = pnand %p158, %p159
      %p161 = pneg %p160
      // Predicated region
      $region29: #{transformer_recognizer_forward.4} parent=5 // pred_check
        _
      $region30: #{transformer_recognizer_forward.4} parent=5 // pred_check_branch
        %163 = sbr.rel (%p160) target = $region32
      $region31: #{transformer_recognizer_forward.4} parent=5 // pred_region
        %s164 = ssub.s32 %s11, 1
        // Predicated region
        $region33: #{transformer_recognizer_forward.4} parent=31 // pred_check
          %p165 = pneg %p58
        $region34: #{transformer_recognizer_forward.4} parent=31 // pred_check_branch
          %167 = sbr.rel (%p165) target = $region36
        $region35: #{transformer_recognizer_forward.4} parent=31 // pred_region
          %168 = dma.done [#allocation4], 4608
        $region36: #{transformer_recognizer_forward.4} parent=31 // pred_fallthru
          _
        // Predicated region
        $region37: #{transformer_recognizer_forward.4} parent=31 // pred_check
          %p169 = pneg %p79
        $region38: #{transformer_recognizer_forward.4} parent=31 // pred_check_branch
          %171 = sbr.rel (%p169) target = $region40
        $region39: #{transformer_recognizer_forward.4} parent=31 // pred_region
          %172 = dma.done [#allocation6], 16
        $region40: #{transformer_recognizer_forward.4} parent=31 // pred_fallthru
          _
        %s173 = smul.u32 2, %s16
        %p174 = scmp.lt.s32.totalorder %s173, 3
        %s175 = scalar_select %p174, %s173, 3
        %s176 = smul.addr %s175, 4
        %s177 = smul.addr %s176, 2
        %s178 = scalar_lea.vmem %s0, %s177
        %p179 = pneg %p37
        %p180 = pneg %p34
        %p181 = pneg %p58
        %p182 = pneg %p55
        %p183 = pneg %p79
        %p184 = pneg %p76
        %p185 = pneg %p105
        %p186 = pneg %p102
        %s187 = smul.u32 2, %s16
        %p188 = scmp.lt.s32.totalorder %s187, 3
        %s189 = scalar_select %p188, %s187, 3
        %s190 = smul.addr %s189, 2
        %s191 = scalar_lea.vmem %s3, %s190
        %s192 = smul.u32 2, %s16
        %p193 = scmp.lt.s32.totalorder %s192, 3
        %s194 = scalar_select %p193, %s192, 3
        %s195 = smul.addr %s194, 4
        %s196 = smul.addr %s195, 2
        %s197 = scalar_lea.vmem %s0, %s196
        %s198 = smul.u32 2, %s16
        %s199 = smul.u32 2, %s16
        %p200 = scmp.lt.s32.totalorder %s199, 3
        %s201 = scalar_select %p200, %s199, 3
        %s202 = smul.addr %s201, 2
        %s203 = scalar_lea.vmem %s3, %s202
        %s204 = smul.u32 2, %s16
        %vm206 = vcmask 521216
        %207 = vst.msk [vmem:[#allocation2] sm:$0x3f] %vm206, 0.0
        %208 = vst.msk [vmem:[#allocation2 + $0x8] sm:$0x3f] %vm206, 0.0
        %209 = vst.msk [vmem:[#allocation2 + $0x10] sm:$0x3f] %vm206, 0.0
        %210 = vst.msk [vmem:[#allocation2 + $0x18] sm:$0x3f] %vm206, 0.0
        %211 = vst.msk [vmem:[#allocation2 + $0x20] sm:$0x3f] %vm206, 0.0
        %212 = vst.msk [vmem:[#allocation2 + $0x28] sm:$0x3f] %vm206, 0.0
        %213 = vst.msk [vmem:[#allocation2 + $0x30] sm:$0x3f] %vm206, 0.0
        %214 = vst.msk [vmem:[#allocation2 + $0x38] sm:$0x3f] %vm206, 0.0
        %215 = vst.msk [vmem:[#allocation2 + $0x40] sm:$0x3f] %vm206, 0.0
        %216 = vst.msk [vmem:[#allocation2 + $0x48] sm:$0x3f] %vm206, 0.0
        %217 = vst.msk [vmem:[#allocation2 + $0x50] sm:$0x3f] %vm206, 0.0
        %218 = vst.msk [vmem:[#allocation2 + $0x58] sm:$0x3f] %vm206, 0.0
        %v219 = vld [vmem:[%s197] sm:$0x3]
        %v220 = vld [vmem:[%s197 + $0x2] sm:$0x3]
        %v221 = vld [vmem:[%s197 + $0x4] sm:$0x3]
        %v222 = vld [vmem:[%s197 + $0x6] sm:$0x3]
        %v223 = vld [vmem:[%s197 + $0x8] sm:$0x3]
        %v224 = vld [vmem:[%s197 + $0xa] sm:$0x3]
        %v225 = vld [vmem:[%s197 + $0xc] sm:$0x3]
        %v226 = vld [vmem:[%s197 + $0xe] sm:$0x3]
        %v227 = vunpack.c.l.bf16 %v219
        %v228 = vunpack.c.l.bf16 %v220
        %v229 = vunpack.c.l.bf16 %v221
        %v230 = vunpack.c.l.bf16 %v222
        %v231 = vunpack.c.l.bf16 %v223
        %v232 = vunpack.c.l.bf16 %v224
        %v233 = vunpack.c.l.bf16 %v225
        %v234 = vunpack.c.l.bf16 %v226
        %s235 = scalar_lea.vmem [#allocation2], 8
        %vm236 = vcmask 519168
        %237 = vst.msk [vmem:[%s235 + $0x1] sm:$0xf] %vm236, %v227
        %238 = vst.msk [vmem:[%s235 + $0x9] sm:$0xf] %vm236, %v228
        %239 = vst.msk [vmem:[%s235 + $0x11] sm:$0xf] %vm236, %v229
        %240 = vst.msk [vmem:[%s235 + $0x19] sm:$0xf] %vm236, %v230
        %241 = vst.msk [vmem:[%s235 + $0x31] sm:$0xf] %vm236, %v231
        %242 = vst.msk [vmem:[%s235 + $0x39] sm:$0xf] %vm236, %v232
        %243 = vst.msk [vmem:[%s235 + $0x41] sm:$0xf] %vm236, %v233
        %244 = vst.msk [vmem:[%s235 + $0x49] sm:$0xf] %vm236, %v234
        %v245 = vld [vmem:[#allocation2] sm:$0xf]
        %v246 = vld [vmem:[#allocation2 + $0x8] sm:$0xf]
        %v247 = vld [vmem:[#allocation2 + $0x10] sm:$0xf]
        %v248 = vld [vmem:[#allocation2 + $0x18] sm:$0xf]
        %v249 = vld [vmem:[#allocation2 + $0x30] sm:$0xf]
        %v250 = vld [vmem:[#allocation2 + $0x38] sm:$0xf]
        %v251 = vld [vmem:[#allocation2 + $0x40] sm:$0xf]
        %v252 = vld [vmem:[#allocation2 + $0x48] sm:$0xf]
        %v253 = vld [vmem:[#allocation2 + $0x1] sm:$0xf]
        %v254 = vld [vmem:[#allocation2 + $0x9] sm:$0xf]
        %v255 = vld [vmem:[#allocation2 + $0x11] sm:$0xf]
        %v256 = vld [vmem:[#allocation2 + $0x19] sm:$0xf]
        %v257 = vld [vmem:[#allocation2 + $0x31] sm:$0xf]
        %v258 = vld [vmem:[#allocation2 + $0x39] sm:$0xf]
        %v259 = vld [vmem:[#allocation2 + $0x41] sm:$0xf]
        %v260 = vld [vmem:[#allocation2 + $0x49] sm:$0xf]
        %v261 = vld [vmem:[#allocation2 + $0x2] sm:$0xf]
        %v262 = vld [vmem:[#allocation2 + $0xa] sm:$0xf]
        %v263 = vld [vmem:[#allocation2 + $0x12] sm:$0xf]
        %v264 = vld [vmem:[#allocation2 + $0x1a] sm:$0xf]
        %v265 = vld [vmem:[#allocation2 + $0x32] sm:$0xf]
        %v266 = vld [vmem:[#allocation2 + $0x3a] sm:$0xf]
        %v267 = vld [vmem:[#allocation2 + $0x42] sm:$0xf]
        %v268 = vld [vmem:[#allocation2 + $0x4a] sm:$0xf]
        %v277 = vcombine.low %v245, %v246
        %v278 = vcombine.low %v247, %v248
        %v279 = vcombine.low %v249, %v250
        %v280 = vcombine.low %v251, %v252
        %v293 = vcombine.low %v253, %v254
        %v294 = vcombine.low %v255, %v256
        %v295 = vcombine.low %v257, %v258
        %v296 = vcombine.low %v259, %v260
        %297 = vrot.lane.b32.xlu0 %v293, 64
        %v298 = vpop.permute.xlu0 %297
        %299 = vrot.lane.b32.xlu0 %v294, 64
        %v300 = vpop.permute.xlu0 %299
        %301 = vrot.lane.b32.xlu0 %v295, 64
        %v302 = vpop.permute.xlu0 %301
        %303 = vrot.lane.b32.xlu0 %v296, 64
        %v304 = vpop.permute.xlu0 %303
        %v317 = vcombine.low %v261, %v262
        %v318 = vcombine.low %v263, %v264
        %v319 = vcombine.low %v265, %v266
        %v320 = vcombine.low %v267, %v268
        %vm325 = vcmask 523264
        %v326 = vsel %vm325, %v277, %v298
        %v327 = vsel %vm325, %v278, %v300
        %v328 = vsel %vm325, %v279, %v302
        %v329 = vsel %vm325, %v280, %v304
        %v330 = vpack.c.bf16 %v327, %v326
        %v331 = vpack.c.bf16 %v318, %v317
        %v332 = vpack.c.bf16 %v329, %v328
        %v333 = vpack.c.bf16 %v320, %v319
        %v334 = vld [vmem:[#allocation3] sm:$0xf]
        %v335 = vld [vmem:[#allocation3 + $0x4] sm:$0xf]
        %v336 = vld [vmem:[#allocation3 + $0x8] sm:$0xf]
        %v337 = vld [vmem:[#allocation3 + $0xc] sm:$0xf]
        %v338 = vld [vmem:[#allocation3 + $0x10] sm:$0xf]
        %v339 = vld [vmem:[#allocation3 + $0x14] sm:$0xf]
        %v340 = vld [vmem:[#allocation3 + $0x18] sm:$0xf]
        %v341 = vld [vmem:[#allocation3 + $0x1c] sm:$0xf]
        %v342 = vld [vmem:[#allocation3 + $0x20] sm:$0xf]
        %v343 = vld [vmem:[#allocation3 + $0x24] sm:$0xf]
        %v344 = vld [vmem:[#allocation3 + $0x28] sm:$0xf]
        %v345 = vld [vmem:[#allocation3 + $0x2c] sm:$0xf]
        %v346 = vld [vmem:[#allocation3 + $0x30] sm:$0xf]
        %v347 = vld [vmem:[#allocation3 + $0x34] sm:$0xf]
        %v348 = vld [vmem:[#allocation3 + $0x38] sm:$0xf]
        %v349 = vld [vmem:[#allocation3 + $0x3c] sm:$0xf]
        %v350 = vld [vmem:[#allocation3 + $0x40] sm:$0xf]
        %v351 = vld [vmem:[#allocation3 + $0x44] sm:$0xf]
        %v352 = vld [vmem:[#allocation3 + $0x48] sm:$0xf]
        %v353 = vld [vmem:[#allocation3 + $0x4c] sm:$0xf]
        %v354 = vld [vmem:[#allocation3 + $0x50] sm:$0xf]
        %v355 = vld [vmem:[#allocation3 + $0x54] sm:$0xf]
        %v356 = vld [vmem:[#allocation3 + $0x58] sm:$0xf]
        %v357 = vld [vmem:[#allocation3 + $0x5c] sm:$0xf]
        %v358 = vld [vmem:[%s235] sm:$0xf]
        %v359 = vld [vmem:[%s235 + $0x8] sm:$0xf]
        %v360 = vld [vmem:[%s235 + $0x10] sm:$0xf]
        %v361 = vld [vmem:[%s235 + $0x18] sm:$0xf]
        %v362 = vld [vmem:[%s235 + $0x30] sm:$0xf]
        %v363 = vld [vmem:[%s235 + $0x38] sm:$0xf]
        %v364 = vld [vmem:[%s235 + $0x40] sm:$0xf]
        %v365 = vld [vmem:[%s235 + $0x48] sm:$0xf]
        %v366 = vld [vmem:[%s235 + $0x1] sm:$0xf]
        %v367 = vld [vmem:[%s235 + $0x9] sm:$0xf]
        %v368 = vld [vmem:[%s235 + $0x11] sm:$0xf]
        %v369 = vld [vmem:[%s235 + $0x19] sm:$0xf]
        %v370 = vld [vmem:[%s235 + $0x31] sm:$0xf]
        %v371 = vld [vmem:[%s235 + $0x39] sm:$0xf]
        %v372 = vld [vmem:[%s235 + $0x41] sm:$0xf]
        %v373 = vld [vmem:[%s235 + $0x49] sm:$0xf]
        %v374 = vld [vmem:[%s235 + $0x2] sm:$0xf]
        %v375 = vld [vmem:[%s235 + $0xa] sm:$0xf]
        %v376 = vld [vmem:[%s235 + $0x12] sm:$0xf]
        %v377 = vld [vmem:[%s235 + $0x1a] sm:$0xf]
        %v378 = vld [vmem:[%s235 + $0x32] sm:$0xf]
        %v379 = vld [vmem:[%s235 + $0x3a] sm:$0xf]
        %v380 = vld [vmem:[%s235 + $0x42] sm:$0xf]
        %v381 = vld [vmem:[%s235 + $0x4a] sm:$0xf]
        %v390 = vcombine.low %v358, %v359
        %v391 = vcombine.low %v360, %v361
        %v392 = vcombine.low %v362, %v363
        %v393 = vcombine.low %v364, %v365
        %v406 = vcombine.low %v366, %v367
        %v407 = vcombine.low %v368, %v369
        %v408 = vcombine.low %v370, %v371
        %v409 = vcombine.low %v372, %v373
        %410 = vrot.lane.b32.xlu0 %v406, 64
        %v411 = vpop.permute.xlu0 %410
        %412 = vrot.lane.b32.xlu0 %v407, 64
        %v413 = vpop.permute.xlu0 %412
        %414 = vrot.lane.b32.xlu0 %v408, 64
        %v415 = vpop.permute.xlu0 %414
        %416 = vrot.lane.b32.xlu0 %v409, 64
        %v417 = vpop.permute.xlu0 %416
        %v430 = vcombine.low %v374, %v375
        %v431 = vcombine.low %v376, %v377
        %v432 = vcombine.low %v378, %v379
        %v433 = vcombine.low %v380, %v381
        %v438 = vsel %vm325, %v390, %v411
        %v439 = vsel %vm325, %v391, %v413
        %v440 = vsel %vm325, %v392, %v415
        %v441 = vsel %vm325, %v393, %v417
        %v442 = vpack.c.bf16 %v439, %v438
        %v443 = vpack.c.bf16 %v431, %v430
        %v444 = vpack.c.bf16 %v441, %v440
        %v445 = vpack.c.bf16 %v433, %v432
        %s446 = scalar_lea.vmem [#allocation3], 96
        %v447 = vld [vmem:[%s446] sm:$0xf]
        %v448 = vld [vmem:[%s446 + $0x4] sm:$0xf]
        %v449 = vld [vmem:[%s446 + $0x8] sm:$0xf]
        %v450 = vld [vmem:[%s446 + $0xc] sm:$0xf]
        %v451 = vld [vmem:[%s446 + $0x10] sm:$0xf]
        %v452 = vld [vmem:[%s446 + $0x14] sm:$0xf]
        %v453 = vld [vmem:[%s446 + $0x18] sm:$0xf]
        %v454 = vld [vmem:[%s446 + $0x1c] sm:$0xf]
        %v455 = vld [vmem:[%s446 + $0x20] sm:$0xf]
        %v456 = vld [vmem:[%s446 + $0x24] sm:$0xf]
        %v457 = vld [vmem:[%s446 + $0x28] sm:$0xf]
        %v458 = vld [vmem:[%s446 + $0x2c] sm:$0xf]
        %v459 = vld [vmem:[%s446 + $0x30] sm:$0xf]
        %v460 = vld [vmem:[%s446 + $0x34] sm:$0xf]
        %v461 = vld [vmem:[%s446 + $0x38] sm:$0xf]
        %v462 = vld [vmem:[%s446 + $0x3c] sm:$0xf]
        %v463 = vld [vmem:[%s446 + $0x40] sm:$0xf]
        %v464 = vld [vmem:[%s446 + $0x44] sm:$0xf]
        %v465 = vld [vmem:[%s446 + $0x48] sm:$0xf]
        %v466 = vld [vmem:[%s446 + $0x4c] sm:$0xf]
        %v467 = vld [vmem:[%s446 + $0x50] sm:$0xf]
        %v468 = vld [vmem:[%s446 + $0x54] sm:$0xf]
        %v469 = vld [vmem:[%s446 + $0x58] sm:$0xf]
        %v470 = vld [vmem:[%s446 + $0x5c] sm:$0xf]
        %v495 = vunpack.c.l.b16 %v447
        %v496 = vunpack.c.l.b16 %v448
        %v497 = vunpack.c.l.b16 %v449
        %v498 = vunpack.c.l.b16 %v450
        %v499 = vunpack.c.l.b16 %v451
        %v500 = vunpack.c.l.b16 %v452
        %v501 = vunpack.c.l.b16 %v453
        %v502 = vunpack.c.l.b16 %v454
        %v503 = vunpack.c.l.b16 %v455
        %v504 = vunpack.c.l.b16 %v456
        %v505 = vunpack.c.l.b16 %v457
        %v506 = vunpack.c.l.b16 %v458
        %v507 = vunpack.c.l.b16 %v459
        %v508 = vunpack.c.l.b16 %v460
        %v509 = vunpack.c.l.b16 %v461
        %v510 = vunpack.c.l.b16 %v462
        %v511 = vunpack.c.l.b16 %v463
        %v512 = vunpack.c.l.b16 %v464
        %v513 = vunpack.c.l.b16 %v465
        %v514 = vunpack.c.l.b16 %v466
        %v515 = vunpack.c.l.b16 %v467
        %v516 = vunpack.c.l.b16 %v468
        %v517 = vunpack.c.l.b16 %v469
        %v518 = vunpack.c.l.b16 %v470
        %v519 = vpack.c.b16 %v496, %v495
        %v520 = vpack.c.b16 %v498, %v497
        %v521 = vpack.c.b16 %v500, %v499
        %v522 = vpack.c.b16 %v502, %v501
        %v523 = vpack.c.b16 %v504, %v503
        %v524 = vpack.c.b16 %v506, %v505
        %v525 = vpack.c.b16 %v508, %v507
        %v526 = vpack.c.b16 %v510, %v509
        %v527 = vpack.c.b16 %v512, %v511
        %v528 = vpack.c.b16 %v514, %v513
        %v529 = vpack.c.b16 %v516, %v515
        %v530 = vpack.c.b16 %v518, %v517
        %v544 = vsel %vm325, %v443, 0
        %v547 = vsel %vm325, %v445, 0
        %549 = vmatprep.subr.bf16.mxu0 0
        %550 = vmatpush1.bf16.msra.mxu0 %v526
        %551 = vmatprep.subr.bf16.mxu0 0
        %552 = vmatpush1.bf16.msra.mxu0 %v525
        %553 = vmatprep.subr.bf16.mxu0 0
        %554 = vmatpush1.bf16.msra.mxu0 %v524
        %555 = vmatprep.subr.bf16.mxu0 0
        %556 = vmatpush1.bf16.msra.mxu0 %v523
        %557 = vmatprep.subr.bf16.mxu0 0
        %558 = vmatpush1.bf16.msra.mxu0 %v522
        %559 = vmatprep.subr.bf16.mxu0 0
        %560 = vmatpush1.bf16.msra.mxu0 %v521
        %561 = vmatprep.subr.bf16.mxu0 0
        %562 = vmatpush1.bf16.msra.mxu0 %v520
        %563 = vmatprep.subr.bf16.mxu0 0
        %564 = vmatpush1.bf16.msra.mxu0 %v519
        %565 = vmatprep.subr.bf16.mxu0 0
        %566 = vmatpush2.bf16.msra.mxu0 0
        %567 = vmatprep.subr.bf16.mxu0 0
        %568 = vmatpush2.bf16.msra.mxu0 0
        %569 = vmatprep.subr.bf16.mxu0 0
        %570 = vmatpush2.bf16.msra.mxu0 0
        %571 = vmatprep.subr.bf16.mxu0 0
        %572 = vmatpush2.bf16.msra.mxu0 0
        %573 = vmatprep.subr.bf16.mxu0 0
        %574 = vmatpush2.bf16.msra.mxu0 %v530
        %575 = vmatprep.subr.bf16.mxu0 0
        %576 = vmatpush2.bf16.msra.mxu0 %v529
        %577 = vmatprep.subr.bf16.mxu0 0
        %578 = vmatpush2.bf16.msra.mxu0 %v528
        %579 = vmatprep.subr.bf16.mxu0 0
        %580 = vmatpush2.bf16.msra.mxu0 %v527
        %581 = vmatprep.mubr.bf16.mxu0 %v544
        %582 = vmatmul.mubr.bf16.gmra.mxu0 %v442
        %v583 = vpop.f32.mrf.mxu0
        %v584 = vadd.f32 0.0, %v583
        %v585 = vpop.f32.mrf.mxu0
        %v586 = vpop.f32.mrf.mxu0
        %v587 = vadd.f32 0.0, %v586
        %v588 = vpop.f32.mrf.mxu0
        %589 = vmatprep.mubr.bf16.mxu0 %v547
        %590 = vmatmul.mubr.bf16.gmra.mxu0 %v444
        %v591 = vpop.f32.mrf.mxu0
        %v592 = vadd.f32 0.0, %v591
        %v593 = vpop.f32.mrf.mxu0
        %v594 = vpop.f32.mrf.mxu0
        %v595 = vadd.f32 0.0, %v594
        %v596 = vpop.f32.mrf.mxu0
        %597 = vdwg.mxu0
        %v622 = vunpack.c.l.b16 %v334
        %v623 = vunpack.c.l.b16 %v335
        %v624 = vunpack.c.l.b16 %v336
        %v625 = vunpack.c.l.b16 %v337
        %v626 = vunpack.c.l.b16 %v338
        %v627 = vunpack.c.l.b16 %v339
        %v628 = vunpack.c.l.b16 %v340
        %v629 = vunpack.c.l.b16 %v341
        %v630 = vunpack.c.l.b16 %v342
        %v631 = vunpack.c.l.b16 %v343
        %v632 = vunpack.c.l.b16 %v344
        %v633 = vunpack.c.l.b16 %v345
        %v634 = vunpack.c.l.b16 %v346
        %v635 = vunpack.c.l.b16 %v347
        %v636 = vunpack.c.l.b16 %v348
        %v637 = vunpack.c.l.b16 %v349
        %v638 = vunpack.c.l.b16 %v350
        %v639 = vunpack.c.l.b16 %v351
        %v640 = vunpack.c.l.b16 %v352
        %v641 = vunpack.c.l.b16 %v353
        %v642 = vunpack.c.l.b16 %v354
        %v643 = vunpack.c.l.b16 %v355
        %v644 = vunpack.c.l.b16 %v356
        %v645 = vunpack.c.l.b16 %v357
        %v646 = vpack.c.b16 %v623, %v622
        %v647 = vpack.c.b16 %v625, %v624
        %v648 = vpack.c.b16 %v627, %v626
        %v649 = vpack.c.b16 %v629, %v628
        %v650 = vpack.c.b16 %v631, %v630
        %v651 = vpack.c.b16 %v633, %v632
        %v652 = vpack.c.b16 %v635, %v634
        %v653 = vpack.c.b16 %v637, %v636
        %v654 = vpack.c.b16 %v639, %v638
        %v655 = vpack.c.b16 %v641, %v640
        %v656 = vpack.c.b16 %v643, %v642
        %v657 = vpack.c.b16 %v645, %v644
        %v671 = vsel %vm325, %v331, 0
        %v674 = vsel %vm325, %v333, 0
        %676 = vmatprep.subr.bf16.mxu0 0
        %677 = vmatpush1.bf16.msra.mxu0 %v653
        %678 = vmatprep.subr.bf16.mxu0 0
        %679 = vmatpush1.bf16.msra.mxu0 %v652
        %680 = vmatprep.subr.bf16.mxu0 0
        %681 = vmatpush1.bf16.msra.mxu0 %v651
        %682 = vmatprep.subr.bf16.mxu0 0
        %683 = vmatpush1.bf16.msra.mxu0 %v650
        %684 = vmatprep.subr.bf16.mxu0 0
        %685 = vmatpush1.bf16.msra.mxu0 %v649
        %686 = vmatprep.subr.bf16.mxu0 0
        %687 = vmatpush1.bf16.msra.mxu0 %v648
        %688 = vmatprep.subr.bf16.mxu0 0
        %689 = vmatpush1.bf16.msra.mxu0 %v647
        %690 = vmatprep.subr.bf16.mxu0 0
        %691 = vmatpush1.bf16.msra.mxu0 %v646
        %692 = vmatprep.subr.bf16.mxu0 0
        %693 = vmatpush2.bf16.msra.mxu0 0
        %694 = vmatprep.subr.bf16.mxu0 0
        %695 = vmatpush2.bf16.msra.mxu0 0
        %696 = vmatprep.subr.bf16.mxu0 0
        %697 = vmatpush2.bf16.msra.mxu0 0
        %698 = vmatprep.subr.bf16.mxu0 0
        %699 = vmatpush2.bf16.msra.mxu0 0
        %700 = vmatprep.subr.bf16.mxu0 0
        %701 = vmatpush2.bf16.msra.mxu0 %v657
        %702 = vmatprep.subr.bf16.mxu0 0
        %703 = vmatpush2.bf16.msra.mxu0 %v656
        %704 = vmatprep.subr.bf16.mxu0 0
        %705 = vmatpush2.bf16.msra.mxu0 %v655
        %706 = vmatprep.subr.bf16.mxu0 0
        %707 = vmatpush2.bf16.msra.mxu0 %v654
        %708 = vmatprep.mubr.bf16.mxu0 %v671
        %709 = vmatmul.mubr.bf16.gmra.mxu0 %v330
        %v710 = vpop.f32.mrf.mxu0
        %v711 = vadd.f32 %v584, %v710
        %v712 = vpop.f32.mrf.mxu0
        %v713 = vpop.f32.mrf.mxu0
        %v714 = vadd.f32 %v587, %v713
        %v715 = vpop.f32.mrf.mxu0
        %716 = vmatprep.mubr.bf16.mxu0 %v674
        %717 = vmatmul.mubr.bf16.gmra.mxu0 %v332
        %v718 = vpop.f32.mrf.mxu0
        %v719 = vadd.f32 %v592, %v718
        %v720 = vpop.f32.mrf.mxu0
        %v721 = vpop.f32.mrf.mxu0
        %v722 = vadd.f32 %v595, %v721
        %v723 = vpop.f32.mrf.mxu0
        %724 = vdwg.mxu0
        %s725 = scalar_lea.vmem [#allocation2], 16
        %v726 = vld [vmem:[%s725] sm:$0xf]
        %v727 = vld [vmem:[%s725 + $0x8] sm:$0xf]
        %v728 = vld [vmem:[%s725 + $0x10] sm:$0xf]
        %v729 = vld [vmem:[%s725 + $0x18] sm:$0xf]
        %v730 = vld [vmem:[%s725 + $0x30] sm:$0xf]
        %v731 = vld [vmem:[%s725 + $0x38] sm:$0xf]
        %v732 = vld [vmem:[%s725 + $0x40] sm:$0xf]
        %v733 = vld [vmem:[%s725 + $0x48] sm:$0xf]
        %v734 = vld [vmem:[%s725 + $0x1] sm:$0xf]
        %v735 = vld [vmem:[%s725 + $0x9] sm:$0xf]
        %v736 = vld [vmem:[%s725 + $0x11] sm:$0xf]
        %v737 = vld [vmem:[%s725 + $0x19] sm:$0xf]
        %v738 = vld [vmem:[%s725 + $0x31] sm:$0xf]
        %v739 = vld [vmem:[%s725 + $0x39] sm:$0xf]
        %v740 = vld [vmem:[%s725 + $0x41] sm:$0xf]
        %v741 = vld [vmem:[%s725 + $0x49] sm:$0xf]
        %v742 = vld [vmem:[%s725 + $0x2] sm:$0xf]
        %v743 = vld [vmem:[%s725 + $0xa] sm:$0xf]
        %v744 = vld [vmem:[%s725 + $0x12] sm:$0xf]
        %v745 = vld [vmem:[%s725 + $0x1a] sm:$0xf]
        %v746 = vld [vmem:[%s725 + $0x32] sm:$0xf]
        %v747 = vld [vmem:[%s725 + $0x3a] sm:$0xf]
        %v748 = vld [vmem:[%s725 + $0x42] sm:$0xf]
        %v749 = vld [vmem:[%s725 + $0x4a] sm:$0xf]
        %v758 = vcombine.low %v726, %v727
        %v759 = vcombine.low %v728, %v729
        %v760 = vcombine.low %v730, %v731
        %v761 = vcombine.low %v732, %v733
        %v774 = vcombine.low %v734, %v735
        %v775 = vcombine.low %v736, %v737
        %v776 = vcombine.low %v738, %v739
        %v777 = vcombine.low %v740, %v741
        %778 = vrot.lane.b32.xlu0 %v774, 64
        %v779 = vpop.permute.xlu0 %778
        %780 = vrot.lane.b32.xlu0 %v775, 64
        %v781 = vpop.permute.xlu0 %780
        %782 = vrot.lane.b32.xlu0 %v776, 64
        %v783 = vpop.permute.xlu0 %782
        %784 = vrot.lane.b32.xlu0 %v777, 64
        %v785 = vpop.permute.xlu0 %784
        %v798 = vcombine.low %v742, %v743
        %v799 = vcombine.low %v744, %v745
        %v800 = vcombine.low %v746, %v747
        %v801 = vcombine.low %v748, %v749
        %v806 = vsel %vm325, %v758, %v779
        %v807 = vsel %vm325, %v759, %v781
        %v808 = vsel %vm325, %v760, %v783
        %v809 = vsel %vm325, %v761, %v785
        %v810 = vpack.c.bf16 %v807, %v806
        %v811 = vpack.c.bf16 %v799, %v798
        %v812 = vpack.c.bf16 %v809, %v808
        %v813 = vpack.c.bf16 %v801, %v800
        %s814 = scalar_lea.vmem [#allocation3], 192
        %v815 = vld [vmem:[%s814] sm:$0xf]
        %v816 = vld [vmem:[%s814 + $0x4] sm:$0xf]
        %v817 = vld [vmem:[%s814 + $0x8] sm:$0xf]
        %v818 = vld [vmem:[%s814 + $0xc] sm:$0xf]
        %v819 = vld [vmem:[%s814 + $0x10] sm:$0xf]
        %v820 = vld [vmem:[%s814 + $0x14] sm:$0xf]
        %v821 = vld [vmem:[%s814 + $0x18] sm:$0xf]
        %v822 = vld [vmem:[%s814 + $0x1c] sm:$0xf]
        %v823 = vld [vmem:[%s814 + $0x20] sm:$0xf]
        %v824 = vld [vmem:[%s814 + $0x24] sm:$0xf]
        %v825 = vld [vmem:[%s814 + $0x28] sm:$0xf]
        %v826 = vld [vmem:[%s814 + $0x2c] sm:$0xf]
        %v827 = vld [vmem:[%s814 + $0x30] sm:$0xf]
        %v828 = vld [vmem:[%s814 + $0x34] sm:$0xf]
        %v829 = vld [vmem:[%s814 + $0x38] sm:$0xf]
        %v830 = vld [vmem:[%s814 + $0x3c] sm:$0xf]
        %v831 = vld [vmem:[%s814 + $0x40] sm:$0xf]
        %v832 = vld [vmem:[%s814 + $0x44] sm:$0xf]
        %v833 = vld [vmem:[%s814 + $0x48] sm:$0xf]
        %v834 = vld [vmem:[%s814 + $0x4c] sm:$0xf]
        %v835 = vld [vmem:[%s814 + $0x50] sm:$0xf]
        %v836 = vld [vmem:[%s814 + $0x54] sm:$0xf]
        %v837 = vld [vmem:[%s814 + $0x58] sm:$0xf]
        %v838 = vld [vmem:[%s814 + $0x5c] sm:$0xf]
        %v863 = vunpack.c.l.b16 %v815
        %v864 = vunpack.c.l.b16 %v816
        %v865 = vunpack.c.l.b16 %v817
        %v866 = vunpack.c.l.b16 %v818
        %v867 = vunpack.c.l.b16 %v819
        %v868 = vunpack.c.l.b16 %v820
        %v869 = vunpack.c.l.b16 %v821
        %v870 = vunpack.c.l.b16 %v822
        %v871 = vunpack.c.l.b16 %v823
        %v872 = vunpack.c.l.b16 %v824
        %v873 = vunpack.c.l.b16 %v825
        %v874 = vunpack.c.l.b16 %v826
        %v875 = vunpack.c.l.b16 %v827
        %v876 = vunpack.c.l.b16 %v828
        %v877 = vunpack.c.l.b16 %v829
        %v878 = vunpack.c.l.b16 %v830
        %v879 = vunpack.c.l.b16 %v831
        %v880 = vunpack.c.l.b16 %v832
        %v881 = vunpack.c.l.b16 %v833
        %v882 = vunpack.c.l.b16 %v834
        %v883 = vunpack.c.l.b16 %v835
        %v884 = vunpack.c.l.b16 %v836
        %v885 = vunpack.c.l.b16 %v837
        %v886 = vunpack.c.l.b16 %v838
        %v887 = vpack.c.b16 %v864, %v863
        %v888 = vpack.c.b16 %v866, %v865
        %v889 = vpack.c.b16 %v868, %v867
        %v890 = vpack.c.b16 %v870, %v869
        %v891 = vpack.c.b16 %v872, %v871
        %v892 = vpack.c.b16 %v874, %v873
        %v893 = vpack.c.b16 %v876, %v875
        %v894 = vpack.c.b16 %v878, %v877
        %v895 = vpack.c.b16 %v880, %v879
        %v896 = vpack.c.b16 %v882, %v881
        %v897 = vpack.c.b16 %v884, %v883
        %v898 = vpack.c.b16 %v886, %v885
        %v912 = vsel %vm325, %v811, 0
        %v915 = vsel %vm325, %v813, 0
        %917 = vmatprep.subr.bf16.mxu0 0
        %918 = vmatpush1.bf16.msra.mxu0 %v894
        %919 = vmatprep.subr.bf16.mxu0 0
        %920 = vmatpush1.bf16.msra.mxu0 %v893
        %921 = vmatprep.subr.bf16.mxu0 0
        %922 = vmatpush1.bf16.msra.mxu0 %v892
        %923 = vmatprep.subr.bf16.mxu0 0
        %924 = vmatpush1.bf16.msra.mxu0 %v891
        %925 = vmatprep.subr.bf16.mxu0 0
        %926 = vmatpush1.bf16.msra.mxu0 %v890
        %927 = vmatprep.subr.bf16.mxu0 0
        %928 = vmatpush1.bf16.msra.mxu0 %v889
        %929 = vmatprep.subr.bf16.mxu0 0
        %930 = vmatpush1.bf16.msra.mxu0 %v888
        %931 = vmatprep.subr.bf16.mxu0 0
        %932 = vmatpush1.bf16.msra.mxu0 %v887
        %933 = vmatprep.subr.bf16.mxu0 0
        %934 = vmatpush2.bf16.msra.mxu0 0
        %935 = vmatprep.subr.bf16.mxu0 0
        %936 = vmatpush2.bf16.msra.mxu0 0
        %937 = vmatprep.subr.bf16.mxu0 0
        %938 = vmatpush2.bf16.msra.mxu0 0
        %939 = vmatprep.subr.bf16.mxu0 0
        %940 = vmatpush2.bf16.msra.mxu0 0
        %941 = vmatprep.subr.bf16.mxu0 0
        %942 = vmatpush2.bf16.msra.mxu0 %v898
        %943 = vmatprep.subr.bf16.mxu0 0
        %944 = vmatpush2.bf16.msra.mxu0 %v897
        %945 = vmatprep.subr.bf16.mxu0 0
        %946 = vmatpush2.bf16.msra.mxu0 %v896
        %947 = vmatprep.subr.bf16.mxu0 0
        %948 = vmatpush2.bf16.msra.mxu0 %v895
        %949 = vmatprep.mubr.bf16.mxu0 %v912
        %950 = vmatmul.mubr.bf16.gmra.mxu0 %v810
        %v951 = vpop.f32.mrf.mxu0
        %v952 = vadd.f32 0.0, %v951
        %v953 = vpop.f32.mrf.mxu0
        %v954 = vpop.f32.mrf.mxu0
        %v955 = vadd.f32 0.0, %v954
        %v956 = vpop.f32.mrf.mxu0
        %957 = vmatprep.mubr.bf16.mxu0 %v915
        %958 = vmatmul.mubr.bf16.gmra.mxu0 %v812
        %v959 = vpop.f32.mrf.mxu0
        %v960 = vadd.f32 0.0, %v959
        %v961 = vpop.f32.mrf.mxu0
        %v962 = vpop.f32.mrf.mxu0
        %v963 = vadd.f32 0.0, %v962
        %v964 = vpop.f32.mrf.mxu0
        %965 = vdwg.mxu0
        %v966 = vadd.f32 %v711, %v952
        %v967 = vadd.f32 %v714, %v955
        %v968 = vadd.f32 %v719, %v960
        %v969 = vadd.f32 %v722, %v963
        %v970 = vld [vmem:[#allocation5] sm:$0x1]
        %v972 = vlaneseq
        %v973 = vshrl.u32 %v972, 7
        %v974 = vsub.s32 0, %v973
        %v975 = vrot.slane %v970, %v974
        %v977 = vadd.f32 %v966, %v975
        %v978 = vadd.f32 %v967, %v975
        %v979 = vadd.f32 %v968, %v975
        %v980 = vadd.f32 %v969, %v975
        %v981 = vmax.f32 %v977, 0.0
        %v982 = vmax.f32 %v978, 0.0
        %v983 = vmax.f32 %v979, 0.0
        %v984 = vmax.f32 %v980, 0.0
        %v989 = vcombine.high %v981, %v981
        %v990 = vcombine.high %v982, %v982
        %v991 = vcombine.high %v983, %v983
        %v992 = vcombine.high %v984, %v984
        %v997 = vmax.f32 %v981, %v989
        %v998 = vmax.f32 %v982, %v990
        %v999 = vmax.f32 %v983, %v991
        %v1000 = vmax.f32 %v984, %v992
        %v1006 = vunpack.c.l.s4 1983009808
        %v1007 = vunpack.c.0.s8 %v1006
        %v1008 = vlaneseq
        %v1009 = vshrl.u32 %v1008, 7
        %v1010 = vsub.s32 %v1007, %v1009
        %v1011 = vrot.slane %v997, %v1010
        %v1012 = vcombine.high %v1011, %v1011
        %v1014 = vunpack.c.l.s4 1983009808
        %v1015 = vunpack.c.0.s8 %v1014
        %v1016 = vlaneseq
        %v1017 = vshrl.u32 %v1016, 7
        %v1018 = vsub.s32 %v1015, %v1017
        %v1019 = vrot.slane %v998, %v1018
        %v1020 = vcombine.high %v1019, %v1019
        %v1022 = vunpack.c.l.s4 1983009808
        %v1023 = vunpack.c.0.s8 %v1022
        %v1024 = vlaneseq
        %v1025 = vshrl.u32 %v1024, 7
        %v1026 = vsub.s32 %v1023, %v1025
        %v1027 = vrot.slane %v999, %v1026
        %v1028 = vcombine.high %v1027, %v1027
        %v1030 = vunpack.c.l.s4 1983009808
        %v1031 = vunpack.c.0.s8 %v1030
        %v1032 = vlaneseq
        %v1033 = vshrl.u32 %v1032, 7
        %v1034 = vsub.s32 %v1031, %v1033
        %v1035 = vrot.slane %v1000, %v1034
        %v1036 = vcombine.high %v1035, %v1035
        %v1045 = vrot.slane %v1011, 7
        %v1046 = vrot.slane %v1045, 2
        %v1047 = vrot.slane %v1012, 7
        %v1048 = vrot.slane %v1047, 2
        %v1049 = vrot.slane %v1019, 7
        %v1050 = vrot.slane %v1049, 2
        %v1051 = vrot.slane %v1020, 7
        %v1052 = vrot.slane %v1051, 2
        %v1053 = vrot.slane %v1027, 7
        %v1054 = vrot.slane %v1053, 2
        %v1055 = vrot.slane %v1028, 7
        %v1056 = vrot.slane %v1055, 2
        %v1057 = vrot.slane %v1035, 7
        %v1058 = vrot.slane %v1057, 2
        %v1059 = vrot.slane %v1036, 7
        %v1060 = vrot.slane %v1059, 2
        %v1069 = vmax.f32 %v1011, %v1046
        %v1070 = vmax.f32 %v1012, %v1048
        %v1071 = vmax.f32 %v1019, %v1050
        %v1072 = vmax.f32 %v1020, %v1052
        %v1073 = vmax.f32 %v1027, %v1054
        %v1074 = vmax.f32 %v1028, %v1056
        %v1075 = vmax.f32 %v1035, %v1058
        %v1076 = vmax.f32 %v1036, %v1060
        %v1077 = vpack.c.bf16 %v1069, %v1069
        %v1078 = vpack.c.bf16 %v1070, %v1070
        %v1079 = vpack.c.bf16 %v1071, %v1071
        %v1080 = vpack.c.bf16 %v1072, %v1072
        %v1081 = vpack.c.bf16 %v1073, %v1073
        %v1082 = vpack.c.bf16 %v1074, %v1074
        %v1083 = vpack.c.bf16 %v1075, %v1075
        %v1084 = vpack.c.bf16 %v1076, %v1076
        %v1094 = vunpack.c.l.s4 1966171168
        %v1095 = vunpack.c.0.s8 %v1094
        %v1096 = vlaneseq
        %v1097 = vshrl.u32 %v1096, 7
        %v1098 = vsub.s32 %v1095, %v1097
        %v1099 = vrot.slane %v1077, %v1098
        %v1101 = vunpack.c.l.s4 1966171168
        %v1102 = vunpack.c.0.s8 %v1101
        %v1103 = vlaneseq
        %v1104 = vshrl.u32 %v1103, 7
        %v1105 = vsub.s32 %v1102, %v1104
        %v1106 = vrot.slane %v1099, %v1105
        %v1108 = vunpack.c.l.s4 1966171168
        %v1109 = vunpack.c.0.s8 %v1108
        %v1110 = vlaneseq
        %v1111 = vshrl.u32 %v1110, 7
        %v1112 = vsub.s32 %v1109, %v1111
        %v1113 = vrot.slane %v1078, %v1112
        %v1115 = vunpack.c.l.s4 1966171168
        %v1116 = vunpack.c.0.s8 %v1115
        %v1117 = vlaneseq
        %v1118 = vshrl.u32 %v1117, 7
        %v1119 = vsub.s32 %v1116, %v1118
        %v1120 = vrot.slane %v1113, %v1119
        %v1122 = vunpack.c.l.s4 1966171168
        %v1123 = vunpack.c.0.s8 %v1122
        %v1124 = vlaneseq
        %v1125 = vshrl.u32 %v1124, 7
        %v1126 = vsub.s32 %v1123, %v1125
        %v1127 = vrot.slane %v1079, %v1126
        %v1129 = vunpack.c.l.s4 1966171168
        %v1130 = vunpack.c.0.s8 %v1129
        %v1131 = vlaneseq
        %v1132 = vshrl.u32 %v1131, 7
        %v1133 = vsub.s32 %v1130, %v1132
        %v1134 = vrot.slane %v1127, %v1133
        %v1136 = vunpack.c.l.s4 1966171168
        %v1137 = vunpack.c.0.s8 %v1136
        %v1138 = vlaneseq
        %v1139 = vshrl.u32 %v1138, 7
        %v1140 = vsub.s32 %v1137, %v1139
        %v1141 = vrot.slane %v1080, %v1140
        %v1143 = vunpack.c.l.s4 1966171168
        %v1144 = vunpack.c.0.s8 %v1143
        %v1145 = vlaneseq
        %v1146 = vshrl.u32 %v1145, 7
        %v1147 = vsub.s32 %v1144, %v1146
        %v1148 = vrot.slane %v1141, %v1147
        %v1150 = vunpack.c.l.s4 1966171168
        %v1151 = vunpack.c.0.s8 %v1150
        %v1152 = vlaneseq
        %v1153 = vshrl.u32 %v1152, 7
        %v1154 = vsub.s32 %v1151, %v1153
        %v1155 = vrot.slane %v1081, %v1154
        %v1157 = vunpack.c.l.s4 1966171168
        %v1158 = vunpack.c.0.s8 %v1157
        %v1159 = vlaneseq
        %v1160 = vshrl.u32 %v1159, 7
        %v1161 = vsub.s32 %v1158, %v1160
        %v1162 = vrot.slane %v1155, %v1161
        %v1164 = vunpack.c.l.s4 1966171168
        %v1165 = vunpack.c.0.s8 %v1164
        %v1166 = vlaneseq
        %v1167 = vshrl.u32 %v1166, 7
        %v1168 = vsub.s32 %v1165, %v1167
        %v1169 = vrot.slane %v1082, %v1168
        %v1171 = vunpack.c.l.s4 1966171168
        %v1172 = vunpack.c.0.s8 %v1171
        %v1173 = vlaneseq
        %v1174 = vshrl.u32 %v1173, 7
        %v1175 = vsub.s32 %v1172, %v1174
        %v1176 = vrot.slane %v1169, %v1175
        %v1178 = vunpack.c.l.s4 1966171168
        %v1179 = vunpack.c.0.s8 %v1178
        %v1180 = vlaneseq
        %v1181 = vshrl.u32 %v1180, 7
        %v1182 = vsub.s32 %v1179, %v1181
        %v1183 = vrot.slane %v1083, %v1182
        %v1185 = vunpack.c.l.s4 1966171168
        %v1186 = vunpack.c.0.s8 %v1185
        %v1187 = vlaneseq
        %v1188 = vshrl.u32 %v1187, 7
        %v1189 = vsub.s32 %v1186, %v1188
        %v1190 = vrot.slane %v1183, %v1189
        %v1192 = vunpack.c.l.s4 1966171168
        %v1193 = vunpack.c.0.s8 %v1192
        %v1194 = vlaneseq
        %v1195 = vshrl.u32 %v1194, 7
        %v1196 = vsub.s32 %v1193, %v1195
        %v1197 = vrot.slane %v1084, %v1196
        %v1199 = vunpack.c.l.s4 1966171168
        %v1200 = vunpack.c.0.s8 %v1199
        %v1201 = vlaneseq
        %v1202 = vshrl.u32 %v1201, 7
        %v1203 = vsub.s32 %v1200, %v1202
        %v1204 = vrot.slane %v1197, %v1203
        %v1206 = vunpack.c.l.s4 1935823168
        %v1207 = vunpack.c.0.s8 %v1206
        %v1208 = vlaneseq
        %v1209 = vshrl.u32 %v1208, 7
        %v1210 = vsub.s32 %v1207, %v1209
        %v1211 = vrot.slane %v1106, %v1210
        %v1213 = vunpack.c.l.s4 1935823168
        %v1214 = vunpack.c.0.s8 %v1213
        %v1215 = vlaneseq
        %v1216 = vshrl.u32 %v1215, 7
        %v1217 = vsub.s32 %v1214, %v1216
        %v1218 = vrot.slane %v1211, %v1217
        %v1220 = vunpack.c.l.s4 1935823168
        %v1221 = vunpack.c.0.s8 %v1220
        %v1222 = vlaneseq
        %v1223 = vshrl.u32 %v1222, 7
        %v1224 = vsub.s32 %v1221, %v1223
        %v1225 = vrot.slane %v1120, %v1224
        %v1227 = vunpack.c.l.s4 1935823168
        %v1228 = vunpack.c.0.s8 %v1227
        %v1229 = vlaneseq
        %v1230 = vshrl.u32 %v1229, 7
        %v1231 = vsub.s32 %v1228, %v1230
        %v1232 = vrot.slane %v1225, %v1231
        %v1234 = vunpack.c.l.s4 1935823168
        %v1235 = vunpack.c.0.s8 %v1234
        %v1236 = vlaneseq
        %v1237 = vshrl.u32 %v1236, 7
        %v1238 = vsub.s32 %v1235, %v1237
        %v1239 = vrot.slane %v1134, %v1238
        %v1241 = vunpack.c.l.s4 1935823168
        %v1242 = vunpack.c.0.s8 %v1241
        %v1243 = vlaneseq
        %v1244 = vshrl.u32 %v1243, 7
        %v1245 = vsub.s32 %v1242, %v1244
        %v1246 = vrot.slane %v1239, %v1245
        %v1248 = vunpack.c.l.s4 1935823168
        %v1249 = vunpack.c.0.s8 %v1248
        %v1250 = vlaneseq
        %v1251 = vshrl.u32 %v1250, 7
        %v1252 = vsub.s32 %v1249, %v1251
        %v1253 = vrot.slane %v1148, %v1252
        %v1255 = vunpack.c.l.s4 1935823168
        %v1256 = vunpack.c.0.s8 %v1255
        %v1257 = vlaneseq
        %v1258 = vshrl.u32 %v1257, 7
        %v1259 = vsub.s32 %v1256, %v1258
        %v1260 = vrot.slane %v1253, %v1259
        %v1262 = vunpack.c.l.s4 1935823168
        %v1263 = vunpack.c.0.s8 %v1262
        %v1264 = vlaneseq
        %v1265 = vshrl.u32 %v1264, 7
        %v1266 = vsub.s32 %v1263, %v1265
        %v1267 = vrot.slane %v1162, %v1266
        %v1269 = vunpack.c.l.s4 1935823168
        %v1270 = vunpack.c.0.s8 %v1269
        %v1271 = vlaneseq
        %v1272 = vshrl.u32 %v1271, 7
        %v1273 = vsub.s32 %v1270, %v1272
        %v1274 = vrot.slane %v1267, %v1273
        %v1276 = vunpack.c.l.s4 1935823168
        %v1277 = vunpack.c.0.s8 %v1276
        %v1278 = vlaneseq
        %v1279 = vshrl.u32 %v1278, 7
        %v1280 = vsub.s32 %v1277, %v1279
        %v1281 = vrot.slane %v1176, %v1280
        %v1283 = vunpack.c.l.s4 1935823168
        %v1284 = vunpack.c.0.s8 %v1283
        %v1285 = vlaneseq
        %v1286 = vshrl.u32 %v1285, 7
        %v1287 = vsub.s32 %v1284, %v1286
        %v1288 = vrot.slane %v1281, %v1287
        %v1290 = vunpack.c.l.s4 1935823168
        %v1291 = vunpack.c.0.s8 %v1290
        %v1292 = vlaneseq
        %v1293 = vshrl.u32 %v1292, 7
        %v1294 = vsub.s32 %v1291, %v1293
        %v1295 = vrot.slane %v1190, %v1294
        %v1297 = vunpack.c.l.s4 1935823168
        %v1298 = vunpack.c.0.s8 %v1297
        %v1299 = vlaneseq
        %v1300 = vshrl.u32 %v1299, 7
        %v1301 = vsub.s32 %v1298, %v1300
        %v1302 = vrot.slane %v1295, %v1301
        %v1304 = vunpack.c.l.s4 1935823168
        %v1305 = vunpack.c.0.s8 %v1304
        %v1306 = vlaneseq
        %v1307 = vshrl.u32 %v1306, 7
        %v1308 = vsub.s32 %v1305, %v1307
        %v1309 = vrot.slane %v1204, %v1308
        %v1311 = vunpack.c.l.s4 1935823168
        %v1312 = vunpack.c.0.s8 %v1311
        %v1313 = vlaneseq
        %v1314 = vshrl.u32 %v1313, 7
        %v1315 = vsub.s32 %v1312, %v1314
        %v1316 = vrot.slane %v1309, %v1315
        %v1317 = vunpack.c.l.b16 %v1218
        %v1318 = vunpack.c.l.b16 %v1232
        %v1319 = vunpack.c.l.b16 %v1246
        %v1320 = vunpack.c.l.b16 %v1260
        %v1321 = vunpack.c.l.b16 %v1274
        %v1322 = vunpack.c.l.b16 %v1288
        %v1323 = vunpack.c.l.b16 %v1302
        %v1324 = vunpack.c.l.b16 %v1316
        %v1325 = vrot.slane %v1318, 7
        %vm1326 = vcmask 1041409
        %v1327 = vsel %vm1326, %v1325, %v1317
        %v1328 = vrot.slane %v1320, 7
        %v1329 = vsel %vm1326, %v1328, %v1319
        %v1330 = vrot.slane %v1322, 7
        %v1331 = vsel %vm1326, %v1330, %v1321
        %v1332 = vrot.slane %v1324, 7
        %v1333 = vsel %vm1326, %v1332, %v1323
        %v1334 = vpack.c.b16 %v1327, %v1327
        %v1335 = vpack.c.b16 %v1329, %v1329
        %v1336 = vpack.c.b16 %v1331, %v1331
        %v1337 = vpack.c.b16 %v1333, %v1333
        %v1339 = vunpack.c.l.s4 1966171168
        %v1340 = vunpack.c.0.s8 %v1339
        %v1341 = vlaneseq
        %v1342 = vshrl.u32 %v1341, 7
        %v1343 = vsub.s32 %v1340, %v1342
        %v1344 = vrot.slane %v1334, %v1343
        %v1346 = vunpack.c.l.s4 1966171168
        %v1347 = vunpack.c.0.s8 %v1346
        %v1348 = vlaneseq
        %v1349 = vshrl.u32 %v1348, 7
        %v1350 = vsub.s32 %v1347, %v1349
        %v1351 = vrot.slane %v1344, %v1350
        %v1353 = vunpack.c.l.s4 1966171168
        %v1354 = vunpack.c.0.s8 %v1353
        %v1355 = vlaneseq
        %v1356 = vshrl.u32 %v1355, 7
        %v1357 = vsub.s32 %v1354, %v1356
        %v1358 = vrot.slane %v1335, %v1357
        %v1360 = vunpack.c.l.s4 1966171168
        %v1361 = vunpack.c.0.s8 %v1360
        %v1362 = vlaneseq
        %v1363 = vshrl.u32 %v1362, 7
        %v1364 = vsub.s32 %v1361, %v1363
        %v1365 = vrot.slane %v1358, %v1364
        %v1367 = vunpack.c.l.s4 1966171168
        %v1368 = vunpack.c.0.s8 %v1367
        %v1369 = vlaneseq
        %v1370 = vshrl.u32 %v1369, 7
        %v1371 = vsub.s32 %v1368, %v1370
        %v1372 = vrot.slane %v1336, %v1371
        %v1374 = vunpack.c.l.s4 1966171168
        %v1375 = vunpack.c.0.s8 %v1374
        %v1376 = vlaneseq
        %v1377 = vshrl.u32 %v1376, 7
        %v1378 = vsub.s32 %v1375, %v1377
        %v1379 = vrot.slane %v1372, %v1378
        %v1381 = vunpack.c.l.s4 1966171168
        %v1382 = vunpack.c.0.s8 %v1381
        %v1383 = vlaneseq
        %v1384 = vshrl.u32 %v1383, 7
        %v1385 = vsub.s32 %v1382, %v1384
        %v1386 = vrot.slane %v1337, %v1385
        %v1388 = vunpack.c.l.s4 1966171168
        %v1389 = vunpack.c.0.s8 %v1388
        %v1390 = vlaneseq
        %v1391 = vshrl.u32 %v1390, 7
        %v1392 = vsub.s32 %v1389, %v1391
        %v1393 = vrot.slane %v1386, %v1392
        %1398 = vst [vmem:[%s203] sm:$0x1] %v1351
        %1399 = vst [vmem:[%s203 + $0x1] sm:$0x1] %v1365
        %1400 = vst [vmem:[%s203 + $0x2] sm:$0x1] %v1379
        %1401 = vst [vmem:[%s203 + $0x3] sm:$0x1] %v1393
        %s1402 = smul.u32 2, %s16
        %p1403 = scmp.lt.s32.totalorder %s1402, 3
        %s1404 = scalar_select %p1403, %s1402, 3
        %s1405 = smul.addr %s1404, 2
        %s1406 = scalar_lea.vmem %s3, %s1405
        // Predicated region
        $region41: #{transformer_recognizer_forward.4} parent=31 // pred_check
          %p1407 = pneg %p102
        $region42: #{transformer_recognizer_forward.4} parent=31 // pred_check_branch
          %1409 = sbr.rel (%p1407) target = $region44
        $region43: #{transformer_recognizer_forward.4} parent=31 // pred_region
          %s1410 = smul.u32 2, %s16
        $region44: #{transformer_recognizer_forward.4} parent=31 // pred_fallthru
          _
      $region32: #{transformer_recognizer_forward.4} parent=5 // pred_fallthru
        _
      %p1411 = scmp.le.s32.totalorder 2, %s11
      // Predicated region
      $region45: #{transformer_recognizer_forward.4} parent=5 // pred_check
        %p1412 = pneg %p1411
      $region46: #{transformer_recognizer_forward.4} parent=5 // pred_check_branch
        %1414 = sbr.rel (%p1412) target = $region48
      $region47: #{transformer_recognizer_forward.4} parent=5 // pred_region
        %s1415 = ssub.s32 %s11, 2
        // Predicated region
        $region49: #{transformer_recognizer_forward.4} parent=47 // pred_check
          %p1416 = pneg %p108
        $region50: #{transformer_recognizer_forward.4} parent=47 // pred_check_branch
          %1418 = sbr.rel (%p1416) target = $region52
        $region51: #{transformer_recognizer_forward.4} parent=47 // pred_region
          %s1419 = smul.u32 2, %s17
          %p1420 = scmp.lt.s32.totalorder %s1419, 3
          %s1421 = scalar_select %p1420, %s1419, 3
          %s1422 = smul.addr %s1421, 2
          %s1423 = scalar_lea.vmem %s3, %s1422
        $region52: #{transformer_recognizer_forward.4} parent=47 // pred_fallthru
          _
      $region48: #{transformer_recognizer_forward.4} parent=5 // pred_fallthru
        _
    $region6: #{transformer_recognizer_forward.4} parent=1 // loop_footer
      %s15 = sadd.s32 1, %s11
    $region7: #{transformer_recognizer_forward.4} parent=1 // loop_footer_branch
      %10 = sbr.rel target = $region3
    $region8: #{transformer_recognizer_forward.4} parent=1 // loop_exit
      _
    %1424 = vsyncpa [#allocation4], 1
    %s1425 = scalar_lea.sflag [#allocation4], 1
    %1426 = vsyncpa %s1425, 1
    %1427 = vsyncpa [#allocation6], 1

// kernel: transformer_recognizer_forward.3
$region0: #{transformer_recognizer_forward.3}
  #allocation0 [shape = 'u32[]', space=smem, size = 0x4, offset = 0x4, fixed_abs, tag = 'smem constant byte address 0x4 - core index']
  #allocation1 [shape = 'u32[144,128]{1,0:T(1,128)}', space=vmem, size = 0x12000, scoped, tag = 'internal scratch']
  #allocation2 [shape = 'f32[2,10,10,3]{3,2,1,0:T(8,128)}', space=vmem, size = 0x28000, scoped, tag = 'scratch operand']
  %s0 = inlined_call_operand.vmem [shape: bf16[4,8,8,3], index: 0, kind: input, shape index: {}]
  %s1 = inlined_call_operand.vmem [shape: bf16[1,27,64], index: 1, kind: input, shape index: {}]
  %s2 = inlined_call_operand.hbm [shape: f32[1,64], index: 2, kind: input, shape index: {}]
  %s3 = inlined_call_operand.vmem [shape: bf16[4,4,4,64], index: 3, kind: output, shape index: {}]
  %s4 = sld [smem:[#allocation0]]
  $region49: #{transformer_recognizer_forward.3} parent=0
    _
  %s6 = ssub.s32 1, %s4
  %s7 = scalar_select 0, %s6, %s4
  $region1: #{transformer_recognizer_forward.3} parent=0
    #allocation3 [shape = 'u8[512]{0}', space=vmem, size = 0x400, scoped, tag = 'input window, operand 2, single buffered']
    #allocation4 [shape = 's32[2]{0}', space=sflag, size = 0x8, scoped, tag = 'scoped memory for transformer_recognizer_forward.3']
    %8 = vsyncpa [#allocation4], 0
    loop: start=0, step=1, limit=4
    $region2: #{transformer_recognizer_forward.3} parent=1 // loop_pre_header
      _
    $region3: #{transformer_recognizer_forward.3} parent=1 // loop_header
      %s10 = sphi 0, %s14
      %p11 = scmp.ge.s32.totalorder %s10, 4
      %s20 = sphi 0, %s22
      %s23 = sphi 0, %s20
      %s24 = sphi 0, %s23
      %s40 = sphi 0, %s24
      %s44 = sphi 0, %s44
      %s46 = sphi 0, %s44
      %s47 = sphi 0, %s46
      %s61 = sphi 0, %s47
      %s65 = sphi 0, %s65
      %s67 = sphi 0, %s65
      %s68 = sphi 0, %s67
      %s82 = sphi 0, %s68
      %s88 = sphi 0, %s90
      %s91 = sphi 0, %s88
      %s92 = sphi 0, %s91
      %s108 = sphi 0, %s92
    $region4: #{transformer_recognizer_forward.3} parent=1 // loop_header_branch
      %13 = sbr.rel (%p11) target = $region8
    $region5: #{transformer_recognizer_forward.3} parent=1 // loop_body
      %s15 = ssub.s32 %s10, 1
      %s16 = ssub.s32 %s10, 2
      %s17 = sadd.s32 %s10, 1
      %s18 = ssub.s32 %s10, %s17
      %p19 = scmp.eq.s32.totalorder %s18, 0
      %s21 = sadd.s32 %s20, 1
      %s22 = scalar_select %p19, %s20, %s21
      %p25 = pneg %p19
      %p26 = scmp.eq.s32.totalorder %s10, 1
      %p27 = por %p25, %p26
      %p28 = scmp.ne.s32.totalorder %s20, %s23
      %p29 = scmp.eq.s32.totalorder %s10, 0
      %p30 = por %p28, %p29
      %p31 = scmp.ne.s32.totalorder %s20, %s23
      %p32 = scmp.eq.s32.totalorder %s15, 1
      %p33 = por %p31, %p32
      %p34 = scmp.ne.s32.totalorder %s23, %s24
      %p35 = scmp.eq.s32.totalorder %s15, 0
      %p36 = por %p34, %p35
      %p37 = scmp.ne.s32.totalorder %s23, %s24
      %p38 = scmp.eq.s32.totalorder %s16, 1
      %p39 = por %p37, %p38
      %p41 = scmp.ne.s32.totalorder %s24, %s40
      %p42 = scmp.eq.s32.totalorder %s16, 0
      %p43 = por %p41, %p42
      %s45 = sadd.s32 %s44, 1
      %p48 = scmp.eq.s32.totalorder %s10, 1
      %p49 = scmp.ne.s32.totalorder %s44, %s46
      %p50 = scmp.eq.s32.totalorder %s10, 0
      %p51 = por %p49, %p50
      %p52 = scmp.ne.s32.totalorder %s44, %s46
      %p53 = scmp.eq.s32.totalorder %s15, 1
      %p54 = por %p52, %p53
      %p55 = scmp.ne.s32.totalorder %s46, %s47
      %p56 = scmp.eq.s32.totalorder %s15, 0
      %p57 = por %p55, %p56
      %p58 = scmp.ne.s32.totalorder %s46, %s47
      %p59 = scmp.eq.s32.totalorder %s16, 1
      %p60 = por %p58, %p59
      %p62 = scmp.ne.s32.totalorder %s47, %s61
      %p63 = scmp.eq.s32.totalorder %s16, 0
      %p64 = por %p62, %p63
      %s66 = sadd.s32 %s65, 1
      %p69 = scmp.eq.s32.totalorder %s10, 1
      %p70 = scmp.ne.s32.totalorder %s65, %s67
      %p71 = scmp.eq.s32.totalorder %s10, 0
      %p72 = por %p70, %p71
      %p73 = scmp.ne.s32.totalorder %s65, %s67
      %p74 = scmp.eq.s32.totalorder %s15, 1
      %p75 = por %p73, %p74
      %p76 = scmp.ne.s32.totalorder %s67, %s68
      %p77 = scmp.eq.s32.totalorder %s15, 0
      %p78 = por %p76, %p77
      %p79 = scmp.ne.s32.totalorder %s67, %s68
      %p80 = scmp.eq.s32.totalorder %s16, 1
      %p81 = por %p79, %p80
      %p83 = scmp.ne.s32.totalorder %s68, %s82
      %p84 = scmp.eq.s32.totalorder %s16, 0
      %p85 = por %p83, %p84
      %s86 = ssub.s32 %s10, %s17
      %p87 = scmp.eq.s32.totalorder %s86, 0
      %s89 = sadd.s32 %s88, 1
      %s90 = scalar_select %p87, %s88, %s89
      %p93 = pneg %p87
      %p94 = scmp.eq.s32.totalorder %s10, 1
      %p95 = por %p93, %p94
      %p96 = scmp.ne.s32.totalorder %s88, %s91
      %p97 = scmp.eq.s32.totalorder %s10, 0
      %p98 = por %p96, %p97
      %p99 = scmp.ne.s32.totalorder %s88, %s91
      %p100 = scmp.eq.s32.totalorder %s15, 1
      %p101 = por %p99, %p100
      %p102 = scmp.ne.s32.totalorder %s91, %s92
      %p103 = scmp.eq.s32.totalorder %s15, 0
      %p104 = por %p102, %p103
      %p105 = scmp.ne.s32.totalorder %s91, %s92
      %p106 = scmp.eq.s32.totalorder %s16, 1
      %p107 = por %p105, %p106
      %p109 = scmp.ne.s32.totalorder %s92, %s108
      %p110 = scmp.eq.s32.totalorder %s16, 0
      %p111 = por %p109, %p110
      %p112 = scmp.le.s32.totalorder 1, %s10
      %p113 = scmp.lt.s32.totalorder %s10, 3
      %p114 = pnand %p112, %p113
      %p115 = pneg %p114
      // Predicated region
      $region9: #{transformer_recognizer_forward.3} parent=5 // pred_check
        _
      $region10: #{transformer_recognizer_forward.3} parent=5 // pred_check_branch
        %117 = sbr.rel (%p114) target = $region12
      $region11: #{transformer_recognizer_forward.3} parent=5 // pred_region
        %s118 = ssub.s32 %s10, 1
        // Predicated region
        $region13: #{transformer_recognizer_forward.3} parent=11 // pred_check
          %p119 = pneg %p57
        $region14: #{transformer_recognizer_forward.3} parent=11 // pred_check_branch
          %121 = sbr.rel (%p119) target = $region16
        $region15: #{transformer_recognizer_forward.3} parent=11 // pred_region
          _
        $region16: #{transformer_recognizer_forward.3} parent=11 // pred_fallthru
          _
        // Predicated region
        $region17: #{transformer_recognizer_forward.3} parent=11 // pred_check
          %p122 = pneg %p78
        $region18: #{transformer_recognizer_forward.3} parent=11 // pred_check_branch
          %124 = sbr.rel (%p122) target = $region20
        $region19: #{transformer_recognizer_forward.3} parent=11 // pred_region
          %s126 = ssub.s32 16, 16
          %127 = vsyncadd [#allocation4], %s126
          %s129 = sshll.u32 [#allocation3], 4
          %s130 = int_to_ptr.vmem [resolvable:$true] %s129
          %132 = dma.hbm_to_vmem [thread:$0]  %s2, 16, %s130, [#allocation4]
        $region20: #{transformer_recognizer_forward.3} parent=11 // pred_fallthru
          _
      $region12: #{transformer_recognizer_forward.3} parent=5 // pred_fallthru
        _
      %p133 = scmp.lt.s32.totalorder %s10, 2
      // Predicated region
      $region21: #{transformer_recognizer_forward.3} parent=5 // pred_check
        %p134 = pneg %p133
      $region22: #{transformer_recognizer_forward.3} parent=5 // pred_check_branch
        %136 = sbr.rel (%p134) target = $region24
      $region23: #{transformer_recognizer_forward.3} parent=5 // pred_region
        // Predicated region
        $region25: #{transformer_recognizer_forward.3} parent=23 // pred_check
          %p137 = pneg %p30
        $region26: #{transformer_recognizer_forward.3} parent=23 // pred_check_branch
          %139 = sbr.rel (%p137) target = $region28
        $region27: #{transformer_recognizer_forward.3} parent=23 // pred_region
          %s140 = smul.u32 2, %s10
          %p141 = scmp.lt.s32.totalorder %s140, 3
          %s142 = scalar_select %p141, %s140, 3
          %s143 = smul.addr %s142, 8
          %s144 = smul.addr %s143, 4
          %s145 = scalar_lea.vmem %s0, %s144
          %s146 = smul.u32 2, %s10
        $region28: #{transformer_recognizer_forward.3} parent=23 // pred_fallthru
          _
      $region24: #{transformer_recognizer_forward.3} parent=5 // pred_fallthru
        _
      %p147 = scmp.le.s32.totalorder 1, %s10
      %p148 = scmp.lt.s32.totalorder %s10, 3
      %p149 = pnand %p147, %p148
      %p150 = pneg %p149
      // Predicated region
      $region29: #{transformer_recognizer_forward.3} parent=5 // pred_check
        _
      $region30: #{transformer_recognizer_forward.3} parent=5 // pred_check_branch
        %152 = sbr.rel (%p149) target = $region32
      $region31: #{transformer_recognizer_forward.3} parent=5 // pred_region
        %s153 = ssub.s32 %s10, 1
        // Predicated region
        $region33: #{transformer_recognizer_forward.3} parent=31 // pred_check
          %p154 = pneg %p78
        $region34: #{transformer_recognizer_forward.3} parent=31 // pred_check_branch
          %156 = sbr.rel (%p154) target = $region36
        $region35: #{transformer_recognizer_forward.3} parent=31 // pred_region
          %157 = dma.done [#allocation4], 16
        $region36: #{transformer_recognizer_forward.3} parent=31 // pred_fallthru
          _
        %s158 = smul.u32 2, %s15
        %p159 = scmp.lt.s32.totalorder %s158, 3
        %s160 = scalar_select %p159, %s158, 3
        %s161 = smul.addr %s160, 8
        %s162 = smul.addr %s161, 4
        %s163 = scalar_lea.vmem %s0, %s162
        %p164 = pneg %p36
        %p165 = pneg %p33
        %p166 = pneg %p57
        %p167 = pneg %p54
        %p168 = pneg %p78
        %p169 = pneg %p75
        %p170 = pneg %p104
        %p171 = pneg %p101
        %s172 = smul.u32 2, %s15
        %p173 = scmp.lt.s32.totalorder %s172, 3
        %s174 = scalar_select %p173, %s172, 3
        %s175 = smul.addr %s174, 4
        %s176 = smul.addr %s175, 2
        %s177 = scalar_lea.vmem %s3, %s176
        %s178 = smul.u32 2, %s15
        %p179 = scmp.lt.s32.totalorder %s178, 3
        %s180 = scalar_select %p179, %s178, 3
        %s181 = smul.addr %s180, 8
        %s182 = smul.addr %s181, 4
        %s183 = scalar_lea.vmem %s0, %s182
        %s184 = smul.u32 2, %s15
        %s185 = smul.u32 2, %s15
        %p186 = scmp.lt.s32.totalorder %s185, 3
        %s187 = scalar_select %p186, %s185, 3
        %s188 = smul.addr %s187, 4
        %s189 = smul.addr %s188, 2
        %s190 = scalar_lea.vmem %s3, %s189
        %s191 = smul.u32 2, %s15
        %vm193 = vcmask 23552
        %194 = vst.msk [vmem:[#allocation2] sm:$0xff] %vm193, 0.0
        %vm195 = vcmask 17408
        %196 = vst.msk [vmem:[#allocation2 + $0x8] sm:$0x3] %vm195, 0.0
        %197 = vst.msk [vmem:[#allocation2 + $0x10] sm:$0xff] %vm193, 0.0
        %198 = vst.msk [vmem:[#allocation2 + $0x18] sm:$0x3] %vm195, 0.0
        %199 = vst.msk [vmem:[#allocation2 + $0x20] sm:$0xff] %vm193, 0.0
        %200 = vst.msk [vmem:[#allocation2 + $0x28] sm:$0x3] %vm195, 0.0
        %201 = vst.msk [vmem:[#allocation2 + $0x30] sm:$0xff] %vm193, 0.0
        %202 = vst.msk [vmem:[#allocation2 + $0x38] sm:$0x3] %vm195, 0.0
        %203 = vst.msk [vmem:[#allocation2 + $0x40] sm:$0xff] %vm193, 0.0
        %204 = vst.msk [vmem:[#allocation2 + $0x48] sm:$0x3] %vm195, 0.0
        %205 = vst.msk [vmem:[#allocation2 + $0x50] sm:$0xff] %vm193, 0.0
        %206 = vst.msk [vmem:[#allocation2 + $0x58] sm:$0x3] %vm195, 0.0
        %207 = vst.msk [vmem:[#allocation2 + $0x60] sm:$0xff] %vm193, 0.0
        %208 = vst.msk [vmem:[#allocation2 + $0x68] sm:$0x3] %vm195, 0.0
        %209 = vst.msk [vmem:[#allocation2 + $0x70] sm:$0xff] %vm193, 0.0
        %210 = vst.msk [vmem:[#allocation2 + $0x78] sm:$0x3] %vm195, 0.0
        %211 = vst.msk [vmem:[#allocation2 + $0x80] sm:$0xff] %vm193, 0.0
        %212 = vst.msk [vmem:[#allocation2 + $0x88] sm:$0x3] %vm195, 0.0
        %213 = vst.msk [vmem:[#allocation2 + $0x90] sm:$0xff] %vm193, 0.0
        %214 = vst.msk [vmem:[#allocation2 + $0x98] sm:$0x3] %vm195, 0.0
        %215 = vst.msk [vmem:[#allocation2 + $0xa0] sm:$0xff] %vm193, 0.0
        %216 = vst.msk [vmem:[#allocation2 + $0xa8] sm:$0x3] %vm195, 0.0
        %217 = vst.msk [vmem:[#allocation2 + $0xb0] sm:$0xff] %vm193, 0.0
        %218 = vst.msk [vmem:[#allocation2 + $0xb8] sm:$0x3] %vm195, 0.0
        %219 = vst.msk [vmem:[#allocation2 + $0xc0] sm:$0xff] %vm193, 0.0
        %220 = vst.msk [vmem:[#allocation2 + $0xc8] sm:$0x3] %vm195, 0.0
        %221 = vst.msk [vmem:[#allocation2 + $0xd0] sm:$0xff] %vm193, 0.0
        %222 = vst.msk [vmem:[#allocation2 + $0xd8] sm:$0x3] %vm195, 0.0
        %223 = vst.msk [vmem:[#allocation2 + $0xe0] sm:$0xff] %vm193, 0.0
        %224 = vst.msk [vmem:[#allocation2 + $0xe8] sm:$0x3] %vm195, 0.0
        %225 = vst.msk [vmem:[#allocation2 + $0xf0] sm:$0xff] %vm193, 0.0
        %226 = vst.msk [vmem:[#allocation2 + $0xf8] sm:$0x3] %vm195, 0.0
        %227 = vst.msk [vmem:[#allocation2 + $0x100] sm:$0xff] %vm193, 0.0
        %228 = vst.msk [vmem:[#allocation2 + $0x108] sm:$0x3] %vm195, 0.0
        %229 = vst.msk [vmem:[#allocation2 + $0x110] sm:$0xff] %vm193, 0.0
        %230 = vst.msk [vmem:[#allocation2 + $0x118] sm:$0x3] %vm195, 0.0
        %231 = vst.msk [vmem:[#allocation2 + $0x120] sm:$0xff] %vm193, 0.0
        %232 = vst.msk [vmem:[#allocation2 + $0x128] sm:$0x3] %vm195, 0.0
        %233 = vst.msk [vmem:[#allocation2 + $0x130] sm:$0xff] %vm193, 0.0
        %234 = vst.msk [vmem:[#allocation2 + $0x138] sm:$0x3] %vm195, 0.0
        %v235 = vld [vmem:[%s183] sm:$0xf]
        %v236 = vld [vmem:[%s183 + $0x4] sm:$0xf]
        %v237 = vld [vmem:[%s183 + $0x8] sm:$0xf]
        %v238 = vld [vmem:[%s183 + $0xc] sm:$0xf]
        %v239 = vld [vmem:[%s183 + $0x10] sm:$0xf]
        %v240 = vld [vmem:[%s183 + $0x14] sm:$0xf]
        %v241 = vld [vmem:[%s183 + $0x18] sm:$0xf]
        %v242 = vld [vmem:[%s183 + $0x1c] sm:$0xf]
        %v243 = vld [vmem:[%s183 + $0x20] sm:$0xf]
        %v244 = vld [vmem:[%s183 + $0x24] sm:$0xf]
        %v245 = vld [vmem:[%s183 + $0x28] sm:$0xf]
        %v246 = vld [vmem:[%s183 + $0x2c] sm:$0xf]
        %v247 = vld [vmem:[%s183 + $0x30] sm:$0xf]
        %v248 = vld [vmem:[%s183 + $0x34] sm:$0xf]
        %v249 = vld [vmem:[%s183 + $0x38] sm:$0xf]
        %v250 = vld [vmem:[%s183 + $0x3c] sm:$0xf]
        %v251 = vunpack.c.l.bf16 %v235
        %v252 = vunpack.c.l.bf16 %v236
        %v253 = vunpack.c.l.bf16 %v237
        %v254 = vunpack.c.l.bf16 %v238
        %v255 = vunpack.c.l.bf16 %v239
        %v256 = vunpack.c.l.bf16 %v240
        %v257 = vunpack.c.l.bf16 %v241
        %v258 = vunpack.c.l.bf16 %v242
        %v259 = vunpack.c.l.bf16 %v243
        %v260 = vunpack.c.l.bf16 %v244
        %v261 = vunpack.c.l.bf16 %v245
        %v262 = vunpack.c.l.bf16 %v246
        %v263 = vunpack.c.l.bf16 %v247
        %v264 = vunpack.c.l.bf16 %v248
        %v265 = vunpack.c.l.bf16 %v249
        %v266 = vunpack.c.l.bf16 %v250
        %s267 = scalar_lea.vmem [#allocation2], 16
        %268 = vst.msk [vmem:[%s267 + $0x1] sm:$0xff] %vm193, %v251
        %269 = vst.msk [vmem:[%s267 + $0x11] sm:$0xff] %vm193, %v252
        %270 = vst.msk [vmem:[%s267 + $0x21] sm:$0xff] %vm193, %v253
        %271 = vst.msk [vmem:[%s267 + $0x31] sm:$0xff] %vm193, %v254
        %272 = vst.msk [vmem:[%s267 + $0x41] sm:$0xff] %vm193, %v255
        %273 = vst.msk [vmem:[%s267 + $0x51] sm:$0xff] %vm193, %v256
        %274 = vst.msk [vmem:[%s267 + $0x61] sm:$0xff] %vm193, %v257
        %275 = vst.msk [vmem:[%s267 + $0x71] sm:$0xff] %vm193, %v258
        %276 = vst.msk [vmem:[%s267 + $0xa1] sm:$0xff] %vm193, %v259
        %277 = vst.msk [vmem:[%s267 + $0xb1] sm:$0xff] %vm193, %v260
        %278 = vst.msk [vmem:[%s267 + $0xc1] sm:$0xff] %vm193, %v261
        %279 = vst.msk [vmem:[%s267 + $0xd1] sm:$0xff] %vm193, %v262
        %280 = vst.msk [vmem:[%s267 + $0xe1] sm:$0xff] %vm193, %v263
        %281 = vst.msk [vmem:[%s267 + $0xf1] sm:$0xff] %vm193, %v264
        %282 = vst.msk [vmem:[%s267 + $0x101] sm:$0xff] %vm193, %v265
        %283 = vst.msk [vmem:[%s267 + $0x111] sm:$0xff] %vm193, %v266
        %v284 = vld [vmem:[#allocation2] sm:$0xff]
        %v285 = vld [vmem:[#allocation2 + $0x10] sm:$0xff]
        %v286 = vld [vmem:[#allocation2 + $0x20] sm:$0xff]
        %v287 = vld [vmem:[#allocation2 + $0x30] sm:$0xff]
        %v288 = vld [vmem:[#allocation2 + $0x40] sm:$0xff]
        %v289 = vld [vmem:[#allocation2 + $0x50] sm:$0xff]
        %v290 = vld [vmem:[#allocation2 + $0x60] sm:$0xff]
        %v291 = vld [vmem:[#allocation2 + $0x70] sm:$0xff]
        %v292 = vld [vmem:[#allocation2 + $0xa0] sm:$0xff]
        %v293 = vld [vmem:[#allocation2 + $0xb0] sm:$0xff]
        %v294 = vld [vmem:[#allocation2 + $0xc0] sm:$0xff]
        %v295 = vld [vmem:[#allocation2 + $0xd0] sm:$0xff]
        %v296 = vld [vmem:[#allocation2 + $0xe0] sm:$0xff]
        %v297 = vld [vmem:[#allocation2 + $0xf0] sm:$0xff]
        %v298 = vld [vmem:[#allocation2 + $0x100] sm:$0xff]
        %v299 = vld [vmem:[#allocation2 + $0x110] sm:$0xff]
        %v300 = vld [vmem:[#allocation2 + $0x1] sm:$0xff]
        %v301 = vld [vmem:[#allocation2 + $0x11] sm:$0xff]
        %v302 = vld [vmem:[#allocation2 + $0x21] sm:$0xff]
        %v303 = vld [vmem:[#allocation2 + $0x31] sm:$0xff]
        %v304 = vld [vmem:[#allocation2 + $0x41] sm:$0xff]
        %v305 = vld [vmem:[#allocation2 + $0x51] sm:$0xff]
        %v306 = vld [vmem:[#allocation2 + $0x61] sm:$0xff]
        %v307 = vld [vmem:[#allocation2 + $0x71] sm:$0xff]
        %v308 = vld [vmem:[#allocation2 + $0xa1] sm:$0xff]
        %v309 = vld [vmem:[#allocation2 + $0xb1] sm:$0xff]
        %v310 = vld [vmem:[#allocation2 + $0xc1] sm:$0xff]
        %v311 = vld [vmem:[#allocation2 + $0xd1] sm:$0xff]
        %v312 = vld [vmem:[#allocation2 + $0xe1] sm:$0xff]
        %v313 = vld [vmem:[#allocation2 + $0xf1] sm:$0xff]
        %v314 = vld [vmem:[#allocation2 + $0x101] sm:$0xff]
        %v315 = vld [vmem:[#allocation2 + $0x111] sm:$0xff]
        %v316 = vld [vmem:[#allocation2 + $0x2] sm:$0xff]
        %v317 = vld [vmem:[#allocation2 + $0x12] sm:$0xff]
        %v318 = vld [vmem:[#allocation2 + $0x22] sm:$0xff]
        %v319 = vld [vmem:[#allocation2 + $0x32] sm:$0xff]
        %v320 = vld [vmem:[#allocation2 + $0x42] sm:$0xff]
        %v321 = vld [vmem:[#allocation2 + $0x52] sm:$0xff]
        %v322 = vld [vmem:[#allocation2 + $0x62] sm:$0xff]
        %v323 = vld [vmem:[#allocation2 + $0x72] sm:$0xff]
        %v324 = vld [vmem:[#allocation2 + $0xa2] sm:$0xff]
        %v325 = vld [vmem:[#allocation2 + $0xb2] sm:$0xff]
        %v326 = vld [vmem:[#allocation2 + $0xc2] sm:$0xff]
        %v327 = vld [vmem:[#allocation2 + $0xd2] sm:$0xff]
        %v328 = vld [vmem:[#allocation2 + $0xe2] sm:$0xff]
        %v329 = vld [vmem:[#allocation2 + $0xf2] sm:$0xff]
        %v330 = vld [vmem:[#allocation2 + $0x102] sm:$0xff]
        %v331 = vld [vmem:[#allocation2 + $0x112] sm:$0xff]
        %v332 = vld [vmem:[%s267] sm:$0xff]
        %v333 = vld [vmem:[%s267 + $0x10] sm:$0xff]
        %v334 = vld [vmem:[%s267 + $0x20] sm:$0xff]
        %v335 = vld [vmem:[%s267 + $0x30] sm:$0xff]
        %v336 = vld [vmem:[%s267 + $0x40] sm:$0xff]
        %v337 = vld [vmem:[%s267 + $0x50] sm:$0xff]
        %v338 = vld [vmem:[%s267 + $0x60] sm:$0xff]
        %v339 = vld [vmem:[%s267 + $0x70] sm:$0xff]
        %v340 = vld [vmem:[%s267 + $0xa0] sm:$0xff]
        %v341 = vld [vmem:[%s267 + $0xb0] sm:$0xff]
        %v342 = vld [vmem:[%s267 + $0xc0] sm:$0xff]
        %v343 = vld [vmem:[%s267 + $0xd0] sm:$0xff]
        %v344 = vld [vmem:[%s267 + $0xe0] sm:$0xff]
        %v345 = vld [vmem:[%s267 + $0xf0] sm:$0xff]
        %v346 = vld [vmem:[%s267 + $0x100] sm:$0xff]
        %v347 = vld [vmem:[%s267 + $0x110] sm:$0xff]
        %v348 = vld [vmem:[%s267 + $0x1] sm:$0xff]
        %v349 = vld [vmem:[%s267 + $0x11] sm:$0xff]
        %v350 = vld [vmem:[%s267 + $0x21] sm:$0xff]
        %v351 = vld [vmem:[%s267 + $0x31] sm:$0xff]
        %v352 = vld [vmem:[%s267 + $0x41] sm:$0xff]
        %v353 = vld [vmem:[%s267 + $0x51] sm:$0xff]
        %v354 = vld [vmem:[%s267 + $0x61] sm:$0xff]
        %v355 = vld [vmem:[%s267 + $0x71] sm:$0xff]
        %v356 = vld [vmem:[%s267 + $0xa1] sm:$0xff]
        %v357 = vld [vmem:[%s267 + $0xb1] sm:$0xff]
        %v358 = vld [vmem:[%s267 + $0xc1] sm:$0xff]
        %v359 = vld [vmem:[%s267 + $0xd1] sm:$0xff]
        %v360 = vld [vmem:[%s267 + $0xe1] sm:$0xff]
        %v361 = vld [vmem:[%s267 + $0xf1] sm:$0xff]
        %v362 = vld [vmem:[%s267 + $0x101] sm:$0xff]
        %v363 = vld [vmem:[%s267 + $0x111] sm:$0xff]
        %v364 = vld [vmem:[%s267 + $0x2] sm:$0xff]
        %v365 = vld [vmem:[%s267 + $0x12] sm:$0xff]
        %v366 = vld [vmem:[%s267 + $0x22] sm:$0xff]
        %v367 = vld [vmem:[%s267 + $0x32] sm:$0xff]
        %v368 = vld [vmem:[%s267 + $0x42] sm:$0xff]
        %v369 = vld [vmem:[%s267 + $0x52] sm:$0xff]
        %v370 = vld [vmem:[%s267 + $0x62] sm:$0xff]
        %v371 = vld [vmem:[%s267 + $0x72] sm:$0xff]
        %v372 = vld [vmem:[%s267 + $0xa2] sm:$0xff]
        %v373 = vld [vmem:[%s267 + $0xb2] sm:$0xff]
        %v374 = vld [vmem:[%s267 + $0xc2] sm:$0xff]
        %v375 = vld [vmem:[%s267 + $0xd2] sm:$0xff]
        %v376 = vld [vmem:[%s267 + $0xe2] sm:$0xff]
        %v377 = vld [vmem:[%s267 + $0xf2] sm:$0xff]
        %v378 = vld [vmem:[%s267 + $0x102] sm:$0xff]
        %v379 = vld [vmem:[%s267 + $0x112] sm:$0xff]
        %s380 = scalar_lea.vmem [#allocation2], 32
        %v381 = vld [vmem:[%s380] sm:$0xff]
        %v382 = vld [vmem:[%s380 + $0x10] sm:$0xff]
        %v383 = vld [vmem:[%s380 + $0x20] sm:$0xff]
        %v384 = vld [vmem:[%s380 + $0x30] sm:$0xff]
        %v385 = vld [vmem:[%s380 + $0x40] sm:$0xff]
        %v386 = vld [vmem:[%s380 + $0x50] sm:$0xff]
        %v387 = vld [vmem:[%s380 + $0x60] sm:$0xff]
        %v388 = vld [vmem:[%s380 + $0x70] sm:$0xff]
        %v389 = vld [vmem:[%s380 + $0xa0] sm:$0xff]
        %v390 = vld [vmem:[%s380 + $0xb0] sm:$0xff]
        %v391 = vld [vmem:[%s380 + $0xc0] sm:$0xff]
        %v392 = vld [vmem:[%s380 + $0xd0] sm:$0xff]
        %v393 = vld [vmem:[%s380 + $0xe0] sm:$0xff]
        %v394 = vld [vmem:[%s380 + $0xf0] sm:$0xff]
        %v395 = vld [vmem:[%s380 + $0x100] sm:$0xff]
        %v396 = vld [vmem:[%s380 + $0x110] sm:$0xff]
        %v397 = vld [vmem:[%s380 + $0x1] sm:$0xff]
        %v398 = vld [vmem:[%s380 + $0x11] sm:$0xff]
        %v399 = vld [vmem:[%s380 + $0x21] sm:$0xff]
        %v400 = vld [vmem:[%s380 + $0x31] sm:$0xff]
        %v401 = vld [vmem:[%s380 + $0x41] sm:$0xff]
        %v402 = vld [vmem:[%s380 + $0x51] sm:$0xff]
        %v403 = vld [vmem:[%s380 + $0x61] sm:$0xff]
        %v404 = vld [vmem:[%s380 + $0x71] sm:$0xff]
        %v405 = vld [vmem:[%s380 + $0xa1] sm:$0xff]
        %v406 = vld [vmem:[%s380 + $0xb1] sm:$0xff]
        %v407 = vld [vmem:[%s380 + $0xc1] sm:$0xff]
        %v408 = vld [vmem:[%s380 + $0xd1] sm:$0xff]
        %v409 = vld [vmem:[%s380 + $0xe1] sm:$0xff]
        %v410 = vld [vmem:[%s380 + $0xf1] sm:$0xff]
        %v411 = vld [vmem:[%s380 + $0x101] sm:$0xff]
        %v412 = vld [vmem:[%s380 + $0x111] sm:$0xff]
        %v413 = vld [vmem:[%s380 + $0x2] sm:$0xff]
        %v414 = vld [vmem:[%s380 + $0x12] sm:$0xff]
        %v415 = vld [vmem:[%s380 + $0x22] sm:$0xff]
        %v416 = vld [vmem:[%s380 + $0x32] sm:$0xff]
        %v417 = vld [vmem:[%s380 + $0x42] sm:$0xff]
        %v418 = vld [vmem:[%s380 + $0x52] sm:$0xff]
        %v419 = vld [vmem:[%s380 + $0x62] sm:$0xff]
        %v420 = vld [vmem:[%s380 + $0x72] sm:$0xff]
        %v421 = vld [vmem:[%s380 + $0xa2] sm:$0xff]
        %v422 = vld [vmem:[%s380 + $0xb2] sm:$0xff]
        %v423 = vld [vmem:[%s380 + $0xc2] sm:$0xff]
        %v424 = vld [vmem:[%s380 + $0xd2] sm:$0xff]
        %v425 = vld [vmem:[%s380 + $0xe2] sm:$0xff]
        %v426 = vld [vmem:[%s380 + $0xf2] sm:$0xff]
        %v427 = vld [vmem:[%s380 + $0x102] sm:$0xff]
        %v428 = vld [vmem:[%s380 + $0x112] sm:$0xff]
        %445 = vrot.lane.b32.xlu0 %v300, 3
        %v446 = vpop.permute.xlu0 %445
        %447 = vrot.lane.b32.xlu0 %v301, 3
        %v448 = vpop.permute.xlu0 %447
        %449 = vrot.lane.b32.xlu0 %v302, 3
        %v450 = vpop.permute.xlu0 %449
        %451 = vrot.lane.b32.xlu0 %v303, 3
        %v452 = vpop.permute.xlu0 %451
        %453 = vrot.lane.b32.xlu0 %v304, 3
        %v454 = vpop.permute.xlu0 %453
        %455 = vrot.lane.b32.xlu0 %v305, 3
        %v456 = vpop.permute.xlu0 %455
        %457 = vrot.lane.b32.xlu0 %v306, 3
        %v458 = vpop.permute.xlu0 %457
        %459 = vrot.lane.b32.xlu0 %v307, 3
        %v460 = vpop.permute.xlu0 %459
        %461 = vrot.lane.b32.xlu0 %v308, 3
        %v462 = vpop.permute.xlu0 %461
        %463 = vrot.lane.b32.xlu0 %v309, 3
        %v464 = vpop.permute.xlu0 %463
        %465 = vrot.lane.b32.xlu0 %v310, 3
        %v466 = vpop.permute.xlu0 %465
        %467 = vrot.lane.b32.xlu0 %v311, 3
        %v468 = vpop.permute.xlu0 %467
        %469 = vrot.lane.b32.xlu0 %v312, 3
        %v470 = vpop.permute.xlu0 %469
        %471 = vrot.lane.b32.xlu0 %v313, 3
        %v472 = vpop.permute.xlu0 %471
        %473 = vrot.lane.b32.xlu0 %v314, 3
        %v474 = vpop.permute.xlu0 %473
        %475 = vrot.lane.b32.xlu0 %v315, 3
        %v476 = vpop.permute.xlu0 %475
        %509 = vrot.lane.b32.xlu0 %v316, 6
        %v510 = vpop.permute.xlu0 %509
        %511 = vrot.lane.b32.xlu0 %v317, 6
        %v512 = vpop.permute.xlu0 %511
        %513 = vrot.lane.b32.xlu0 %v318, 6
        %v514 = vpop.permute.xlu0 %513
        %515 = vrot.lane.b32.xlu0 %v319, 6
        %v516 = vpop.permute.xlu0 %515
        %517 = vrot.lane.b32.xlu0 %v320, 6
        %v518 = vpop.permute.xlu0 %517
        %519 = vrot.lane.b32.xlu0 %v321, 6
        %v520 = vpop.permute.xlu0 %519
        %521 = vrot.lane.b32.xlu0 %v322, 6
        %v522 = vpop.permute.xlu0 %521
        %523 = vrot.lane.b32.xlu0 %v323, 6
        %v524 = vpop.permute.xlu0 %523
        %525 = vrot.lane.b32.xlu0 %v324, 6
        %v526 = vpop.permute.xlu0 %525
        %527 = vrot.lane.b32.xlu0 %v325, 6
        %v528 = vpop.permute.xlu0 %527
        %529 = vrot.lane.b32.xlu0 %v326, 6
        %v530 = vpop.permute.xlu0 %529
        %531 = vrot.lane.b32.xlu0 %v327, 6
        %v532 = vpop.permute.xlu0 %531
        %533 = vrot.lane.b32.xlu0 %v328, 6
        %v534 = vpop.permute.xlu0 %533
        %535 = vrot.lane.b32.xlu0 %v329, 6
        %v536 = vpop.permute.xlu0 %535
        %537 = vrot.lane.b32.xlu0 %v330, 6
        %v538 = vpop.permute.xlu0 %537
        %539 = vrot.lane.b32.xlu0 %v331, 6
        %v540 = vpop.permute.xlu0 %539
        %573 = vrot.lane.b32.xlu0 %v332, 9
        %v574 = vpop.permute.xlu0 %573
        %575 = vrot.lane.b32.xlu0 %v333, 9
        %v576 = vpop.permute.xlu0 %575
        %577 = vrot.lane.b32.xlu0 %v334, 9
        %v578 = vpop.permute.xlu0 %577
        %579 = vrot.lane.b32.xlu0 %v335, 9
        %v580 = vpop.permute.xlu0 %579
        %581 = vrot.lane.b32.xlu0 %v336, 9
        %v582 = vpop.permute.xlu0 %581
        %583 = vrot.lane.b32.xlu0 %v337, 9
        %v584 = vpop.permute.xlu0 %583
        %585 = vrot.lane.b32.xlu0 %v338, 9
        %v586 = vpop.permute.xlu0 %585
        %587 = vrot.lane.b32.xlu0 %v339, 9
        %v588 = vpop.permute.xlu0 %587
        %589 = vrot.lane.b32.xlu0 %v340, 9
        %v590 = vpop.permute.xlu0 %589
        %591 = vrot.lane.b32.xlu0 %v341, 9
        %v592 = vpop.permute.xlu0 %591
        %593 = vrot.lane.b32.xlu0 %v342, 9
        %v594 = vpop.permute.xlu0 %593
        %595 = vrot.lane.b32.xlu0 %v343, 9
        %v596 = vpop.permute.xlu0 %595
        %597 = vrot.lane.b32.xlu0 %v344, 9
        %v598 = vpop.permute.xlu0 %597
        %599 = vrot.lane.b32.xlu0 %v345, 9
        %v600 = vpop.permute.xlu0 %599
        %601 = vrot.lane.b32.xlu0 %v346, 9
        %v602 = vpop.permute.xlu0 %601
        %603 = vrot.lane.b32.xlu0 %v347, 9
        %v604 = vpop.permute.xlu0 %603
        %637 = vrot.lane.b32.xlu0 %v348, 12
        %v638 = vpop.permute.xlu0 %637
        %639 = vrot.lane.b32.xlu0 %v349, 12
        %v640 = vpop.permute.xlu0 %639
        %641 = vrot.lane.b32.xlu0 %v350, 12
        %v642 = vpop.permute.xlu0 %641
        %643 = vrot.lane.b32.xlu0 %v351, 12
        %v644 = vpop.permute.xlu0 %643
        %645 = vrot.lane.b32.xlu0 %v352, 12
        %v646 = vpop.permute.xlu0 %645
        %647 = vrot.lane.b32.xlu0 %v353, 12
        %v648 = vpop.permute.xlu0 %647
        %649 = vrot.lane.b32.xlu0 %v354, 12
        %v650 = vpop.permute.xlu0 %649
        %651 = vrot.lane.b32.xlu0 %v355, 12
        %v652 = vpop.permute.xlu0 %651
        %653 = vrot.lane.b32.xlu0 %v356, 12
        %v654 = vpop.permute.xlu0 %653
        %655 = vrot.lane.b32.xlu0 %v357, 12
        %v656 = vpop.permute.xlu0 %655
        %657 = vrot.lane.b32.xlu0 %v358, 12
        %v658 = vpop.permute.xlu0 %657
        %659 = vrot.lane.b32.xlu0 %v359, 12
        %v660 = vpop.permute.xlu0 %659
        %661 = vrot.lane.b32.xlu0 %v360, 12
        %v662 = vpop.permute.xlu0 %661
        %663 = vrot.lane.b32.xlu0 %v361, 12
        %v664 = vpop.permute.xlu0 %663
        %665 = vrot.lane.b32.xlu0 %v362, 12
        %v666 = vpop.permute.xlu0 %665
        %667 = vrot.lane.b32.xlu0 %v363, 12
        %v668 = vpop.permute.xlu0 %667
        %701 = vrot.lane.b32.xlu0 %v364, 15
        %v702 = vpop.permute.xlu0 %701
        %703 = vrot.lane.b32.xlu0 %v365, 15
        %v704 = vpop.permute.xlu0 %703
        %705 = vrot.lane.b32.xlu0 %v366, 15
        %v706 = vpop.permute.xlu0 %705
        %707 = vrot.lane.b32.xlu0 %v367, 15
        %v708 = vpop.permute.xlu0 %707
        %709 = vrot.lane.b32.xlu0 %v368, 15
        %v710 = vpop.permute.xlu0 %709
        %711 = vrot.lane.b32.xlu0 %v369, 15
        %v712 = vpop.permute.xlu0 %711
        %713 = vrot.lane.b32.xlu0 %v370, 15
        %v714 = vpop.permute.xlu0 %713
        %715 = vrot.lane.b32.xlu0 %v371, 15
        %v716 = vpop.permute.xlu0 %715
        %717 = vrot.lane.b32.xlu0 %v372, 15
        %v718 = vpop.permute.xlu0 %717
        %719 = vrot.lane.b32.xlu0 %v373, 15
        %v720 = vpop.permute.xlu0 %719
        %721 = vrot.lane.b32.xlu0 %v374, 15
        %v722 = vpop.permute.xlu0 %721
        %723 = vrot.lane.b32.xlu0 %v375, 15
        %v724 = vpop.permute.xlu0 %723
        %725 = vrot.lane.b32.xlu0 %v376, 15
        %v726 = vpop.permute.xlu0 %725
        %727 = vrot.lane.b32.xlu0 %v377, 15
        %v728 = vpop.permute.xlu0 %727
        %729 = vrot.lane.b32.xlu0 %v378, 15
        %v730 = vpop.permute.xlu0 %729
        %731 = vrot.lane.b32.xlu0 %v379, 15
        %v732 = vpop.permute.xlu0 %731
        %765 = vrot.lane.b32.xlu0 %v381, 18
        %v766 = vpop.permute.xlu0 %765
        %767 = vrot.lane.b32.xlu0 %v382, 18
        %v768 = vpop.permute.xlu0 %767
        %769 = vrot.lane.b32.xlu0 %v383, 18
        %v770 = vpop.permute.xlu0 %769
        %771 = vrot.lane.b32.xlu0 %v384, 18
        %v772 = vpop.permute.xlu0 %771
        %773 = vrot.lane.b32.xlu0 %v385, 18
        %v774 = vpop.permute.xlu0 %773
        %775 = vrot.lane.b32.xlu0 %v386, 18
        %v776 = vpop.permute.xlu0 %775
        %777 = vrot.lane.b32.xlu0 %v387, 18
        %v778 = vpop.permute.xlu0 %777
        %779 = vrot.lane.b32.xlu0 %v388, 18
        %v780 = vpop.permute.xlu0 %779
        %781 = vrot.lane.b32.xlu0 %v389, 18
        %v782 = vpop.permute.xlu0 %781
        %783 = vrot.lane.b32.xlu0 %v390, 18
        %v784 = vpop.permute.xlu0 %783
        %785 = vrot.lane.b32.xlu0 %v391, 18
        %v786 = vpop.permute.xlu0 %785
        %787 = vrot.lane.b32.xlu0 %v392, 18
        %v788 = vpop.permute.xlu0 %787
        %789 = vrot.lane.b32.xlu0 %v393, 18
        %v790 = vpop.permute.xlu0 %789
        %791 = vrot.lane.b32.xlu0 %v394, 18
        %v792 = vpop.permute.xlu0 %791
        %793 = vrot.lane.b32.xlu0 %v395, 18
        %v794 = vpop.permute.xlu0 %793
        %795 = vrot.lane.b32.xlu0 %v396, 18
        %v796 = vpop.permute.xlu0 %795
        %829 = vrot.lane.b32.xlu0 %v397, 21
        %v830 = vpop.permute.xlu0 %829
        %831 = vrot.lane.b32.xlu0 %v398, 21
        %v832 = vpop.permute.xlu0 %831
        %833 = vrot.lane.b32.xlu0 %v399, 21
        %v834 = vpop.permute.xlu0 %833
        %835 = vrot.lane.b32.xlu0 %v400, 21
        %v836 = vpop.permute.xlu0 %835
        %837 = vrot.lane.b32.xlu0 %v401, 21
        %v838 = vpop.permute.xlu0 %837
        %839 = vrot.lane.b32.xlu0 %v402, 21
        %v840 = vpop.permute.xlu0 %839
        %841 = vrot.lane.b32.xlu0 %v403, 21
        %v842 = vpop.permute.xlu0 %841
        %843 = vrot.lane.b32.xlu0 %v404, 21
        %v844 = vpop.permute.xlu0 %843
        %845 = vrot.lane.b32.xlu0 %v405, 21
        %v846 = vpop.permute.xlu0 %845
        %847 = vrot.lane.b32.xlu0 %v406, 21
        %v848 = vpop.permute.xlu0 %847
        %849 = vrot.lane.b32.xlu0 %v407, 21
        %v850 = vpop.permute.xlu0 %849
        %851 = vrot.lane.b32.xlu0 %v408, 21
        %v852 = vpop.permute.xlu0 %851
        %853 = vrot.lane.b32.xlu0 %v409, 21
        %v854 = vpop.permute.xlu0 %853
        %855 = vrot.lane.b32.xlu0 %v410, 21
        %v856 = vpop.permute.xlu0 %855
        %857 = vrot.lane.b32.xlu0 %v411, 21
        %v858 = vpop.permute.xlu0 %857
        %859 = vrot.lane.b32.xlu0 %v412, 21
        %v860 = vpop.permute.xlu0 %859
        %893 = vrot.lane.b32.xlu0 %v413, 24
        %v894 = vpop.permute.xlu0 %893
        %895 = vrot.lane.b32.xlu0 %v414, 24
        %v896 = vpop.permute.xlu0 %895
        %897 = vrot.lane.b32.xlu0 %v415, 24
        %v898 = vpop.permute.xlu0 %897
        %899 = vrot.lane.b32.xlu0 %v416, 24
        %v900 = vpop.permute.xlu0 %899
        %901 = vrot.lane.b32.xlu0 %v417, 24
        %v902 = vpop.permute.xlu0 %901
        %903 = vrot.lane.b32.xlu0 %v418, 24
        %v904 = vpop.permute.xlu0 %903
        %905 = vrot.lane.b32.xlu0 %v419, 24
        %v906 = vpop.permute.xlu0 %905
        %907 = vrot.lane.b32.xlu0 %v420, 24
        %v908 = vpop.permute.xlu0 %907
        %909 = vrot.lane.b32.xlu0 %v421, 24
        %v910 = vpop.permute.xlu0 %909
        %911 = vrot.lane.b32.xlu0 %v422, 24
        %v912 = vpop.permute.xlu0 %911
        %913 = vrot.lane.b32.xlu0 %v423, 24
        %v914 = vpop.permute.xlu0 %913
        %915 = vrot.lane.b32.xlu0 %v424, 24
        %v916 = vpop.permute.xlu0 %915
        %917 = vrot.lane.b32.xlu0 %v425, 24
        %v918 = vpop.permute.xlu0 %917
        %919 = vrot.lane.b32.xlu0 %v426, 24
        %v920 = vpop.permute.xlu0 %919
        %921 = vrot.lane.b32.xlu0 %v427, 24
        %v922 = vpop.permute.xlu0 %921
        %923 = vrot.lane.b32.xlu0 %v428, 24
        %v924 = vpop.permute.xlu0 %923
        %v941 = vsel %vm193, %v284, %v446
        %v942 = vsel %vm193, %v285, %v448
        %v943 = vsel %vm193, %v286, %v450
        %v944 = vsel %vm193, %v287, %v452
        %v945 = vsel %vm193, %v288, %v454
        %v946 = vsel %vm193, %v289, %v456
        %v947 = vsel %vm193, %v290, %v458
        %v948 = vsel %vm193, %v291, %v460
        %v949 = vsel %vm193, %v292, %v462
        %v950 = vsel %vm193, %v293, %v464
        %v951 = vsel %vm193, %v294, %v466
        %v952 = vsel %vm193, %v295, %v468
        %v953 = vsel %vm193, %v296, %v470
        %v954 = vsel %vm193, %v297, %v472
        %v955 = vsel %vm193, %v298, %v474
        %v956 = vsel %vm193, %v299, %v476
        %vm957 = vcmask 48128
        %v958 = vsel %vm957, %v941, %v510
        %v959 = vsel %vm957, %v942, %v512
        %v960 = vsel %vm957, %v943, %v514
        %v961 = vsel %vm957, %v944, %v516
        %v962 = vsel %vm957, %v945, %v518
        %v963 = vsel %vm957, %v946, %v520
        %v964 = vsel %vm957, %v947, %v522
        %v965 = vsel %vm957, %v948, %v524
        %v966 = vsel %vm957, %v949, %v526
        %v967 = vsel %vm957, %v950, %v528
        %v968 = vsel %vm957, %v951, %v530
        %v969 = vsel %vm957, %v952, %v532
        %v970 = vsel %vm957, %v953, %v534
        %v971 = vsel %vm957, %v954, %v536
        %v972 = vsel %vm957, %v955, %v538
        %v973 = vsel %vm957, %v956, %v540
        %vm974 = vcmask 72704
        %v975 = vsel %vm974, %v958, %v574
        %v976 = vsel %vm974, %v959, %v576
        %v977 = vsel %vm974, %v960, %v578
        %v978 = vsel %vm974, %v961, %v580
        %v979 = vsel %vm974, %v962, %v582
        %v980 = vsel %vm974, %v963, %v584
        %v981 = vsel %vm974, %v964, %v586
        %v982 = vsel %vm974, %v965, %v588
        %v983 = vsel %vm974, %v966, %v590
        %v984 = vsel %vm974, %v967, %v592
        %v985 = vsel %vm974, %v968, %v594
        %v986 = vsel %vm974, %v969, %v596
        %v987 = vsel %vm974, %v970, %v598
        %v988 = vsel %vm974, %v971, %v600
        %v989 = vsel %vm974, %v972, %v602
        %v990 = vsel %vm974, %v973, %v604
        %vm991 = vcmask 97280
        %v992 = vsel %vm991, %v975, %v638
        %v993 = vsel %vm991, %v976, %v640
        %v994 = vsel %vm991, %v977, %v642
        %v995 = vsel %vm991, %v978, %v644
        %v996 = vsel %vm991, %v979, %v646
        %v997 = vsel %vm991, %v980, %v648
        %v998 = vsel %vm991, %v981, %v650
        %v999 = vsel %vm991, %v982, %v652
        %v1000 = vsel %vm991, %v983, %v654
        %v1001 = vsel %vm991, %v984, %v656
        %v1002 = vsel %vm991, %v985, %v658
        %v1003 = vsel %vm991, %v986, %v660
        %v1004 = vsel %vm991, %v987, %v662
        %v1005 = vsel %vm991, %v988, %v664
        %v1006 = vsel %vm991, %v989, %v666
        %v1007 = vsel %vm991, %v990, %v668
        %vm1008 = vcmask 121856
        %v1009 = vsel %vm1008, %v992, %v702
        %v1010 = vsel %vm1008, %v993, %v704
        %v1011 = vsel %vm1008, %v994, %v706
        %v1012 = vsel %vm1008, %v995, %v708
        %v1013 = vsel %vm1008, %v996, %v710
        %v1014 = vsel %vm1008, %v997, %v712
        %v1015 = vsel %vm1008, %v998, %v714
        %v1016 = vsel %vm1008, %v999, %v716
        %v1017 = vsel %vm1008, %v1000, %v718
        %v1018 = vsel %vm1008, %v1001, %v720
        %v1019 = vsel %vm1008, %v1002, %v722
        %v1020 = vsel %vm1008, %v1003, %v724
        %v1021 = vsel %vm1008, %v1004, %v726
        %v1022 = vsel %vm1008, %v1005, %v728
        %v1023 = vsel %vm1008, %v1006, %v730
        %v1024 = vsel %vm1008, %v1007, %v732
        %vm1025 = vcmask 146432
        %v1026 = vsel %vm1025, %v1009, %v766
        %v1027 = vsel %vm1025, %v1010, %v768
        %v1028 = vsel %vm1025, %v1011, %v770
        %v1029 = vsel %vm1025, %v1012, %v772
        %v1030 = vsel %vm1025, %v1013, %v774
        %v1031 = vsel %vm1025, %v1014, %v776
        %v1032 = vsel %vm1025, %v1015, %v778
        %v1033 = vsel %vm1025, %v1016, %v780
        %v1034 = vsel %vm1025, %v1017, %v782
        %v1035 = vsel %vm1025, %v1018, %v784
        %v1036 = vsel %vm1025, %v1019, %v786
        %v1037 = vsel %vm1025, %v1020, %v788
        %v1038 = vsel %vm1025, %v1021, %v790
        %v1039 = vsel %vm1025, %v1022, %v792
        %v1040 = vsel %vm1025, %v1023, %v794
        %v1041 = vsel %vm1025, %v1024, %v796
        %vm1042 = vcmask 171008
        %v1043 = vsel %vm1042, %v1026, %v830
        %v1044 = vsel %vm1042, %v1027, %v832
        %v1045 = vsel %vm1042, %v1028, %v834
        %v1046 = vsel %vm1042, %v1029, %v836
        %v1047 = vsel %vm1042, %v1030, %v838
        %v1048 = vsel %vm1042, %v1031, %v840
        %v1049 = vsel %vm1042, %v1032, %v842
        %v1050 = vsel %vm1042, %v1033, %v844
        %v1051 = vsel %vm1042, %v1034, %v846
        %v1052 = vsel %vm1042, %v1035, %v848
        %v1053 = vsel %vm1042, %v1036, %v850
        %v1054 = vsel %vm1042, %v1037, %v852
        %v1055 = vsel %vm1042, %v1038, %v854
        %v1056 = vsel %vm1042, %v1039, %v856
        %v1057 = vsel %vm1042, %v1040, %v858
        %v1058 = vsel %vm1042, %v1041, %v860
        %vm1059 = vcmask 195584
        %v1060 = vsel %vm1059, %v1043, %v894
        %v1061 = vsel %vm1059, %v1044, %v896
        %v1062 = vsel %vm1059, %v1045, %v898
        %v1063 = vsel %vm1059, %v1046, %v900
        %v1064 = vsel %vm1059, %v1047, %v902
        %v1065 = vsel %vm1059, %v1048, %v904
        %v1066 = vsel %vm1059, %v1049, %v906
        %v1067 = vsel %vm1059, %v1050, %v908
        %v1068 = vsel %vm1059, %v1051, %v910
        %v1069 = vsel %vm1059, %v1052, %v912
        %v1070 = vsel %vm1059, %v1053, %v914
        %v1071 = vsel %vm1059, %v1054, %v916
        %v1072 = vsel %vm1059, %v1055, %v918
        %v1073 = vsel %vm1059, %v1056, %v920
        %v1074 = vsel %vm1059, %v1057, %v922
        %v1075 = vsel %vm1059, %v1058, %v924
        %v1076 = vpack.c.bf16 %v1061, %v1060
        %v1077 = vpack.c.bf16 %v1063, %v1062
        %v1078 = vpack.c.bf16 %v1065, %v1064
        %v1079 = vpack.c.bf16 %v1067, %v1066
        %v1080 = vpack.c.bf16 %v1069, %v1068
        %v1081 = vpack.c.bf16 %v1071, %v1070
        %v1082 = vpack.c.bf16 %v1073, %v1072
        %v1083 = vpack.c.bf16 %v1075, %v1074
        %v1084 = vld [vmem:[%s1] sm:$0xf]
        %v1085 = vld [vmem:[%s1 + $0x4] sm:$0xf]
        %v1086 = vld [vmem:[%s1 + $0x8] sm:$0xf]
        %v1087 = vld [vmem:[%s1 + $0xc] sm:$0x3]
        %v1088 = vld [vmem:[#allocation3] sm:$0x1]
        %v1090 = vlaneseq
        %v1091 = vshrl.u32 %v1090, 7
        %v1092 = vsub.s32 0, %v1091
        %v1093 = vrot.slane %v1088, %v1092
        %v1099 = vunpack.c.l.b16 %v1084
        %v1100 = vunpack.c.l.b16 %v1085
        %v1101 = vunpack.c.l.b16 %v1086
        %v1102 = vunpack.c.l.b16 %v1087
        %v1103 = vpack.c.b16 %v1100, %v1099
        %v1104 = vpack.c.b16 %v1102, %v1101
        %vm1106 = vcmask 220160
        %v1108 = vsel %vm1106, %v1076, 0
        %v1111 = vsel %vm1106, %v1077, 0
        %v1114 = vsel %vm1106, %v1078, 0
        %v1117 = vsel %vm1106, %v1079, 0
        %v1120 = vsel %vm1106, %v1080, 0
        %v1123 = vsel %vm1106, %v1081, 0
        %v1126 = vsel %vm1106, %v1082, 0
        %v1129 = vsel %vm1106, %v1083, 0
        %vm1131 = vcmask 1044480
        %vm1132 = vcmask 1045504
        %v1133 = vsel %vm1131, 4294967295, 65535
        %v1134 = vsel %vm1132, %v1133, 0
        %v1136 = vand.u32 %v1104, %v1134
        %1138 = vmatprep.subr.bf16.mxu0 0
        %1139 = vmatpush1.bf16.msra.mxu0 0
        %1140 = vmatprep.subr.bf16.mxu0 0
        %1141 = vmatpush1.bf16.msra.mxu0 0
        %1142 = vmatprep.subr.bf16.mxu0 0
        %1143 = vmatpush1.bf16.msra.mxu0 0
        %1144 = vmatprep.subr.bf16.mxu0 0
        %1145 = vmatpush1.bf16.msra.mxu0 0
        %1146 = vmatprep.subr.bf16.mxu0 0
        %1147 = vmatpush1.bf16.msra.mxu0 0
        %1148 = vmatprep.subr.bf16.mxu0 0
        %1149 = vmatpush1.bf16.msra.mxu0 0
        %1150 = vmatprep.subr.bf16.mxu0 0
        %1151 = vmatpush1.bf16.msra.mxu0 %v1136
        %1152 = vmatprep.subr.bf16.mxu0 0
        %1153 = vmatpush1.bf16.msra.mxu0 %v1103
        %1154 = vmatprep.subr.bf16.mxu0 0
        %1155 = vmatpush2.bf16.msra.mxu0 0
        %1156 = vmatprep.subr.bf16.mxu0 0
        %1157 = vmatpush2.bf16.msra.mxu0 0
        %1158 = vmatprep.subr.bf16.mxu0 0
        %1159 = vmatpush2.bf16.msra.mxu0 0
        %1160 = vmatprep.subr.bf16.mxu0 0
        %1161 = vmatpush2.bf16.msra.mxu0 0
        %1162 = vmatprep.subr.bf16.mxu0 0
        %1163 = vmatpush2.bf16.msra.mxu0 0
        %1164 = vmatprep.subr.bf16.mxu0 0
        %1165 = vmatpush2.bf16.msra.mxu0 0
        %1166 = vmatprep.subr.bf16.mxu0 0
        %1167 = vmatpush2.bf16.msra.mxu0 0
        %1168 = vmatprep.subr.bf16.mxu0 0
        %1169 = vmatpush2.bf16.msra.mxu0 0
        %1170 = vmatprep.mubr.bf16.mxu0 0
        %1171 = vmatmul.mubr.bf16.gmra.mxu0 %v1108
        %v1172 = vpop.f32.mrf.mxu0
        %v1173 = vadd.f32 %v1093, %v1172
        %v1174 = vpop.f32.mrf.mxu0
        %v1175 = vpop.f32.mrf.mxu0
        %v1176 = vadd.f32 %v1093, %v1175
        %v1177 = vpop.f32.mrf.mxu0
        %1178 = vmatprep.mubr.bf16.mxu0 0
        %1179 = vmatmul.mubr.bf16.gmra.mxu0 %v1111
        %v1180 = vpop.f32.mrf.mxu0
        %v1181 = vadd.f32 %v1093, %v1180
        %v1182 = vpop.f32.mrf.mxu0
        %v1183 = vpop.f32.mrf.mxu0
        %v1184 = vadd.f32 %v1093, %v1183
        %v1185 = vpop.f32.mrf.mxu0
        %1186 = vmatprep.mubr.bf16.mxu0 0
        %1187 = vmatmul.mubr.bf16.gmra.mxu0 %v1114
        %v1188 = vpop.f32.mrf.mxu0
        %v1189 = vadd.f32 %v1093, %v1188
        %v1190 = vpop.f32.mrf.mxu0
        %v1191 = vpop.f32.mrf.mxu0
        %v1192 = vadd.f32 %v1093, %v1191
        %v1193 = vpop.f32.mrf.mxu0
        %1194 = vmatprep.mubr.bf16.mxu0 0
        %1195 = vmatmul.mubr.bf16.gmra.mxu0 %v1117
        %v1196 = vpop.f32.mrf.mxu0
        %v1197 = vadd.f32 %v1093, %v1196
        %v1198 = vpop.f32.mrf.mxu0
        %v1199 = vpop.f32.mrf.mxu0
        %v1200 = vadd.f32 %v1093, %v1199
        %v1201 = vpop.f32.mrf.mxu0
        %1202 = vmatprep.mubr.bf16.mxu0 0
        %1203 = vmatmul.mubr.bf16.gmra.mxu0 %v1120
        %v1204 = vpop.f32.mrf.mxu0
        %v1205 = vadd.f32 %v1093, %v1204
        %v1206 = vpop.f32.mrf.mxu0
        %v1207 = vpop.f32.mrf.mxu0
        %v1208 = vadd.f32 %v1093, %v1207
        %v1209 = vpop.f32.mrf.mxu0
        %1210 = vmatprep.mubr.bf16.mxu0 0
        %1211 = vmatmul.mubr.bf16.gmra.mxu0 %v1123
        %v1212 = vpop.f32.mrf.mxu0
        %v1213 = vadd.f32 %v1093, %v1212
        %v1214 = vpop.f32.mrf.mxu0
        %v1215 = vpop.f32.mrf.mxu0
        %v1216 = vadd.f32 %v1093, %v1215
        %v1217 = vpop.f32.mrf.mxu0
        %1218 = vmatprep.mubr.bf16.mxu0 0
        %1219 = vmatmul.mubr.bf16.gmra.mxu0 %v1126
        %v1220 = vpop.f32.mrf.mxu0
        %v1221 = vadd.f32 %v1093, %v1220
        %v1222 = vpop.f32.mrf.mxu0
        %v1223 = vpop.f32.mrf.mxu0
        %v1224 = vadd.f32 %v1093, %v1223
        %v1225 = vpop.f32.mrf.mxu0
        %1226 = vmatprep.mubr.bf16.mxu0 0
        %1227 = vmatmul.mubr.bf16.gmra.mxu0 %v1129
        %v1228 = vpop.f32.mrf.mxu0
        %v1229 = vadd.f32 %v1093, %v1228
        %v1230 = vpop.f32.mrf.mxu0
        %v1231 = vpop.f32.mrf.mxu0
        %v1232 = vadd.f32 %v1093, %v1231
        %v1233 = vpop.f32.mrf.mxu0
        %1234 = vdwg.mxu0
        %v1235 = vmax.f32 %v1173, 0.0
        %v1236 = vmax.f32 %v1176, 0.0
        %v1237 = vmax.f32 %v1181, 0.0
        %v1238 = vmax.f32 %v1184, 0.0
        %v1239 = vmax.f32 %v1189, 0.0
        %v1240 = vmax.f32 %v1192, 0.0
        %v1241 = vmax.f32 %v1197, 0.0
        %v1242 = vmax.f32 %v1200, 0.0
        %v1243 = vmax.f32 %v1205, 0.0
        %v1244 = vmax.f32 %v1208, 0.0
        %v1245 = vmax.f32 %v1213, 0.0
        %v1246 = vmax.f32 %v1216, 0.0
        %v1247 = vmax.f32 %v1221, 0.0
        %v1248 = vmax.f32 %v1224, 0.0
        %v1249 = vmax.f32 %v1229, 0.0
        %v1250 = vmax.f32 %v1232, 0.0
        %v1251 = vmax.f32 %v1235, %v1236
        %v1252 = vmax.f32 %v1237, %v1238
        %v1253 = vmax.f32 %v1239, %v1240
        %v1254 = vmax.f32 %v1241, %v1242
        %v1255 = vmax.f32 %v1243, %v1244
        %v1256 = vmax.f32 %v1245, %v1246
        %v1257 = vmax.f32 %v1247, %v1248
        %v1258 = vmax.f32 %v1249, %v1250
        %v1267 = vcombine.high %v1251, %v1251
        %v1269 = vunpack.c.l.s4 1983009808
        %v1270 = vunpack.c.0.s8 %v1269
        %v1271 = vlaneseq
        %v1272 = vshrl.u32 %v1271, 7
        %v1273 = vsub.s32 %v1270, %v1272
        %v1274 = vrot.slane %v1251, %v1273
        %v1276 = vunpack.c.l.s4 1983009808
        %v1277 = vunpack.c.0.s8 %v1276
        %v1278 = vlaneseq
        %v1279 = vshrl.u32 %v1278, 7
        %v1280 = vsub.s32 %v1277, %v1279
        %v1281 = vrot.slane %v1267, %v1280
        %v1282 = vcombine.high %v1274, %v1274
        %v1283 = vcombine.high %v1281, %v1281
        %v1284 = vcombine.high %v1252, %v1252
        %v1286 = vunpack.c.l.s4 1983009808
        %v1287 = vunpack.c.0.s8 %v1286
        %v1288 = vlaneseq
        %v1289 = vshrl.u32 %v1288, 7
        %v1290 = vsub.s32 %v1287, %v1289
        %v1291 = vrot.slane %v1252, %v1290
        %v1293 = vunpack.c.l.s4 1983009808
        %v1294 = vunpack.c.0.s8 %v1293
        %v1295 = vlaneseq
        %v1296 = vshrl.u32 %v1295, 7
        %v1297 = vsub.s32 %v1294, %v1296
        %v1298 = vrot.slane %v1284, %v1297
        %v1299 = vcombine.high %v1291, %v1291
        %v1300 = vcombine.high %v1298, %v1298
        %v1301 = vcombine.high %v1253, %v1253
        %v1303 = vunpack.c.l.s4 1983009808
        %v1304 = vunpack.c.0.s8 %v1303
        %v1305 = vlaneseq
        %v1306 = vshrl.u32 %v1305, 7
        %v1307 = vsub.s32 %v1304, %v1306
        %v1308 = vrot.slane %v1253, %v1307
        %v1310 = vunpack.c.l.s4 1983009808
        %v1311 = vunpack.c.0.s8 %v1310
        %v1312 = vlaneseq
        %v1313 = vshrl.u32 %v1312, 7
        %v1314 = vsub.s32 %v1311, %v1313
        %v1315 = vrot.slane %v1301, %v1314
        %v1316 = vcombine.high %v1308, %v1308
        %v1317 = vcombine.high %v1315, %v1315
        %v1318 = vcombine.high %v1254, %v1254
        %v1320 = vunpack.c.l.s4 1983009808
        %v1321 = vunpack.c.0.s8 %v1320
        %v1322 = vlaneseq
        %v1323 = vshrl.u32 %v1322, 7
        %v1324 = vsub.s32 %v1321, %v1323
        %v1325 = vrot.slane %v1254, %v1324
        %v1327 = vunpack.c.l.s4 1983009808
        %v1328 = vunpack.c.0.s8 %v1327
        %v1329 = vlaneseq
        %v1330 = vshrl.u32 %v1329, 7
        %v1331 = vsub.s32 %v1328, %v1330
        %v1332 = vrot.slane %v1318, %v1331
        %v1333 = vcombine.high %v1325, %v1325
        %v1334 = vcombine.high %v1332, %v1332
        %v1335 = vcombine.high %v1255, %v1255
        %v1337 = vunpack.c.l.s4 1983009808
        %v1338 = vunpack.c.0.s8 %v1337
        %v1339 = vlaneseq
        %v1340 = vshrl.u32 %v1339, 7
        %v1341 = vsub.s32 %v1338, %v1340
        %v1342 = vrot.slane %v1255, %v1341
        %v1344 = vunpack.c.l.s4 1983009808
        %v1345 = vunpack.c.0.s8 %v1344
        %v1346 = vlaneseq
        %v1347 = vshrl.u32 %v1346, 7
        %v1348 = vsub.s32 %v1345, %v1347
        %v1349 = vrot.slane %v1335, %v1348
        %v1350 = vcombine.high %v1342, %v1342
        %v1351 = vcombine.high %v1349, %v1349
        %v1352 = vcombine.high %v1256, %v1256
        %v1354 = vunpack.c.l.s4 1983009808
        %v1355 = vunpack.c.0.s8 %v1354
        %v1356 = vlaneseq
        %v1357 = vshrl.u32 %v1356, 7
        %v1358 = vsub.s32 %v1355, %v1357
        %v1359 = vrot.slane %v1256, %v1358
        %v1361 = vunpack.c.l.s4 1983009808
        %v1362 = vunpack.c.0.s8 %v1361
        %v1363 = vlaneseq
        %v1364 = vshrl.u32 %v1363, 7
        %v1365 = vsub.s32 %v1362, %v1364
        %v1366 = vrot.slane %v1352, %v1365
        %v1367 = vcombine.high %v1359, %v1359
        %v1368 = vcombine.high %v1366, %v1366
        %v1369 = vcombine.high %v1257, %v1257
        %v1371 = vunpack.c.l.s4 1983009808
        %v1372 = vunpack.c.0.s8 %v1371
        %v1373 = vlaneseq
        %v1374 = vshrl.u32 %v1373, 7
        %v1375 = vsub.s32 %v1372, %v1374
        %v1376 = vrot.slane %v1257, %v1375
        %v1378 = vunpack.c.l.s4 1983009808
        %v1379 = vunpack.c.0.s8 %v1378
        %v1380 = vlaneseq
        %v1381 = vshrl.u32 %v1380, 7
        %v1382 = vsub.s32 %v1379, %v1381
        %v1383 = vrot.slane %v1369, %v1382
        %v1384 = vcombine.high %v1376, %v1376
        %v1385 = vcombine.high %v1383, %v1383
        %v1386 = vcombine.high %v1258, %v1258
        %v1388 = vunpack.c.l.s4 1983009808
        %v1389 = vunpack.c.0.s8 %v1388
        %v1390 = vlaneseq
        %v1391 = vshrl.u32 %v1390, 7
        %v1392 = vsub.s32 %v1389, %v1391
        %v1393 = vrot.slane %v1258, %v1392
        %v1395 = vunpack.c.l.s4 1983009808
        %v1396 = vunpack.c.0.s8 %v1395
        %v1397 = vlaneseq
        %v1398 = vshrl.u32 %v1397, 7
        %v1399 = vsub.s32 %v1396, %v1398
        %v1400 = vrot.slane %v1386, %v1399
        %v1401 = vcombine.high %v1393, %v1393
        %v1402 = vcombine.high %v1400, %v1400
        %v1435 = vrot.slane %v1274, 7
        %v1436 = vrot.slane %v1435, 2
        %v1437 = vrot.slane %v1282, 7
        %v1438 = vrot.slane %v1437, 2
        %v1439 = vrot.slane %v1281, 7
        %v1440 = vrot.slane %v1439, 2
        %v1441 = vrot.slane %v1283, 7
        %v1442 = vrot.slane %v1441, 2
        %v1443 = vrot.slane %v1291, 7
        %v1444 = vrot.slane %v1443, 2
        %v1445 = vrot.slane %v1299, 7
        %v1446 = vrot.slane %v1445, 2
        %v1447 = vrot.slane %v1298, 7
        %v1448 = vrot.slane %v1447, 2
        %v1449 = vrot.slane %v1300, 7
        %v1450 = vrot.slane %v1449, 2
        %v1451 = vrot.slane %v1308, 7
        %v1452 = vrot.slane %v1451, 2
        %v1453 = vrot.slane %v1316, 7
        %v1454 = vrot.slane %v1453, 2
        %v1455 = vrot.slane %v1315, 7
        %v1456 = vrot.slane %v1455, 2
        %v1457 = vrot.slane %v1317, 7
        %v1458 = vrot.slane %v1457, 2
        %v1459 = vrot.slane %v1325, 7
        %v1460 = vrot.slane %v1459, 2
        %v1461 = vrot.slane %v1333, 7
        %v1462 = vrot.slane %v1461, 2
        %v1463 = vrot.slane %v1332, 7
        %v1464 = vrot.slane %v1463, 2
        %v1465 = vrot.slane %v1334, 7
        %v1466 = vrot.slane %v1465, 2
        %v1467 = vrot.slane %v1342, 7
        %v1468 = vrot.slane %v1467, 2
        %v1469 = vrot.slane %v1350, 7
        %v1470 = vrot.slane %v1469, 2
        %v1471 = vrot.slane %v1349, 7
        %v1472 = vrot.slane %v1471, 2
        %v1473 = vrot.slane %v1351, 7
        %v1474 = vrot.slane %v1473, 2
        %v1475 = vrot.slane %v1359, 7
        %v1476 = vrot.slane %v1475, 2
        %v1477 = vrot.slane %v1367, 7
        %v1478 = vrot.slane %v1477, 2
        %v1479 = vrot.slane %v1366, 7
        %v1480 = vrot.slane %v1479, 2
        %v1481 = vrot.slane %v1368, 7
        %v1482 = vrot.slane %v1481, 2
        %v1483 = vrot.slane %v1376, 7
        %v1484 = vrot.slane %v1483, 2
        %v1485 = vrot.slane %v1384, 7
        %v1486 = vrot.slane %v1485, 2
        %v1487 = vrot.slane %v1383, 7
        %v1488 = vrot.slane %v1487, 2
        %v1489 = vrot.slane %v1385, 7
        %v1490 = vrot.slane %v1489, 2
        %v1491 = vrot.slane %v1393, 7
        %v1492 = vrot.slane %v1491, 2
        %v1493 = vrot.slane %v1401, 7
        %v1494 = vrot.slane %v1493, 2
        %v1495 = vrot.slane %v1400, 7
        %v1496 = vrot.slane %v1495, 2
        %v1497 = vrot.slane %v1402, 7
        %v1498 = vrot.slane %v1497, 2
        %v1531 = vmax.f32 %v1274, %v1436
        %v1532 = vmax.f32 %v1282, %v1438
        %v1533 = vmax.f32 %v1281, %v1440
        %v1534 = vmax.f32 %v1283, %v1442
        %v1535 = vmax.f32 %v1291, %v1444
        %v1536 = vmax.f32 %v1299, %v1446
        %v1537 = vmax.f32 %v1298, %v1448
        %v1538 = vmax.f32 %v1300, %v1450
        %v1539 = vmax.f32 %v1308, %v1452
        %v1540 = vmax.f32 %v1316, %v1454
        %v1541 = vmax.f32 %v1315, %v1456
        %v1542 = vmax.f32 %v1317, %v1458
        %v1543 = vmax.f32 %v1325, %v1460
        %v1544 = vmax.f32 %v1333, %v1462
        %v1545 = vmax.f32 %v1332, %v1464
        %v1546 = vmax.f32 %v1334, %v1466
        %v1547 = vmax.f32 %v1342, %v1468
        %v1548 = vmax.f32 %v1350, %v1470
        %v1549 = vmax.f32 %v1349, %v1472
        %v1550 = vmax.f32 %v1351, %v1474
        %v1551 = vmax.f32 %v1359, %v1476
        %v1552 = vmax.f32 %v1367, %v1478
        %v1553 = vmax.f32 %v1366, %v1480
        %v1554 = vmax.f32 %v1368, %v1482
        %v1555 = vmax.f32 %v1376, %v1484
        %v1556 = vmax.f32 %v1384, %v1486
        %v1557 = vmax.f32 %v1383, %v1488
        %v1558 = vmax.f32 %v1385, %v1490
        %v1559 = vmax.f32 %v1393, %v1492
        %v1560 = vmax.f32 %v1401, %v1494
        %v1561 = vmax.f32 %v1400, %v1496
        %v1562 = vmax.f32 %v1402, %v1498
        %v1563 = vpack.c.bf16 %v1531, %v1531
        %v1564 = vpack.c.bf16 %v1532, %v1532
        %v1565 = vpack.c.bf16 %v1533, %v1533
        %v1566 = vpack.c.bf16 %v1534, %v1534
        %v1567 = vpack.c.bf16 %v1535, %v1535
        %v1568 = vpack.c.bf16 %v1536, %v1536
        %v1569 = vpack.c.bf16 %v1537, %v1537
        %v1570 = vpack.c.bf16 %v1538, %v1538
        %v1571 = vpack.c.bf16 %v1539, %v1539
        %v1572 = vpack.c.bf16 %v1540, %v1540
        %v1573 = vpack.c.bf16 %v1541, %v1541
        %v1574 = vpack.c.bf16 %v1542, %v1542
        %v1575 = vpack.c.bf16 %v1543, %v1543
        %v1576 = vpack.c.bf16 %v1544, %v1544
        %v1577 = vpack.c.bf16 %v1545, %v1545
        %v1578 = vpack.c.bf16 %v1546, %v1546
        %v1579 = vpack.c.bf16 %v1547, %v1547
        %v1580 = vpack.c.bf16 %v1548, %v1548
        %v1581 = vpack.c.bf16 %v1549, %v1549
        %v1582 = vpack.c.bf16 %v1550, %v1550
        %v1583 = vpack.c.bf16 %v1551, %v1551
        %v1584 = vpack.c.bf16 %v1552, %v1552
        %v1585 = vpack.c.bf16 %v1553, %v1553
        %v1586 = vpack.c.bf16 %v1554, %v1554
        %v1587 = vpack.c.bf16 %v1555, %v1555
        %v1588 = vpack.c.bf16 %v1556, %v1556
        %v1589 = vpack.c.bf16 %v1557, %v1557
        %v1590 = vpack.c.bf16 %v1558, %v1558
        %v1591 = vpack.c.bf16 %v1559, %v1559
        %v1592 = vpack.c.bf16 %v1560, %v1560
        %v1593 = vpack.c.bf16 %v1561, %v1561
        %v1594 = vpack.c.bf16 %v1562, %v1562
        %v1628 = vunpack.c.l.s4 1983009808
        %v1629 = vunpack.c.0.s8 %v1628
        %v1630 = vlaneseq
        %v1631 = vshrl.u32 %v1630, 7
        %v1632 = vsub.s32 %v1629, %v1631
        %v1633 = vrot.slane %v1563, %v1632
        %v1635 = vunpack.c.l.s4 1983009808
        %v1636 = vunpack.c.0.s8 %v1635
        %v1637 = vlaneseq
        %v1638 = vshrl.u32 %v1637, 7
        %v1639 = vsub.s32 %v1636, %v1638
        %v1640 = vrot.slane %v1564, %v1639
        %v1642 = vunpack.c.l.s4 1983009808
        %v1643 = vunpack.c.0.s8 %v1642
        %v1644 = vlaneseq
        %v1645 = vshrl.u32 %v1644, 7
        %v1646 = vsub.s32 %v1643, %v1645
        %v1647 = vrot.slane %v1565, %v1646
        %v1649 = vunpack.c.l.s4 1983009808
        %v1650 = vunpack.c.0.s8 %v1649
        %v1651 = vlaneseq
        %v1652 = vshrl.u32 %v1651, 7
        %v1653 = vsub.s32 %v1650, %v1652
        %v1654 = vrot.slane %v1566, %v1653
        %v1656 = vunpack.c.l.s4 1983009808
        %v1657 = vunpack.c.0.s8 %v1656
        %v1658 = vlaneseq
        %v1659 = vshrl.u32 %v1658, 7
        %v1660 = vsub.s32 %v1657, %v1659
        %v1661 = vrot.slane %v1567, %v1660
        %v1663 = vunpack.c.l.s4 1983009808
        %v1664 = vunpack.c.0.s8 %v1663
        %v1665 = vlaneseq
        %v1666 = vshrl.u32 %v1665, 7
        %v1667 = vsub.s32 %v1664, %v1666
        %v1668 = vrot.slane %v1568, %v1667
        %v1670 = vunpack.c.l.s4 1983009808
        %v1671 = vunpack.c.0.s8 %v1670
        %v1672 = vlaneseq
        %v1673 = vshrl.u32 %v1672, 7
        %v1674 = vsub.s32 %v1671, %v1673
        %v1675 = vrot.slane %v1569, %v1674
        %v1677 = vunpack.c.l.s4 1983009808
        %v1678 = vunpack.c.0.s8 %v1677
        %v1679 = vlaneseq
        %v1680 = vshrl.u32 %v1679, 7
        %v1681 = vsub.s32 %v1678, %v1680
        %v1682 = vrot.slane %v1570, %v1681
        %v1684 = vunpack.c.l.s4 1983009808
        %v1685 = vunpack.c.0.s8 %v1684
        %v1686 = vlaneseq
        %v1687 = vshrl.u32 %v1686, 7
        %v1688 = vsub.s32 %v1685, %v1687
        %v1689 = vrot.slane %v1571, %v1688
        %v1691 = vunpack.c.l.s4 1983009808
        %v1692 = vunpack.c.0.s8 %v1691
        %v1693 = vlaneseq
        %v1694 = vshrl.u32 %v1693, 7
        %v1695 = vsub.s32 %v1692, %v1694
        %v1696 = vrot.slane %v1572, %v1695
        %v1698 = vunpack.c.l.s4 1983009808
        %v1699 = vunpack.c.0.s8 %v1698
        %v1700 = vlaneseq
        %v1701 = vshrl.u32 %v1700, 7
        %v1702 = vsub.s32 %v1699, %v1701
        %v1703 = vrot.slane %v1573, %v1702
        %v1705 = vunpack.c.l.s4 1983009808
        %v1706 = vunpack.c.0.s8 %v1705
        %v1707 = vlaneseq
        %v1708 = vshrl.u32 %v1707, 7
        %v1709 = vsub.s32 %v1706, %v1708
        %v1710 = vrot.slane %v1574, %v1709
        %v1712 = vunpack.c.l.s4 1983009808
        %v1713 = vunpack.c.0.s8 %v1712
        %v1714 = vlaneseq
        %v1715 = vshrl.u32 %v1714, 7
        %v1716 = vsub.s32 %v1713, %v1715
        %v1717 = vrot.slane %v1575, %v1716
        %v1719 = vunpack.c.l.s4 1983009808
        %v1720 = vunpack.c.0.s8 %v1719
        %v1721 = vlaneseq
        %v1722 = vshrl.u32 %v1721, 7
        %v1723 = vsub.s32 %v1720, %v1722
        %v1724 = vrot.slane %v1576, %v1723
        %v1726 = vunpack.c.l.s4 1983009808
        %v1727 = vunpack.c.0.s8 %v1726
        %v1728 = vlaneseq
        %v1729 = vshrl.u32 %v1728, 7
        %v1730 = vsub.s32 %v1727, %v1729
        %v1731 = vrot.slane %v1577, %v1730
        %v1733 = vunpack.c.l.s4 1983009808
        %v1734 = vunpack.c.0.s8 %v1733
        %v1735 = vlaneseq
        %v1736 = vshrl.u32 %v1735, 7
        %v1737 = vsub.s32 %v1734, %v1736
        %v1738 = vrot.slane %v1578, %v1737
        %v1740 = vunpack.c.l.s4 1983009808
        %v1741 = vunpack.c.0.s8 %v1740
        %v1742 = vlaneseq
        %v1743 = vshrl.u32 %v1742, 7
        %v1744 = vsub.s32 %v1741, %v1743
        %v1745 = vrot.slane %v1579, %v1744
        %v1747 = vunpack.c.l.s4 1983009808
        %v1748 = vunpack.c.0.s8 %v1747
        %v1749 = vlaneseq
        %v1750 = vshrl.u32 %v1749, 7
        %v1751 = vsub.s32 %v1748, %v1750
        %v1752 = vrot.slane %v1580, %v1751
        %v1754 = vunpack.c.l.s4 1983009808
        %v1755 = vunpack.c.0.s8 %v1754
        %v1756 = vlaneseq
        %v1757 = vshrl.u32 %v1756, 7
        %v1758 = vsub.s32 %v1755, %v1757
        %v1759 = vrot.slane %v1581, %v1758
        %v1761 = vunpack.c.l.s4 1983009808
        %v1762 = vunpack.c.0.s8 %v1761
        %v1763 = vlaneseq
        %v1764 = vshrl.u32 %v1763, 7
        %v1765 = vsub.s32 %v1762, %v1764
        %v1766 = vrot.slane %v1582, %v1765
        %v1768 = vunpack.c.l.s4 1983009808
        %v1769 = vunpack.c.0.s8 %v1768
        %v1770 = vlaneseq
        %v1771 = vshrl.u32 %v1770, 7
        %v1772 = vsub.s32 %v1769, %v1771
        %v1773 = vrot.slane %v1583, %v1772
        %v1775 = vunpack.c.l.s4 1983009808
        %v1776 = vunpack.c.0.s8 %v1775
        %v1777 = vlaneseq
        %v1778 = vshrl.u32 %v1777, 7
        %v1779 = vsub.s32 %v1776, %v1778
        %v1780 = vrot.slane %v1584, %v1779
        %v1782 = vunpack.c.l.s4 1983009808
        %v1783 = vunpack.c.0.s8 %v1782
        %v1784 = vlaneseq
        %v1785 = vshrl.u32 %v1784, 7
        %v1786 = vsub.s32 %v1783, %v1785
        %v1787 = vrot.slane %v1585, %v1786
        %v1789 = vunpack.c.l.s4 1983009808
        %v1790 = vunpack.c.0.s8 %v1789
        %v1791 = vlaneseq
        %v1792 = vshrl.u32 %v1791, 7
        %v1793 = vsub.s32 %v1790, %v1792
        %v1794 = vrot.slane %v1586, %v1793
        %v1796 = vunpack.c.l.s4 1983009808
        %v1797 = vunpack.c.0.s8 %v1796
        %v1798 = vlaneseq
        %v1799 = vshrl.u32 %v1798, 7
        %v1800 = vsub.s32 %v1797, %v1799
        %v1801 = vrot.slane %v1587, %v1800
        %v1803 = vunpack.c.l.s4 1983009808
        %v1804 = vunpack.c.0.s8 %v1803
        %v1805 = vlaneseq
        %v1806 = vshrl.u32 %v1805, 7
        %v1807 = vsub.s32 %v1804, %v1806
        %v1808 = vrot.slane %v1588, %v1807
        %v1810 = vunpack.c.l.s4 1983009808
        %v1811 = vunpack.c.0.s8 %v1810
        %v1812 = vlaneseq
        %v1813 = vshrl.u32 %v1812, 7
        %v1814 = vsub.s32 %v1811, %v1813
        %v1815 = vrot.slane %v1589, %v1814
        %v1817 = vunpack.c.l.s4 1983009808
        %v1818 = vunpack.c.0.s8 %v1817
        %v1819 = vlaneseq
        %v1820 = vshrl.u32 %v1819, 7
        %v1821 = vsub.s32 %v1818, %v1820
        %v1822 = vrot.slane %v1590, %v1821
        %v1824 = vunpack.c.l.s4 1983009808
        %v1825 = vunpack.c.0.s8 %v1824
        %v1826 = vlaneseq
        %v1827 = vshrl.u32 %v1826, 7
        %v1828 = vsub.s32 %v1825, %v1827
        %v1829 = vrot.slane %v1591, %v1828
        %v1831 = vunpack.c.l.s4 1983009808
        %v1832 = vunpack.c.0.s8 %v1831
        %v1833 = vlaneseq
        %v1834 = vshrl.u32 %v1833, 7
        %v1835 = vsub.s32 %v1832, %v1834
        %v1836 = vrot.slane %v1592, %v1835
        %v1838 = vunpack.c.l.s4 1983009808
        %v1839 = vunpack.c.0.s8 %v1838
        %v1840 = vlaneseq
        %v1841 = vshrl.u32 %v1840, 7
        %v1842 = vsub.s32 %v1839, %v1841
        %v1843 = vrot.slane %v1593, %v1842
        %v1845 = vunpack.c.l.s4 1983009808
        %v1846 = vunpack.c.0.s8 %v1845
        %v1847 = vlaneseq
        %v1848 = vshrl.u32 %v1847, 7
        %v1849 = vsub.s32 %v1846, %v1848
        %v1850 = vrot.slane %v1594, %v1849
        %v1852 = vunpack.c.l.s4 1983009808
        %v1853 = vunpack.c.0.s8 %v1852
        %v1854 = vlaneseq
        %v1855 = vshrl.u32 %v1854, 7
        %v1856 = vsub.s32 %v1853, %v1855
        %v1857 = vrot.slane %v1633, %v1856
        %v1859 = vunpack.c.l.s4 1983009808
        %v1860 = vunpack.c.0.s8 %v1859
        %v1861 = vlaneseq
        %v1862 = vshrl.u32 %v1861, 7
        %v1863 = vsub.s32 %v1860, %v1862
        %v1864 = vrot.slane %v1640, %v1863
        %v1866 = vunpack.c.l.s4 1983009808
        %v1867 = vunpack.c.0.s8 %v1866
        %v1868 = vlaneseq
        %v1869 = vshrl.u32 %v1868, 7
        %v1870 = vsub.s32 %v1867, %v1869
        %v1871 = vrot.slane %v1647, %v1870
        %v1873 = vunpack.c.l.s4 1983009808
        %v1874 = vunpack.c.0.s8 %v1873
        %v1875 = vlaneseq
        %v1876 = vshrl.u32 %v1875, 7
        %v1877 = vsub.s32 %v1874, %v1876
        %v1878 = vrot.slane %v1654, %v1877
        %v1880 = vunpack.c.l.s4 1983009808
        %v1881 = vunpack.c.0.s8 %v1880
        %v1882 = vlaneseq
        %v1883 = vshrl.u32 %v1882, 7
        %v1884 = vsub.s32 %v1881, %v1883
        %v1885 = vrot.slane %v1661, %v1884
        %v1887 = vunpack.c.l.s4 1983009808
        %v1888 = vunpack.c.0.s8 %v1887
        %v1889 = vlaneseq
        %v1890 = vshrl.u32 %v1889, 7
        %v1891 = vsub.s32 %v1888, %v1890
        %v1892 = vrot.slane %v1668, %v1891
        %v1894 = vunpack.c.l.s4 1983009808
        %v1895 = vunpack.c.0.s8 %v1894
        %v1896 = vlaneseq
        %v1897 = vshrl.u32 %v1896, 7
        %v1898 = vsub.s32 %v1895, %v1897
        %v1899 = vrot.slane %v1675, %v1898
        %v1901 = vunpack.c.l.s4 1983009808
        %v1902 = vunpack.c.0.s8 %v1901
        %v1903 = vlaneseq
        %v1904 = vshrl.u32 %v1903, 7
        %v1905 = vsub.s32 %v1902, %v1904
        %v1906 = vrot.slane %v1682, %v1905
        %v1908 = vunpack.c.l.s4 1983009808
        %v1909 = vunpack.c.0.s8 %v1908
        %v1910 = vlaneseq
        %v1911 = vshrl.u32 %v1910, 7
        %v1912 = vsub.s32 %v1909, %v1911
        %v1913 = vrot.slane %v1689, %v1912
        %v1915 = vunpack.c.l.s4 1983009808
        %v1916 = vunpack.c.0.s8 %v1915
        %v1917 = vlaneseq
        %v1918 = vshrl.u32 %v1917, 7
        %v1919 = vsub.s32 %v1916, %v1918
        %v1920 = vrot.slane %v1696, %v1919
        %v1922 = vunpack.c.l.s4 1983009808
        %v1923 = vunpack.c.0.s8 %v1922
        %v1924 = vlaneseq
        %v1925 = vshrl.u32 %v1924, 7
        %v1926 = vsub.s32 %v1923, %v1925
        %v1927 = vrot.slane %v1703, %v1926
        %v1929 = vunpack.c.l.s4 1983009808
        %v1930 = vunpack.c.0.s8 %v1929
        %v1931 = vlaneseq
        %v1932 = vshrl.u32 %v1931, 7
        %v1933 = vsub.s32 %v1930, %v1932
        %v1934 = vrot.slane %v1710, %v1933
        %v1936 = vunpack.c.l.s4 1983009808
        %v1937 = vunpack.c.0.s8 %v1936
        %v1938 = vlaneseq
        %v1939 = vshrl.u32 %v1938, 7
        %v1940 = vsub.s32 %v1937, %v1939
        %v1941 = vrot.slane %v1717, %v1940
        %v1943 = vunpack.c.l.s4 1983009808
        %v1944 = vunpack.c.0.s8 %v1943
        %v1945 = vlaneseq
        %v1946 = vshrl.u32 %v1945, 7
        %v1947 = vsub.s32 %v1944, %v1946
        %v1948 = vrot.slane %v1724, %v1947
        %v1950 = vunpack.c.l.s4 1983009808
        %v1951 = vunpack.c.0.s8 %v1950
        %v1952 = vlaneseq
        %v1953 = vshrl.u32 %v1952, 7
        %v1954 = vsub.s32 %v1951, %v1953
        %v1955 = vrot.slane %v1731, %v1954
        %v1957 = vunpack.c.l.s4 1983009808
        %v1958 = vunpack.c.0.s8 %v1957
        %v1959 = vlaneseq
        %v1960 = vshrl.u32 %v1959, 7
        %v1961 = vsub.s32 %v1958, %v1960
        %v1962 = vrot.slane %v1738, %v1961
        %v1964 = vunpack.c.l.s4 1983009808
        %v1965 = vunpack.c.0.s8 %v1964
        %v1966 = vlaneseq
        %v1967 = vshrl.u32 %v1966, 7
        %v1968 = vsub.s32 %v1965, %v1967
        %v1969 = vrot.slane %v1745, %v1968
        %v1971 = vunpack.c.l.s4 1983009808
        %v1972 = vunpack.c.0.s8 %v1971
        %v1973 = vlaneseq
        %v1974 = vshrl.u32 %v1973, 7
        %v1975 = vsub.s32 %v1972, %v1974
        %v1976 = vrot.slane %v1752, %v1975
        %v1978 = vunpack.c.l.s4 1983009808
        %v1979 = vunpack.c.0.s8 %v1978
        %v1980 = vlaneseq
        %v1981 = vshrl.u32 %v1980, 7
        %v1982 = vsub.s32 %v1979, %v1981
        %v1983 = vrot.slane %v1759, %v1982
        %v1985 = vunpack.c.l.s4 1983009808
        %v1986 = vunpack.c.0.s8 %v1985
        %v1987 = vlaneseq
        %v1988 = vshrl.u32 %v1987, 7
        %v1989 = vsub.s32 %v1986, %v1988
        %v1990 = vrot.slane %v1766, %v1989
        %v1992 = vunpack.c.l.s4 1983009808
        %v1993 = vunpack.c.0.s8 %v1992
        %v1994 = vlaneseq
        %v1995 = vshrl.u32 %v1994, 7
        %v1996 = vsub.s32 %v1993, %v1995
        %v1997 = vrot.slane %v1773, %v1996
        %v1999 = vunpack.c.l.s4 1983009808
        %v2000 = vunpack.c.0.s8 %v1999
        %v2001 = vlaneseq
        %v2002 = vshrl.u32 %v2001, 7
        %v2003 = vsub.s32 %v2000, %v2002
        %v2004 = vrot.slane %v1780, %v2003
        %v2006 = vunpack.c.l.s4 1983009808
        %v2007 = vunpack.c.0.s8 %v2006
        %v2008 = vlaneseq
        %v2009 = vshrl.u32 %v2008, 7
        %v2010 = vsub.s32 %v2007, %v2009
        %v2011 = vrot.slane %v1787, %v2010
        %v2013 = vunpack.c.l.s4 1983009808
        %v2014 = vunpack.c.0.s8 %v2013
        %v2015 = vlaneseq
        %v2016 = vshrl.u32 %v2015, 7
        %v2017 = vsub.s32 %v2014, %v2016
        %v2018 = vrot.slane %v1794, %v2017
        %v2020 = vunpack.c.l.s4 1983009808
        %v2021 = vunpack.c.0.s8 %v2020
        %v2022 = vlaneseq
        %v2023 = vshrl.u32 %v2022, 7
        %v2024 = vsub.s32 %v2021, %v2023
        %v2025 = vrot.slane %v1801, %v2024
        %v2027 = vunpack.c.l.s4 1983009808
        %v2028 = vunpack.c.0.s8 %v2027
        %v2029 = vlaneseq
        %v2030 = vshrl.u32 %v2029, 7
        %v2031 = vsub.s32 %v2028, %v2030
        %v2032 = vrot.slane %v1808, %v2031
        %v2034 = vunpack.c.l.s4 1983009808
        %v2035 = vunpack.c.0.s8 %v2034
        %v2036 = vlaneseq
        %v2037 = vshrl.u32 %v2036, 7
        %v2038 = vsub.s32 %v2035, %v2037
        %v2039 = vrot.slane %v1815, %v2038
        %v2041 = vunpack.c.l.s4 1983009808
        %v2042 = vunpack.c.0.s8 %v2041
        %v2043 = vlaneseq
        %v2044 = vshrl.u32 %v2043, 7
        %v2045 = vsub.s32 %v2042, %v2044
        %v2046 = vrot.slane %v1822, %v2045
        %v2048 = vunpack.c.l.s4 1983009808
        %v2049 = vunpack.c.0.s8 %v2048
        %v2050 = vlaneseq
        %v2051 = vshrl.u32 %v2050, 7
        %v2052 = vsub.s32 %v2049, %v2051
        %v2053 = vrot.slane %v1829, %v2052
        %v2055 = vunpack.c.l.s4 1983009808
        %v2056 = vunpack.c.0.s8 %v2055
        %v2057 = vlaneseq
        %v2058 = vshrl.u32 %v2057, 7
        %v2059 = vsub.s32 %v2056, %v2058
        %v2060 = vrot.slane %v1836, %v2059
        %v2062 = vunpack.c.l.s4 1983009808
        %v2063 = vunpack.c.0.s8 %v2062
        %v2064 = vlaneseq
        %v2065 = vshrl.u32 %v2064, 7
        %v2066 = vsub.s32 %v2063, %v2065
        %v2067 = vrot.slane %v1843, %v2066
        %v2069 = vunpack.c.l.s4 1983009808
        %v2070 = vunpack.c.0.s8 %v2069
        %v2071 = vlaneseq
        %v2072 = vshrl.u32 %v2071, 7
        %v2073 = vsub.s32 %v2070, %v2072
        %v2074 = vrot.slane %v1850, %v2073
        %v2075 = vunpack.c.l.b16 %v1857
        %v2076 = vunpack.c.l.b16 %v1864
        %v2077 = vunpack.c.l.b16 %v1871
        %v2078 = vunpack.c.l.b16 %v1878
        %v2079 = vunpack.c.l.b16 %v1885
        %v2080 = vunpack.c.l.b16 %v1892
        %v2081 = vunpack.c.l.b16 %v1899
        %v2082 = vunpack.c.l.b16 %v1906
        %v2083 = vunpack.c.l.b16 %v1913
        %v2084 = vunpack.c.l.b16 %v1920
        %v2085 = vunpack.c.l.b16 %v1927
        %v2086 = vunpack.c.l.b16 %v1934
        %v2087 = vunpack.c.l.b16 %v1941
        %v2088 = vunpack.c.l.b16 %v1948
        %v2089 = vunpack.c.l.b16 %v1955
        %v2090 = vunpack.c.l.b16 %v1962
        %v2091 = vunpack.c.l.b16 %v1969
        %v2092 = vunpack.c.l.b16 %v1976
        %v2093 = vunpack.c.l.b16 %v1983
        %v2094 = vunpack.c.l.b16 %v1990
        %v2095 = vunpack.c.l.b16 %v1997
        %v2096 = vunpack.c.l.b16 %v2004
        %v2097 = vunpack.c.l.b16 %v2011
        %v2098 = vunpack.c.l.b16 %v2018
        %v2099 = vunpack.c.l.b16 %v2025
        %v2100 = vunpack.c.l.b16 %v2032
        %v2101 = vunpack.c.l.b16 %v2039
        %v2102 = vunpack.c.l.b16 %v2046
        %v2103 = vunpack.c.l.b16 %v2053
        %v2104 = vunpack.c.l.b16 %v2060
        %v2105 = vunpack.c.l.b16 %v2067
        %v2106 = vunpack.c.l.b16 %v2074
        %v2107 = vrot.slane %v2076, 7
        %vm2108 = vcmask 1041409
        %v2109 = vsel %vm2108, %v2107, %v2075
        %v2110 = vrot.slane %v2077, 6
        %vm2111 = vcmask 1042434
        %v2112 = vsel %vm2111, %v2110, %v2109
        %v2113 = vrot.slane %v2078, 5
        %vm2114 = vcmask 1043459
        %v2115 = vsel %vm2114, %v2113, %v2112
        %v2116 = vrot.slane %v2080, 7
        %v2117 = vsel %vm2108, %v2116, %v2079
        %v2118 = vrot.slane %v2081, 6
        %v2119 = vsel %vm2111, %v2118, %v2117
        %v2120 = vrot.slane %v2082, 5
        %v2121 = vsel %vm2114, %v2120, %v2119
        %v2122 = vrot.slane %v2084, 7
        %v2123 = vsel %vm2108, %v2122, %v2083
        %v2124 = vrot.slane %v2085, 6
        %v2125 = vsel %vm2111, %v2124, %v2123
        %v2126 = vrot.slane %v2086, 5
        %v2127 = vsel %vm2114, %v2126, %v2125
        %v2128 = vrot.slane %v2088, 7
        %v2129 = vsel %vm2108, %v2128, %v2087
        %v2130 = vrot.slane %v2089, 6
        %v2131 = vsel %vm2111, %v2130, %v2129
        %v2132 = vrot.slane %v2090, 5
        %v2133 = vsel %vm2114, %v2132, %v2131
        %v2134 = vrot.slane %v2092, 7
        %v2135 = vsel %vm2108, %v2134, %v2091
        %v2136 = vrot.slane %v2093, 6
        %v2137 = vsel %vm2111, %v2136, %v2135
        %v2138 = vrot.slane %v2094, 5
        %v2139 = vsel %vm2114, %v2138, %v2137
        %v2140 = vrot.slane %v2096, 7
        %v2141 = vsel %vm2108, %v2140, %v2095
        %v2142 = vrot.slane %v2097, 6
        %v2143 = vsel %vm2111, %v2142, %v2141
        %v2144 = vrot.slane %v2098, 5
        %v2145 = vsel %vm2114, %v2144, %v2143
        %v2146 = vrot.slane %v2100, 7
        %v2147 = vsel %vm2108, %v2146, %v2099
        %v2148 = vrot.slane %v2101, 6
        %v2149 = vsel %vm2111, %v2148, %v2147
        %v2150 = vrot.slane %v2102, 5
        %v2151 = vsel %vm2114, %v2150, %v2149
        %v2152 = vrot.slane %v2104, 7
        %v2153 = vsel %vm2108, %v2152, %v2103
        %v2154 = vrot.slane %v2105, 6
        %v2155 = vsel %vm2111, %v2154, %v2153
        %v2156 = vrot.slane %v2106, 5
        %v2157 = vsel %vm2114, %v2156, %v2155
        %v2158 = vpack.c.b16 %v2115, %v2115
        %v2159 = vpack.c.b16 %v2121, %v2121
        %v2160 = vpack.c.b16 %v2127, %v2127
        %v2161 = vpack.c.b16 %v2133, %v2133
        %v2162 = vpack.c.b16 %v2139, %v2139
        %v2163 = vpack.c.b16 %v2145, %v2145
        %v2164 = vpack.c.b16 %v2151, %v2151
        %v2165 = vpack.c.b16 %v2157, %v2157
        %v2167 = vunpack.c.l.s4 1983009808
        %v2168 = vunpack.c.0.s8 %v2167
        %v2169 = vlaneseq
        %v2170 = vshrl.u32 %v2169, 7
        %v2171 = vsub.s32 %v2168, %v2170
        %v2172 = vrot.slane %v2158, %v2171
        %v2174 = vunpack.c.l.s4 1983009808
        %v2175 = vunpack.c.0.s8 %v2174
        %v2176 = vlaneseq
        %v2177 = vshrl.u32 %v2176, 7
        %v2178 = vsub.s32 %v2175, %v2177
        %v2179 = vrot.slane %v2159, %v2178
        %v2181 = vunpack.c.l.s4 1983009808
        %v2182 = vunpack.c.0.s8 %v2181
        %v2183 = vlaneseq
        %v2184 = vshrl.u32 %v2183, 7
        %v2185 = vsub.s32 %v2182, %v2184
        %v2186 = vrot.slane %v2160, %v2185
        %v2188 = vunpack.c.l.s4 1983009808
        %v2189 = vunpack.c.0.s8 %v2188
        %v2190 = vlaneseq
        %v2191 = vshrl.u32 %v2190, 7
        %v2192 = vsub.s32 %v2189, %v2191
        %v2193 = vrot.slane %v2161, %v2192
        %v2195 = vunpack.c.l.s4 1983009808
        %v2196 = vunpack.c.0.s8 %v2195
        %v2197 = vlaneseq
        %v2198 = vshrl.u32 %v2197, 7
        %v2199 = vsub.s32 %v2196, %v2198
        %v2200 = vrot.slane %v2162, %v2199
        %v2202 = vunpack.c.l.s4 1983009808
        %v2203 = vunpack.c.0.s8 %v2202
        %v2204 = vlaneseq
        %v2205 = vshrl.u32 %v2204, 7
        %v2206 = vsub.s32 %v2203, %v2205
        %v2207 = vrot.slane %v2163, %v2206
        %v2209 = vunpack.c.l.s4 1983009808
        %v2210 = vunpack.c.0.s8 %v2209
        %v2211 = vlaneseq
        %v2212 = vshrl.u32 %v2211, 7
        %v2213 = vsub.s32 %v2210, %v2212
        %v2214 = vrot.slane %v2164, %v2213
        %v2216 = vunpack.c.l.s4 1983009808
        %v2217 = vunpack.c.0.s8 %v2216
        %v2218 = vlaneseq
        %v2219 = vshrl.u32 %v2218, 7
        %v2220 = vsub.s32 %v2217, %v2219
        %v2221 = vrot.slane %v2165, %v2220
        %vm2230 = vcmask 517120
        %2231 = vst.msk [vmem:[%s190] sm:$0x3] %vm2230, %v2172
        %2232 = vst.msk [vmem:[%s190 + $0x2] sm:$0x3] %vm2230, %v2179
        %2233 = vst.msk [vmem:[%s190 + $0x4] sm:$0x3] %vm2230, %v2186
        %2234 = vst.msk [vmem:[%s190 + $0x6] sm:$0x3] %vm2230, %v2193
        %2235 = vst.msk [vmem:[%s190 + $0x8] sm:$0x3] %vm2230, %v2200
        %2236 = vst.msk [vmem:[%s190 + $0xa] sm:$0x3] %vm2230, %v2207
        %2237 = vst.msk [vmem:[%s190 + $0xc] sm:$0x3] %vm2230, %v2214
        %2238 = vst.msk [vmem:[%s190 + $0xe] sm:$0x3] %vm2230, %v2221
        %s2239 = smul.u32 2, %s15
        %p2240 = scmp.lt.s32.totalorder %s2239, 3
        %s2241 = scalar_select %p2240, %s2239, 3
        %s2242 = smul.addr %s2241, 4
        %s2243 = smul.addr %s2242, 2
        %s2244 = scalar_lea.vmem %s3, %s2243
        // Predicated region
        $region37: #{transformer_recognizer_forward.3} parent=31 // pred_check
          %p2245 = pneg %p101
        $region38: #{transformer_recognizer_forward.3} parent=31 // pred_check_branch
          %2247 = sbr.rel (%p2245) target = $region40
        $region39: #{transformer_recognizer_forward.3} parent=31 // pred_region
          %s2248 = smul.u32 2, %s15
        $region40: #{transformer_recognizer_forward.3} parent=31 // pred_fallthru
          _
      $region32: #{transformer_recognizer_forward.3} parent=5 // pred_fallthru
        _
      %p2249 = scmp.le.s32.totalorder 2, %s10
      // Predicated region
      $region41: #{transformer_recognizer_forward.3} parent=5 // pred_check
        %p2250 = pneg %p2249
      $region42: #{transformer_recognizer_forward.3} parent=5 // pred_check_branch
        %2252 = sbr.rel (%p2250) target = $region44
      $region43: #{transformer_recognizer_forward.3} parent=5 // pred_region
        %s2253 = ssub.s32 %s10, 2
        // Predicated region
        $region45: #{transformer_recognizer_forward.3} parent=43 // pred_check
          %p2254 = pneg %p107
        $region46: #{transformer_recognizer_forward.3} parent=43 // pred_check_branch
          %2256 = sbr.rel (%p2254) target = $region48
        $region47: #{transformer_recognizer_forward.3} parent=43 // pred_region
          %s2257 = smul.u32 2, %s16
          %p2258 = scmp.lt.s32.totalorder %s2257, 3
          %s2259 = scalar_select %p2258, %s2257, 3
          %s2260 = smul.addr %s2259, 4
          %s2261 = smul.addr %s2260, 2
          %s2262 = scalar_lea.vmem %s3, %s2261
        $region48: #{transformer_recognizer_forward.3} parent=43 // pred_fallthru
          _
      $region44: #{transformer_recognizer_forward.3} parent=5 // pred_fallthru
        _
    $region6: #{transformer_recognizer_forward.3} parent=1 // loop_footer
      %s14 = sadd.s32 1, %s10
    $region7: #{transformer_recognizer_forward.3} parent=1 // loop_footer_branch
      %9 = sbr.rel target = $region3
    $region8: #{transformer_recognizer_forward.3} parent=1 // loop_exit
      _
    %2263 = vsyncpa [#allocation4], 1
    %s2264 = scalar_lea.sflag [#allocation4], 1
    %2265 = vsyncpa %s2264, 1

// kernel: transformer_recognizer_forward.5
$region0: #{transformer_recognizer_forward.5}
  #allocation0 [shape = 'u32[]', space=smem, size = 0x4, offset = 0x4, fixed_abs, tag = 'smem constant byte address 0x4 - core index']
  #allocation1 [shape = 'u32[144,128]{1,0:T(1,128)}', space=vmem, size = 0x12000, scoped, tag = 'internal scratch']
  #allocation2 [shape = 'f32[8,128]{1,0:T(8,128)}', space=vmem, size = 0x1000, scoped, tag = 'scratch operand']
  %s0 = inlined_call_operand.vmem [shape: bf16[4,4,128], index: 0, kind: input, shape index: {}]
  %s1 = inlined_call_operand.vmem [shape: f32[4,1,128], index: 1, kind: input, shape index: {}]
  %s2 = inlined_call_operand.hbm [shape: bf16[2,128,384], index: 2, kind: input, shape index: {}]
  %s3 = inlined_call_operand.hbm [shape: f32[2,1,384], index: 3, kind: input, shape index: {}]
  %s4 = inlined_call_operand.hbm [shape: bf16[2,128,128], index: 4, kind: input, shape index: {}]
  %s5 = inlined_call_operand.hbm [shape: f32[2,1,128], index: 5, kind: input, shape index: {}]
  %s6 = inlined_call_operand.hbm [shape: f32[2,1,128], index: 6, kind: input, shape index: {}]
  %s7 = inlined_call_operand.hbm [shape: f32[2,1,128], index: 7, kind: input, shape index: {}]
  %s8 = inlined_call_operand.hbm [shape: bf16[2,128,2048], index: 8, kind: input, shape index: {}]
  %s9 = inlined_call_operand.hbm [shape: f32[2,1,2048], index: 9, kind: input, shape index: {}]
  %s10 = inlined_call_operand.hbm [shape: bf16[2,2048,128], index: 10, kind: input, shape index: {}]
  %s11 = inlined_call_operand.hbm [shape: f32[2,1,128], index: 11, kind: input, shape index: {}]
  %s12 = inlined_call_operand.hbm [shape: f32[2,1,128], index: 12, kind: input, shape index: {}]
  %s13 = inlined_call_operand.hbm [shape: f32[2,1,128], index: 13, kind: input, shape index: {}]
  %s14 = inlined_call_operand.vmem [shape: bf16[128,128], index: 14, kind: input, shape index: {}]
  %s15 = inlined_call_operand.vmem [shape: f32[1,128], index: 15, kind: input, shape index: {}]
  %s16 = inlined_call_operand.vmem [shape: f32[4,4,128], index: 16, kind: output, shape index: {}]
  %s17 = sld [smem:[#allocation0]]
  $region153: #{transformer_recognizer_forward.5} parent=0
    _
  %s19 = ssub.s32 1, %s17
  %s20 = scalar_select 0, %s19, %s17
  $region1: #{transformer_recognizer_forward.5} parent=0
    #allocation3 [shape = 'u8[196608]{0}', space=vmem, size = 0x30000, scoped, tag = 'input window, operand 2']
    #allocation4 [shape = 's32[2]{0}', space=sflag, size = 0x8, scoped, tag = 'scoped memory for transformer_recognizer_forward.5']
    #allocation5 [shape = 'u8[3072]{0}', space=vmem, size = 0xc00, scoped, tag = 'input window, operand 3']
    #allocation6 [shape = 's32[2]{0}', space=sflag, size = 0x8, scoped, tag = 'scoped memory for transformer_recognizer_forward.5']
    #allocation7 [shape = 'u8[65536]{0}', space=vmem, size = 0x10000, scoped, tag = 'input window, operand 4']
    #allocation8 [shape = 'u8[1024]{0}', space=vmem, size = 0x400, scoped, tag = 'input window, operand 5']
    #allocation9 [shape = 's32[2]{0}', space=sflag, size = 0x8, scoped, tag = 'scoped memory for transformer_recognizer_forward.5']
    #allocation10 [shape = 'u8[1024]{0}', space=vmem, size = 0x400, scoped, tag = 'input window, operand 6']
    #allocation11 [shape = 'u8[1024]{0}', space=vmem, size = 0x400, scoped, tag = 'input window, operand 7']
    #allocation12 [shape = 's32[2]{0}', space=sflag, size = 0x8, scoped, tag = 'scoped memory for transformer_recognizer_forward.5']
    #allocation13 [shape = 'u8[1048576]{0}', space=vmem, size = 0x100000, scoped, tag = 'input window, operand 8']
    #allocation14 [shape = 'u8[16384]{0}', space=vmem, size = 0x4000, scoped, tag = 'input window, operand 9']
    #allocation15 [shape = 's32[2]{0}', space=sflag, size = 0x8, scoped, tag = 'scoped memory for transformer_recognizer_forward.5']
    #allocation16 [shape = 'u8[1048576]{0}', space=vmem, size = 0x100000, scoped, tag = 'input window, operand 10']
    #allocation17 [shape = 'u8[1024]{0}', space=vmem, size = 0x400, scoped, tag = 'input window, operand 11']
    #allocation18 [shape = 's32[2]{0}', space=sflag, size = 0x8, scoped, tag = 'scoped memory for transformer_recognizer_forward.5']
    #allocation19 [shape = 'u8[1024]{0}', space=vmem, size = 0x400, scoped, tag = 'input window, operand 12']
    #allocation20 [shape = 'u8[1024]{0}', space=vmem, size = 0x400, scoped, tag = 'input window, operand 13']
    #allocation21 [shape = 's32[2]{0}', space=sflag, size = 0x8, scoped, tag = 'scoped memory for transformer_recognizer_forward.5']
    %21 = vsyncpa [#allocation4], 0
    %s22 = scalar_lea.sflag [#allocation4], 1
    %23 = vsyncpa %s22, 0
    %24 = vsyncpa [#allocation6], 0
    %s25 = scalar_lea.sflag [#allocation6], 1
    %26 = vsyncpa %s25, 0
    %27 = vsyncpa [#allocation9], 0
    %s28 = scalar_lea.sflag [#allocation9], 1
    %29 = vsyncpa %s28, 0
    %30 = vsyncpa [#allocation12], 0
    %s31 = scalar_lea.sflag [#allocation12], 1
    %32 = vsyncpa %s31, 0
    %33 = vsyncpa [#allocation15], 0
    %s34 = scalar_lea.sflag [#allocation15], 1
    %35 = vsyncpa %s34, 0
    %36 = vsyncpa [#allocation18], 0
    %s37 = scalar_lea.sflag [#allocation18], 1
    %38 = vsyncpa %s37, 0
    %39 = vsyncpa [#allocation21], 0
    %s40 = scalar_lea.sflag [#allocation21], 1
    %41 = vsyncpa %s40, 0
    loop: start=0, step=1, limit=6
    $region2: #{transformer_recognizer_forward.5} parent=1 // loop_pre_header
      _
    $region3: #{transformer_recognizer_forward.5} parent=1 // loop_header
      %s43 = sphi 0, %s47
      %p44 = scmp.ge.s32.totalorder %s43, 6
      %s50 = sphi 0, %s62
      %s51 = sphi 0, %s58
      %s52 = sphi 0, %s50
      %s53 = sphi 0, %s51
      %s54 = sphi 0, %s52
      %s55 = sphi 0, %s53
      %s65 = sphi 0, %s67
      %s68 = sphi 0, %s65
      %s69 = sphi 0, %s68
      %s85 = sphi 0, %s69
      %s91 = sphi 0, %s93
      %s94 = sphi 0, %s91
      %s95 = sphi 0, %s94
      %s111 = sphi 0, %s95
      %s117 = sphi 0, %s119
      %s120 = sphi 0, %s117
      %s121 = sphi 0, %s120
      %s137 = sphi 0, %s121
      %s143 = sphi 0, %s145
      %s146 = sphi 0, %s143
      %s147 = sphi 0, %s146
      %s163 = sphi 0, %s147
      %s169 = sphi 0, %s171
      %s172 = sphi 0, %s169
      %s173 = sphi 0, %s172
      %s189 = sphi 0, %s173
      %s195 = sphi 0, %s197
      %s198 = sphi 0, %s195
      %s199 = sphi 0, %s198
      %s215 = sphi 0, %s199
      %s221 = sphi 0, %s223
      %s224 = sphi 0, %s221
      %s225 = sphi 0, %s224
      %s241 = sphi 0, %s225
      %s247 = sphi 0, %s249
      %s250 = sphi 0, %s247
      %s251 = sphi 0, %s250
      %s267 = sphi 0, %s251
      %s273 = sphi 0, %s275
      %s276 = sphi 0, %s273
      %s277 = sphi 0, %s276
      %s293 = sphi 0, %s277
      %s299 = sphi 0, %s301
      %s302 = sphi 0, %s299
      %s303 = sphi 0, %s302
      %s319 = sphi 0, %s303
      %s325 = sphi 0, %s327
      %s328 = sphi 0, %s325
      %s329 = sphi 0, %s328
      %s345 = sphi 0, %s329
      %s351 = sphi 0, %s353
      %s354 = sphi 0, %s351
      %s355 = sphi 0, %s354
      %s371 = sphi 0, %s355
      %s377 = sphi 0, %s379
      %s380 = sphi 0, %s377
      %s381 = sphi 0, %s380
      %s397 = sphi 0, %s381
      %s403 = sphi 0, %s405
      %s406 = sphi 0, %s403
      %s407 = sphi 0, %s406
      %s423 = sphi 0, %s407
      %s427 = sphi 0, %s427
      %s429 = sphi 0, %s427
      %s430 = sphi 0, %s429
      %s444 = sphi 0, %s430
      %s448 = sphi 0, %s448
      %s450 = sphi 0, %s448
      %s451 = sphi 0, %s450
      %s465 = sphi 0, %s451
      %s471 = sphi 0, %s473
      %s474 = sphi 0, %s471
      %s475 = sphi 0, %s474
      %s491 = sphi 0, %s475
    $region4: #{transformer_recognizer_forward.5} parent=1 // loop_header_branch
      %46 = sbr.rel (%p44) target = $region8
    $region5: #{transformer_recognizer_forward.5} parent=1 // loop_body
      %s48 = ssub.s32 %s43, 1
      %s49 = ssub.s32 %s43, 2
      %s56 = sadd.s32 1, %s51
      %p57 = scmp.ge.s32.totalorder %s56, 2
      %s58 = scalar_select %p57, 0, %s56
      %s59 = sadd.s32 1, %s50
      %s60 = scalar_select %p57, %s59, %s50
      %p61 = scmp.ge.s32.totalorder %s60, 2
      %s62 = scalar_select %p61, 0, %s60
      %s63 = ssub.s32 %s50, %s62
      %p64 = scmp.eq.s32.totalorder %s63, 0
      %s66 = sadd.s32 %s65, 1
      %s67 = scalar_select %p64, %s65, %s66
      %p70 = pneg %p64
      %p71 = scmp.eq.s32.totalorder %s43, 3
      %p72 = por %p70, %p71
      %p73 = scmp.ne.s32.totalorder %s65, %s68
      %p74 = scmp.eq.s32.totalorder %s43, 0
      %p75 = por %p73, %p74
      %p76 = scmp.ne.s32.totalorder %s65, %s68
      %p77 = scmp.eq.s32.totalorder %s48, 3
      %p78 = por %p76, %p77
      %p79 = scmp.ne.s32.totalorder %s68, %s69
      %p80 = scmp.eq.s32.totalorder %s48, 0
      %p81 = por %p79, %p80
      %p82 = scmp.ne.s32.totalorder %s68, %s69
      %p83 = scmp.eq.s32.totalorder %s49, 3
      %p84 = por %p82, %p83
      %p86 = scmp.ne.s32.totalorder %s69, %s85
      %p87 = scmp.eq.s32.totalorder %s49, 0
      %p88 = por %p86, %p87
      %s89 = ssub.s32 %s50, %s62
      %p90 = scmp.eq.s32.totalorder %s89, 0
      %s92 = sadd.s32 %s91, 1
      %s93 = scalar_select %p90, %s91, %s92
      %p96 = pneg %p90
      %p97 = scmp.eq.s32.totalorder %s43, 3
      %p98 = por %p96, %p97
      %p99 = scmp.ne.s32.totalorder %s91, %s94
      %p100 = scmp.eq.s32.totalorder %s43, 0
      %p101 = por %p99, %p100
      %p102 = scmp.ne.s32.totalorder %s91, %s94
      %p103 = scmp.eq.s32.totalorder %s48, 3
      %p104 = por %p102, %p103
      %p105 = scmp.ne.s32.totalorder %s94, %s95
      %p106 = scmp.eq.s32.totalorder %s48, 0
      %p107 = por %p105, %p106
      %p108 = scmp.ne.s32.totalorder %s94, %s95
      %p109 = scmp.eq.s32.totalorder %s49, 3
      %p110 = por %p108, %p109
      %p112 = scmp.ne.s32.totalorder %s95, %s111
      %p113 = scmp.eq.s32.totalorder %s49, 0
      %p114 = por %p112, %p113
      %s115 = ssub.s32 %s51, %s58
      %p116 = scmp.eq.s32.totalorder %s115, 0
      %s118 = sadd.s32 %s117, 1
      %s119 = scalar_select %p116, %s117, %s118
      %p122 = pneg %p116
      %p123 = scmp.eq.s32.totalorder %s43, 3
      %p124 = por %p122, %p123
      %p125 = scmp.ne.s32.totalorder %s117, %s120
      %p126 = scmp.eq.s32.totalorder %s43, 0
      %p127 = por %p125, %p126
      %p128 = scmp.ne.s32.totalorder %s117, %s120
      %p129 = scmp.eq.s32.totalorder %s48, 3
      %p130 = por %p128, %p129
      %p131 = scmp.ne.s32.totalorder %s120, %s121
      %p132 = scmp.eq.s32.totalorder %s48, 0
      %p133 = por %p131, %p132
      %p134 = scmp.ne.s32.totalorder %s120, %s121
      %p135 = scmp.eq.s32.totalorder %s49, 3
      %p136 = por %p134, %p135
      %p138 = scmp.ne.s32.totalorder %s121, %s137
      %p139 = scmp.eq.s32.totalorder %s49, 0
      %p140 = por %p138, %p139
      %s141 = ssub.s32 %s51, %s58
      %p142 = scmp.eq.s32.totalorder %s141, 0
      %s144 = sadd.s32 %s143, 1
      %s145 = scalar_select %p142, %s143, %s144
      %p148 = pneg %p142
      %p149 = scmp.eq.s32.totalorder %s43, 3
      %p150 = por %p148, %p149
      %p151 = scmp.ne.s32.totalorder %s143, %s146
      %p152 = scmp.eq.s32.totalorder %s43, 0
      %p153 = por %p151, %p152
      %p154 = scmp.ne.s32.totalorder %s143, %s146
      %p155 = scmp.eq.s32.totalorder %s48, 3
      %p156 = por %p154, %p155
      %p157 = scmp.ne.s32.totalorder %s146, %s147
      %p158 = scmp.eq.s32.totalorder %s48, 0
      %p159 = por %p157, %p158
      %p160 = scmp.ne.s32.totalorder %s146, %s147
      %p161 = scmp.eq.s32.totalorder %s49, 3
      %p162 = por %p160, %p161
      %p164 = scmp.ne.s32.totalorder %s147, %s163
      %p165 = scmp.eq.s32.totalorder %s49, 0
      %p166 = por %p164, %p165
      %s167 = ssub.s32 %s51, %s58
      %p168 = scmp.eq.s32.totalorder %s167, 0
      %s170 = sadd.s32 %s169, 1
      %s171 = scalar_select %p168, %s169, %s170
      %p174 = pneg %p168
      %p175 = scmp.eq.s32.totalorder %s43, 3
      %p176 = por %p174, %p175
      %p177 = scmp.ne.s32.totalorder %s169, %s172
      %p178 = scmp.eq.s32.totalorder %s43, 0
      %p179 = por %p177, %p178
      %p180 = scmp.ne.s32.totalorder %s169, %s172
      %p181 = scmp.eq.s32.totalorder %s48, 3
      %p182 = por %p180, %p181
      %p183 = scmp.ne.s32.totalorder %s172, %s173
      %p184 = scmp.eq.s32.totalorder %s48, 0
      %p185 = por %p183, %p184
      %p186 = scmp.ne.s32.totalorder %s172, %s173
      %p187 = scmp.eq.s32.totalorder %s49, 3
      %p188 = por %p186, %p187
      %p190 = scmp.ne.s32.totalorder %s173, %s189
      %p191 = scmp.eq.s32.totalorder %s49, 0
      %p192 = por %p190, %p191
      %s193 = ssub.s32 %s51, %s58
      %p194 = scmp.eq.s32.totalorder %s193, 0
      %s196 = sadd.s32 %s195, 1
      %s197 = scalar_select %p194, %s195, %s196
      %p200 = pneg %p194
      %p201 = scmp.eq.s32.totalorder %s43, 3
      %p202 = por %p200, %p201
      %p203 = scmp.ne.s32.totalorder %s195, %s198
      %p204 = scmp.eq.s32.totalorder %s43, 0
      %p205 = por %p203, %p204
      %p206 = scmp.ne.s32.totalorder %s195, %s198
      %p207 = scmp.eq.s32.totalorder %s48, 3
      %p208 = por %p206, %p207
      %p209 = scmp.ne.s32.totalorder %s198, %s199
      %p210 = scmp.eq.s32.totalorder %s48, 0
      %p211 = por %p209, %p210
      %p212 = scmp.ne.s32.totalorder %s198, %s199
      %p213 = scmp.eq.s32.totalorder %s49, 3
      %p214 = por %p212, %p213
      %p216 = scmp.ne.s32.totalorder %s199, %s215
      %p217 = scmp.eq.s32.totalorder %s49, 0
      %p218 = por %p216, %p217
      %s219 = ssub.s32 %s51, %s58
      %p220 = scmp.eq.s32.totalorder %s219, 0
      %s222 = sadd.s32 %s221, 1
      %s223 = scalar_select %p220, %s221, %s222
      %p226 = pneg %p220
      %p227 = scmp.eq.s32.totalorder %s43, 3
      %p228 = por %p226, %p227
      %p229 = scmp.ne.s32.totalorder %s221, %s224
      %p230 = scmp.eq.s32.totalorder %s43, 0
      %p231 = por %p229, %p230
      %p232 = scmp.ne.s32.totalorder %s221, %s224
      %p233 = scmp.eq.s32.totalorder %s48, 3
      %p234 = por %p232, %p233
      %p235 = scmp.ne.s32.totalorder %s224, %s225
      %p236 = scmp.eq.s32.totalorder %s48, 0
      %p237 = por %p235, %p236
      %p238 = scmp.ne.s32.totalorder %s224, %s225
      %p239 = scmp.eq.s32.totalorder %s49, 3
      %p240 = por %p238, %p239
      %p242 = scmp.ne.s32.totalorder %s225, %s241
      %p243 = scmp.eq.s32.totalorder %s49, 0
      %p244 = por %p242, %p243
      %s245 = ssub.s32 %s51, %s58
      %p246 = scmp.eq.s32.totalorder %s245, 0
      %s248 = sadd.s32 %s247, 1
      %s249 = scalar_select %p246, %s247, %s248
      %p252 = pneg %p246
      %p253 = scmp.eq.s32.totalorder %s43, 3
      %p254 = por %p252, %p253
      %p255 = scmp.ne.s32.totalorder %s247, %s250
      %p256 = scmp.eq.s32.totalorder %s43, 0
      %p257 = por %p255, %p256
      %p258 = scmp.ne.s32.totalorder %s247, %s250
      %p259 = scmp.eq.s32.totalorder %s48, 3
      %p260 = por %p258, %p259
      %p261 = scmp.ne.s32.totalorder %s250, %s251
      %p262 = scmp.eq.s32.totalorder %s48, 0
      %p263 = por %p261, %p262
      %p264 = scmp.ne.s32.totalorder %s250, %s251
      %p265 = scmp.eq.s32.totalorder %s49, 3
      %p266 = por %p264, %p265
      %p268 = scmp.ne.s32.totalorder %s251, %s267
      %p269 = scmp.eq.s32.totalorder %s49, 0
      %p270 = por %p268, %p269
      %s271 = ssub.s32 %s51, %s58
      %p272 = scmp.eq.s32.totalorder %s271, 0
      %s274 = sadd.s32 %s273, 1
      %s275 = scalar_select %p272, %s273, %s274
      %p278 = pneg %p272
      %p279 = scmp.eq.s32.totalorder %s43, 3
      %p280 = por %p278, %p279
      %p281 = scmp.ne.s32.totalorder %s273, %s276
      %p282 = scmp.eq.s32.totalorder %s43, 0
      %p283 = por %p281, %p282
      %p284 = scmp.ne.s32.totalorder %s273, %s276
      %p285 = scmp.eq.s32.totalorder %s48, 3
      %p286 = por %p284, %p285
      %p287 = scmp.ne.s32.totalorder %s276, %s277
      %p288 = scmp.eq.s32.totalorder %s48, 0
      %p289 = por %p287, %p288
      %p290 = scmp.ne.s32.totalorder %s276, %s277
      %p291 = scmp.eq.s32.totalorder %s49, 3
      %p292 = por %p290, %p291
      %p294 = scmp.ne.s32.totalorder %s277, %s293
      %p295 = scmp.eq.s32.totalorder %s49, 0
      %p296 = por %p294, %p295
      %s297 = ssub.s32 %s51, %s58
      %p298 = scmp.eq.s32.totalorder %s297, 0
      %s300 = sadd.s32 %s299, 1
      %s301 = scalar_select %p298, %s299, %s300
      %p304 = pneg %p298
      %p305 = scmp.eq.s32.totalorder %s43, 3
      %p306 = por %p304, %p305
      %p307 = scmp.ne.s32.totalorder %s299, %s302
      %p308 = scmp.eq.s32.totalorder %s43, 0
      %p309 = por %p307, %p308
      %p310 = scmp.ne.s32.totalorder %s299, %s302
      %p311 = scmp.eq.s32.totalorder %s48, 3
      %p312 = por %p310, %p311
      %p313 = scmp.ne.s32.totalorder %s302, %s303
      %p314 = scmp.eq.s32.totalorder %s48, 0
      %p315 = por %p313, %p314
      %p316 = scmp.ne.s32.totalorder %s302, %s303
      %p317 = scmp.eq.s32.totalorder %s49, 3
      %p318 = por %p316, %p317
      %p320 = scmp.ne.s32.totalorder %s303, %s319
      %p321 = scmp.eq.s32.totalorder %s49, 0
      %p322 = por %p320, %p321
      %s323 = ssub.s32 %s51, %s58
      %p324 = scmp.eq.s32.totalorder %s323, 0
      %s326 = sadd.s32 %s325, 1
      %s327 = scalar_select %p324, %s325, %s326
      %p330 = pneg %p324
      %p331 = scmp.eq.s32.totalorder %s43, 3
      %p332 = por %p330, %p331
      %p333 = scmp.ne.s32.totalorder %s325, %s328
      %p334 = scmp.eq.s32.totalorder %s43, 0
      %p335 = por %p333, %p334
      %p336 = scmp.ne.s32.totalorder %s325, %s328
      %p337 = scmp.eq.s32.totalorder %s48, 3
      %p338 = por %p336, %p337
      %p339 = scmp.ne.s32.totalorder %s328, %s329
      %p340 = scmp.eq.s32.totalorder %s48, 0
      %p341 = por %p339, %p340
      %p342 = scmp.ne.s32.totalorder %s328, %s329
      %p343 = scmp.eq.s32.totalorder %s49, 3
      %p344 = por %p342, %p343
      %p346 = scmp.ne.s32.totalorder %s329, %s345
      %p347 = scmp.eq.s32.totalorder %s49, 0
      %p348 = por %p346, %p347
      %s349 = ssub.s32 %s51, %s58
      %p350 = scmp.eq.s32.totalorder %s349, 0
      %s352 = sadd.s32 %s351, 1
      %s353 = scalar_select %p350, %s351, %s352
      %p356 = pneg %p350
      %p357 = scmp.eq.s32.totalorder %s43, 3
      %p358 = por %p356, %p357
      %p359 = scmp.ne.s32.totalorder %s351, %s354
      %p360 = scmp.eq.s32.totalorder %s43, 0
      %p361 = por %p359, %p360
      %p362 = scmp.ne.s32.totalorder %s351, %s354
      %p363 = scmp.eq.s32.totalorder %s48, 3
      %p364 = por %p362, %p363
      %p365 = scmp.ne.s32.totalorder %s354, %s355
      %p366 = scmp.eq.s32.totalorder %s48, 0
      %p367 = por %p365, %p366
      %p368 = scmp.ne.s32.totalorder %s354, %s355
      %p369 = scmp.eq.s32.totalorder %s49, 3
      %p370 = por %p368, %p369
      %p372 = scmp.ne.s32.totalorder %s355, %s371
      %p373 = scmp.eq.s32.totalorder %s49, 0
      %p374 = por %p372, %p373
      %s375 = ssub.s32 %s51, %s58
      %p376 = scmp.eq.s32.totalorder %s375, 0
      %s378 = sadd.s32 %s377, 1
      %s379 = scalar_select %p376, %s377, %s378
      %p382 = pneg %p376
      %p383 = scmp.eq.s32.totalorder %s43, 3
      %p384 = por %p382, %p383
      %p385 = scmp.ne.s32.totalorder %s377, %s380
      %p386 = scmp.eq.s32.totalorder %s43, 0
      %p387 = por %p385, %p386
      %p388 = scmp.ne.s32.totalorder %s377, %s380
      %p389 = scmp.eq.s32.totalorder %s48, 3
      %p390 = por %p388, %p389
      %p391 = scmp.ne.s32.totalorder %s380, %s381
      %p392 = scmp.eq.s32.totalorder %s48, 0
      %p393 = por %p391, %p392
      %p394 = scmp.ne.s32.totalorder %s380, %s381
      %p395 = scmp.eq.s32.totalorder %s49, 3
      %p396 = por %p394, %p395
      %p398 = scmp.ne.s32.totalorder %s381, %s397
      %p399 = scmp.eq.s32.totalorder %s49, 0
      %p400 = por %p398, %p399
      %s401 = ssub.s32 %s51, %s58
      %p402 = scmp.eq.s32.totalorder %s401, 0
      %s404 = sadd.s32 %s403, 1
      %s405 = scalar_select %p402, %s403, %s404
      %p408 = pneg %p402
      %p409 = scmp.eq.s32.totalorder %s43, 3
      %p410 = por %p408, %p409
      %p411 = scmp.ne.s32.totalorder %s403, %s406
      %p412 = scmp.eq.s32.totalorder %s43, 0
      %p413 = por %p411, %p412
      %p414 = scmp.ne.s32.totalorder %s403, %s406
      %p415 = scmp.eq.s32.totalorder %s48, 3
      %p416 = por %p414, %p415
      %p417 = scmp.ne.s32.totalorder %s406, %s407
      %p418 = scmp.eq.s32.totalorder %s48, 0
      %p419 = por %p417, %p418
      %p420 = scmp.ne.s32.totalorder %s406, %s407
      %p421 = scmp.eq.s32.totalorder %s49, 3
      %p422 = por %p420, %p421
      %p424 = scmp.ne.s32.totalorder %s407, %s423
      %p425 = scmp.eq.s32.totalorder %s49, 0
      %p426 = por %p424, %p425
      %s428 = sadd.s32 %s427, 1
      %p431 = scmp.eq.s32.totalorder %s43, 3
      %p432 = scmp.ne.s32.totalorder %s427, %s429
      %p433 = scmp.eq.s32.totalorder %s43, 0
      %p434 = por %p432, %p433
      %p435 = scmp.ne.s32.totalorder %s427, %s429
      %p436 = scmp.eq.s32.totalorder %s48, 3
      %p437 = por %p435, %p436
      %p438 = scmp.ne.s32.totalorder %s429, %s430
      %p439 = scmp.eq.s32.totalorder %s48, 0
      %p440 = por %p438, %p439
      %p441 = scmp.ne.s32.totalorder %s429, %s430
      %p442 = scmp.eq.s32.totalorder %s49, 3
      %p443 = por %p441, %p442
      %p445 = scmp.ne.s32.totalorder %s430, %s444
      %p446 = scmp.eq.s32.totalorder %s49, 0
      %p447 = por %p445, %p446
      %s449 = sadd.s32 %s448, 1
      %p452 = scmp.eq.s32.totalorder %s43, 3
      %p453 = scmp.ne.s32.totalorder %s448, %s450
      %p454 = scmp.eq.s32.totalorder %s43, 0
      %p455 = por %p453, %p454
      %p456 = scmp.ne.s32.totalorder %s448, %s450
      %p457 = scmp.eq.s32.totalorder %s48, 3
      %p458 = por %p456, %p457
      %p459 = scmp.ne.s32.totalorder %s450, %s451
      %p460 = scmp.eq.s32.totalorder %s48, 0
      %p461 = por %p459, %p460
      %p462 = scmp.ne.s32.totalorder %s450, %s451
      %p463 = scmp.eq.s32.totalorder %s49, 3
      %p464 = por %p462, %p463
      %p466 = scmp.ne.s32.totalorder %s451, %s465
      %p467 = scmp.eq.s32.totalorder %s49, 0
      %p468 = por %p466, %p467
      %s469 = ssub.s32 %s50, %s62
      %p470 = scmp.eq.s32.totalorder %s469, 0
      %s472 = sadd.s32 %s471, 1
      %s473 = scalar_select %p470, %s471, %s472
      %p476 = pneg %p470
      %p477 = scmp.eq.s32.totalorder %s43, 3
      %p478 = por %p476, %p477
      %p479 = scmp.ne.s32.totalorder %s471, %s474
      %p480 = scmp.eq.s32.totalorder %s43, 0
      %p481 = por %p479, %p480
      %p482 = scmp.ne.s32.totalorder %s471, %s474
      %p483 = scmp.eq.s32.totalorder %s48, 3
      %p484 = por %p482, %p483
      %p485 = scmp.ne.s32.totalorder %s474, %s475
      %p486 = scmp.eq.s32.totalorder %s48, 0
      %p487 = por %p485, %p486
      %p488 = scmp.ne.s32.totalorder %s474, %s475
      %p489 = scmp.eq.s32.totalorder %s49, 3
      %p490 = por %p488, %p489
      %p492 = scmp.ne.s32.totalorder %s475, %s491
      %p493 = scmp.eq.s32.totalorder %s49, 0
      %p494 = por %p492, %p493
      %p495 = scmp.le.s32.totalorder 1, %s43
      %p496 = scmp.lt.s32.totalorder %s43, 5
      %p497 = pnand %p495, %p496
      %p498 = pneg %p497
      // Predicated region
      $region9: #{transformer_recognizer_forward.5} parent=5 // pred_check
        _
      $region10: #{transformer_recognizer_forward.5} parent=5 // pred_check_branch
        %500 = sbr.rel (%p497) target = $region12
      $region11: #{transformer_recognizer_forward.5} parent=5 // pred_region
        %s501 = ssub.s32 %s43, 1
        // Predicated region
        $region13: #{transformer_recognizer_forward.5} parent=11 // pred_check
          %p502 = pneg %p440
        $region14: #{transformer_recognizer_forward.5} parent=11 // pred_check_branch
          %504 = sbr.rel (%p502) target = $region16
        $region15: #{transformer_recognizer_forward.5} parent=11 // pred_region
          _
        $region16: #{transformer_recognizer_forward.5} parent=11 // pred_fallthru
          _
        // Predicated region
        $region17: #{transformer_recognizer_forward.5} parent=11 // pred_check
          %p505 = pneg %p461
        $region18: #{transformer_recognizer_forward.5} parent=11 // pred_check_branch
          %507 = sbr.rel (%p505) target = $region20
        $region19: #{transformer_recognizer_forward.5} parent=11 // pred_region
          _
        $region20: #{transformer_recognizer_forward.5} parent=11 // pred_fallthru
          _
      $region12: #{transformer_recognizer_forward.5} parent=5 // pred_fallthru
        _
      %p508 = scmp.lt.s32.totalorder %s43, 4
      // Predicated region
      $region21: #{transformer_recognizer_forward.5} parent=5 // pred_check
        %p509 = pneg %p508
      $region22: #{transformer_recognizer_forward.5} parent=5 // pred_check_branch
        %511 = sbr.rel (%p509) target = $region24
      $region23: #{transformer_recognizer_forward.5} parent=5 // pred_region
        // Predicated region
        $region25: #{transformer_recognizer_forward.5} parent=23 // pred_check
          %p512 = pneg %p75
        $region26: #{transformer_recognizer_forward.5} parent=23 // pred_check_branch
          %514 = sbr.rel (%p512) target = $region28
        $region27: #{transformer_recognizer_forward.5} parent=23 // pred_region
          %s515 = smul.u32 2, %s50
          %p516 = scmp.lt.s32.totalorder %s515, 3
          %s517 = scalar_select %p516, %s515, 3
          %s518 = smul.addr %s517, 2
          %s519 = scalar_lea.vmem %s0, %s518
          %s520 = smul.u32 2, %s50
        $region28: #{transformer_recognizer_forward.5} parent=23 // pred_fallthru
          _
        // Predicated region
        $region29: #{transformer_recognizer_forward.5} parent=23 // pred_check
          %p521 = pneg %p101
        $region30: #{transformer_recognizer_forward.5} parent=23 // pred_check_branch
          %523 = sbr.rel (%p521) target = $region32
        $region31: #{transformer_recognizer_forward.5} parent=23 // pred_region
          %s524 = smul.u32 2, %s50
          %p525 = scmp.lt.s32.totalorder %s524, 3
          %s526 = scalar_select %p525, %s524, 3
          %s527 = scalar_lea.vmem %s1, %s526
          %s528 = smul.u32 2, %s50
        $region32: #{transformer_recognizer_forward.5} parent=23 // pred_fallthru
          _
        // Predicated region
        $region33: #{transformer_recognizer_forward.5} parent=23 // pred_check
          %p529 = pneg %p127
        $region34: #{transformer_recognizer_forward.5} parent=23 // pred_check_branch
          %531 = sbr.rel (%p529) target = $region36
        $region35: #{transformer_recognizer_forward.5} parent=23 // pred_region
          %s532 = sand.u32 %s117, 1
          %s533 = scalar_lea.sflag [#allocation4], %s532
          %s534 = sand.u32 %s117, 1
          %s535 = smul.addr %s534, 192
          %s536 = scalar_lea.vmem [#allocation3], %s535
          %s538 = ssub.s32 3072, 3072
          %539 = vsyncadd %s533, %s538
          %s540 = smul.addr %s51, 48
          %s541 = smul.addr %s540, 64
          %s542 = scalar_lea.hbm %s2, %s541
          %s543 = sshll.u32 %s536, 4
          %s544 = int_to_ptr.vmem [resolvable:$true] %s543
          %549 = dma.hbm_to_vmem [thread:$0]  %s542, 3072, %s544, %s533, 192, 192, 12
        $region36: #{transformer_recognizer_forward.5} parent=23 // pred_fallthru
          _
        // Predicated region
        $region37: #{transformer_recognizer_forward.5} parent=23 // pred_check
          %p550 = pneg %p153
        $region38: #{transformer_recognizer_forward.5} parent=23 // pred_check_branch
          %552 = sbr.rel (%p550) target = $region40
        $region39: #{transformer_recognizer_forward.5} parent=23 // pred_region
          %s553 = sand.u32 %s43, 1
          %s554 = scalar_lea.sflag [#allocation6], %s553
          %s555 = sand.u32 %s143, 1
          %s556 = smul.addr %s555, 3
          %s557 = scalar_lea.vmem [#allocation5], %s556
          %s559 = ssub.s32 48, 48
          %560 = vsyncadd %s554, %s559
          %s561 = smul.addr %s51, 3
          %s562 = smul.addr %s561, 16
          %s563 = scalar_lea.hbm %s3, %s562
          %s565 = sshll.u32 %s557, 4
          %s566 = int_to_ptr.vmem [resolvable:$true] %s565
          %568 = dma.hbm_to_vmem [thread:$0]  %s563, 48, %s566, %s554
        $region40: #{transformer_recognizer_forward.5} parent=23 // pred_fallthru
          _
        // Predicated region
        $region41: #{transformer_recognizer_forward.5} parent=23 // pred_check
          %p569 = pneg %p179
        $region42: #{transformer_recognizer_forward.5} parent=23 // pred_check_branch
          %571 = sbr.rel (%p569) target = $region44
        $region43: #{transformer_recognizer_forward.5} parent=23 // pred_region
          %s572 = sand.u32 %s43, 1
          %s573 = scalar_lea.sflag [#allocation6], %s572
          %s574 = sand.u32 %s169, 1
          %s575 = smul.addr %s574, 64
          %s576 = scalar_lea.vmem [#allocation7], %s575
          %s578 = ssub.s32 1024, 1024
          %579 = vsyncadd %s573, %s578
          %s580 = smul.addr %s51, 16
          %s581 = smul.addr %s580, 64
          %s582 = scalar_lea.hbm %s4, %s581
          %s583 = sshll.u32 %s576, 4
          %s584 = int_to_ptr.vmem [resolvable:$true] %s583
          %589 = dma.hbm_to_vmem [thread:$0]  %s582, 1024, %s584, %s573, 64, 64, 4
        $region44: #{transformer_recognizer_forward.5} parent=23 // pred_fallthru
          _
        // Predicated region
        $region45: #{transformer_recognizer_forward.5} parent=23 // pred_check
          %p590 = pneg %p205
        $region46: #{transformer_recognizer_forward.5} parent=23 // pred_check_branch
          %592 = sbr.rel (%p590) target = $region48
        $region47: #{transformer_recognizer_forward.5} parent=23 // pred_region
          %s593 = sand.u32 %s43, 1
          %s594 = scalar_lea.sflag [#allocation9], %s593
          %s595 = sand.u32 %s195, 1
          %s596 = scalar_lea.vmem [#allocation8], %s595
          %s598 = ssub.s32 16, 16
          %599 = vsyncadd %s594, %s598
          %s600 = smul.addr %s51, 16
          %s601 = scalar_lea.hbm %s5, %s600
          %s603 = sshll.u32 %s596, 4
          %s604 = int_to_ptr.vmem [resolvable:$true] %s603
          %606 = dma.hbm_to_vmem [thread:$0]  %s601, 16, %s604, %s594
        $region48: #{transformer_recognizer_forward.5} parent=23 // pred_fallthru
          _
        // Predicated region
        $region49: #{transformer_recognizer_forward.5} parent=23 // pred_check
          %p607 = pneg %p231
        $region50: #{transformer_recognizer_forward.5} parent=23 // pred_check_branch
          %609 = sbr.rel (%p607) target = $region52
        $region51: #{transformer_recognizer_forward.5} parent=23 // pred_region
          %s610 = sand.u32 %s43, 1
          %s611 = scalar_lea.sflag [#allocation9], %s610
          %s612 = sand.u32 %s221, 1
          %s613 = scalar_lea.vmem [#allocation10], %s612
          %s615 = ssub.s32 16, 16
          %616 = vsyncadd %s611, %s615
          %s617 = smul.addr %s51, 16
          %s618 = scalar_lea.hbm %s6, %s617
          %s620 = sshll.u32 %s613, 4
          %s621 = int_to_ptr.vmem [resolvable:$true] %s620
          %623 = dma.hbm_to_vmem [thread:$0]  %s618, 16, %s621, %s611
        $region52: #{transformer_recognizer_forward.5} parent=23 // pred_fallthru
          _
        // Predicated region
        $region53: #{transformer_recognizer_forward.5} parent=23 // pred_check
          %p624 = pneg %p257
        $region54: #{transformer_recognizer_forward.5} parent=23 // pred_check_branch
          %626 = sbr.rel (%p624) target = $region56
        $region55: #{transformer_recognizer_forward.5} parent=23 // pred_region
          %s627 = sand.u32 %s43, 1
          %s628 = scalar_lea.sflag [#allocation12], %s627
          %s629 = sand.u32 %s247, 1
          %s630 = scalar_lea.vmem [#allocation11], %s629
          %s632 = ssub.s32 16, 16
          %633 = vsyncadd %s628, %s632
          %s634 = smul.addr %s51, 16
          %s635 = scalar_lea.hbm %s7, %s634
          %s637 = sshll.u32 %s630, 4
          %s638 = int_to_ptr.vmem [resolvable:$true] %s637
          %640 = dma.hbm_to_vmem [thread:$0]  %s635, 16, %s638, %s628
        $region56: #{transformer_recognizer_forward.5} parent=23 // pred_fallthru
          _
        // Predicated region
        $region57: #{transformer_recognizer_forward.5} parent=23 // pred_check
          %p641 = pneg %p283
        $region58: #{transformer_recognizer_forward.5} parent=23 // pred_check_branch
          %643 = sbr.rel (%p641) target = $region60
        $region59: #{transformer_recognizer_forward.5} parent=23 // pred_region
          %s644 = sand.u32 %s43, 1
          %s645 = scalar_lea.sflag [#allocation12], %s644
          %s646 = sand.u32 %s273, 1
          %s647 = smul.addr %s646, 1024
          %s648 = scalar_lea.vmem [#allocation13], %s647
          %s650 = ssub.s32 16384, 16384
          %651 = vsyncadd %s645, %s650
          %s652 = smul.addr %s51, 256
          %s653 = smul.addr %s652, 64
          %s654 = scalar_lea.hbm %s8, %s653
          %s655 = sshll.u32 %s648, 4
          %s656 = int_to_ptr.vmem [resolvable:$true] %s655
          %661 = dma.hbm_to_vmem [thread:$0]  %s654, 16384, %s656, %s645, 1024, 1024, 64
        $region60: #{transformer_recognizer_forward.5} parent=23 // pred_fallthru
          _
        // Predicated region
        $region61: #{transformer_recognizer_forward.5} parent=23 // pred_check
          %p662 = pneg %p309
        $region62: #{transformer_recognizer_forward.5} parent=23 // pred_check_branch
          %664 = sbr.rel (%p662) target = $region64
        $region63: #{transformer_recognizer_forward.5} parent=23 // pred_region
          %s665 = sand.u32 %s43, 1
          %s666 = scalar_lea.sflag [#allocation15], %s665
          %s667 = sand.u32 %s299, 1
          %s668 = smul.addr %s667, 16
          %s669 = scalar_lea.vmem [#allocation14], %s668
          %s671 = ssub.s32 256, 256
          %672 = vsyncadd %s666, %s671
          %s673 = smul.addr %s51, 16
          %s674 = smul.addr %s673, 16
          %s675 = scalar_lea.hbm %s9, %s674
          %s677 = sshll.u32 %s669, 4
          %s678 = int_to_ptr.vmem [resolvable:$true] %s677
          %680 = dma.hbm_to_vmem [thread:$0]  %s675, 256, %s678, %s666
        $region64: #{transformer_recognizer_forward.5} parent=23 // pred_fallthru
          _
        // Predicated region
        $region65: #{transformer_recognizer_forward.5} parent=23 // pred_check
          %p681 = pneg %p335
        $region66: #{transformer_recognizer_forward.5} parent=23 // pred_check_branch
          %683 = sbr.rel (%p681) target = $region68
        $region67: #{transformer_recognizer_forward.5} parent=23 // pred_region
          %s684 = sand.u32 %s43, 1
          %s685 = scalar_lea.sflag [#allocation15], %s684
          %s686 = sand.u32 %s325, 1
          %s687 = smul.addr %s686, 1024
          %s688 = scalar_lea.vmem [#allocation16], %s687
          %s690 = ssub.s32 16384, 16384
          %691 = vsyncadd %s685, %s690
          %s692 = smul.addr %s51, 256
          %s693 = smul.addr %s692, 64
          %s694 = scalar_lea.hbm %s10, %s693
          %s695 = sshll.u32 %s688, 4
          %s696 = int_to_ptr.vmem [resolvable:$true] %s695
          %701 = dma.hbm_to_vmem [thread:$0]  %s694, 16384, %s696, %s685, 64, 64, 4
        $region68: #{transformer_recognizer_forward.5} parent=23 // pred_fallthru
          _
        // Predicated region
        $region69: #{transformer_recognizer_forward.5} parent=23 // pred_check
          %p702 = pneg %p361
        $region70: #{transformer_recognizer_forward.5} parent=23 // pred_check_branch
          %704 = sbr.rel (%p702) target = $region72
        $region71: #{transformer_recognizer_forward.5} parent=23 // pred_region
          %s705 = sand.u32 %s43, 1
          %s706 = scalar_lea.sflag [#allocation18], %s705
          %s707 = sand.u32 %s351, 1
          %s708 = scalar_lea.vmem [#allocation17], %s707
          %s710 = ssub.s32 16, 16
          %711 = vsyncadd %s706, %s710
          %s712 = smul.addr %s51, 16
          %s713 = scalar_lea.hbm %s11, %s712
          %s715 = sshll.u32 %s708, 4
          %s716 = int_to_ptr.vmem [resolvable:$true] %s715
          %718 = dma.hbm_to_vmem [thread:$0]  %s713, 16, %s716, %s706
        $region72: #{transformer_recognizer_forward.5} parent=23 // pred_fallthru
          _
        // Predicated region
        $region73: #{transformer_recognizer_forward.5} parent=23 // pred_check
          %p719 = pneg %p387
        $region74: #{transformer_recognizer_forward.5} parent=23 // pred_check_branch
          %721 = sbr.rel (%p719) target = $region76
        $region75: #{transformer_recognizer_forward.5} parent=23 // pred_region
          %s722 = sand.u32 %s43, 1
          %s723 = scalar_lea.sflag [#allocation18], %s722
          %s724 = sand.u32 %s377, 1
          %s725 = scalar_lea.vmem [#allocation19], %s724
          %s727 = ssub.s32 16, 16
          %728 = vsyncadd %s723, %s727
          %s729 = smul.addr %s51, 16
          %s730 = scalar_lea.hbm %s12, %s729
          %s732 = sshll.u32 %s725, 4
          %s733 = int_to_ptr.vmem [resolvable:$true] %s732
          %735 = dma.hbm_to_vmem [thread:$0]  %s730, 16, %s733, %s723
        $region76: #{transformer_recognizer_forward.5} parent=23 // pred_fallthru
          _
        // Predicated region
        $region77: #{transformer_recognizer_forward.5} parent=23 // pred_check
          %p736 = pneg %p413
        $region78: #{transformer_recognizer_forward.5} parent=23 // pred_check_branch
          %738 = sbr.rel (%p736) target = $region80
        $region79: #{transformer_recognizer_forward.5} parent=23 // pred_region
          %s739 = sand.u32 %s403, 1
          %s740 = scalar_lea.sflag [#allocation21], %s739
          %s741 = sand.u32 %s403, 1
          %s742 = scalar_lea.vmem [#allocation20], %s741
          %s744 = ssub.s32 16, 16
          %745 = vsyncadd %s740, %s744
          %s746 = smul.addr %s51, 16
          %s747 = scalar_lea.hbm %s13, %s746
          %s749 = sshll.u32 %s742, 4
          %s750 = int_to_ptr.vmem [resolvable:$true] %s749
          %752 = dma.hbm_to_vmem [thread:$0]  %s747, 16, %s750, %s740
        $region80: #{transformer_recognizer_forward.5} parent=23 // pred_fallthru
          _
      $region24: #{transformer_recognizer_forward.5} parent=5 // pred_fallthru
        _
      %p753 = scmp.le.s32.totalorder 1, %s43
      %p754 = scmp.lt.s32.totalorder %s43, 5
      %p755 = pnand %p753, %p754
      %p756 = pneg %p755
      // Predicated region
      $region81: #{transformer_recognizer_forward.5} parent=5 // pred_check
        _
      $region82: #{transformer_recognizer_forward.5} parent=5 // pred_check_branch
        %758 = sbr.rel (%p755) target = $region84
      $region83: #{transformer_recognizer_forward.5} parent=5 // pred_region
        %s759 = ssub.s32 %s43, 1
        %s760 = sand.u32 %s120, 1
        %s761 = scalar_lea.sflag [#allocation4], %s760
        %s762 = sand.u32 %s120, 1
        %s763 = smul.addr %s762, 192
        %s764 = scalar_lea.vmem [#allocation3], %s763
        // Predicated region
        $region85: #{transformer_recognizer_forward.5} parent=83 // pred_check
          %p765 = pneg %p133
        $region86: #{transformer_recognizer_forward.5} parent=83 // pred_check_branch
          %767 = sbr.rel (%p765) target = $region88
        $region87: #{transformer_recognizer_forward.5} parent=83 // pred_region
          %768 = dma.done %s761, 3072
        $region88: #{transformer_recognizer_forward.5} parent=83 // pred_fallthru
          _
        %s769 = sand.u32 %s48, 1
        %s770 = scalar_lea.sflag [#allocation6], %s769
        %s771 = sand.u32 %s146, 1
        %s772 = smul.addr %s771, 3
        %s773 = scalar_lea.vmem [#allocation5], %s772
        // Predicated region
        $region89: #{transformer_recognizer_forward.5} parent=83 // pred_check
          %p774 = pneg %p159
        $region90: #{transformer_recognizer_forward.5} parent=83 // pred_check_branch
          %776 = sbr.rel (%p774) target = $region92
        $region91: #{transformer_recognizer_forward.5} parent=83 // pred_region
          %777 = dma.done %s770, 48
        $region92: #{transformer_recognizer_forward.5} parent=83 // pred_fallthru
          _
        %s778 = sand.u32 %s48, 1
        %s779 = scalar_lea.sflag [#allocation6], %s778
        %s780 = sand.u32 %s172, 1
        %s781 = smul.addr %s780, 64
        %s782 = scalar_lea.vmem [#allocation7], %s781
        // Predicated region
        $region93: #{transformer_recognizer_forward.5} parent=83 // pred_check
          %p783 = pneg %p185
        $region94: #{transformer_recognizer_forward.5} parent=83 // pred_check_branch
          %785 = sbr.rel (%p783) target = $region96
        $region95: #{transformer_recognizer_forward.5} parent=83 // pred_region
          %786 = dma.done %s779, 1024
        $region96: #{transformer_recognizer_forward.5} parent=83 // pred_fallthru
          _
        %s787 = sand.u32 %s48, 1
        %s788 = scalar_lea.sflag [#allocation9], %s787
        %s789 = sand.u32 %s198, 1
        %s790 = scalar_lea.vmem [#allocation8], %s789
        // Predicated region
        $region97: #{transformer_recognizer_forward.5} parent=83 // pred_check
          %p791 = pneg %p211
        $region98: #{transformer_recognizer_forward.5} parent=83 // pred_check_branch
          %793 = sbr.rel (%p791) target = $region100
        $region99: #{transformer_recognizer_forward.5} parent=83 // pred_region
          %794 = dma.done %s788, 16
        $region100: #{transformer_recognizer_forward.5} parent=83 // pred_fallthru
          _
        %s795 = sand.u32 %s48, 1
        %s796 = scalar_lea.sflag [#allocation9], %s795
        %s797 = sand.u32 %s224, 1
        %s798 = scalar_lea.vmem [#allocation10], %s797
        // Predicated region
        $region101: #{transformer_recognizer_forward.5} parent=83 // pred_check
          %p799 = pneg %p237
        $region102: #{transformer_recognizer_forward.5} parent=83 // pred_check_branch
          %801 = sbr.rel (%p799) target = $region104
        $region103: #{transformer_recognizer_forward.5} parent=83 // pred_region
          %802 = dma.done %s796, 16
        $region104: #{transformer_recognizer_forward.5} parent=83 // pred_fallthru
          _
        %s803 = sand.u32 %s48, 1
        %s804 = scalar_lea.sflag [#allocation12], %s803
        %s805 = sand.u32 %s250, 1
        %s806 = scalar_lea.vmem [#allocation11], %s805
        // Predicated region
        $region105: #{transformer_recognizer_forward.5} parent=83 // pred_check
          %p807 = pneg %p263
        $region106: #{transformer_recognizer_forward.5} parent=83 // pred_check_branch
          %809 = sbr.rel (%p807) target = $region108
        $region107: #{transformer_recognizer_forward.5} parent=83 // pred_region
          %810 = dma.done %s804, 16
        $region108: #{transformer_recognizer_forward.5} parent=83 // pred_fallthru
          _
        %s811 = sand.u32 %s48, 1
        %s812 = scalar_lea.sflag [#allocation12], %s811
        %s813 = sand.u32 %s276, 1
        %s814 = smul.addr %s813, 1024
        %s815 = scalar_lea.vmem [#allocation13], %s814
        // Predicated region
        $region109: #{transformer_recognizer_forward.5} parent=83 // pred_check
          %p816 = pneg %p289
        $region110: #{transformer_recognizer_forward.5} parent=83 // pred_check_branch
          %818 = sbr.rel (%p816) target = $region112
        $region111: #{transformer_recognizer_forward.5} parent=83 // pred_region
          %819 = dma.done %s812, 16384
        $region112: #{transformer_recognizer_forward.5} parent=83 // pred_fallthru
          _
        %s820 = sand.u32 %s48, 1
        %s821 = scalar_lea.sflag [#allocation15], %s820
        %s822 = sand.u32 %s302, 1
        %s823 = smul.addr %s822, 16
        %s824 = scalar_lea.vmem [#allocation14], %s823
        // Predicated region
        $region113: #{transformer_recognizer_forward.5} parent=83 // pred_check
          %p825 = pneg %p315
        $region114: #{transformer_recognizer_forward.5} parent=83 // pred_check_branch
          %827 = sbr.rel (%p825) target = $region116
        $region115: #{transformer_recognizer_forward.5} parent=83 // pred_region
          %828 = dma.done %s821, 256
        $region116: #{transformer_recognizer_forward.5} parent=83 // pred_fallthru
          _
        %s829 = sand.u32 %s48, 1
        %s830 = scalar_lea.sflag [#allocation15], %s829
        %s831 = sand.u32 %s328, 1
        %s832 = smul.addr %s831, 1024
        %s833 = scalar_lea.vmem [#allocation16], %s832
        // Predicated region
        $region117: #{transformer_recognizer_forward.5} parent=83 // pred_check
          %p834 = pneg %p341
        $region118: #{transformer_recognizer_forward.5} parent=83 // pred_check_branch
          %836 = sbr.rel (%p834) target = $region120
        $region119: #{transformer_recognizer_forward.5} parent=83 // pred_region
          %837 = dma.done %s830, 16384
        $region120: #{transformer_recognizer_forward.5} parent=83 // pred_fallthru
          _
        %s838 = sand.u32 %s48, 1
        %s839 = scalar_lea.sflag [#allocation18], %s838
        %s840 = sand.u32 %s354, 1
        %s841 = scalar_lea.vmem [#allocation17], %s840
        // Predicated region
        $region121: #{transformer_recognizer_forward.5} parent=83 // pred_check
          %p842 = pneg %p367
        $region122: #{transformer_recognizer_forward.5} parent=83 // pred_check_branch
          %844 = sbr.rel (%p842) target = $region124
        $region123: #{transformer_recognizer_forward.5} parent=83 // pred_region
          %845 = dma.done %s839, 16
        $region124: #{transformer_recognizer_forward.5} parent=83 // pred_fallthru
          _
        %s846 = sand.u32 %s48, 1
        %s847 = scalar_lea.sflag [#allocation18], %s846
        %s848 = sand.u32 %s380, 1
        %s849 = scalar_lea.vmem [#allocation19], %s848
        // Predicated region
        $region125: #{transformer_recognizer_forward.5} parent=83 // pred_check
          %p850 = pneg %p393
        $region126: #{transformer_recognizer_forward.5} parent=83 // pred_check_branch
          %852 = sbr.rel (%p850) target = $region128
        $region127: #{transformer_recognizer_forward.5} parent=83 // pred_region
          %853 = dma.done %s847, 16
        $region128: #{transformer_recognizer_forward.5} parent=83 // pred_fallthru
          _
        %s854 = sand.u32 %s406, 1
        %s855 = scalar_lea.sflag [#allocation21], %s854
        %s856 = sand.u32 %s406, 1
        %s857 = scalar_lea.vmem [#allocation20], %s856
        // Predicated region
        $region129: #{transformer_recognizer_forward.5} parent=83 // pred_check
          %p858 = pneg %p419
        $region130: #{transformer_recognizer_forward.5} parent=83 // pred_check_branch
          %860 = sbr.rel (%p858) target = $region132
        $region131: #{transformer_recognizer_forward.5} parent=83 // pred_region
          %861 = dma.done %s855, 16
        $region132: #{transformer_recognizer_forward.5} parent=83 // pred_fallthru
          _
        %s862 = smul.u32 2, %s52
        %p863 = scmp.lt.s32.totalorder %s862, 3
        %s864 = scalar_select %p863, %s862, 3
        %s865 = smul.addr %s864, 2
        %s866 = scalar_lea.vmem %s0, %s865
        %p867 = pneg %p81
        %p868 = pneg %p78
        %s869 = smul.u32 2, %s52
        %p870 = scmp.lt.s32.totalorder %s869, 3
        %s871 = scalar_select %p870, %s869, 3
        %s872 = scalar_lea.vmem %s1, %s871
        %p873 = pneg %p107
        %p874 = pneg %p104
        %s875 = sand.u32 %s120, 1
        %s876 = scalar_lea.sflag [#allocation4], %s875
        %s877 = sand.u32 %s120, 1
        %s878 = smul.addr %s877, 192
        %s879 = scalar_lea.vmem [#allocation3], %s878
        %p880 = pneg %p133
        %p881 = pneg %p130
        %s882 = sand.u32 %s48, 1
        %s883 = scalar_lea.sflag [#allocation6], %s882
        %s884 = sand.u32 %s146, 1
        %s885 = smul.addr %s884, 3
        %s886 = scalar_lea.vmem [#allocation5], %s885
        %p887 = pneg %p159
        %p888 = pneg %p156
        %s889 = sand.u32 %s48, 1
        %s890 = scalar_lea.sflag [#allocation6], %s889
        %s891 = sand.u32 %s172, 1
        %s892 = smul.addr %s891, 64
        %s893 = scalar_lea.vmem [#allocation7], %s892
        %p894 = pneg %p185
        %p895 = pneg %p182
        %s896 = sand.u32 %s48, 1
        %s897 = scalar_lea.sflag [#allocation9], %s896
        %s898 = sand.u32 %s198, 1
        %s899 = scalar_lea.vmem [#allocation8], %s898
        %p900 = pneg %p211
        %p901 = pneg %p208
        %s902 = sand.u32 %s48, 1
        %s903 = scalar_lea.sflag [#allocation9], %s902
        %s904 = sand.u32 %s224, 1
        %s905 = scalar_lea.vmem [#allocation10], %s904
        %p906 = pneg %p237
        %p907 = pneg %p234
        %s908 = sand.u32 %s48, 1
        %s909 = scalar_lea.sflag [#allocation12], %s908
        %s910 = sand.u32 %s250, 1
        %s911 = scalar_lea.vmem [#allocation11], %s910
        %p912 = pneg %p263
        %p913 = pneg %p260
        %s914 = sand.u32 %s48, 1
        %s915 = scalar_lea.sflag [#allocation12], %s914
        %s916 = sand.u32 %s276, 1
        %s917 = smul.addr %s916, 1024
        %s918 = scalar_lea.vmem [#allocation13], %s917
        %p919 = pneg %p289
        %p920 = pneg %p286
        %s921 = sand.u32 %s48, 1
        %s922 = scalar_lea.sflag [#allocation15], %s921
        %s923 = sand.u32 %s302, 1
        %s924 = smul.addr %s923, 16
        %s925 = scalar_lea.vmem [#allocation14], %s924
        %p926 = pneg %p315
        %p927 = pneg %p312
        %s928 = sand.u32 %s48, 1
        %s929 = scalar_lea.sflag [#allocation15], %s928
        %s930 = sand.u32 %s328, 1
        %s931 = smul.addr %s930, 1024
        %s932 = scalar_lea.vmem [#allocation16], %s931
        %p933 = pneg %p341
        %p934 = pneg %p338
        %s935 = sand.u32 %s48, 1
        %s936 = scalar_lea.sflag [#allocation18], %s935
        %s937 = sand.u32 %s354, 1
        %s938 = scalar_lea.vmem [#allocation17], %s937
        %p939 = pneg %p367
        %p940 = pneg %p364
        %s941 = sand.u32 %s48, 1
        %s942 = scalar_lea.sflag [#allocation18], %s941
        %s943 = sand.u32 %s380, 1
        %s944 = scalar_lea.vmem [#allocation19], %s943
        %p945 = pneg %p393
        %p946 = pneg %p390
        %s947 = sand.u32 %s406, 1
        %s948 = scalar_lea.sflag [#allocation21], %s947
        %s949 = sand.u32 %s406, 1
        %s950 = scalar_lea.vmem [#allocation20], %s949
        %p951 = pneg %p419
        %p952 = pneg %p416
        %p953 = pneg %p440
        %p954 = pneg %p437
        %p955 = pneg %p461
        %p956 = pneg %p458
        %p957 = pneg %p487
        %p958 = pneg %p484
        %s959 = smul.u32 2, %s52
        %p960 = scmp.lt.s32.totalorder %s959, 3
        %s961 = scalar_select %p960, %s959, 3
        %s962 = smul.addr %s961, 4
        %s963 = scalar_lea.vmem %s16, %s962
        %s964 = smul.u32 2, %s52
        %p965 = scmp.lt.s32.totalorder %s964, 3
        %s966 = scalar_select %p965, %s964, 3
        %s967 = smul.addr %s966, 2
        %s968 = scalar_lea.vmem %s0, %s967
        %s969 = smul.u32 2, %s52
        %s970 = smul.u32 2, %s52
        %p971 = scmp.lt.s32.totalorder %s970, 3
        %s972 = scalar_select %p971, %s970, 3
        %s973 = scalar_lea.vmem %s1, %s972
        %s974 = smul.u32 2, %s52
        %s975 = smul.u32 2, %s52
        %p976 = scmp.lt.s32.totalorder %s975, 3
        %s977 = scalar_select %p976, %s975, 3
        %s978 = smul.addr %s977, 4
        %s979 = scalar_lea.vmem %s16, %s978
        %s980 = smul.u32 2, %s52
        %p982 = scmp.eq.s32.totalorder %s53, 0
        // Predicated region
        $region133: #{transformer_recognizer_forward.5} parent=83 // pred_check
          %p983 = pneg %p982
        $region134: #{transformer_recognizer_forward.5} parent=83 // pred_check_branch
          %985 = sbr.rel (%p983) target = $region136
        $region135: #{transformer_recognizer_forward.5} parent=83 // pred_region
          %v986 = vld [vmem:[%s968] sm:$0x3]
          %v987 = vld [vmem:[%s968 + $0x2] sm:$0x3]
          %v988 = vunpack.c.l.bf16 %v986
          %v989 = vunpack.c.l.bf16 %v987
          %v990 = vld [vmem:[%s973] sm:$0x1]
          %v991 = vld [vmem:[%s973 + $0x1] sm:$0x1]
          %v994 = vlaneseq
          %v995 = vshrl.u32 %v994, 7
          %v996 = vsub.s32 0, %v995
          %v997 = vrot.slane %v990, %v996
          %v998 = vlaneseq
          %v999 = vshrl.u32 %v998, 7
          %v1000 = vsub.s32 0, %v999
          %v1001 = vrot.slane %v991, %v1000
          %v1004 = vadd.f32 %v988, %v997
          %v1005 = vadd.f32 %v989, %v1001
          %v1008 = vcombine.low %v1004, %v1005
          %1010 = vst [vmem:[#allocation2] sm:$0xff] %v1008
        $region136: #{transformer_recognizer_forward.5} parent=83 // pred_fallthru
          _
        %v1011 = vld [vmem:[#allocation2] sm:$0xff]
        %v1012 = vpack.c.bf16 %v1011, %v1011
        %v1013 = vld [vmem:[%s764] sm:$0xff]
        %v1014 = vld [vmem:[%s764 + $0x8] sm:$0xf]
        %v1015 = vld [vmem:[%s764 + $0xc] sm:$0xff]
        %v1016 = vld [vmem:[%s764 + $0x14] sm:$0xf]
        %v1017 = vld [vmem:[%s764 + $0x18] sm:$0xff]
        %v1018 = vld [vmem:[%s764 + $0x20] sm:$0xf]
        %v1019 = vld [vmem:[%s764 + $0x24] sm:$0xff]
        %v1020 = vld [vmem:[%s764 + $0x2c] sm:$0xf]
        %v1021 = vld [vmem:[%s764 + $0x30] sm:$0xff]
        %v1022 = vld [vmem:[%s764 + $0x38] sm:$0xf]
        %v1023 = vld [vmem:[%s764 + $0x3c] sm:$0xff]
        %v1024 = vld [vmem:[%s764 + $0x44] sm:$0xf]
        %v1025 = vld [vmem:[%s764 + $0x48] sm:$0xff]
        %v1026 = vld [vmem:[%s764 + $0x50] sm:$0xf]
        %v1027 = vld [vmem:[%s764 + $0x54] sm:$0xff]
        %v1028 = vld [vmem:[%s764 + $0x5c] sm:$0xf]
        %v1029 = vld [vmem:[%s764 + $0x60] sm:$0xff]
        %v1030 = vld [vmem:[%s764 + $0x68] sm:$0xf]
        %v1031 = vld [vmem:[%s764 + $0x6c] sm:$0xff]
        %v1032 = vld [vmem:[%s764 + $0x74] sm:$0xf]
        %v1033 = vld [vmem:[%s764 + $0x78] sm:$0xff]
        %v1034 = vld [vmem:[%s764 + $0x80] sm:$0xf]
        %v1035 = vld [vmem:[%s764 + $0x84] sm:$0xff]
        %v1036 = vld [vmem:[%s764 + $0x8c] sm:$0xf]
        %v1037 = vld [vmem:[%s764 + $0x90] sm:$0xff]
        %v1038 = vld [vmem:[%s764 + $0x98] sm:$0xf]
        %v1039 = vld [vmem:[%s764 + $0x9c] sm:$0xff]
        %v1040 = vld [vmem:[%s764 + $0xa4] sm:$0xf]
        %v1041 = vld [vmem:[%s764 + $0xa8] sm:$0xff]
        %v1042 = vld [vmem:[%s764 + $0xb0] sm:$0xf]
        %v1043 = vld [vmem:[%s764 + $0xb4] sm:$0xff]
        %v1044 = vld [vmem:[%s764 + $0xbc] sm:$0xf]
        %v1045 = vld [vmem:[%s773] sm:$0x7]
        %v1047 = vlaneseq
        %v1048 = vshrl.u32 %v1047, 7
        %v1049 = vsub.s32 0, %v1048
        %v1050 = vrot.slane %v1045, %v1049
        %v1051 = vlaneseq
        %v1052 = vshrl.u32 %v1051, 7
        %v1053 = vsub.s32 1, %v1052
        %v1054 = vrot.slane %v1045, %v1053
        %v1055 = vlaneseq
        %v1056 = vshrl.u32 %v1055, 7
        %v1057 = vsub.s32 2, %v1056
        %v1058 = vrot.slane %v1045, %v1057
        %v1094 = vunpack.c.l.b16 %v1013
        %v1095 = vunpack.c.h.b16 %v1013
        %v1096 = vunpack.c.l.b16 %v1014
        %v1097 = vunpack.c.l.b16 %v1015
        %v1098 = vunpack.c.h.b16 %v1015
        %v1099 = vunpack.c.l.b16 %v1016
        %v1100 = vunpack.c.l.b16 %v1017
        %v1101 = vunpack.c.h.b16 %v1017
        %v1102 = vunpack.c.l.b16 %v1018
        %v1103 = vunpack.c.l.b16 %v1019
        %v1104 = vunpack.c.h.b16 %v1019
        %v1105 = vunpack.c.l.b16 %v1020
        %v1106 = vunpack.c.l.b16 %v1021
        %v1107 = vunpack.c.h.b16 %v1021
        %v1108 = vunpack.c.l.b16 %v1022
        %v1109 = vunpack.c.l.b16 %v1023
        %v1110 = vunpack.c.h.b16 %v1023
        %v1111 = vunpack.c.l.b16 %v1024
        %v1112 = vunpack.c.l.b16 %v1025
        %v1113 = vunpack.c.h.b16 %v1025
        %v1114 = vunpack.c.l.b16 %v1026
        %v1115 = vunpack.c.l.b16 %v1027
        %v1116 = vunpack.c.h.b16 %v1027
        %v1117 = vunpack.c.l.b16 %v1028
        %v1118 = vunpack.c.l.b16 %v1029
        %v1119 = vunpack.c.h.b16 %v1029
        %v1120 = vunpack.c.l.b16 %v1030
        %v1121 = vunpack.c.l.b16 %v1031
        %v1122 = vunpack.c.h.b16 %v1031
        %v1123 = vunpack.c.l.b16 %v1032
        %v1124 = vunpack.c.l.b16 %v1033
        %v1125 = vunpack.c.h.b16 %v1033
        %v1126 = vunpack.c.l.b16 %v1034
        %v1127 = vunpack.c.l.b16 %v1035
        %v1128 = vunpack.c.h.b16 %v1035
        %v1129 = vunpack.c.l.b16 %v1036
        %v1130 = vunpack.c.l.b16 %v1037
        %v1131 = vunpack.c.h.b16 %v1037
        %v1132 = vunpack.c.l.b16 %v1038
        %v1133 = vunpack.c.l.b16 %v1039
        %v1134 = vunpack.c.h.b16 %v1039
        %v1135 = vunpack.c.l.b16 %v1040
        %v1136 = vunpack.c.l.b16 %v1041
        %v1137 = vunpack.c.h.b16 %v1041
        %v1138 = vunpack.c.l.b16 %v1042
        %v1139 = vunpack.c.l.b16 %v1043
        %v1140 = vunpack.c.h.b16 %v1043
        %v1141 = vunpack.c.l.b16 %v1044
        %v1142 = vpack.c.b16 %v1097, %v1094
        %v1143 = vpack.c.b16 %v1098, %v1095
        %v1144 = vpack.c.b16 %v1099, %v1096
        %v1145 = vpack.c.b16 %v1103, %v1100
        %v1146 = vpack.c.b16 %v1104, %v1101
        %v1147 = vpack.c.b16 %v1105, %v1102
        %v1148 = vpack.c.b16 %v1109, %v1106
        %v1149 = vpack.c.b16 %v1110, %v1107
        %v1150 = vpack.c.b16 %v1111, %v1108
        %v1151 = vpack.c.b16 %v1115, %v1112
        %v1152 = vpack.c.b16 %v1116, %v1113
        %v1153 = vpack.c.b16 %v1117, %v1114
        %v1154 = vpack.c.b16 %v1121, %v1118
        %v1155 = vpack.c.b16 %v1122, %v1119
        %v1156 = vpack.c.b16 %v1123, %v1120
        %v1157 = vpack.c.b16 %v1127, %v1124
        %v1158 = vpack.c.b16 %v1128, %v1125
        %v1159 = vpack.c.b16 %v1129, %v1126
        %v1160 = vpack.c.b16 %v1133, %v1130
        %v1161 = vpack.c.b16 %v1134, %v1131
        %v1162 = vpack.c.b16 %v1135, %v1132
        %v1163 = vpack.c.b16 %v1139, %v1136
        %v1164 = vpack.c.b16 %v1140, %v1137
        %v1165 = vpack.c.b16 %v1141, %v1138
        %1190 = vmatprep.subr.bf16.mxu0 %v1164
        %1191 = vmatpush1.bf16.msra.mxu0 %v1163
        %1192 = vmatprep.subr.bf16.mxu0 %v1161
        %1193 = vmatpush1.bf16.msra.mxu0 %v1160
        %1194 = vmatprep.subr.bf16.mxu0 %v1158
        %1195 = vmatpush1.bf16.msra.mxu0 %v1157
        %1196 = vmatprep.subr.bf16.mxu0 %v1155
        %1197 = vmatpush1.bf16.msra.mxu0 %v1154
        %1198 = vmatprep.subr.bf16.mxu0 %v1152
        %1199 = vmatpush1.bf16.msra.mxu0 %v1151
        %1200 = vmatprep.subr.bf16.mxu0 %v1149
        %1201 = vmatpush1.bf16.msra.mxu0 %v1148
        %1202 = vmatprep.subr.bf16.mxu0 %v1146
        %1203 = vmatpush1.bf16.msra.mxu0 %v1145
        %1204 = vmatprep.subr.bf16.mxu0 %v1143
        %1205 = vmatpush1.bf16.msra.mxu0 %v1142
        %1206 = vmatprep.subr.bf16.mxu0 0
        %1207 = vmatpush2.bf16.msra.mxu0 0
        %1208 = vmatprep.subr.bf16.mxu0 0
        %1209 = vmatpush2.bf16.msra.mxu0 0
        %1210 = vmatprep.subr.bf16.mxu0 0
        %1211 = vmatpush2.bf16.msra.mxu0 0
        %1212 = vmatprep.subr.bf16.mxu0 0
        %1213 = vmatpush2.bf16.msra.mxu0 0
        %1214 = vmatprep.subr.bf16.mxu0 0
        %1215 = vmatpush2.bf16.msra.mxu0 0
        %1216 = vmatprep.subr.bf16.mxu0 0
        %1217 = vmatpush2.bf16.msra.mxu0 0
        %1218 = vmatprep.subr.bf16.mxu0 0
        %1219 = vmatpush2.bf16.msra.mxu0 0
        %1220 = vmatprep.subr.bf16.mxu0 0
        %1221 = vmatpush2.bf16.msra.mxu0 0
        %1222 = vmatprep.mubr.bf16.mxu0 0
        %1223 = vmatmul.mubr.bf16.gmra.mxu0 %v1012
        %v1224 = vpop.f32.mrf.mxu0
        %v1225 = vadd.f32 %v1050, %v1224
        %v1226 = vpop.f32.mrf.mxu0
        %v1227 = vadd.f32 %v1054, %v1226
        %v1228 = vpop.f32.mrf.mxu0
        %v1229 = vpop.f32.mrf.mxu0
        %1230 = vdwg.mxu0
        %1231 = vmatprep.subr.bf16.mxu0 0
        %1232 = vmatpush1.bf16.msra.mxu0 %v1165
        %1233 = vmatprep.subr.bf16.mxu0 0
        %1234 = vmatpush1.bf16.msra.mxu0 %v1162
        %1235 = vmatprep.subr.bf16.mxu0 0
        %1236 = vmatpush1.bf16.msra.mxu0 %v1159
        %1237 = vmatprep.subr.bf16.mxu0 0
        %1238 = vmatpush1.bf16.msra.mxu0 %v1156
        %1239 = vmatprep.subr.bf16.mxu0 0
        %1240 = vmatpush1.bf16.msra.mxu0 %v1153
        %1241 = vmatprep.subr.bf16.mxu0 0
        %1242 = vmatpush1.bf16.msra.mxu0 %v1150
        %1243 = vmatprep.subr.bf16.mxu0 0
        %1244 = vmatpush1.bf16.msra.mxu0 %v1147
        %1245 = vmatprep.subr.bf16.mxu0 0
        %1246 = vmatpush1.bf16.msra.mxu0 %v1144
        %1247 = vmatprep.subr.bf16.mxu0 0
        %1248 = vmatpush2.bf16.msra.mxu0 0
        %1249 = vmatprep.subr.bf16.mxu0 0
        %1250 = vmatpush2.bf16.msra.mxu0 0
        %1251 = vmatprep.subr.bf16.mxu0 0
        %1252 = vmatpush2.bf16.msra.mxu0 0
        %1253 = vmatprep.subr.bf16.mxu0 0
        %1254 = vmatpush2.bf16.msra.mxu0 0
        %1255 = vmatprep.subr.bf16.mxu0 0
        %1256 = vmatpush2.bf16.msra.mxu0 0
        %1257 = vmatprep.subr.bf16.mxu0 0
        %1258 = vmatpush2.bf16.msra.mxu0 0
        %1259 = vmatprep.subr.bf16.mxu0 0
        %1260 = vmatpush2.bf16.msra.mxu0 0
        %1261 = vmatprep.subr.bf16.mxu0 0
        %1262 = vmatpush2.bf16.msra.mxu0 0
        %1263 = vmatprep.mubr.bf16.mxu0 0
        %1264 = vmatmul.mubr.bf16.gmra.mxu0 %v1012
        %v1265 = vpop.f32.mrf.mxu0
        %v1266 = vadd.f32 %v1058, %v1265
        %v1267 = vpop.f32.mrf.mxu0
        %v1268 = vpop.f32.mrf.mxu0
        %v1269 = vpop.f32.mrf.mxu0
        %1270 = vdwg.mxu0
        %1272 = vrot.lane.b32.xlu0 %v1225, 96
        %v1273 = vpop.permute.xlu0 %1272
        %1275 = vrot.lane.b32.xlu0 %v1225, 64
        %v1276 = vpop.permute.xlu0 %1275
        %1278 = vrot.lane.b32.xlu0 %v1225, 32
        %v1279 = vpop.permute.xlu0 %1278
        %v1281 = vcombine.high %v1225, %v1225
        %v1282 = vcombine.high %v1273, %v1273
        %v1283 = vcombine.high %v1276, %v1276
        %v1284 = vcombine.high %v1279, %v1279
        %v1289 = vpack.c.bf16 %v1225, %v1225
        %v1290 = vpack.c.bf16 %v1281, %v1281
        %v1291 = vpack.c.bf16 %v1273, %v1273
        %v1292 = vpack.c.bf16 %v1282, %v1282
        %v1293 = vpack.c.bf16 %v1276, %v1276
        %v1294 = vpack.c.bf16 %v1283, %v1283
        %v1295 = vpack.c.bf16 %v1279, %v1279
        %v1296 = vpack.c.bf16 %v1284, %v1284
        %1298 = vrot.lane.b32.xlu0 %v1227, 96
        %v1299 = vpop.permute.xlu0 %1298
        %1301 = vrot.lane.b32.xlu0 %v1227, 64
        %v1302 = vpop.permute.xlu0 %1301
        %1304 = vrot.lane.b32.xlu0 %v1227, 32
        %v1305 = vpop.permute.xlu0 %1304
        %v1307 = vcombine.high %v1227, %v1227
        %v1308 = vcombine.high %v1299, %v1299
        %v1309 = vcombine.high %v1302, %v1302
        %v1310 = vcombine.high %v1305, %v1305
        %v1315 = vpack.c.bf16 %v1227, %v1227
        %v1316 = vpack.c.bf16 %v1307, %v1307
        %v1317 = vpack.c.bf16 %v1299, %v1299
        %v1318 = vpack.c.bf16 %v1308, %v1308
        %v1319 = vpack.c.bf16 %v1302, %v1302
        %v1320 = vpack.c.bf16 %v1309, %v1309
        %v1321 = vpack.c.bf16 %v1305, %v1305
        %v1322 = vpack.c.bf16 %v1310, %v1310
        %1324 = vrot.lane.b32.xlu0 %v1266, 96
        %v1325 = vpop.permute.xlu0 %1324
        %1327 = vrot.lane.b32.xlu0 %v1266, 64
        %v1328 = vpop.permute.xlu0 %1327
        %1330 = vrot.lane.b32.xlu0 %v1266, 32
        %v1331 = vpop.permute.xlu0 %1330
        %v1333 = vcombine.high %v1266, %v1266
        %v1334 = vcombine.high %v1325, %v1325
        %v1335 = vcombine.high %v1328, %v1328
        %v1336 = vcombine.high %v1331, %v1331
        %v1341 = vpack.c.bf16 %v1266, %v1266
        %v1342 = vpack.c.bf16 %v1333, %v1333
        %v1343 = vpack.c.bf16 %v1325, %v1325
        %v1344 = vpack.c.bf16 %v1334, %v1334
        %v1345 = vpack.c.bf16 %v1328, %v1328
        %v1346 = vpack.c.bf16 %v1335, %v1335
        %v1347 = vpack.c.bf16 %v1331, %v1331
        %v1348 = vpack.c.bf16 %v1336, %v1336
        %vm1349 = vcmask 261120
        %v1351 = vsel %vm1349, %v1289, 0
        %v1354 = vsel %vm1349, %v1315, 0
        %1356 = vmatprep.subr.bf16.mxu0 0
        %1357 = vmatpush1.bf16.xpose.msra.mxu0 0
        %1358 = vmatprep.subr.bf16.mxu0 0
        %1359 = vmatpush1.bf16.xpose.msra.mxu0 0
        %1360 = vmatprep.subr.bf16.mxu0 0
        %1361 = vmatpush1.bf16.xpose.msra.mxu0 0
        %1362 = vmatprep.subr.bf16.mxu0 0
        %1363 = vmatpush1.bf16.xpose.msra.mxu0 0
        %1364 = vmatprep.subr.bf16.mxu0 0
        %1365 = vmatpush1.bf16.xpose.msra.mxu0 0
        %1366 = vmatprep.subr.bf16.mxu0 0
        %1367 = vmatpush1.bf16.xpose.msra.mxu0 0
        %1368 = vmatprep.subr.bf16.mxu0 0
        %1369 = vmatpush1.bf16.xpose.msra.mxu0 0
        %1370 = vmatprep.subr.bf16.mxu0 0
        %1371 = vmatpush1.bf16.xpose.msra.mxu0 %v1354
        %1372 = vmatprep.subr.bf16.mxu0 0
        %1373 = vmatpush2.bf16.xpose.msra.mxu0 0
        %1374 = vmatprep.subr.bf16.mxu0 0
        %1375 = vmatpush2.bf16.xpose.msra.mxu0 0
        %1376 = vmatprep.subr.bf16.mxu0 0
        %1377 = vmatpush2.bf16.xpose.msra.mxu0 0
        %1378 = vmatprep.subr.bf16.mxu0 0
        %1379 = vmatpush2.bf16.xpose.msra.mxu0 0
        %1380 = vmatprep.subr.bf16.mxu0 0
        %1381 = vmatpush2.bf16.xpose.msra.mxu0 0
        %1382 = vmatprep.subr.bf16.mxu0 0
        %1383 = vmatpush2.bf16.xpose.msra.mxu0 0
        %1384 = vmatprep.subr.bf16.mxu0 0
        %1385 = vmatpush2.bf16.xpose.msra.mxu0 0
        %1386 = vmatprep.subr.bf16.mxu0 0
        %1387 = vmatpush2.bf16.xpose.msra.mxu0 0
        %1388 = vmatprep.mubr.bf16.mxu0 0
        %1389 = vmatmul.mubr.bf16.gmra.mxu0 %v1351
        %v1390 = vpop.f32.mrf.mxu0
        %v1391 = vadd.f32 0.0, %v1390
        %v1392 = vpop.f32.mrf.mxu0
        %v1393 = vpop.f32.mrf.mxu0
        %v1394 = vpop.f32.mrf.mxu0
        %1395 = vdwg.mxu0
        %v1397 = vsel %vm1349, %v1290, 0
        %v1400 = vsel %vm1349, %v1316, 0
        %1402 = vmatprep.subr.bf16.mxu0 0
        %1403 = vmatpush1.bf16.xpose.msra.mxu0 0
        %1404 = vmatprep.subr.bf16.mxu0 0
        %1405 = vmatpush1.bf16.xpose.msra.mxu0 0
        %1406 = vmatprep.subr.bf16.mxu0 0
        %1407 = vmatpush1.bf16.xpose.msra.mxu0 0
        %1408 = vmatprep.subr.bf16.mxu0 0
        %1409 = vmatpush1.bf16.xpose.msra.mxu0 0
        %1410 = vmatprep.subr.bf16.mxu0 0
        %1411 = vmatpush1.bf16.xpose.msra.mxu0 0
        %1412 = vmatprep.subr.bf16.mxu0 0
        %1413 = vmatpush1.bf16.xpose.msra.mxu0 0
        %1414 = vmatprep.subr.bf16.mxu0 0
        %1415 = vmatpush1.bf16.xpose.msra.mxu0 0
        %1416 = vmatprep.subr.bf16.mxu0 0
        %1417 = vmatpush1.bf16.xpose.msra.mxu0 %v1400
        %1418 = vmatprep.subr.bf16.mxu0 0
        %1419 = vmatpush2.bf16.xpose.msra.mxu0 0
        %1420 = vmatprep.subr.bf16.mxu0 0
        %1421 = vmatpush2.bf16.xpose.msra.mxu0 0
        %1422 = vmatprep.subr.bf16.mxu0 0
        %1423 = vmatpush2.bf16.xpose.msra.mxu0 0
        %1424 = vmatprep.subr.bf16.mxu0 0
        %1425 = vmatpush2.bf16.xpose.msra.mxu0 0
        %1426 = vmatprep.subr.bf16.mxu0 0
        %1427 = vmatpush2.bf16.xpose.msra.mxu0 0
        %1428 = vmatprep.subr.bf16.mxu0 0
        %1429 = vmatpush2.bf16.xpose.msra.mxu0 0
        %1430 = vmatprep.subr.bf16.mxu0 0
        %1431 = vmatpush2.bf16.xpose.msra.mxu0 0
        %1432 = vmatprep.subr.bf16.mxu0 0
        %1433 = vmatpush2.bf16.xpose.msra.mxu0 0
        %1434 = vmatprep.mubr.bf16.mxu0 0
        %1435 = vmatmul.mubr.bf16.gmra.mxu0 %v1397
        %v1436 = vpop.f32.mrf.mxu0
        %v1437 = vadd.f32 0.0, %v1436
        %v1438 = vpop.f32.mrf.mxu0
        %v1439 = vpop.f32.mrf.mxu0
        %v1440 = vpop.f32.mrf.mxu0
        %1441 = vdwg.mxu0
        %v1443 = vsel %vm1349, %v1291, 0
        %v1446 = vsel %vm1349, %v1317, 0
        %1448 = vmatprep.subr.bf16.mxu0 0
        %1449 = vmatpush1.bf16.xpose.msra.mxu0 0
        %1450 = vmatprep.subr.bf16.mxu0 0
        %1451 = vmatpush1.bf16.xpose.msra.mxu0 0
        %1452 = vmatprep.subr.bf16.mxu0 0
        %1453 = vmatpush1.bf16.xpose.msra.mxu0 0
        %1454 = vmatprep.subr.bf16.mxu0 0
        %1455 = vmatpush1.bf16.xpose.msra.mxu0 0
        %1456 = vmatprep.subr.bf16.mxu0 0
        %1457 = vmatpush1.bf16.xpose.msra.mxu0 0
        %1458 = vmatprep.subr.bf16.mxu0 0
        %1459 = vmatpush1.bf16.xpose.msra.mxu0 0
        %1460 = vmatprep.subr.bf16.mxu0 0
        %1461 = vmatpush1.bf16.xpose.msra.mxu0 0
        %1462 = vmatprep.subr.bf16.mxu0 0
        %1463 = vmatpush1.bf16.xpose.msra.mxu0 %v1446
        %1464 = vmatprep.subr.bf16.mxu0 0
        %1465 = vmatpush2.bf16.xpose.msra.mxu0 0
        %1466 = vmatprep.subr.bf16.mxu0 0
        %1467 = vmatpush2.bf16.xpose.msra.mxu0 0
        %1468 = vmatprep.subr.bf16.mxu0 0
        %1469 = vmatpush2.bf16.xpose.msra.mxu0 0
        %1470 = vmatprep.subr.bf16.mxu0 0
        %1471 = vmatpush2.bf16.xpose.msra.mxu0 0
        %1472 = vmatprep.subr.bf16.mxu0 0
        %1473 = vmatpush2.bf16.xpose.msra.mxu0 0
        %1474 = vmatprep.subr.bf16.mxu0 0
        %1475 = vmatpush2.bf16.xpose.msra.mxu0 0
        %1476 = vmatprep.subr.bf16.mxu0 0
        %1477 = vmatpush2.bf16.xpose.msra.mxu0 0
        %1478 = vmatprep.subr.bf16.mxu0 0
        %1479 = vmatpush2.bf16.xpose.msra.mxu0 0
        %1480 = vmatprep.mubr.bf16.mxu0 0
        %1481 = vmatmul.mubr.bf16.gmra.mxu0 %v1443
        %v1482 = vpop.f32.mrf.mxu0
        %v1483 = vadd.f32 0.0, %v1482
        %v1484 = vpop.f32.mrf.mxu0
        %v1485 = vpop.f32.mrf.mxu0
        %v1486 = vpop.f32.mrf.mxu0
        %1487 = vdwg.mxu0
        %v1489 = vsel %vm1349, %v1292, 0
        %v1492 = vsel %vm1349, %v1318, 0
        %1494 = vmatprep.subr.bf16.mxu0 0
        %1495 = vmatpush1.bf16.xpose.msra.mxu0 0
        %1496 = vmatprep.subr.bf16.mxu0 0
        %1497 = vmatpush1.bf16.xpose.msra.mxu0 0
        %1498 = vmatprep.subr.bf16.mxu0 0
        %1499 = vmatpush1.bf16.xpose.msra.mxu0 0
        %1500 = vmatprep.subr.bf16.mxu0 0
        %1501 = vmatpush1.bf16.xpose.msra.mxu0 0
        %1502 = vmatprep.subr.bf16.mxu0 0
        %1503 = vmatpush1.bf16.xpose.msra.mxu0 0
        %1504 = vmatprep.subr.bf16.mxu0 0
        %1505 = vmatpush1.bf16.xpose.msra.mxu0 0
        %1506 = vmatprep.subr.bf16.mxu0 0
        %1507 = vmatpush1.bf16.xpose.msra.mxu0 0
        %1508 = vmatprep.subr.bf16.mxu0 0
        %1509 = vmatpush1.bf16.xpose.msra.mxu0 %v1492
        %1510 = vmatprep.subr.bf16.mxu0 0
        %1511 = vmatpush2.bf16.xpose.msra.mxu0 0
        %1512 = vmatprep.subr.bf16.mxu0 0
        %1513 = vmatpush2.bf16.xpose.msra.mxu0 0
        %1514 = vmatprep.subr.bf16.mxu0 0
        %1515 = vmatpush2.bf16.xpose.msra.mxu0 0
        %1516 = vmatprep.subr.bf16.mxu0 0
        %1517 = vmatpush2.bf16.xpose.msra.mxu0 0
        %1518 = vmatprep.subr.bf16.mxu0 0
        %1519 = vmatpush2.bf16.xpose.msra.mxu0 0
        %1520 = vmatprep.subr.bf16.mxu0 0
        %1521 = vmatpush2.bf16.xpose.msra.mxu0 0
        %1522 = vmatprep.subr.bf16.mxu0 0
        %1523 = vmatpush2.bf16.xpose.msra.mxu0 0
        %1524 = vmatprep.subr.bf16.mxu0 0
        %1525 = vmatpush2.bf16.xpose.msra.mxu0 0
        %1526 = vmatprep.mubr.bf16.mxu0 0
        %1527 = vmatmul.mubr.bf16.gmra.mxu0 %v1489
        %v1528 = vpop.f32.mrf.mxu0
        %v1529 = vadd.f32 0.0, %v1528
        %v1530 = vpop.f32.mrf.mxu0
        %v1531 = vpop.f32.mrf.mxu0
        %v1532 = vpop.f32.mrf.mxu0
        %1533 = vdwg.mxu0
        %v1535 = vsel %vm1349, %v1293, 0
        %v1538 = vsel %vm1349, %v1319, 0
        %1540 = vmatprep.subr.bf16.mxu0 0
        %1541 = vmatpush1.bf16.xpose.msra.mxu0 0
        %1542 = vmatprep.subr.bf16.mxu0 0
        %1543 = vmatpush1.bf16.xpose.msra.mxu0 0
        %1544 = vmatprep.subr.bf16.mxu0 0
        %1545 = vmatpush1.bf16.xpose.msra.mxu0 0
        %1546 = vmatprep.subr.bf16.mxu0 0
        %1547 = vmatpush1.bf16.xpose.msra.mxu0 0
        %1548 = vmatprep.subr.bf16.mxu0 0
        %1549 = vmatpush1.bf16.xpose.msra.mxu0 0
        %1550 = vmatprep.subr.bf16.mxu0 0
        %1551 = vmatpush1.bf16.xpose.msra.mxu0 0
        %1552 = vmatprep.subr.bf16.mxu0 0
        %1553 = vmatpush1.bf16.xpose.msra.mxu0 0
        %1554 = vmatprep.subr.bf16.mxu0 0
        %1555 = vmatpush1.bf16.xpose.msra.mxu0 %v1538
        %1556 = vmatprep.subr.bf16.mxu0 0
        %1557 = vmatpush2.bf16.xpose.msra.mxu0 0
        %1558 = vmatprep.subr.bf16.mxu0 0
        %1559 = vmatpush2.bf16.xpose.msra.mxu0 0
        %1560 = vmatprep.subr.bf16.mxu0 0
        %1561 = vmatpush2.bf16.xpose.msra.mxu0 0
        %1562 = vmatprep.subr.bf16.mxu0 0
        %1563 = vmatpush2.bf16.xpose.msra.mxu0 0
        %1564 = vmatprep.subr.bf16.mxu0 0
        %1565 = vmatpush2.bf16.xpose.msra.mxu0 0
        %1566 = vmatprep.subr.bf16.mxu0 0
        %1567 = vmatpush2.bf16.xpose.msra.mxu0 0
        %1568 = vmatprep.subr.bf16.mxu0 0
        %1569 = vmatpush2.bf16.xpose.msra.mxu0 0
        %1570 = vmatprep.subr.bf16.mxu0 0
        %1571 = vmatpush2.bf16.xpose.msra.mxu0 0
        %1572 = vmatprep.mubr.bf16.mxu0 0
        %1573 = vmatmul.mubr.bf16.gmra.mxu0 %v1535
        %v1574 = vpop.f32.mrf.mxu0
        %v1575 = vadd.f32 0.0, %v1574
        %v1576 = vpop.f32.mrf.mxu0
        %v1577 = vpop.f32.mrf.mxu0
        %v1578 = vpop.f32.mrf.mxu0
        %1579 = vdwg.mxu0
        %v1581 = vsel %vm1349, %v1294, 0
        %v1584 = vsel %vm1349, %v1320, 0
        %1586 = vmatprep.subr.bf16.mxu0 0
        %1587 = vmatpush1.bf16.xpose.msra.mxu0 0
        %1588 = vmatprep.subr.bf16.mxu0 0
        %1589 = vmatpush1.bf16.xpose.msra.mxu0 0
        %1590 = vmatprep.subr.bf16.mxu0 0
        %1591 = vmatpush1.bf16.xpose.msra.mxu0 0
        %1592 = vmatprep.subr.bf16.mxu0 0
        %1593 = vmatpush1.bf16.xpose.msra.mxu0 0
        %1594 = vmatprep.subr.bf16.mxu0 0
        %1595 = vmatpush1.bf16.xpose.msra.mxu0 0
        %1596 = vmatprep.subr.bf16.mxu0 0
        %1597 = vmatpush1.bf16.xpose.msra.mxu0 0
        %1598 = vmatprep.subr.bf16.mxu0 0
        %1599 = vmatpush1.bf16.xpose.msra.mxu0 0
        %1600 = vmatprep.subr.bf16.mxu0 0
        %1601 = vmatpush1.bf16.xpose.msra.mxu0 %v1584
        %1602 = vmatprep.subr.bf16.mxu0 0
        %1603 = vmatpush2.bf16.xpose.msra.mxu0 0
        %1604 = vmatprep.subr.bf16.mxu0 0
        %1605 = vmatpush2.bf16.xpose.msra.mxu0 0
        %1606 = vmatprep.subr.bf16.mxu0 0
        %1607 = vmatpush2.bf16.xpose.msra.mxu0 0
        %1608 = vmatprep.subr.bf16.mxu0 0
        %1609 = vmatpush2.bf16.xpose.msra.mxu0 0
        %1610 = vmatprep.subr.bf16.mxu0 0
        %1611 = vmatpush2.bf16.xpose.msra.mxu0 0
        %1612 = vmatprep.subr.bf16.mxu0 0
        %1613 = vmatpush2.bf16.xpose.msra.mxu0 0
        %1614 = vmatprep.subr.bf16.mxu0 0
        %1615 = vmatpush2.bf16.xpose.msra.mxu0 0
        %1616 = vmatprep.subr.bf16.mxu0 0
        %1617 = vmatpush2.bf16.xpose.msra.mxu0 0
        %1618 = vmatprep.mubr.bf16.mxu0 0
        %1619 = vmatmul.mubr.bf16.gmra.mxu0 %v1581
        %v1620 = vpop.f32.mrf.mxu0
        %v1621 = vadd.f32 0.0, %v1620
        %v1622 = vpop.f32.mrf.mxu0
        %v1623 = vpop.f32.mrf.mxu0
        %v1624 = vpop.f32.mrf.mxu0
        %1625 = vdwg.mxu0
        %v1627 = vsel %vm1349, %v1295, 0
        %v1630 = vsel %vm1349, %v1321, 0
        %1632 = vmatprep.subr.bf16.mxu0 0
        %1633 = vmatpush1.bf16.xpose.msra.mxu0 0
        %1634 = vmatprep.subr.bf16.mxu0 0
        %1635 = vmatpush1.bf16.xpose.msra.mxu0 0
        %1636 = vmatprep.subr.bf16.mxu0 0
        %1637 = vmatpush1.bf16.xpose.msra.mxu0 0
        %1638 = vmatprep.subr.bf16.mxu0 0
        %1639 = vmatpush1.bf16.xpose.msra.mxu0 0
        %1640 = vmatprep.subr.bf16.mxu0 0
        %1641 = vmatpush1.bf16.xpose.msra.mxu0 0
        %1642 = vmatprep.subr.bf16.mxu0 0
        %1643 = vmatpush1.bf16.xpose.msra.mxu0 0
        %1644 = vmatprep.subr.bf16.mxu0 0
        %1645 = vmatpush1.bf16.xpose.msra.mxu0 0
        %1646 = vmatprep.subr.bf16.mxu0 0
        %1647 = vmatpush1.bf16.xpose.msra.mxu0 %v1630
        %1648 = vmatprep.subr.bf16.mxu0 0
        %1649 = vmatpush2.bf16.xpose.msra.mxu0 0
        %1650 = vmatprep.subr.bf16.mxu0 0
        %1651 = vmatpush2.bf16.xpose.msra.mxu0 0
        %1652 = vmatprep.subr.bf16.mxu0 0
        %1653 = vmatpush2.bf16.xpose.msra.mxu0 0
        %1654 = vmatprep.subr.bf16.mxu0 0
        %1655 = vmatpush2.bf16.xpose.msra.mxu0 0
        %1656 = vmatprep.subr.bf16.mxu0 0
        %1657 = vmatpush2.bf16.xpose.msra.mxu0 0
        %1658 = vmatprep.subr.bf16.mxu0 0
        %1659 = vmatpush2.bf16.xpose.msra.mxu0 0
        %1660 = vmatprep.subr.bf16.mxu0 0
        %1661 = vmatpush2.bf16.xpose.msra.mxu0 0
        %1662 = vmatprep.subr.bf16.mxu0 0
        %1663 = vmatpush2.bf16.xpose.msra.mxu0 0
        %1664 = vmatprep.mubr.bf16.mxu0 0
        %1665 = vmatmul.mubr.bf16.gmra.mxu0 %v1627
        %v1666 = vpop.f32.mrf.mxu0
        %v1667 = vadd.f32 0.0, %v1666
        %v1668 = vpop.f32.mrf.mxu0
        %v1669 = vpop.f32.mrf.mxu0
        %v1670 = vpop.f32.mrf.mxu0
        %1671 = vdwg.mxu0
        %v1673 = vsel %vm1349, %v1296, 0
        %v1676 = vsel %vm1349, %v1322, 0
        %1678 = vmatprep.subr.bf16.mxu0 0
        %1679 = vmatpush1.bf16.xpose.msra.mxu0 0
        %1680 = vmatprep.subr.bf16.mxu0 0
        %1681 = vmatpush1.bf16.xpose.msra.mxu0 0
        %1682 = vmatprep.subr.bf16.mxu0 0
        %1683 = vmatpush1.bf16.xpose.msra.mxu0 0
        %1684 = vmatprep.subr.bf16.mxu0 0
        %1685 = vmatpush1.bf16.xpose.msra.mxu0 0
        %1686 = vmatprep.subr.bf16.mxu0 0
        %1687 = vmatpush1.bf16.xpose.msra.mxu0 0
        %1688 = vmatprep.subr.bf16.mxu0 0
        %1689 = vmatpush1.bf16.xpose.msra.mxu0 0
        %1690 = vmatprep.subr.bf16.mxu0 0
        %1691 = vmatpush1.bf16.xpose.msra.mxu0 0
        %1692 = vmatprep.subr.bf16.mxu0 0
        %1693 = vmatpush1.bf16.xpose.msra.mxu0 %v1676
        %1694 = vmatprep.subr.bf16.mxu0 0
        %1695 = vmatpush2.bf16.xpose.msra.mxu0 0
        %1696 = vmatprep.subr.bf16.mxu0 0
        %1697 = vmatpush2.bf16.xpose.msra.mxu0 0
        %1698 = vmatprep.subr.bf16.mxu0 0
        %1699 = vmatpush2.bf16.xpose.msra.mxu0 0
        %1700 = vmatprep.subr.bf16.mxu0 0
        %1701 = vmatpush2.bf16.xpose.msra.mxu0 0
        %1702 = vmatprep.subr.bf16.mxu0 0
        %1703 = vmatpush2.bf16.xpose.msra.mxu0 0
        %1704 = vmatprep.subr.bf16.mxu0 0
        %1705 = vmatpush2.bf16.xpose.msra.mxu0 0
        %1706 = vmatprep.subr.bf16.mxu0 0
        %1707 = vmatpush2.bf16.xpose.msra.mxu0 0
        %1708 = vmatprep.subr.bf16.mxu0 0
        %1709 = vmatpush2.bf16.xpose.msra.mxu0 0
        %1710 = vmatprep.mubr.bf16.mxu0 0
        %1711 = vmatmul.mubr.bf16.gmra.mxu0 %v1673
        %v1712 = vpop.f32.mrf.mxu0
        %v1713 = vadd.f32 0.0, %v1712
        %v1714 = vpop.f32.mrf.mxu0
        %v1715 = vpop.f32.mrf.mxu0
        %v1716 = vpop.f32.mrf.mxu0
        %1717 = vdwg.mxu0
        %vm1718 = vcmask 27648
        %v1719 = vsel %vm1718, %v1391, -inf
        %1720 = vmax.xlane.f32.xlu0 %v1719
        %v1721 = vpop.xlane.xlu0 %1720
        %v1722 = vsel %vm1718, %v1437, -inf
        %1723 = vmax.xlane.f32.xlu0 %v1722
        %v1724 = vpop.xlane.xlu0 %1723
        %v1725 = vsel %vm1718, %v1483, -inf
        %1726 = vmax.xlane.f32.xlu0 %v1725
        %v1727 = vpop.xlane.xlu0 %1726
        %v1728 = vsel %vm1718, %v1529, -inf
        %1729 = vmax.xlane.f32.xlu0 %v1728
        %v1730 = vpop.xlane.xlu0 %1729
        %v1731 = vsel %vm1718, %v1575, -inf
        %1732 = vmax.xlane.f32.xlu0 %v1731
        %v1733 = vpop.xlane.xlu0 %1732
        %v1734 = vsel %vm1718, %v1621, -inf
        %1735 = vmax.xlane.f32.xlu0 %v1734
        %v1736 = vpop.xlane.xlu0 %1735
        %v1737 = vsel %vm1718, %v1667, -inf
        %1738 = vmax.xlane.f32.xlu0 %v1737
        %v1739 = vpop.xlane.xlu0 %1738
        %v1740 = vsel %vm1718, %v1713, -inf
        %1741 = vmax.xlane.f32.xlu0 %v1740
        %v1742 = vpop.xlane.xlu0 %1741
        %v1743 = vsub.f32 %v1391, %v1721
        %v1744 = vsub.f32 %v1437, %v1724
        %v1745 = vsub.f32 %v1483, %v1727
        %v1746 = vsub.f32 %v1529, %v1730
        %v1747 = vsub.f32 %v1575, %v1733
        %v1748 = vsub.f32 %v1621, %v1736
        %v1749 = vsub.f32 %v1667, %v1739
        %v1750 = vsub.f32 %v1713, %v1742
        %v1751 = vmul.f32 %v1743, 1.442695
        %v1752 = vpow.pop %v1751
        %v1753 = vmul.f32 %v1744, 1.442695
        %v1754 = vpow.pop %v1753
        %v1755 = vmul.f32 %v1745, 1.442695
        %v1756 = vpow.pop %v1755
        %v1757 = vmul.f32 %v1746, 1.442695
        %v1758 = vpow.pop %v1757
        %v1759 = vmul.f32 %v1747, 1.442695
        %v1760 = vpow.pop %v1759
        %v1761 = vmul.f32 %v1748, 1.442695
        %v1762 = vpow.pop %v1761
        %v1763 = vmul.f32 %v1749, 1.442695
        %v1764 = vpow.pop %v1763
        %v1765 = vmul.f32 %v1750, 1.442695
        %v1766 = vpow.pop %v1765
        %v1767 = vsel %vm1718, %v1752, 0.0
        %1768 = vadd.xlane.f32.xlu0 %v1767
        %v1769 = vpop.xlane.xlu0 %1768
        %v1770 = vsel %vm1718, %v1754, 0.0
        %1771 = vadd.xlane.f32.xlu0 %v1770
        %v1772 = vpop.xlane.xlu0 %1771
        %v1773 = vsel %vm1718, %v1756, 0.0
        %1774 = vadd.xlane.f32.xlu0 %v1773
        %v1775 = vpop.xlane.xlu0 %1774
        %v1776 = vsel %vm1718, %v1758, 0.0
        %1777 = vadd.xlane.f32.xlu0 %v1776
        %v1778 = vpop.xlane.xlu0 %1777
        %v1779 = vsel %vm1718, %v1760, 0.0
        %1780 = vadd.xlane.f32.xlu0 %v1779
        %v1781 = vpop.xlane.xlu0 %1780
        %v1782 = vsel %vm1718, %v1762, 0.0
        %1783 = vadd.xlane.f32.xlu0 %v1782
        %v1784 = vpop.xlane.xlu0 %1783
        %v1785 = vsel %vm1718, %v1764, 0.0
        %1786 = vadd.xlane.f32.xlu0 %v1785
        %v1787 = vpop.xlane.xlu0 %1786
        %v1788 = vsel %vm1718, %v1766, 0.0
        %1789 = vadd.xlane.f32.xlu0 %v1788
        %v1790 = vpop.xlane.xlu0 %1789
        %v1791 = vrcp.pop %v1769
        %v1792 = vmul.f32 %v1752, %v1791
        %v1793 = vrcp.pop %v1772
        %v1794 = vmul.f32 %v1754, %v1793
        %v1795 = vrcp.pop %v1775
        %v1796 = vmul.f32 %v1756, %v1795
        %v1797 = vrcp.pop %v1778
        %v1798 = vmul.f32 %v1758, %v1797
        %v1799 = vrcp.pop %v1781
        %v1800 = vmul.f32 %v1760, %v1799
        %v1801 = vrcp.pop %v1784
        %v1802 = vmul.f32 %v1762, %v1801
        %v1803 = vrcp.pop %v1787
        %v1804 = vmul.f32 %v1764, %v1803
        %v1805 = vrcp.pop %v1790
        %v1806 = vmul.f32 %v1766, %v1805
        %v1807 = vpack.c.bf16 %v1792, %v1792
        %v1808 = vpack.c.bf16 %v1794, %v1794
        %v1809 = vpack.c.bf16 %v1796, %v1796
        %v1810 = vpack.c.bf16 %v1798, %v1798
        %v1811 = vpack.c.bf16 %v1800, %v1800
        %v1812 = vpack.c.bf16 %v1802, %v1802
        %v1813 = vpack.c.bf16 %v1804, %v1804
        %v1814 = vpack.c.bf16 %v1806, %v1806
        %vm1815 = vcmask 31744
        %v1817 = vsel %vm1815, %v1807, 0
        %vm1819 = vcmask 1041408
        %v1821 = vsel %vm1819, %v1341, 0
        %1823 = vmatprep.subr.bf16.mxu0 0
        %1824 = vmatpush1.bf16.msra.mxu0 0
        %1825 = vmatprep.subr.bf16.mxu0 0
        %1826 = vmatpush1.bf16.msra.mxu0 0
        %1827 = vmatprep.subr.bf16.mxu0 0
        %1828 = vmatpush1.bf16.msra.mxu0 0
        %1829 = vmatprep.subr.bf16.mxu0 0
        %1830 = vmatpush1.bf16.msra.mxu0 0
        %1831 = vmatprep.subr.bf16.mxu0 0
        %1832 = vmatpush1.bf16.msra.mxu0 0
        %1833 = vmatprep.subr.bf16.mxu0 0
        %1834 = vmatpush1.bf16.msra.mxu0 0
        %1835 = vmatprep.subr.bf16.mxu0 0
        %1836 = vmatpush1.bf16.msra.mxu0 0
        %1837 = vmatprep.subr.bf16.mxu0 0
        %1838 = vmatpush1.bf16.msra.mxu0 %v1821
        %1839 = vmatprep.subr.bf16.mxu0 0
        %1840 = vmatpush2.bf16.msra.mxu0 0
        %1841 = vmatprep.subr.bf16.mxu0 0
        %1842 = vmatpush2.bf16.msra.mxu0 0
        %1843 = vmatprep.subr.bf16.mxu0 0
        %1844 = vmatpush2.bf16.msra.mxu0 0
        %1845 = vmatprep.subr.bf16.mxu0 0
        %1846 = vmatpush2.bf16.msra.mxu0 0
        %1847 = vmatprep.subr.bf16.mxu0 0
        %1848 = vmatpush2.bf16.msra.mxu0 0
        %1849 = vmatprep.subr.bf16.mxu0 0
        %1850 = vmatpush2.bf16.msra.mxu0 0
        %1851 = vmatprep.subr.bf16.mxu0 0
        %1852 = vmatpush2.bf16.msra.mxu0 0
        %1853 = vmatprep.subr.bf16.mxu0 0
        %1854 = vmatpush2.bf16.msra.mxu0 0
        %1855 = vmatprep.mubr.bf16.mxu0 0
        %1856 = vmatmul.mubr.bf16.gmra.mxu0 %v1817
        %v1857 = vpop.f32.mrf.mxu0
        %v1858 = vadd.f32 0.0, %v1857
        %v1859 = vpop.f32.mrf.mxu0
        %v1860 = vpop.f32.mrf.mxu0
        %v1861 = vpop.f32.mrf.mxu0
        %1862 = vdwg.mxu0
        %v1864 = vsel %vm1815, %v1808, 0
        %v1867 = vsel %vm1819, %v1342, 0
        %1869 = vmatprep.subr.bf16.mxu0 0
        %1870 = vmatpush1.bf16.msra.mxu0 0
        %1871 = vmatprep.subr.bf16.mxu0 0
        %1872 = vmatpush1.bf16.msra.mxu0 0
        %1873 = vmatprep.subr.bf16.mxu0 0
        %1874 = vmatpush1.bf16.msra.mxu0 0
        %1875 = vmatprep.subr.bf16.mxu0 0
        %1876 = vmatpush1.bf16.msra.mxu0 0
        %1877 = vmatprep.subr.bf16.mxu0 0
        %1878 = vmatpush1.bf16.msra.mxu0 0
        %1879 = vmatprep.subr.bf16.mxu0 0
        %1880 = vmatpush1.bf16.msra.mxu0 0
        %1881 = vmatprep.subr.bf16.mxu0 0
        %1882 = vmatpush1.bf16.msra.mxu0 0
        %1883 = vmatprep.subr.bf16.mxu0 0
        %1884 = vmatpush1.bf16.msra.mxu0 %v1867
        %1885 = vmatprep.subr.bf16.mxu0 0
        %1886 = vmatpush2.bf16.msra.mxu0 0
        %1887 = vmatprep.subr.bf16.mxu0 0
        %1888 = vmatpush2.bf16.msra.mxu0 0
        %1889 = vmatprep.subr.bf16.mxu0 0
        %1890 = vmatpush2.bf16.msra.mxu0 0
        %1891 = vmatprep.subr.bf16.mxu0 0
        %1892 = vmatpush2.bf16.msra.mxu0 0
        %1893 = vmatprep.subr.bf16.mxu0 0
        %1894 = vmatpush2.bf16.msra.mxu0 0
        %1895 = vmatprep.subr.bf16.mxu0 0
        %1896 = vmatpush2.bf16.msra.mxu0 0
        %1897 = vmatprep.subr.bf16.mxu0 0
        %1898 = vmatpush2.bf16.msra.mxu0 0
        %1899 = vmatprep.subr.bf16.mxu0 0
        %1900 = vmatpush2.bf16.msra.mxu0 0
        %1901 = vmatprep.mubr.bf16.mxu0 0
        %1902 = vmatmul.mubr.bf16.gmra.mxu0 %v1864
        %v1903 = vpop.f32.mrf.mxu0
        %v1904 = vadd.f32 0.0, %v1903
        %v1905 = vpop.f32.mrf.mxu0
        %v1906 = vpop.f32.mrf.mxu0
        %v1907 = vpop.f32.mrf.mxu0
        %1908 = vdwg.mxu0
        %v1910 = vsel %vm1815, %v1809, 0
        %v1913 = vsel %vm1819, %v1343, 0
        %1915 = vmatprep.subr.bf16.mxu0 0
        %1916 = vmatpush1.bf16.msra.mxu0 0
        %1917 = vmatprep.subr.bf16.mxu0 0
        %1918 = vmatpush1.bf16.msra.mxu0 0
        %1919 = vmatprep.subr.bf16.mxu0 0
        %1920 = vmatpush1.bf16.msra.mxu0 0
        %1921 = vmatprep.subr.bf16.mxu0 0
        %1922 = vmatpush1.bf16.msra.mxu0 0
        %1923 = vmatprep.subr.bf16.mxu0 0
        %1924 = vmatpush1.bf16.msra.mxu0 0
        %1925 = vmatprep.subr.bf16.mxu0 0
        %1926 = vmatpush1.bf16.msra.mxu0 0
        %1927 = vmatprep.subr.bf16.mxu0 0
        %1928 = vmatpush1.bf16.msra.mxu0 0
        %1929 = vmatprep.subr.bf16.mxu0 0
        %1930 = vmatpush1.bf16.msra.mxu0 %v1913
        %1931 = vmatprep.subr.bf16.mxu0 0
        %1932 = vmatpush2.bf16.msra.mxu0 0
        %1933 = vmatprep.subr.bf16.mxu0 0
        %1934 = vmatpush2.bf16.msra.mxu0 0
        %1935 = vmatprep.subr.bf16.mxu0 0
        %1936 = vmatpush2.bf16.msra.mxu0 0
        %1937 = vmatprep.subr.bf16.mxu0 0
        %1938 = vmatpush2.bf16.msra.mxu0 0
        %1939 = vmatprep.subr.bf16.mxu0 0
        %1940 = vmatpush2.bf16.msra.mxu0 0
        %1941 = vmatprep.subr.bf16.mxu0 0
        %1942 = vmatpush2.bf16.msra.mxu0 0
        %1943 = vmatprep.subr.bf16.mxu0 0
        %1944 = vmatpush2.bf16.msra.mxu0 0
        %1945 = vmatprep.subr.bf16.mxu0 0
        %1946 = vmatpush2.bf16.msra.mxu0 0
        %1947 = vmatprep.mubr.bf16.mxu0 0
        %1948 = vmatmul.mubr.bf16.gmra.mxu0 %v1910
        %v1949 = vpop.f32.mrf.mxu0
        %v1950 = vadd.f32 0.0, %v1949
        %v1951 = vpop.f32.mrf.mxu0
        %v1952 = vpop.f32.mrf.mxu0
        %v1953 = vpop.f32.mrf.mxu0
        %1954 = vdwg.mxu0
        %v1956 = vsel %vm1815, %v1810, 0
        %v1959 = vsel %vm1819, %v1344, 0
        %1961 = vmatprep.subr.bf16.mxu0 0
        %1962 = vmatpush1.bf16.msra.mxu0 0
        %1963 = vmatprep.subr.bf16.mxu0 0
        %1964 = vmatpush1.bf16.msra.mxu0 0
        %1965 = vmatprep.subr.bf16.mxu0 0
        %1966 = vmatpush1.bf16.msra.mxu0 0
        %1967 = vmatprep.subr.bf16.mxu0 0
        %1968 = vmatpush1.bf16.msra.mxu0 0
        %1969 = vmatprep.subr.bf16.mxu0 0
        %1970 = vmatpush1.bf16.msra.mxu0 0
        %1971 = vmatprep.subr.bf16.mxu0 0
        %1972 = vmatpush1.bf16.msra.mxu0 0
        %1973 = vmatprep.subr.bf16.mxu0 0
        %1974 = vmatpush1.bf16.msra.mxu0 0
        %1975 = vmatprep.subr.bf16.mxu0 0
        %1976 = vmatpush1.bf16.msra.mxu0 %v1959
        %1977 = vmatprep.subr.bf16.mxu0 0
        %1978 = vmatpush2.bf16.msra.mxu0 0
        %1979 = vmatprep.subr.bf16.mxu0 0
        %1980 = vmatpush2.bf16.msra.mxu0 0
        %1981 = vmatprep.subr.bf16.mxu0 0
        %1982 = vmatpush2.bf16.msra.mxu0 0
        %1983 = vmatprep.subr.bf16.mxu0 0
        %1984 = vmatpush2.bf16.msra.mxu0 0
        %1985 = vmatprep.subr.bf16.mxu0 0
        %1986 = vmatpush2.bf16.msra.mxu0 0
        %1987 = vmatprep.subr.bf16.mxu0 0
        %1988 = vmatpush2.bf16.msra.mxu0 0
        %1989 = vmatprep.subr.bf16.mxu0 0
        %1990 = vmatpush2.bf16.msra.mxu0 0
        %1991 = vmatprep.subr.bf16.mxu0 0
        %1992 = vmatpush2.bf16.msra.mxu0 0
        %1993 = vmatprep.mubr.bf16.mxu0 0
        %1994 = vmatmul.mubr.bf16.gmra.mxu0 %v1956
        %v1995 = vpop.f32.mrf.mxu0
        %v1996 = vadd.f32 0.0, %v1995
        %v1997 = vpop.f32.mrf.mxu0
        %v1998 = vpop.f32.mrf.mxu0
        %v1999 = vpop.f32.mrf.mxu0
        %2000 = vdwg.mxu0
        %v2002 = vsel %vm1815, %v1811, 0
        %v2005 = vsel %vm1819, %v1345, 0
        %2007 = vmatprep.subr.bf16.mxu0 0
        %2008 = vmatpush1.bf16.msra.mxu0 0
        %2009 = vmatprep.subr.bf16.mxu0 0
        %2010 = vmatpush1.bf16.msra.mxu0 0
        %2011 = vmatprep.subr.bf16.mxu0 0
        %2012 = vmatpush1.bf16.msra.mxu0 0
        %2013 = vmatprep.subr.bf16.mxu0 0
        %2014 = vmatpush1.bf16.msra.mxu0 0
        %2015 = vmatprep.subr.bf16.mxu0 0
        %2016 = vmatpush1.bf16.msra.mxu0 0
        %2017 = vmatprep.subr.bf16.mxu0 0
        %2018 = vmatpush1.bf16.msra.mxu0 0
        %2019 = vmatprep.subr.bf16.mxu0 0
        %2020 = vmatpush1.bf16.msra.mxu0 0
        %2021 = vmatprep.subr.bf16.mxu0 0
        %2022 = vmatpush1.bf16.msra.mxu0 %v2005
        %2023 = vmatprep.subr.bf16.mxu0 0
        %2024 = vmatpush2.bf16.msra.mxu0 0
        %2025 = vmatprep.subr.bf16.mxu0 0
        %2026 = vmatpush2.bf16.msra.mxu0 0
        %2027 = vmatprep.subr.bf16.mxu0 0
        %2028 = vmatpush2.bf16.msra.mxu0 0
        %2029 = vmatprep.subr.bf16.mxu0 0
        %2030 = vmatpush2.bf16.msra.mxu0 0
        %2031 = vmatprep.subr.bf16.mxu0 0
        %2032 = vmatpush2.bf16.msra.mxu0 0
        %2033 = vmatprep.subr.bf16.mxu0 0
        %2034 = vmatpush2.bf16.msra.mxu0 0
        %2035 = vmatprep.subr.bf16.mxu0 0
        %2036 = vmatpush2.bf16.msra.mxu0 0
        %2037 = vmatprep.subr.bf16.mxu0 0
        %2038 = vmatpush2.bf16.msra.mxu0 0
        %2039 = vmatprep.mubr.bf16.mxu0 0
        %2040 = vmatmul.mubr.bf16.gmra.mxu0 %v2002
        %v2041 = vpop.f32.mrf.mxu0
        %v2042 = vadd.f32 0.0, %v2041
        %v2043 = vpop.f32.mrf.mxu0
        %v2044 = vpop.f32.mrf.mxu0
        %v2045 = vpop.f32.mrf.mxu0
        %2046 = vdwg.mxu0
        %v2048 = vsel %vm1815, %v1812, 0
        %v2051 = vsel %vm1819, %v1346, 0
        %2053 = vmatprep.subr.bf16.mxu0 0
        %2054 = vmatpush1.bf16.msra.mxu0 0
        %2055 = vmatprep.subr.bf16.mxu0 0
        %2056 = vmatpush1.bf16.msra.mxu0 0
        %2057 = vmatprep.subr.bf16.mxu0 0
        %2058 = vmatpush1.bf16.msra.mxu0 0
        %2059 = vmatprep.subr.bf16.mxu0 0
        %2060 = vmatpush1.bf16.msra.mxu0 0
        %2061 = vmatprep.subr.bf16.mxu0 0
        %2062 = vmatpush1.bf16.msra.mxu0 0
        %2063 = vmatprep.subr.bf16.mxu0 0
        %2064 = vmatpush1.bf16.msra.mxu0 0
        %2065 = vmatprep.subr.bf16.mxu0 0
        %2066 = vmatpush1.bf16.msra.mxu0 0
        %2067 = vmatprep.subr.bf16.mxu0 0
        %2068 = vmatpush1.bf16.msra.mxu0 %v2051
        %2069 = vmatprep.subr.bf16.mxu0 0
        %2070 = vmatpush2.bf16.msra.mxu0 0
        %2071 = vmatprep.subr.bf16.mxu0 0
        %2072 = vmatpush2.bf16.msra.mxu0 0
        %2073 = vmatprep.subr.bf16.mxu0 0
        %2074 = vmatpush2.bf16.msra.mxu0 0
        %2075 = vmatprep.subr.bf16.mxu0 0
        %2076 = vmatpush2.bf16.msra.mxu0 0
        %2077 = vmatprep.subr.bf16.mxu0 0
        %2078 = vmatpush2.bf16.msra.mxu0 0
        %2079 = vmatprep.subr.bf16.mxu0 0
        %2080 = vmatpush2.bf16.msra.mxu0 0
        %2081 = vmatprep.subr.bf16.mxu0 0
        %2082 = vmatpush2.bf16.msra.mxu0 0
        %2083 = vmatprep.subr.bf16.mxu0 0
        %2084 = vmatpush2.bf16.msra.mxu0 0
        %2085 = vmatprep.mubr.bf16.mxu0 0
        %2086 = vmatmul.mubr.bf16.gmra.mxu0 %v2048
        %v2087 = vpop.f32.mrf.mxu0
        %v2088 = vadd.f32 0.0, %v2087
        %v2089 = vpop.f32.mrf.mxu0
        %v2090 = vpop.f32.mrf.mxu0
        %v2091 = vpop.f32.mrf.mxu0
        %2092 = vdwg.mxu0
        %v2094 = vsel %vm1815, %v1813, 0
        %v2097 = vsel %vm1819, %v1347, 0
        %2099 = vmatprep.subr.bf16.mxu0 0
        %2100 = vmatpush1.bf16.msra.mxu0 0
        %2101 = vmatprep.subr.bf16.mxu0 0
        %2102 = vmatpush1.bf16.msra.mxu0 0
        %2103 = vmatprep.subr.bf16.mxu0 0
        %2104 = vmatpush1.bf16.msra.mxu0 0
        %2105 = vmatprep.subr.bf16.mxu0 0
        %2106 = vmatpush1.bf16.msra.mxu0 0
        %2107 = vmatprep.subr.bf16.mxu0 0
        %2108 = vmatpush1.bf16.msra.mxu0 0
        %2109 = vmatprep.subr.bf16.mxu0 0
        %2110 = vmatpush1.bf16.msra.mxu0 0
        %2111 = vmatprep.subr.bf16.mxu0 0
        %2112 = vmatpush1.bf16.msra.mxu0 0
        %2113 = vmatprep.subr.bf16.mxu0 0
        %2114 = vmatpush1.bf16.msra.mxu0 %v2097
        %2115 = vmatprep.subr.bf16.mxu0 0
        %2116 = vmatpush2.bf16.msra.mxu0 0
        %2117 = vmatprep.subr.bf16.mxu0 0
        %2118 = vmatpush2.bf16.msra.mxu0 0
        %2119 = vmatprep.subr.bf16.mxu0 0
        %2120 = vmatpush2.bf16.msra.mxu0 0
        %2121 = vmatprep.subr.bf16.mxu0 0
        %2122 = vmatpush2.bf16.msra.mxu0 0
        %2123 = vmatprep.subr.bf16.mxu0 0
        %2124 = vmatpush2.bf16.msra.mxu0 0
        %2125 = vmatprep.subr.bf16.mxu0 0
        %2126 = vmatpush2.bf16.msra.mxu0 0
        %2127 = vmatprep.subr.bf16.mxu0 0
        %2128 = vmatpush2.bf16.msra.mxu0 0
        %2129 = vmatprep.subr.bf16.mxu0 0
        %2130 = vmatpush2.bf16.msra.mxu0 0
        %2131 = vmatprep.mubr.bf16.mxu0 0
        %2132 = vmatmul.mubr.bf16.gmra.mxu0 %v2094
        %v2133 = vpop.f32.mrf.mxu0
        %v2134 = vadd.f32 0.0, %v2133
        %v2135 = vpop.f32.mrf.mxu0
        %v2136 = vpop.f32.mrf.mxu0
        %v2137 = vpop.f32.mrf.mxu0
        %2138 = vdwg.mxu0
        %v2140 = vsel %vm1815, %v1814, 0
        %v2143 = vsel %vm1819, %v1348, 0
        %2145 = vmatprep.subr.bf16.mxu0 0
        %2146 = vmatpush1.bf16.msra.mxu0 0
        %2147 = vmatprep.subr.bf16.mxu0 0
        %2148 = vmatpush1.bf16.msra.mxu0 0
        %2149 = vmatprep.subr.bf16.mxu0 0
        %2150 = vmatpush1.bf16.msra.mxu0 0
        %2151 = vmatprep.subr.bf16.mxu0 0
        %2152 = vmatpush1.bf16.msra.mxu0 0
        %2153 = vmatprep.subr.bf16.mxu0 0
        %2154 = vmatpush1.bf16.msra.mxu0 0
        %2155 = vmatprep.subr.bf16.mxu0 0
        %2156 = vmatpush1.bf16.msra.mxu0 0
        %2157 = vmatprep.subr.bf16.mxu0 0
        %2158 = vmatpush1.bf16.msra.mxu0 0
        %2159 = vmatprep.subr.bf16.mxu0 0
        %2160 = vmatpush1.bf16.msra.mxu0 %v2143
        %2161 = vmatprep.subr.bf16.mxu0 0
        %2162 = vmatpush2.bf16.msra.mxu0 0
        %2163 = vmatprep.subr.bf16.mxu0 0
        %2164 = vmatpush2.bf16.msra.mxu0 0
        %2165 = vmatprep.subr.bf16.mxu0 0
        %2166 = vmatpush2.bf16.msra.mxu0 0
        %2167 = vmatprep.subr.bf16.mxu0 0
        %2168 = vmatpush2.bf16.msra.mxu0 0
        %2169 = vmatprep.subr.bf16.mxu0 0
        %2170 = vmatpush2.bf16.msra.mxu0 0
        %2171 = vmatprep.subr.bf16.mxu0 0
        %2172 = vmatpush2.bf16.msra.mxu0 0
        %2173 = vmatprep.subr.bf16.mxu0 0
        %2174 = vmatpush2.bf16.msra.mxu0 0
        %2175 = vmatprep.subr.bf16.mxu0 0
        %2176 = vmatpush2.bf16.msra.mxu0 0
        %2177 = vmatprep.mubr.bf16.mxu0 0
        %2178 = vmatmul.mubr.bf16.gmra.mxu0 %v2140
        %v2179 = vpop.f32.mrf.mxu0
        %v2180 = vadd.f32 0.0, %v2179
        %v2181 = vpop.f32.mrf.mxu0
        %v2182 = vpop.f32.mrf.mxu0
        %v2183 = vpop.f32.mrf.mxu0
        %2184 = vdwg.mxu0
        %v2187 = vcombine.low %v1858, %v1904
        %v2191 = vcombine.low %v1950, %v1996
        %2192 = vrot.lane.b32.xlu0 %v2191, 32
        %v2193 = vpop.permute.xlu0 %2192
        %v2197 = vcombine.low %v2042, %v2088
        %2198 = vrot.lane.b32.xlu0 %v2197, 64
        %v2199 = vpop.permute.xlu0 %2198
        %v2203 = vcombine.low %v2134, %v2180
        %2204 = vrot.lane.b32.xlu0 %v2203, 96
        %v2205 = vpop.permute.xlu0 %2204
        %v2207 = vsel %vm1349, %v2187, %v2193
        %vm2208 = vcmask 523264
        %v2209 = vsel %vm2208, %v2207, %v2199
        %vm2210 = vcmask 785408
        %v2211 = vsel %vm2210, %v2209, %v2205
        %v2212 = vpack.c.bf16 %v2211, %v2211
        %v2213 = vld [vmem:[%s782] sm:$0xf]
        %v2214 = vld [vmem:[%s782 + $0x4] sm:$0xf]
        %v2215 = vld [vmem:[%s782 + $0x8] sm:$0xf]
        %v2216 = vld [vmem:[%s782 + $0xc] sm:$0xf]
        %v2217 = vld [vmem:[%s782 + $0x10] sm:$0xf]
        %v2218 = vld [vmem:[%s782 + $0x14] sm:$0xf]
        %v2219 = vld [vmem:[%s782 + $0x18] sm:$0xf]
        %v2220 = vld [vmem:[%s782 + $0x1c] sm:$0xf]
        %v2221 = vld [vmem:[%s782 + $0x20] sm:$0xf]
        %v2222 = vld [vmem:[%s782 + $0x24] sm:$0xf]
        %v2223 = vld [vmem:[%s782 + $0x28] sm:$0xf]
        %v2224 = vld [vmem:[%s782 + $0x2c] sm:$0xf]
        %v2225 = vld [vmem:[%s782 + $0x30] sm:$0xf]
        %v2226 = vld [vmem:[%s782 + $0x34] sm:$0xf]
        %v2227 = vld [vmem:[%s782 + $0x38] sm:$0xf]
        %v2228 = vld [vmem:[%s782 + $0x3c] sm:$0xf]
        %v2229 = vld [vmem:[%s790] sm:$0x1]
        %v2231 = vlaneseq
        %v2232 = vshrl.u32 %v2231, 7
        %v2233 = vsub.s32 0, %v2232
        %v2234 = vrot.slane %v2229, %v2233
        %v2252 = vunpack.c.l.b16 %v2213
        %v2253 = vunpack.c.l.b16 %v2214
        %v2254 = vunpack.c.l.b16 %v2215
        %v2255 = vunpack.c.l.b16 %v2216
        %v2256 = vunpack.c.l.b16 %v2217
        %v2257 = vunpack.c.l.b16 %v2218
        %v2258 = vunpack.c.l.b16 %v2219
        %v2259 = vunpack.c.l.b16 %v2220
        %v2260 = vunpack.c.l.b16 %v2221
        %v2261 = vunpack.c.l.b16 %v2222
        %v2262 = vunpack.c.l.b16 %v2223
        %v2263 = vunpack.c.l.b16 %v2224
        %v2264 = vunpack.c.l.b16 %v2225
        %v2265 = vunpack.c.l.b16 %v2226
        %v2266 = vunpack.c.l.b16 %v2227
        %v2267 = vunpack.c.l.b16 %v2228
        %v2268 = vpack.c.b16 %v2253, %v2252
        %v2269 = vpack.c.b16 %v2255, %v2254
        %v2270 = vpack.c.b16 %v2257, %v2256
        %v2271 = vpack.c.b16 %v2259, %v2258
        %v2272 = vpack.c.b16 %v2261, %v2260
        %v2273 = vpack.c.b16 %v2263, %v2262
        %v2274 = vpack.c.b16 %v2265, %v2264
        %v2275 = vpack.c.b16 %v2267, %v2266
        %2284 = vmatprep.subr.bf16.mxu0 0
        %2285 = vmatpush1.bf16.msra.mxu0 %v2275
        %2286 = vmatprep.subr.bf16.mxu0 0
        %2287 = vmatpush1.bf16.msra.mxu0 %v2274
        %2288 = vmatprep.subr.bf16.mxu0 0
        %2289 = vmatpush1.bf16.msra.mxu0 %v2273
        %2290 = vmatprep.subr.bf16.mxu0 0
        %2291 = vmatpush1.bf16.msra.mxu0 %v2272
        %2292 = vmatprep.subr.bf16.mxu0 0
        %2293 = vmatpush1.bf16.msra.mxu0 %v2271
        %2294 = vmatprep.subr.bf16.mxu0 0
        %2295 = vmatpush1.bf16.msra.mxu0 %v2270
        %2296 = vmatprep.subr.bf16.mxu0 0
        %2297 = vmatpush1.bf16.msra.mxu0 %v2269
        %2298 = vmatprep.subr.bf16.mxu0 0
        %2299 = vmatpush1.bf16.msra.mxu0 %v2268
        %2300 = vmatprep.subr.bf16.mxu0 0
        %2301 = vmatpush2.bf16.msra.mxu0 0
        %2302 = vmatprep.subr.bf16.mxu0 0
        %2303 = vmatpush2.bf16.msra.mxu0 0
        %2304 = vmatprep.subr.bf16.mxu0 0
        %2305 = vmatpush2.bf16.msra.mxu0 0
        %2306 = vmatprep.subr.bf16.mxu0 0
        %2307 = vmatpush2.bf16.msra.mxu0 0
        %2308 = vmatprep.subr.bf16.mxu0 0
        %2309 = vmatpush2.bf16.msra.mxu0 0
        %2310 = vmatprep.subr.bf16.mxu0 0
        %2311 = vmatpush2.bf16.msra.mxu0 0
        %2312 = vmatprep.subr.bf16.mxu0 0
        %2313 = vmatpush2.bf16.msra.mxu0 0
        %2314 = vmatprep.subr.bf16.mxu0 0
        %2315 = vmatpush2.bf16.msra.mxu0 0
        %2316 = vmatprep.mubr.bf16.mxu0 0
        %2317 = vmatmul.mubr.bf16.gmra.mxu0 %v2212
        %v2318 = vpop.f32.mrf.mxu0
        %v2319 = vadd.f32 %v2234, %v2318
        %v2320 = vpop.f32.mrf.mxu0
        %v2321 = vpop.f32.mrf.mxu0
        %v2322 = vpop.f32.mrf.mxu0
        %2323 = vdwg.mxu0
        %v2324 = vadd.f32 %v1011, %v2319
        %v2325 = vld [vmem:[%s798] sm:$0x1]
        %v2326 = vld [vmem:[%s806] sm:$0x1]
        %2327 = vadd.xlane.f32.xlu0 %v2324
        %v2328 = vpop.xlane.xlu0 %2327
        %v2329 = vrcp.pop 128.0
        %v2330 = vmul.f32 %v2328, %v2329
        %v2331 = vsub.f32 %v2324, %v2330
        %v2332 = vmul.f32 %v2331, %v2331
        %2333 = vadd.xlane.f32.xlu0 %v2332
        %v2334 = vpop.xlane.xlu0 %2333
        %v2335 = vmul.f32 %v2334, %v2329
        %v2336 = vadd.f32 %v2335, 1e-05
        %v2337 = vrsqrt.pop %v2336
        %v2338 = vmul.f32 %v2331, %v2337
        %v2340 = vlaneseq
        %v2341 = vshrl.u32 %v2340, 7
        %v2342 = vsub.s32 0, %v2341
        %v2343 = vrot.slane %v2325, %v2342
        %v2345 = vmul.f32 %v2338, %v2343
        %v2347 = vlaneseq
        %v2348 = vshrl.u32 %v2347, 7
        %v2349 = vsub.s32 0, %v2348
        %v2350 = vrot.slane %v2326, %v2349
        %v2352 = vadd.f32 %v2345, %v2350
        %v2353 = vpack.c.bf16 %v2352, %v2352
        %v2354 = vld [vmem:[%s815] sm:$0xff]
        %v2355 = vld [vmem:[%s815 + $0x8] sm:$0xff]
        %v2356 = vld [vmem:[%s815 + $0x40] sm:$0xff]
        %v2357 = vld [vmem:[%s815 + $0x48] sm:$0xff]
        %v2358 = vld [vmem:[%s815 + $0x80] sm:$0xff]
        %v2359 = vld [vmem:[%s815 + $0x88] sm:$0xff]
        %v2360 = vld [vmem:[%s815 + $0xc0] sm:$0xff]
        %v2361 = vld [vmem:[%s815 + $0xc8] sm:$0xff]
        %v2362 = vld [vmem:[%s815 + $0x100] sm:$0xff]
        %v2363 = vld [vmem:[%s815 + $0x108] sm:$0xff]
        %v2364 = vld [vmem:[%s815 + $0x140] sm:$0xff]
        %v2365 = vld [vmem:[%s815 + $0x148] sm:$0xff]
        %v2366 = vld [vmem:[%s815 + $0x180] sm:$0xff]
        %v2367 = vld [vmem:[%s815 + $0x188] sm:$0xff]
        %v2368 = vld [vmem:[%s815 + $0x1c0] sm:$0xff]
        %v2369 = vld [vmem:[%s815 + $0x1c8] sm:$0xff]
        %v2370 = vld [vmem:[%s815 + $0x200] sm:$0xff]
        %v2371 = vld [vmem:[%s815 + $0x208] sm:$0xff]
        %v2372 = vld [vmem:[%s815 + $0x240] sm:$0xff]
        %v2373 = vld [vmem:[%s815 + $0x248] sm:$0xff]
        %v2374 = vld [vmem:[%s815 + $0x280] sm:$0xff]
        %v2375 = vld [vmem:[%s815 + $0x288] sm:$0xff]
        %v2376 = vld [vmem:[%s815 + $0x2c0] sm:$0xff]
        %v2377 = vld [vmem:[%s815 + $0x2c8] sm:$0xff]
        %v2378 = vld [vmem:[%s815 + $0x300] sm:$0xff]
        %v2379 = vld [vmem:[%s815 + $0x308] sm:$0xff]
        %v2380 = vld [vmem:[%s815 + $0x340] sm:$0xff]
        %v2381 = vld [vmem:[%s815 + $0x348] sm:$0xff]
        %v2382 = vld [vmem:[%s815 + $0x380] sm:$0xff]
        %v2383 = vld [vmem:[%s815 + $0x388] sm:$0xff]
        %v2384 = vld [vmem:[%s815 + $0x3c0] sm:$0xff]
        %v2385 = vld [vmem:[%s815 + $0x3c8] sm:$0xff]
        %v2386 = vld [vmem:[%s824] sm:$0xf]
        %v2388 = vlaneseq
        %v2389 = vshrl.u32 %v2388, 7
        %v2390 = vsub.s32 0, %v2389
        %v2391 = vrot.slane %v2386, %v2390
        %v2392 = vlaneseq
        %v2393 = vshrl.u32 %v2392, 7
        %v2394 = vsub.s32 1, %v2393
        %v2395 = vrot.slane %v2386, %v2394
        %v2396 = vlaneseq
        %v2397 = vshrl.u32 %v2396, 7
        %v2398 = vsub.s32 2, %v2397
        %v2399 = vrot.slane %v2386, %v2398
        %v2400 = vlaneseq
        %v2401 = vshrl.u32 %v2400, 7
        %v2402 = vsub.s32 3, %v2401
        %v2403 = vrot.slane %v2386, %v2402
        %v2440 = vunpack.c.l.b16 %v2354
        %v2441 = vunpack.c.h.b16 %v2354
        %v2442 = vunpack.c.l.b16 %v2355
        %v2443 = vunpack.c.h.b16 %v2355
        %v2444 = vunpack.c.l.b16 %v2356
        %v2445 = vunpack.c.h.b16 %v2356
        %v2446 = vunpack.c.l.b16 %v2357
        %v2447 = vunpack.c.h.b16 %v2357
        %v2448 = vunpack.c.l.b16 %v2358
        %v2449 = vunpack.c.h.b16 %v2358
        %v2450 = vunpack.c.l.b16 %v2359
        %v2451 = vunpack.c.h.b16 %v2359
        %v2452 = vunpack.c.l.b16 %v2360
        %v2453 = vunpack.c.h.b16 %v2360
        %v2454 = vunpack.c.l.b16 %v2361
        %v2455 = vunpack.c.h.b16 %v2361
        %v2456 = vunpack.c.l.b16 %v2362
        %v2457 = vunpack.c.h.b16 %v2362
        %v2458 = vunpack.c.l.b16 %v2363
        %v2459 = vunpack.c.h.b16 %v2363
        %v2460 = vunpack.c.l.b16 %v2364
        %v2461 = vunpack.c.h.b16 %v2364
        %v2462 = vunpack.c.l.b16 %v2365
        %v2463 = vunpack.c.h.b16 %v2365
        %v2464 = vunpack.c.l.b16 %v2366
        %v2465 = vunpack.c.h.b16 %v2366
        %v2466 = vunpack.c.l.b16 %v2367
        %v2467 = vunpack.c.h.b16 %v2367
        %v2468 = vunpack.c.l.b16 %v2368
        %v2469 = vunpack.c.h.b16 %v2368
        %v2470 = vunpack.c.l.b16 %v2369
        %v2471 = vunpack.c.h.b16 %v2369
        %v2472 = vunpack.c.l.b16 %v2370
        %v2473 = vunpack.c.h.b16 %v2370
        %v2474 = vunpack.c.l.b16 %v2371
        %v2475 = vunpack.c.h.b16 %v2371
        %v2476 = vunpack.c.l.b16 %v2372
        %v2477 = vunpack.c.h.b16 %v2372
        %v2478 = vunpack.c.l.b16 %v2373
        %v2479 = vunpack.c.h.b16 %v2373
        %v2480 = vunpack.c.l.b16 %v2374
        %v2481 = vunpack.c.h.b16 %v2374
        %v2482 = vunpack.c.l.b16 %v2375
        %v2483 = vunpack.c.h.b16 %v2375
        %v2484 = vunpack.c.l.b16 %v2376
        %v2485 = vunpack.c.h.b16 %v2376
        %v2486 = vunpack.c.l.b16 %v2377
        %v2487 = vunpack.c.h.b16 %v2377
        %v2488 = vunpack.c.l.b16 %v2378
        %v2489 = vunpack.c.h.b16 %v2378
        %v2490 = vunpack.c.l.b16 %v2379
        %v2491 = vunpack.c.h.b16 %v2379
        %v2492 = vunpack.c.l.b16 %v2380
        %v2493 = vunpack.c.h.b16 %v2380
        %v2494 = vunpack.c.l.b16 %v2381
        %v2495 = vunpack.c.h.b16 %v2381
        %v2496 = vunpack.c.l.b16 %v2382
        %v2497 = vunpack.c.h.b16 %v2382
        %v2498 = vunpack.c.l.b16 %v2383
        %v2499 = vunpack.c.h.b16 %v2383
        %v2500 = vunpack.c.l.b16 %v2384
        %v2501 = vunpack.c.h.b16 %v2384
        %v2502 = vunpack.c.l.b16 %v2385
        %v2503 = vunpack.c.h.b16 %v2385
        %v2504 = vpack.c.b16 %v2444, %v2440
        %v2505 = vpack.c.b16 %v2445, %v2441
        %v2506 = vpack.c.b16 %v2446, %v2442
        %v2507 = vpack.c.b16 %v2447, %v2443
        %v2508 = vpack.c.b16 %v2452, %v2448
        %v2509 = vpack.c.b16 %v2453, %v2449
        %v2510 = vpack.c.b16 %v2454, %v2450
        %v2511 = vpack.c.b16 %v2455, %v2451
        %v2512 = vpack.c.b16 %v2460, %v2456
        %v2513 = vpack.c.b16 %v2461, %v2457
        %v2514 = vpack.c.b16 %v2462, %v2458
        %v2515 = vpack.c.b16 %v2463, %v2459
        %v2516 = vpack.c.b16 %v2468, %v2464
        %v2517 = vpack.c.b16 %v2469, %v2465
        %v2518 = vpack.c.b16 %v2470, %v2466
        %v2519 = vpack.c.b16 %v2471, %v2467
        %v2520 = vpack.c.b16 %v2476, %v2472
        %v2521 = vpack.c.b16 %v2477, %v2473
        %v2522 = vpack.c.b16 %v2478, %v2474
        %v2523 = vpack.c.b16 %v2479, %v2475
        %v2524 = vpack.c.b16 %v2484, %v2480
        %v2525 = vpack.c.b16 %v2485, %v2481
        %v2526 = vpack.c.b16 %v2486, %v2482
        %v2527 = vpack.c.b16 %v2487, %v2483
        %v2528 = vpack.c.b16 %v2492, %v2488
        %v2529 = vpack.c.b16 %v2493, %v2489
        %v2530 = vpack.c.b16 %v2494, %v2490
        %v2531 = vpack.c.b16 %v2495, %v2491
        %v2532 = vpack.c.b16 %v2500, %v2496
        %v2533 = vpack.c.b16 %v2501, %v2497
        %v2534 = vpack.c.b16 %v2502, %v2498
        %v2535 = vpack.c.b16 %v2503, %v2499
        %2568 = vmatprep.subr.bf16.mxu0 %v2533
        %2569 = vmatpush1.bf16.msra.mxu0 %v2532
        %2570 = vmatprep.subr.bf16.mxu0 %v2529
        %2571 = vmatpush1.bf16.msra.mxu0 %v2528
        %2572 = vmatprep.subr.bf16.mxu0 %v2525
        %2573 = vmatpush1.bf16.msra.mxu0 %v2524
        %2574 = vmatprep.subr.bf16.mxu0 %v2521
        %2575 = vmatpush1.bf16.msra.mxu0 %v2520
        %2576 = vmatprep.subr.bf16.mxu0 %v2517
        %2577 = vmatpush1.bf16.msra.mxu0 %v2516
        %2578 = vmatprep.subr.bf16.mxu0 %v2513
        %2579 = vmatpush1.bf16.msra.mxu0 %v2512
        %2580 = vmatprep.subr.bf16.mxu0 %v2509
        %2581 = vmatpush1.bf16.msra.mxu0 %v2508
        %2582 = vmatprep.subr.bf16.mxu0 %v2505
        %2583 = vmatpush1.bf16.msra.mxu0 %v2504
        %2584 = vmatprep.subr.bf16.mxu0 0
        %2585 = vmatpush2.bf16.msra.mxu0 0
        %2586 = vmatprep.subr.bf16.mxu0 0
        %2587 = vmatpush2.bf16.msra.mxu0 0
        %2588 = vmatprep.subr.bf16.mxu0 0
        %2589 = vmatpush2.bf16.msra.mxu0 0
        %2590 = vmatprep.subr.bf16.mxu0 0
        %2591 = vmatpush2.bf16.msra.mxu0 0
        %2592 = vmatprep.subr.bf16.mxu0 0
        %2593 = vmatpush2.bf16.msra.mxu0 0
        %2594 = vmatprep.subr.bf16.mxu0 0
        %2595 = vmatpush2.bf16.msra.mxu0 0
        %2596 = vmatprep.subr.bf16.mxu0 0
        %2597 = vmatpush2.bf16.msra.mxu0 0
        %2598 = vmatprep.subr.bf16.mxu0 0
        %2599 = vmatpush2.bf16.msra.mxu0 0
        %2600 = vmatprep.mubr.bf16.mxu0 0
        %2601 = vmatmul.mubr.bf16.gmra.mxu0 %v2353
        %v2602 = vpop.f32.mrf.mxu0
        %v2603 = vadd.f32 %v2391, %v2602
        %v2604 = vpop.f32.mrf.mxu0
        %v2605 = vadd.f32 %v2395, %v2604
        %v2606 = vpop.f32.mrf.mxu0
        %v2607 = vpop.f32.mrf.mxu0
        %2608 = vdwg.mxu0
        %2609 = vmatprep.subr.bf16.mxu0 %v2535
        %2610 = vmatpush1.bf16.msra.mxu0 %v2534
        %2611 = vmatprep.subr.bf16.mxu0 %v2531
        %2612 = vmatpush1.bf16.msra.mxu0 %v2530
        %2613 = vmatprep.subr.bf16.mxu0 %v2527
        %2614 = vmatpush1.bf16.msra.mxu0 %v2526
        %2615 = vmatprep.subr.bf16.mxu0 %v2523
        %2616 = vmatpush1.bf16.msra.mxu0 %v2522
        %2617 = vmatprep.subr.bf16.mxu0 %v2519
        %2618 = vmatpush1.bf16.msra.mxu0 %v2518
        %2619 = vmatprep.subr.bf16.mxu0 %v2515
        %2620 = vmatpush1.bf16.msra.mxu0 %v2514
        %2621 = vmatprep.subr.bf16.mxu0 %v2511
        %2622 = vmatpush1.bf16.msra.mxu0 %v2510
        %2623 = vmatprep.subr.bf16.mxu0 %v2507
        %2624 = vmatpush1.bf16.msra.mxu0 %v2506
        %2625 = vmatprep.subr.bf16.mxu0 0
        %2626 = vmatpush2.bf16.msra.mxu0 0
        %2627 = vmatprep.subr.bf16.mxu0 0
        %2628 = vmatpush2.bf16.msra.mxu0 0
        %2629 = vmatprep.subr.bf16.mxu0 0
        %2630 = vmatpush2.bf16.msra.mxu0 0
        %2631 = vmatprep.subr.bf16.mxu0 0
        %2632 = vmatpush2.bf16.msra.mxu0 0
        %2633 = vmatprep.subr.bf16.mxu0 0
        %2634 = vmatpush2.bf16.msra.mxu0 0
        %2635 = vmatprep.subr.bf16.mxu0 0
        %2636 = vmatpush2.bf16.msra.mxu0 0
        %2637 = vmatprep.subr.bf16.mxu0 0
        %2638 = vmatpush2.bf16.msra.mxu0 0
        %2639 = vmatprep.subr.bf16.mxu0 0
        %2640 = vmatpush2.bf16.msra.mxu0 0
        %2641 = vmatprep.mubr.bf16.mxu0 0
        %2642 = vmatmul.mubr.bf16.gmra.mxu0 %v2353
        %v2643 = vpop.f32.mrf.mxu0
        %v2644 = vadd.f32 %v2399, %v2643
        %v2645 = vpop.f32.mrf.mxu0
        %v2646 = vadd.f32 %v2403, %v2645
        %v2647 = vpop.f32.mrf.mxu0
        %v2648 = vpop.f32.mrf.mxu0
        %2649 = vdwg.mxu0
        %v2650 = vmax.f32 %v2603, 0.0
        %v2651 = vmax.f32 %v2605, 0.0
        %v2652 = vmax.f32 %v2644, 0.0
        %v2653 = vmax.f32 %v2646, 0.0
        %v2654 = vpack.c.bf16 %v2650, %v2650
        %v2655 = vpack.c.bf16 %v2651, %v2651
        %v2656 = vpack.c.bf16 %v2652, %v2652
        %v2657 = vpack.c.bf16 %v2653, %v2653
        %v2658 = vld [vmem:[%s833] sm:$0xf]
        %v2659 = vld [vmem:[%s833 + $0x4] sm:$0xf]
        %v2660 = vld [vmem:[%s833 + $0x8] sm:$0xf]
        %v2661 = vld [vmem:[%s833 + $0xc] sm:$0xf]
        %v2662 = vld [vmem:[%s833 + $0x10] sm:$0xf]
        %v2663 = vld [vmem:[%s833 + $0x14] sm:$0xf]
        %v2664 = vld [vmem:[%s833 + $0x18] sm:$0xf]
        %v2665 = vld [vmem:[%s833 + $0x1c] sm:$0xf]
        %v2666 = vld [vmem:[%s833 + $0x20] sm:$0xf]
        %v2667 = vld [vmem:[%s833 + $0x24] sm:$0xf]
        %v2668 = vld [vmem:[%s833 + $0x28] sm:$0xf]
        %v2669 = vld [vmem:[%s833 + $0x2c] sm:$0xf]
        %v2670 = vld [vmem:[%s833 + $0x30] sm:$0xf]
        %v2671 = vld [vmem:[%s833 + $0x34] sm:$0xf]
        %v2672 = vld [vmem:[%s833 + $0x38] sm:$0xf]
        %v2673 = vld [vmem:[%s833 + $0x3c] sm:$0xf]
        %v2674 = vld [vmem:[%s833 + $0x40] sm:$0xf]
        %v2675 = vld [vmem:[%s833 + $0x44] sm:$0xf]
        %v2676 = vld [vmem:[%s833 + $0x48] sm:$0xf]
        %v2677 = vld [vmem:[%s833 + $0x4c] sm:$0xf]
        %v2678 = vld [vmem:[%s833 + $0x50] sm:$0xf]
        %v2679 = vld [vmem:[%s833 + $0x54] sm:$0xf]
        %v2680 = vld [vmem:[%s833 + $0x58] sm:$0xf]
        %v2681 = vld [vmem:[%s833 + $0x5c] sm:$0xf]
        %v2682 = vld [vmem:[%s833 + $0x60] sm:$0xf]
        %v2683 = vld [vmem:[%s833 + $0x64] sm:$0xf]
        %v2684 = vld [vmem:[%s833 + $0x68] sm:$0xf]
        %v2685 = vld [vmem:[%s833 + $0x6c] sm:$0xf]
        %v2686 = vld [vmem:[%s833 + $0x70] sm:$0xf]
        %v2687 = vld [vmem:[%s833 + $0x74] sm:$0xf]
        %v2688 = vld [vmem:[%s833 + $0x78] sm:$0xf]
        %v2689 = vld [vmem:[%s833 + $0x7c] sm:$0xf]
        %v2690 = vld [vmem:[%s833 + $0x80] sm:$0xf]
        %v2691 = vld [vmem:[%s833 + $0x84] sm:$0xf]
        %v2692 = vld [vmem:[%s833 + $0x88] sm:$0xf]
        %v2693 = vld [vmem:[%s833 + $0x8c] sm:$0xf]
        %v2694 = vld [vmem:[%s833 + $0x90] sm:$0xf]
        %v2695 = vld [vmem:[%s833 + $0x94] sm:$0xf]
        %v2696 = vld [vmem:[%s833 + $0x98] sm:$0xf]
        %v2697 = vld [vmem:[%s833 + $0x9c] sm:$0xf]
        %v2698 = vld [vmem:[%s833 + $0xa0] sm:$0xf]
        %v2699 = vld [vmem:[%s833 + $0xa4] sm:$0xf]
        %v2700 = vld [vmem:[%s833 + $0xa8] sm:$0xf]
        %v2701 = vld [vmem:[%s833 + $0xac] sm:$0xf]
        %v2702 = vld [vmem:[%s833 + $0xb0] sm:$0xf]
        %v2703 = vld [vmem:[%s833 + $0xb4] sm:$0xf]
        %v2704 = vld [vmem:[%s833 + $0xb8] sm:$0xf]
        %v2705 = vld [vmem:[%s833 + $0xbc] sm:$0xf]
        %v2706 = vld [vmem:[%s833 + $0xc0] sm:$0xf]
        %v2707 = vld [vmem:[%s833 + $0xc4] sm:$0xf]
        %v2708 = vld [vmem:[%s833 + $0xc8] sm:$0xf]
        %v2709 = vld [vmem:[%s833 + $0xcc] sm:$0xf]
        %v2710 = vld [vmem:[%s833 + $0xd0] sm:$0xf]
        %v2711 = vld [vmem:[%s833 + $0xd4] sm:$0xf]
        %v2712 = vld [vmem:[%s833 + $0xd8] sm:$0xf]
        %v2713 = vld [vmem:[%s833 + $0xdc] sm:$0xf]
        %v2714 = vld [vmem:[%s833 + $0xe0] sm:$0xf]
        %v2715 = vld [vmem:[%s833 + $0xe4] sm:$0xf]
        %v2716 = vld [vmem:[%s833 + $0xe8] sm:$0xf]
        %v2717 = vld [vmem:[%s833 + $0xec] sm:$0xf]
        %v2718 = vld [vmem:[%s833 + $0xf0] sm:$0xf]
        %v2719 = vld [vmem:[%s833 + $0xf4] sm:$0xf]
        %v2720 = vld [vmem:[%s833 + $0xf8] sm:$0xf]
        %v2721 = vld [vmem:[%s833 + $0xfc] sm:$0xf]
        %v2722 = vld [vmem:[%s815 + $0x10] sm:$0xff]
        %v2723 = vld [vmem:[%s815 + $0x18] sm:$0xff]
        %v2724 = vld [vmem:[%s815 + $0x50] sm:$0xff]
        %v2725 = vld [vmem:[%s815 + $0x58] sm:$0xff]
        %v2726 = vld [vmem:[%s815 + $0x90] sm:$0xff]
        %v2727 = vld [vmem:[%s815 + $0x98] sm:$0xff]
        %v2728 = vld [vmem:[%s815 + $0xd0] sm:$0xff]
        %v2729 = vld [vmem:[%s815 + $0xd8] sm:$0xff]
        %v2730 = vld [vmem:[%s815 + $0x110] sm:$0xff]
        %v2731 = vld [vmem:[%s815 + $0x118] sm:$0xff]
        %v2732 = vld [vmem:[%s815 + $0x150] sm:$0xff]
        %v2733 = vld [vmem:[%s815 + $0x158] sm:$0xff]
        %v2734 = vld [vmem:[%s815 + $0x190] sm:$0xff]
        %v2735 = vld [vmem:[%s815 + $0x198] sm:$0xff]
        %v2736 = vld [vmem:[%s815 + $0x1d0] sm:$0xff]
        %v2737 = vld [vmem:[%s815 + $0x1d8] sm:$0xff]
        %v2738 = vld [vmem:[%s815 + $0x210] sm:$0xff]
        %v2739 = vld [vmem:[%s815 + $0x218] sm:$0xff]
        %v2740 = vld [vmem:[%s815 + $0x250] sm:$0xff]
        %v2741 = vld [vmem:[%s815 + $0x258] sm:$0xff]
        %v2742 = vld [vmem:[%s815 + $0x290] sm:$0xff]
        %v2743 = vld [vmem:[%s815 + $0x298] sm:$0xff]
        %v2744 = vld [vmem:[%s815 + $0x2d0] sm:$0xff]
        %v2745 = vld [vmem:[%s815 + $0x2d8] sm:$0xff]
        %v2746 = vld [vmem:[%s815 + $0x310] sm:$0xff]
        %v2747 = vld [vmem:[%s815 + $0x318] sm:$0xff]
        %v2748 = vld [vmem:[%s815 + $0x350] sm:$0xff]
        %v2749 = vld [vmem:[%s815 + $0x358] sm:$0xff]
        %v2750 = vld [vmem:[%s815 + $0x390] sm:$0xff]
        %v2751 = vld [vmem:[%s815 + $0x398] sm:$0xff]
        %v2752 = vld [vmem:[%s815 + $0x3d0] sm:$0xff]
        %v2753 = vld [vmem:[%s815 + $0x3d8] sm:$0xff]
        %v2754 = vld [vmem:[%s824 + $0x4] sm:$0xf]
        %v2756 = vlaneseq
        %v2757 = vshrl.u32 %v2756, 7
        %v2758 = vsub.s32 0, %v2757
        %v2759 = vrot.slane %v2754, %v2758
        %v2760 = vlaneseq
        %v2761 = vshrl.u32 %v2760, 7
        %v2762 = vsub.s32 1, %v2761
        %v2763 = vrot.slane %v2754, %v2762
        %v2764 = vlaneseq
        %v2765 = vshrl.u32 %v2764, 7
        %v2766 = vsub.s32 2, %v2765
        %v2767 = vrot.slane %v2754, %v2766
        %v2768 = vlaneseq
        %v2769 = vshrl.u32 %v2768, 7
        %v2770 = vsub.s32 3, %v2769
        %v2771 = vrot.slane %v2754, %v2770
        %v2808 = vunpack.c.l.b16 %v2722
        %v2809 = vunpack.c.h.b16 %v2722
        %v2810 = vunpack.c.l.b16 %v2723
        %v2811 = vunpack.c.h.b16 %v2723
        %v2812 = vunpack.c.l.b16 %v2724
        %v2813 = vunpack.c.h.b16 %v2724
        %v2814 = vunpack.c.l.b16 %v2725
        %v2815 = vunpack.c.h.b16 %v2725
        %v2816 = vunpack.c.l.b16 %v2726
        %v2817 = vunpack.c.h.b16 %v2726
        %v2818 = vunpack.c.l.b16 %v2727
        %v2819 = vunpack.c.h.b16 %v2727
        %v2820 = vunpack.c.l.b16 %v2728
        %v2821 = vunpack.c.h.b16 %v2728
        %v2822 = vunpack.c.l.b16 %v2729
        %v2823 = vunpack.c.h.b16 %v2729
        %v2824 = vunpack.c.l.b16 %v2730
        %v2825 = vunpack.c.h.b16 %v2730
        %v2826 = vunpack.c.l.b16 %v2731
        %v2827 = vunpack.c.h.b16 %v2731
        %v2828 = vunpack.c.l.b16 %v2732
        %v2829 = vunpack.c.h.b16 %v2732
        %v2830 = vunpack.c.l.b16 %v2733
        %v2831 = vunpack.c.h.b16 %v2733
        %v2832 = vunpack.c.l.b16 %v2734
        %v2833 = vunpack.c.h.b16 %v2734
        %v2834 = vunpack.c.l.b16 %v2735
        %v2835 = vunpack.c.h.b16 %v2735
        %v2836 = vunpack.c.l.b16 %v2736
        %v2837 = vunpack.c.h.b16 %v2736
        %v2838 = vunpack.c.l.b16 %v2737
        %v2839 = vunpack.c.h.b16 %v2737
        %v2840 = vunpack.c.l.b16 %v2738
        %v2841 = vunpack.c.h.b16 %v2738
        %v2842 = vunpack.c.l.b16 %v2739
        %v2843 = vunpack.c.h.b16 %v2739
        %v2844 = vunpack.c.l.b16 %v2740
        %v2845 = vunpack.c.h.b16 %v2740
        %v2846 = vunpack.c.l.b16 %v2741
        %v2847 = vunpack.c.h.b16 %v2741
        %v2848 = vunpack.c.l.b16 %v2742
        %v2849 = vunpack.c.h.b16 %v2742
        %v2850 = vunpack.c.l.b16 %v2743
        %v2851 = vunpack.c.h.b16 %v2743
        %v2852 = vunpack.c.l.b16 %v2744
        %v2853 = vunpack.c.h.b16 %v2744
        %v2854 = vunpack.c.l.b16 %v2745
        %v2855 = vunpack.c.h.b16 %v2745
        %v2856 = vunpack.c.l.b16 %v2746
        %v2857 = vunpack.c.h.b16 %v2746
        %v2858 = vunpack.c.l.b16 %v2747
        %v2859 = vunpack.c.h.b16 %v2747
        %v2860 = vunpack.c.l.b16 %v2748
        %v2861 = vunpack.c.h.b16 %v2748
        %v2862 = vunpack.c.l.b16 %v2749
        %v2863 = vunpack.c.h.b16 %v2749
        %v2864 = vunpack.c.l.b16 %v2750
        %v2865 = vunpack.c.h.b16 %v2750
        %v2866 = vunpack.c.l.b16 %v2751
        %v2867 = vunpack.c.h.b16 %v2751
        %v2868 = vunpack.c.l.b16 %v2752
        %v2869 = vunpack.c.h.b16 %v2752
        %v2870 = vunpack.c.l.b16 %v2753
        %v2871 = vunpack.c.h.b16 %v2753
        %v2872 = vpack.c.b16 %v2812, %v2808
        %v2873 = vpack.c.b16 %v2813, %v2809
        %v2874 = vpack.c.b16 %v2814, %v2810
        %v2875 = vpack.c.b16 %v2815, %v2811
        %v2876 = vpack.c.b16 %v2820, %v2816
        %v2877 = vpack.c.b16 %v2821, %v2817
        %v2878 = vpack.c.b16 %v2822, %v2818
        %v2879 = vpack.c.b16 %v2823, %v2819
        %v2880 = vpack.c.b16 %v2828, %v2824
        %v2881 = vpack.c.b16 %v2829, %v2825
        %v2882 = vpack.c.b16 %v2830, %v2826
        %v2883 = vpack.c.b16 %v2831, %v2827
        %v2884 = vpack.c.b16 %v2836, %v2832
        %v2885 = vpack.c.b16 %v2837, %v2833
        %v2886 = vpack.c.b16 %v2838, %v2834
        %v2887 = vpack.c.b16 %v2839, %v2835
        %v2888 = vpack.c.b16 %v2844, %v2840
        %v2889 = vpack.c.b16 %v2845, %v2841
        %v2890 = vpack.c.b16 %v2846, %v2842
        %v2891 = vpack.c.b16 %v2847, %v2843
        %v2892 = vpack.c.b16 %v2852, %v2848
        %v2893 = vpack.c.b16 %v2853, %v2849
        %v2894 = vpack.c.b16 %v2854, %v2850
        %v2895 = vpack.c.b16 %v2855, %v2851
        %v2896 = vpack.c.b16 %v2860, %v2856
        %v2897 = vpack.c.b16 %v2861, %v2857
        %v2898 = vpack.c.b16 %v2862, %v2858
        %v2899 = vpack.c.b16 %v2863, %v2859
        %v2900 = vpack.c.b16 %v2868, %v2864
        %v2901 = vpack.c.b16 %v2869, %v2865
        %v2902 = vpack.c.b16 %v2870, %v2866
        %v2903 = vpack.c.b16 %v2871, %v2867
        %2936 = vmatprep.subr.bf16.mxu0 %v2901
        %2937 = vmatpush1.bf16.msra.mxu0 %v2900
        %2938 = vmatprep.subr.bf16.mxu0 %v2897
        %2939 = vmatpush1.bf16.msra.mxu0 %v2896
        %2940 = vmatprep.subr.bf16.mxu0 %v2893
        %2941 = vmatpush1.bf16.msra.mxu0 %v2892
        %2942 = vmatprep.subr.bf16.mxu0 %v2889
        %2943 = vmatpush1.bf16.msra.mxu0 %v2888
        %2944 = vmatprep.subr.bf16.mxu0 %v2885
        %2945 = vmatpush1.bf16.msra.mxu0 %v2884
        %2946 = vmatprep.subr.bf16.mxu0 %v2881
        %2947 = vmatpush1.bf16.msra.mxu0 %v2880
        %2948 = vmatprep.subr.bf16.mxu0 %v2877
        %2949 = vmatpush1.bf16.msra.mxu0 %v2876
        %2950 = vmatprep.subr.bf16.mxu0 %v2873
        %2951 = vmatpush1.bf16.msra.mxu0 %v2872
        %2952 = vmatprep.subr.bf16.mxu0 0
        %2953 = vmatpush2.bf16.msra.mxu0 0
        %2954 = vmatprep.subr.bf16.mxu0 0
        %2955 = vmatpush2.bf16.msra.mxu0 0
        %2956 = vmatprep.subr.bf16.mxu0 0
        %2957 = vmatpush2.bf16.msra.mxu0 0
        %2958 = vmatprep.subr.bf16.mxu0 0
        %2959 = vmatpush2.bf16.msra.mxu0 0
        %2960 = vmatprep.subr.bf16.mxu0 0
        %2961 = vmatpush2.bf16.msra.mxu0 0
        %2962 = vmatprep.subr.bf16.mxu0 0
        %2963 = vmatpush2.bf16.msra.mxu0 0
        %2964 = vmatprep.subr.bf16.mxu0 0
        %2965 = vmatpush2.bf16.msra.mxu0 0
        %2966 = vmatprep.subr.bf16.mxu0 0
        %2967 = vmatpush2.bf16.msra.mxu0 0
        %2968 = vmatprep.mubr.bf16.mxu0 0
        %2969 = vmatmul.mubr.bf16.gmra.mxu0 %v2353
        %v2970 = vpop.f32.mrf.mxu0
        %v2971 = vadd.f32 %v2759, %v2970
        %v2972 = vpop.f32.mrf.mxu0
        %v2973 = vadd.f32 %v2763, %v2972
        %v2974 = vpop.f32.mrf.mxu0
        %v2975 = vpop.f32.mrf.mxu0
        %2976 = vdwg.mxu0
        %2977 = vmatprep.subr.bf16.mxu0 %v2903
        %2978 = vmatpush1.bf16.msra.mxu0 %v2902
        %2979 = vmatprep.subr.bf16.mxu0 %v2899
        %2980 = vmatpush1.bf16.msra.mxu0 %v2898
        %2981 = vmatprep.subr.bf16.mxu0 %v2895
        %2982 = vmatpush1.bf16.msra.mxu0 %v2894
        %2983 = vmatprep.subr.bf16.mxu0 %v2891
        %2984 = vmatpush1.bf16.msra.mxu0 %v2890
        %2985 = vmatprep.subr.bf16.mxu0 %v2887
        %2986 = vmatpush1.bf16.msra.mxu0 %v2886
        %2987 = vmatprep.subr.bf16.mxu0 %v2883
        %2988 = vmatpush1.bf16.msra.mxu0 %v2882
        %2989 = vmatprep.subr.bf16.mxu0 %v2879
        %2990 = vmatpush1.bf16.msra.mxu0 %v2878
        %2991 = vmatprep.subr.bf16.mxu0 %v2875
        %2992 = vmatpush1.bf16.msra.mxu0 %v2874
        %2993 = vmatprep.subr.bf16.mxu0 0
        %2994 = vmatpush2.bf16.msra.mxu0 0
        %2995 = vmatprep.subr.bf16.mxu0 0
        %2996 = vmatpush2.bf16.msra.mxu0 0
        %2997 = vmatprep.subr.bf16.mxu0 0
        %2998 = vmatpush2.bf16.msra.mxu0 0
        %2999 = vmatprep.subr.bf16.mxu0 0
        %3000 = vmatpush2.bf16.msra.mxu0 0
        %3001 = vmatprep.subr.bf16.mxu0 0
        %3002 = vmatpush2.bf16.msra.mxu0 0
        %3003 = vmatprep.subr.bf16.mxu0 0
        %3004 = vmatpush2.bf16.msra.mxu0 0
        %3005 = vmatprep.subr.bf16.mxu0 0
        %3006 = vmatpush2.bf16.msra.mxu0 0
        %3007 = vmatprep.subr.bf16.mxu0 0
        %3008 = vmatpush2.bf16.msra.mxu0 0
        %3009 = vmatprep.mubr.bf16.mxu0 0
        %3010 = vmatmul.mubr.bf16.gmra.mxu0 %v2353
        %v3011 = vpop.f32.mrf.mxu0
        %v3012 = vadd.f32 %v2767, %v3011
        %v3013 = vpop.f32.mrf.mxu0
        %v3014 = vadd.f32 %v2771, %v3013
        %v3015 = vpop.f32.mrf.mxu0
        %v3016 = vpop.f32.mrf.mxu0
        %3017 = vdwg.mxu0
        %v3018 = vmax.f32 %v2971, 0.0
        %v3019 = vmax.f32 %v2973, 0.0
        %v3020 = vmax.f32 %v3012, 0.0
        %v3021 = vmax.f32 %v3014, 0.0
        %v3022 = vpack.c.bf16 %v3018, %v3018
        %v3023 = vpack.c.bf16 %v3019, %v3019
        %v3024 = vpack.c.bf16 %v3020, %v3020
        %v3025 = vpack.c.bf16 %v3021, %v3021
        %v3026 = vld [vmem:[%s833 + $0x100] sm:$0xf]
        %v3027 = vld [vmem:[%s833 + $0x104] sm:$0xf]
        %v3028 = vld [vmem:[%s833 + $0x108] sm:$0xf]
        %v3029 = vld [vmem:[%s833 + $0x10c] sm:$0xf]
        %v3030 = vld [vmem:[%s833 + $0x110] sm:$0xf]
        %v3031 = vld [vmem:[%s833 + $0x114] sm:$0xf]
        %v3032 = vld [vmem:[%s833 + $0x118] sm:$0xf]
        %v3033 = vld [vmem:[%s833 + $0x11c] sm:$0xf]
        %v3034 = vld [vmem:[%s833 + $0x120] sm:$0xf]
        %v3035 = vld [vmem:[%s833 + $0x124] sm:$0xf]
        %v3036 = vld [vmem:[%s833 + $0x128] sm:$0xf]
        %v3037 = vld [vmem:[%s833 + $0x12c] sm:$0xf]
        %v3038 = vld [vmem:[%s833 + $0x130] sm:$0xf]
        %v3039 = vld [vmem:[%s833 + $0x134] sm:$0xf]
        %v3040 = vld [vmem:[%s833 + $0x138] sm:$0xf]
        %v3041 = vld [vmem:[%s833 + $0x13c] sm:$0xf]
        %v3042 = vld [vmem:[%s833 + $0x140] sm:$0xf]
        %v3043 = vld [vmem:[%s833 + $0x144] sm:$0xf]
        %v3044 = vld [vmem:[%s833 + $0x148] sm:$0xf]
        %v3045 = vld [vmem:[%s833 + $0x14c] sm:$0xf]
        %v3046 = vld [vmem:[%s833 + $0x150] sm:$0xf]
        %v3047 = vld [vmem:[%s833 + $0x154] sm:$0xf]
        %v3048 = vld [vmem:[%s833 + $0x158] sm:$0xf]
        %v3049 = vld [vmem:[%s833 + $0x15c] sm:$0xf]
        %v3050 = vld [vmem:[%s833 + $0x160] sm:$0xf]
        %v3051 = vld [vmem:[%s833 + $0x164] sm:$0xf]
        %v3052 = vld [vmem:[%s833 + $0x168] sm:$0xf]
        %v3053 = vld [vmem:[%s833 + $0x16c] sm:$0xf]
        %v3054 = vld [vmem:[%s833 + $0x170] sm:$0xf]
        %v3055 = vld [vmem:[%s833 + $0x174] sm:$0xf]
        %v3056 = vld [vmem:[%s833 + $0x178] sm:$0xf]
        %v3057 = vld [vmem:[%s833 + $0x17c] sm:$0xf]
        %v3058 = vld [vmem:[%s833 + $0x180] sm:$0xf]
        %v3059 = vld [vmem:[%s833 + $0x184] sm:$0xf]
        %v3060 = vld [vmem:[%s833 + $0x188] sm:$0xf]
        %v3061 = vld [vmem:[%s833 + $0x18c] sm:$0xf]
        %v3062 = vld [vmem:[%s833 + $0x190] sm:$0xf]
        %v3063 = vld [vmem:[%s833 + $0x194] sm:$0xf]
        %v3064 = vld [vmem:[%s833 + $0x198] sm:$0xf]
        %v3065 = vld [vmem:[%s833 + $0x19c] sm:$0xf]
        %v3066 = vld [vmem:[%s833 + $0x1a0] sm:$0xf]
        %v3067 = vld [vmem:[%s833 + $0x1a4] sm:$0xf]
        %v3068 = vld [vmem:[%s833 + $0x1a8] sm:$0xf]
        %v3069 = vld [vmem:[%s833 + $0x1ac] sm:$0xf]
        %v3070 = vld [vmem:[%s833 + $0x1b0] sm:$0xf]
        %v3071 = vld [vmem:[%s833 + $0x1b4] sm:$0xf]
        %v3072 = vld [vmem:[%s833 + $0x1b8] sm:$0xf]
        %v3073 = vld [vmem:[%s833 + $0x1bc] sm:$0xf]
        %v3074 = vld [vmem:[%s833 + $0x1c0] sm:$0xf]
        %v3075 = vld [vmem:[%s833 + $0x1c4] sm:$0xf]
        %v3076 = vld [vmem:[%s833 + $0x1c8] sm:$0xf]
        %v3077 = vld [vmem:[%s833 + $0x1cc] sm:$0xf]
        %v3078 = vld [vmem:[%s833 + $0x1d0] sm:$0xf]
        %v3079 = vld [vmem:[%s833 + $0x1d4] sm:$0xf]
        %v3080 = vld [vmem:[%s833 + $0x1d8] sm:$0xf]
        %v3081 = vld [vmem:[%s833 + $0x1dc] sm:$0xf]
        %v3082 = vld [vmem:[%s833 + $0x1e0] sm:$0xf]
        %v3083 = vld [vmem:[%s833 + $0x1e4] sm:$0xf]
        %v3084 = vld [vmem:[%s833 + $0x1e8] sm:$0xf]
        %v3085 = vld [vmem:[%s833 + $0x1ec] sm:$0xf]
        %v3086 = vld [vmem:[%s833 + $0x1f0] sm:$0xf]
        %v3087 = vld [vmem:[%s833 + $0x1f4] sm:$0xf]
        %v3088 = vld [vmem:[%s833 + $0x1f8] sm:$0xf]
        %v3089 = vld [vmem:[%s833 + $0x1fc] sm:$0xf]
        %v3154 = vunpack.c.l.b16 %v3026
        %v3155 = vunpack.c.l.b16 %v3027
        %v3156 = vunpack.c.l.b16 %v3028
        %v3157 = vunpack.c.l.b16 %v3029
        %v3158 = vunpack.c.l.b16 %v3030
        %v3159 = vunpack.c.l.b16 %v3031
        %v3160 = vunpack.c.l.b16 %v3032
        %v3161 = vunpack.c.l.b16 %v3033
        %v3162 = vunpack.c.l.b16 %v3034
        %v3163 = vunpack.c.l.b16 %v3035
        %v3164 = vunpack.c.l.b16 %v3036
        %v3165 = vunpack.c.l.b16 %v3037
        %v3166 = vunpack.c.l.b16 %v3038
        %v3167 = vunpack.c.l.b16 %v3039
        %v3168 = vunpack.c.l.b16 %v3040
        %v3169 = vunpack.c.l.b16 %v3041
        %v3170 = vunpack.c.l.b16 %v3042
        %v3171 = vunpack.c.l.b16 %v3043
        %v3172 = vunpack.c.l.b16 %v3044
        %v3173 = vunpack.c.l.b16 %v3045
        %v3174 = vunpack.c.l.b16 %v3046
        %v3175 = vunpack.c.l.b16 %v3047
        %v3176 = vunpack.c.l.b16 %v3048
        %v3177 = vunpack.c.l.b16 %v3049
        %v3178 = vunpack.c.l.b16 %v3050
        %v3179 = vunpack.c.l.b16 %v3051
        %v3180 = vunpack.c.l.b16 %v3052
        %v3181 = vunpack.c.l.b16 %v3053
        %v3182 = vunpack.c.l.b16 %v3054
        %v3183 = vunpack.c.l.b16 %v3055
        %v3184 = vunpack.c.l.b16 %v3056
        %v3185 = vunpack.c.l.b16 %v3057
        %v3186 = vunpack.c.l.b16 %v3058
        %v3187 = vunpack.c.l.b16 %v3059
        %v3188 = vunpack.c.l.b16 %v3060
        %v3189 = vunpack.c.l.b16 %v3061
        %v3190 = vunpack.c.l.b16 %v3062
        %v3191 = vunpack.c.l.b16 %v3063
        %v3192 = vunpack.c.l.b16 %v3064
        %v3193 = vunpack.c.l.b16 %v3065
        %v3194 = vunpack.c.l.b16 %v3066
        %v3195 = vunpack.c.l.b16 %v3067
        %v3196 = vunpack.c.l.b16 %v3068
        %v3197 = vunpack.c.l.b16 %v3069
        %v3198 = vunpack.c.l.b16 %v3070
        %v3199 = vunpack.c.l.b16 %v3071
        %v3200 = vunpack.c.l.b16 %v3072
        %v3201 = vunpack.c.l.b16 %v3073
        %v3202 = vunpack.c.l.b16 %v3074
        %v3203 = vunpack.c.l.b16 %v3075
        %v3204 = vunpack.c.l.b16 %v3076
        %v3205 = vunpack.c.l.b16 %v3077
        %v3206 = vunpack.c.l.b16 %v3078
        %v3207 = vunpack.c.l.b16 %v3079
        %v3208 = vunpack.c.l.b16 %v3080
        %v3209 = vunpack.c.l.b16 %v3081
        %v3210 = vunpack.c.l.b16 %v3082
        %v3211 = vunpack.c.l.b16 %v3083
        %v3212 = vunpack.c.l.b16 %v3084
        %v3213 = vunpack.c.l.b16 %v3085
        %v3214 = vunpack.c.l.b16 %v3086
        %v3215 = vunpack.c.l.b16 %v3087
        %v3216 = vunpack.c.l.b16 %v3088
        %v3217 = vunpack.c.l.b16 %v3089
        %v3218 = vpack.c.b16 %v3155, %v3154
        %v3219 = vpack.c.b16 %v3157, %v3156
        %v3220 = vpack.c.b16 %v3159, %v3158
        %v3221 = vpack.c.b16 %v3161, %v3160
        %v3222 = vpack.c.b16 %v3163, %v3162
        %v3223 = vpack.c.b16 %v3165, %v3164
        %v3224 = vpack.c.b16 %v3167, %v3166
        %v3225 = vpack.c.b16 %v3169, %v3168
        %v3226 = vpack.c.b16 %v3171, %v3170
        %v3227 = vpack.c.b16 %v3173, %v3172
        %v3228 = vpack.c.b16 %v3175, %v3174
        %v3229 = vpack.c.b16 %v3177, %v3176
        %v3230 = vpack.c.b16 %v3179, %v3178
        %v3231 = vpack.c.b16 %v3181, %v3180
        %v3232 = vpack.c.b16 %v3183, %v3182
        %v3233 = vpack.c.b16 %v3185, %v3184
        %v3234 = vpack.c.b16 %v3187, %v3186
        %v3235 = vpack.c.b16 %v3189, %v3188
        %v3236 = vpack.c.b16 %v3191, %v3190
        %v3237 = vpack.c.b16 %v3193, %v3192
        %v3238 = vpack.c.b16 %v3195, %v3194
        %v3239 = vpack.c.b16 %v3197, %v3196
        %v3240 = vpack.c.b16 %v3199, %v3198
        %v3241 = vpack.c.b16 %v3201, %v3200
        %v3242 = vpack.c.b16 %v3203, %v3202
        %v3243 = vpack.c.b16 %v3205, %v3204
        %v3244 = vpack.c.b16 %v3207, %v3206
        %v3245 = vpack.c.b16 %v3209, %v3208
        %v3246 = vpack.c.b16 %v3211, %v3210
        %v3247 = vpack.c.b16 %v3213, %v3212
        %v3248 = vpack.c.b16 %v3215, %v3214
        %v3249 = vpack.c.b16 %v3217, %v3216
        %3282 = vmatprep.subr.bf16.mxu0 0
        %3283 = vmatpush1.bf16.msra.mxu0 %v3225
        %3284 = vmatprep.subr.bf16.mxu0 0
        %3285 = vmatpush1.bf16.msra.mxu0 %v3224
        %3286 = vmatprep.subr.bf16.mxu0 0
        %3287 = vmatpush1.bf16.msra.mxu0 %v3223
        %3288 = vmatprep.subr.bf16.mxu0 0
        %3289 = vmatpush1.bf16.msra.mxu0 %v3222
        %3290 = vmatprep.subr.bf16.mxu0 0
        %3291 = vmatpush1.bf16.msra.mxu0 %v3221
        %3292 = vmatprep.subr.bf16.mxu0 0
        %3293 = vmatpush1.bf16.msra.mxu0 %v3220
        %3294 = vmatprep.subr.bf16.mxu0 0
        %3295 = vmatpush1.bf16.msra.mxu0 %v3219
        %3296 = vmatprep.subr.bf16.mxu0 0
        %3297 = vmatpush1.bf16.msra.mxu0 %v3218
        %3298 = vmatprep.subr.bf16.mxu0 0
        %3299 = vmatpush2.bf16.msra.mxu0 %v3233
        %3300 = vmatprep.subr.bf16.mxu0 0
        %3301 = vmatpush2.bf16.msra.mxu0 %v3232
        %3302 = vmatprep.subr.bf16.mxu0 0
        %3303 = vmatpush2.bf16.msra.mxu0 %v3231
        %3304 = vmatprep.subr.bf16.mxu0 0
        %3305 = vmatpush2.bf16.msra.mxu0 %v3230
        %3306 = vmatprep.subr.bf16.mxu0 0
        %3307 = vmatpush2.bf16.msra.mxu0 %v3229
        %3308 = vmatprep.subr.bf16.mxu0 0
        %3309 = vmatpush2.bf16.msra.mxu0 %v3228
        %3310 = vmatprep.subr.bf16.mxu0 0
        %3311 = vmatpush2.bf16.msra.mxu0 %v3227
        %3312 = vmatprep.subr.bf16.mxu0 0
        %3313 = vmatpush2.bf16.msra.mxu0 %v3226
        %3314 = vmatprep.mubr.bf16.mxu0 %v3023
        %3315 = vmatmul.mubr.bf16.gmra.mxu0 %v3022
        %v3316 = vpop.f32.mrf.mxu0
        %v3317 = vadd.f32 0.0, %v3316
        %v3318 = vpop.f32.mrf.mxu0
        %v3319 = vpop.f32.mrf.mxu0
        %v3320 = vpop.f32.mrf.mxu0
        %3321 = vdwg.mxu0
        %3322 = vmatprep.subr.bf16.mxu0 0
        %3323 = vmatpush1.bf16.msra.mxu0 %v3241
        %3324 = vmatprep.subr.bf16.mxu0 0
        %3325 = vmatpush1.bf16.msra.mxu0 %v3240
        %3326 = vmatprep.subr.bf16.mxu0 0
        %3327 = vmatpush1.bf16.msra.mxu0 %v3239
        %3328 = vmatprep.subr.bf16.mxu0 0
        %3329 = vmatpush1.bf16.msra.mxu0 %v3238
        %3330 = vmatprep.subr.bf16.mxu0 0
        %3331 = vmatpush1.bf16.msra.mxu0 %v3237
        %3332 = vmatprep.subr.bf16.mxu0 0
        %3333 = vmatpush1.bf16.msra.mxu0 %v3236
        %3334 = vmatprep.subr.bf16.mxu0 0
        %3335 = vmatpush1.bf16.msra.mxu0 %v3235
        %3336 = vmatprep.subr.bf16.mxu0 0
        %3337 = vmatpush1.bf16.msra.mxu0 %v3234
        %3338 = vmatprep.subr.bf16.mxu0 0
        %3339 = vmatpush2.bf16.msra.mxu0 %v3249
        %3340 = vmatprep.subr.bf16.mxu0 0
        %3341 = vmatpush2.bf16.msra.mxu0 %v3248
        %3342 = vmatprep.subr.bf16.mxu0 0
        %3343 = vmatpush2.bf16.msra.mxu0 %v3247
        %3344 = vmatprep.subr.bf16.mxu0 0
        %3345 = vmatpush2.bf16.msra.mxu0 %v3246
        %3346 = vmatprep.subr.bf16.mxu0 0
        %3347 = vmatpush2.bf16.msra.mxu0 %v3245
        %3348 = vmatprep.subr.bf16.mxu0 0
        %3349 = vmatpush2.bf16.msra.mxu0 %v3244
        %3350 = vmatprep.subr.bf16.mxu0 0
        %3351 = vmatpush2.bf16.msra.mxu0 %v3243
        %3352 = vmatprep.subr.bf16.mxu0 0
        %3353 = vmatpush2.bf16.msra.mxu0 %v3242
        %3354 = vmatprep.mubr.bf16.mxu0 %v3025
        %3355 = vmatmul.mubr.bf16.gmra.mxu0 %v3024
        %v3356 = vpop.f32.mrf.mxu0
        %v3357 = vadd.f32 %v3317, %v3356
        %v3358 = vpop.f32.mrf.mxu0
        %v3359 = vpop.f32.mrf.mxu0
        %v3360 = vpop.f32.mrf.mxu0
        %3361 = vdwg.mxu0
        %v3426 = vunpack.c.l.b16 %v2658
        %v3427 = vunpack.c.l.b16 %v2659
        %v3428 = vunpack.c.l.b16 %v2660
        %v3429 = vunpack.c.l.b16 %v2661
        %v3430 = vunpack.c.l.b16 %v2662
        %v3431 = vunpack.c.l.b16 %v2663
        %v3432 = vunpack.c.l.b16 %v2664
        %v3433 = vunpack.c.l.b16 %v2665
        %v3434 = vunpack.c.l.b16 %v2666
        %v3435 = vunpack.c.l.b16 %v2667
        %v3436 = vunpack.c.l.b16 %v2668
        %v3437 = vunpack.c.l.b16 %v2669
        %v3438 = vunpack.c.l.b16 %v2670
        %v3439 = vunpack.c.l.b16 %v2671
        %v3440 = vunpack.c.l.b16 %v2672
        %v3441 = vunpack.c.l.b16 %v2673
        %v3442 = vunpack.c.l.b16 %v2674
        %v3443 = vunpack.c.l.b16 %v2675
        %v3444 = vunpack.c.l.b16 %v2676
        %v3445 = vunpack.c.l.b16 %v2677
        %v3446 = vunpack.c.l.b16 %v2678
        %v3447 = vunpack.c.l.b16 %v2679
        %v3448 = vunpack.c.l.b16 %v2680
        %v3449 = vunpack.c.l.b16 %v2681
        %v3450 = vunpack.c.l.b16 %v2682
        %v3451 = vunpack.c.l.b16 %v2683
        %v3452 = vunpack.c.l.b16 %v2684
        %v3453 = vunpack.c.l.b16 %v2685
        %v3454 = vunpack.c.l.b16 %v2686
        %v3455 = vunpack.c.l.b16 %v2687
        %v3456 = vunpack.c.l.b16 %v2688
        %v3457 = vunpack.c.l.b16 %v2689
        %v3458 = vunpack.c.l.b16 %v2690
        %v3459 = vunpack.c.l.b16 %v2691
        %v3460 = vunpack.c.l.b16 %v2692
        %v3461 = vunpack.c.l.b16 %v2693
        %v3462 = vunpack.c.l.b16 %v2694
        %v3463 = vunpack.c.l.b16 %v2695
        %v3464 = vunpack.c.l.b16 %v2696
        %v3465 = vunpack.c.l.b16 %v2697
        %v3466 = vunpack.c.l.b16 %v2698
        %v3467 = vunpack.c.l.b16 %v2699
        %v3468 = vunpack.c.l.b16 %v2700
        %v3469 = vunpack.c.l.b16 %v2701
        %v3470 = vunpack.c.l.b16 %v2702
        %v3471 = vunpack.c.l.b16 %v2703
        %v3472 = vunpack.c.l.b16 %v2704
        %v3473 = vunpack.c.l.b16 %v2705
        %v3474 = vunpack.c.l.b16 %v2706
        %v3475 = vunpack.c.l.b16 %v2707
        %v3476 = vunpack.c.l.b16 %v2708
        %v3477 = vunpack.c.l.b16 %v2709
        %v3478 = vunpack.c.l.b16 %v2710
        %v3479 = vunpack.c.l.b16 %v2711
        %v3480 = vunpack.c.l.b16 %v2712
        %v3481 = vunpack.c.l.b16 %v2713
        %v3482 = vunpack.c.l.b16 %v2714
        %v3483 = vunpack.c.l.b16 %v2715
        %v3484 = vunpack.c.l.b16 %v2716
        %v3485 = vunpack.c.l.b16 %v2717
        %v3486 = vunpack.c.l.b16 %v2718
        %v3487 = vunpack.c.l.b16 %v2719
        %v3488 = vunpack.c.l.b16 %v2720
        %v3489 = vunpack.c.l.b16 %v2721
        %v3490 = vpack.c.b16 %v3427, %v3426
        %v3491 = vpack.c.b16 %v3429, %v3428
        %v3492 = vpack.c.b16 %v3431, %v3430
        %v3493 = vpack.c.b16 %v3433, %v3432
        %v3494 = vpack.c.b16 %v3435, %v3434
        %v3495 = vpack.c.b16 %v3437, %v3436
        %v3496 = vpack.c.b16 %v3439, %v3438
        %v3497 = vpack.c.b16 %v3441, %v3440
        %v3498 = vpack.c.b16 %v3443, %v3442
        %v3499 = vpack.c.b16 %v3445, %v3444
        %v3500 = vpack.c.b16 %v3447, %v3446
        %v3501 = vpack.c.b16 %v3449, %v3448
        %v3502 = vpack.c.b16 %v3451, %v3450
        %v3503 = vpack.c.b16 %v3453, %v3452
        %v3504 = vpack.c.b16 %v3455, %v3454
        %v3505 = vpack.c.b16 %v3457, %v3456
        %v3506 = vpack.c.b16 %v3459, %v3458
        %v3507 = vpack.c.b16 %v3461, %v3460
        %v3508 = vpack.c.b16 %v3463, %v3462
        %v3509 = vpack.c.b16 %v3465, %v3464
        %v3510 = vpack.c.b16 %v3467, %v3466
        %v3511 = vpack.c.b16 %v3469, %v3468
        %v3512 = vpack.c.b16 %v3471, %v3470
        %v3513 = vpack.c.b16 %v3473, %v3472
        %v3514 = vpack.c.b16 %v3475, %v3474
        %v3515 = vpack.c.b16 %v3477, %v3476
        %v3516 = vpack.c.b16 %v3479, %v3478
        %v3517 = vpack.c.b16 %v3481, %v3480
        %v3518 = vpack.c.b16 %v3483, %v3482
        %v3519 = vpack.c.b16 %v3485, %v3484
        %v3520 = vpack.c.b16 %v3487, %v3486
        %v3521 = vpack.c.b16 %v3489, %v3488
        %3554 = vmatprep.subr.bf16.mxu0 0
        %3555 = vmatpush1.bf16.msra.mxu0 %v3497
        %3556 = vmatprep.subr.bf16.mxu0 0
        %3557 = vmatpush1.bf16.msra.mxu0 %v3496
        %3558 = vmatprep.subr.bf16.mxu0 0
        %3559 = vmatpush1.bf16.msra.mxu0 %v3495
        %3560 = vmatprep.subr.bf16.mxu0 0
        %3561 = vmatpush1.bf16.msra.mxu0 %v3494
        %3562 = vmatprep.subr.bf16.mxu0 0
        %3563 = vmatpush1.bf16.msra.mxu0 %v3493
        %3564 = vmatprep.subr.bf16.mxu0 0
        %3565 = vmatpush1.bf16.msra.mxu0 %v3492
        %3566 = vmatprep.subr.bf16.mxu0 0
        %3567 = vmatpush1.bf16.msra.mxu0 %v3491
        %3568 = vmatprep.subr.bf16.mxu0 0
        %3569 = vmatpush1.bf16.msra.mxu0 %v3490
        %3570 = vmatprep.subr.bf16.mxu0 0
        %3571 = vmatpush2.bf16.msra.mxu0 %v3505
        %3572 = vmatprep.subr.bf16.mxu0 0
        %3573 = vmatpush2.bf16.msra.mxu0 %v3504
        %3574 = vmatprep.subr.bf16.mxu0 0
        %3575 = vmatpush2.bf16.msra.mxu0 %v3503
        %3576 = vmatprep.subr.bf16.mxu0 0
        %3577 = vmatpush2.bf16.msra.mxu0 %v3502
        %3578 = vmatprep.subr.bf16.mxu0 0
        %3579 = vmatpush2.bf16.msra.mxu0 %v3501
        %3580 = vmatprep.subr.bf16.mxu0 0
        %3581 = vmatpush2.bf16.msra.mxu0 %v3500
        %3582 = vmatprep.subr.bf16.mxu0 0
        %3583 = vmatpush2.bf16.msra.mxu0 %v3499
        %3584 = vmatprep.subr.bf16.mxu0 0
        %3585 = vmatpush2.bf16.msra.mxu0 %v3498
        %3586 = vmatprep.mubr.bf16.mxu0 %v2655
        %3587 = vmatmul.mubr.bf16.gmra.mxu0 %v2654
        %v3588 = vpop.f32.mrf.mxu0
        %v3589 = vadd.f32 %v3357, %v3588
        %v3590 = vpop.f32.mrf.mxu0
        %v3591 = vpop.f32.mrf.mxu0
        %v3592 = vpop.f32.mrf.mxu0
        %3593 = vdwg.mxu0
        %3594 = vmatprep.subr.bf16.mxu0 0
        %3595 = vmatpush1.bf16.msra.mxu0 %v3513
        %3596 = vmatprep.subr.bf16.mxu0 0
        %3597 = vmatpush1.bf16.msra.mxu0 %v3512
        %3598 = vmatprep.subr.bf16.mxu0 0
        %3599 = vmatpush1.bf16.msra.mxu0 %v3511
        %3600 = vmatprep.subr.bf16.mxu0 0
        %3601 = vmatpush1.bf16.msra.mxu0 %v3510
        %3602 = vmatprep.subr.bf16.mxu0 0
        %3603 = vmatpush1.bf16.msra.mxu0 %v3509
        %3604 = vmatprep.subr.bf16.mxu0 0
        %3605 = vmatpush1.bf16.msra.mxu0 %v3508
        %3606 = vmatprep.subr.bf16.mxu0 0
        %3607 = vmatpush1.bf16.msra.mxu0 %v3507
        %3608 = vmatprep.subr.bf16.mxu0 0
        %3609 = vmatpush1.bf16.msra.mxu0 %v3506
        %3610 = vmatprep.subr.bf16.mxu0 0
        %3611 = vmatpush2.bf16.msra.mxu0 %v3521
        %3612 = vmatprep.subr.bf16.mxu0 0
        %3613 = vmatpush2.bf16.msra.mxu0 %v3520
        %3614 = vmatprep.subr.bf16.mxu0 0
        %3615 = vmatpush2.bf16.msra.mxu0 %v3519
        %3616 = vmatprep.subr.bf16.mxu0 0
        %3617 = vmatpush2.bf16.msra.mxu0 %v3518
        %3618 = vmatprep.subr.bf16.mxu0 0
        %3619 = vmatpush2.bf16.msra.mxu0 %v3517
        %3620 = vmatprep.subr.bf16.mxu0 0
        %3621 = vmatpush2.bf16.msra.mxu0 %v3516
        %3622 = vmatprep.subr.bf16.mxu0 0
        %3623 = vmatpush2.bf16.msra.mxu0 %v3515
        %3624 = vmatprep.subr.bf16.mxu0 0
        %3625 = vmatpush2.bf16.msra.mxu0 %v3514
        %3626 = vmatprep.mubr.bf16.mxu0 %v2657
        %3627 = vmatmul.mubr.bf16.gmra.mxu0 %v2656
        %v3628 = vpop.f32.mrf.mxu0
        %v3629 = vadd.f32 %v3589, %v3628
        %v3630 = vpop.f32.mrf.mxu0
        %v3631 = vpop.f32.mrf.mxu0
        %v3632 = vpop.f32.mrf.mxu0
        %3633 = vdwg.mxu0
        %v3634 = vld [vmem:[%s815 + $0x20] sm:$0xff]
        %v3635 = vld [vmem:[%s815 + $0x28] sm:$0xff]
        %v3636 = vld [vmem:[%s815 + $0x60] sm:$0xff]
        %v3637 = vld [vmem:[%s815 + $0x68] sm:$0xff]
        %v3638 = vld [vmem:[%s815 + $0xa0] sm:$0xff]
        %v3639 = vld [vmem:[%s815 + $0xa8] sm:$0xff]
        %v3640 = vld [vmem:[%s815 + $0xe0] sm:$0xff]
        %v3641 = vld [vmem:[%s815 + $0xe8] sm:$0xff]
        %v3642 = vld [vmem:[%s815 + $0x120] sm:$0xff]
        %v3643 = vld [vmem:[%s815 + $0x128] sm:$0xff]
        %v3644 = vld [vmem:[%s815 + $0x160] sm:$0xff]
        %v3645 = vld [vmem:[%s815 + $0x168] sm:$0xff]
        %v3646 = vld [vmem:[%s815 + $0x1a0] sm:$0xff]
        %v3647 = vld [vmem:[%s815 + $0x1a8] sm:$0xff]
        %v3648 = vld [vmem:[%s815 + $0x1e0] sm:$0xff]
        %v3649 = vld [vmem:[%s815 + $0x1e8] sm:$0xff]
        %v3650 = vld [vmem:[%s815 + $0x220] sm:$0xff]
        %v3651 = vld [vmem:[%s815 + $0x228] sm:$0xff]
        %v3652 = vld [vmem:[%s815 + $0x260] sm:$0xff]
        %v3653 = vld [vmem:[%s815 + $0x268] sm:$0xff]
        %v3654 = vld [vmem:[%s815 + $0x2a0] sm:$0xff]
        %v3655 = vld [vmem:[%s815 + $0x2a8] sm:$0xff]
        %v3656 = vld [vmem:[%s815 + $0x2e0] sm:$0xff]
        %v3657 = vld [vmem:[%s815 + $0x2e8] sm:$0xff]
        %v3658 = vld [vmem:[%s815 + $0x320] sm:$0xff]
        %v3659 = vld [vmem:[%s815 + $0x328] sm:$0xff]
        %v3660 = vld [vmem:[%s815 + $0x360] sm:$0xff]
        %v3661 = vld [vmem:[%s815 + $0x368] sm:$0xff]
        %v3662 = vld [vmem:[%s815 + $0x3a0] sm:$0xff]
        %v3663 = vld [vmem:[%s815 + $0x3a8] sm:$0xff]
        %v3664 = vld [vmem:[%s815 + $0x3e0] sm:$0xff]
        %v3665 = vld [vmem:[%s815 + $0x3e8] sm:$0xff]
        %v3666 = vld [vmem:[%s824 + $0x8] sm:$0xf]
        %v3668 = vlaneseq
        %v3669 = vshrl.u32 %v3668, 7
        %v3670 = vsub.s32 0, %v3669
        %v3671 = vrot.slane %v3666, %v3670
        %v3672 = vlaneseq
        %v3673 = vshrl.u32 %v3672, 7
        %v3674 = vsub.s32 1, %v3673
        %v3675 = vrot.slane %v3666, %v3674
        %v3676 = vlaneseq
        %v3677 = vshrl.u32 %v3676, 7
        %v3678 = vsub.s32 2, %v3677
        %v3679 = vrot.slane %v3666, %v3678
        %v3680 = vlaneseq
        %v3681 = vshrl.u32 %v3680, 7
        %v3682 = vsub.s32 3, %v3681
        %v3683 = vrot.slane %v3666, %v3682
        %v3720 = vunpack.c.l.b16 %v3634
        %v3721 = vunpack.c.h.b16 %v3634
        %v3722 = vunpack.c.l.b16 %v3635
        %v3723 = vunpack.c.h.b16 %v3635
        %v3724 = vunpack.c.l.b16 %v3636
        %v3725 = vunpack.c.h.b16 %v3636
        %v3726 = vunpack.c.l.b16 %v3637
        %v3727 = vunpack.c.h.b16 %v3637
        %v3728 = vunpack.c.l.b16 %v3638
        %v3729 = vunpack.c.h.b16 %v3638
        %v3730 = vunpack.c.l.b16 %v3639
        %v3731 = vunpack.c.h.b16 %v3639
        %v3732 = vunpack.c.l.b16 %v3640
        %v3733 = vunpack.c.h.b16 %v3640
        %v3734 = vunpack.c.l.b16 %v3641
        %v3735 = vunpack.c.h.b16 %v3641
        %v3736 = vunpack.c.l.b16 %v3642
        %v3737 = vunpack.c.h.b16 %v3642
        %v3738 = vunpack.c.l.b16 %v3643
        %v3739 = vunpack.c.h.b16 %v3643
        %v3740 = vunpack.c.l.b16 %v3644
        %v3741 = vunpack.c.h.b16 %v3644
        %v3742 = vunpack.c.l.b16 %v3645
        %v3743 = vunpack.c.h.b16 %v3645
        %v3744 = vunpack.c.l.b16 %v3646
        %v3745 = vunpack.c.h.b16 %v3646
        %v3746 = vunpack.c.l.b16 %v3647
        %v3747 = vunpack.c.h.b16 %v3647
        %v3748 = vunpack.c.l.b16 %v3648
        %v3749 = vunpack.c.h.b16 %v3648
        %v3750 = vunpack.c.l.b16 %v3649
        %v3751 = vunpack.c.h.b16 %v3649
        %v3752 = vunpack.c.l.b16 %v3650
        %v3753 = vunpack.c.h.b16 %v3650
        %v3754 = vunpack.c.l.b16 %v3651
        %v3755 = vunpack.c.h.b16 %v3651
        %v3756 = vunpack.c.l.b16 %v3652
        %v3757 = vunpack.c.h.b16 %v3652
        %v3758 = vunpack.c.l.b16 %v3653
        %v3759 = vunpack.c.h.b16 %v3653
        %v3760 = vunpack.c.l.b16 %v3654
        %v3761 = vunpack.c.h.b16 %v3654
        %v3762 = vunpack.c.l.b16 %v3655
        %v3763 = vunpack.c.h.b16 %v3655
        %v3764 = vunpack.c.l.b16 %v3656
        %v3765 = vunpack.c.h.b16 %v3656
        %v3766 = vunpack.c.l.b16 %v3657
        %v3767 = vunpack.c.h.b16 %v3657
        %v3768 = vunpack.c.l.b16 %v3658
        %v3769 = vunpack.c.h.b16 %v3658
        %v3770 = vunpack.c.l.b16 %v3659
        %v3771 = vunpack.c.h.b16 %v3659
        %v3772 = vunpack.c.l.b16 %v3660
        %v3773 = vunpack.c.h.b16 %v3660
        %v3774 = vunpack.c.l.b16 %v3661
        %v3775 = vunpack.c.h.b16 %v3661
        %v3776 = vunpack.c.l.b16 %v3662
        %v3777 = vunpack.c.h.b16 %v3662
        %v3778 = vunpack.c.l.b16 %v3663
        %v3779 = vunpack.c.h.b16 %v3663
        %v3780 = vunpack.c.l.b16 %v3664
        %v3781 = vunpack.c.h.b16 %v3664
        %v3782 = vunpack.c.l.b16 %v3665
        %v3783 = vunpack.c.h.b16 %v3665
        %v3784 = vpack.c.b16 %v3724, %v3720
        %v3785 = vpack.c.b16 %v3725, %v3721
        %v3786 = vpack.c.b16 %v3726, %v3722
        %v3787 = vpack.c.b16 %v3727, %v3723
        %v3788 = vpack.c.b16 %v3732, %v3728
        %v3789 = vpack.c.b16 %v3733, %v3729
        %v3790 = vpack.c.b16 %v3734, %v3730
        %v3791 = vpack.c.b16 %v3735, %v3731
        %v3792 = vpack.c.b16 %v3740, %v3736
        %v3793 = vpack.c.b16 %v3741, %v3737
        %v3794 = vpack.c.b16 %v3742, %v3738
        %v3795 = vpack.c.b16 %v3743, %v3739
        %v3796 = vpack.c.b16 %v3748, %v3744
        %v3797 = vpack.c.b16 %v3749, %v3745
        %v3798 = vpack.c.b16 %v3750, %v3746
        %v3799 = vpack.c.b16 %v3751, %v3747
        %v3800 = vpack.c.b16 %v3756, %v3752
        %v3801 = vpack.c.b16 %v3757, %v3753
        %v3802 = vpack.c.b16 %v3758, %v3754
        %v3803 = vpack.c.b16 %v3759, %v3755
        %v3804 = vpack.c.b16 %v3764, %v3760
        %v3805 = vpack.c.b16 %v3765, %v3761
        %v3806 = vpack.c.b16 %v3766, %v3762
        %v3807 = vpack.c.b16 %v3767, %v3763
        %v3808 = vpack.c.b16 %v3772, %v3768
        %v3809 = vpack.c.b16 %v3773, %v3769
        %v3810 = vpack.c.b16 %v3774, %v3770
        %v3811 = vpack.c.b16 %v3775, %v3771
        %v3812 = vpack.c.b16 %v3780, %v3776
        %v3813 = vpack.c.b16 %v3781, %v3777
        %v3814 = vpack.c.b16 %v3782, %v3778
        %v3815 = vpack.c.b16 %v3783, %v3779
        %3848 = vmatprep.subr.bf16.mxu0 %v3813
        %3849 = vmatpush1.bf16.msra.mxu0 %v3812
        %3850 = vmatprep.subr.bf16.mxu0 %v3809
        %3851 = vmatpush1.bf16.msra.mxu0 %v3808
        %3852 = vmatprep.subr.bf16.mxu0 %v3805
        %3853 = vmatpush1.bf16.msra.mxu0 %v3804
        %3854 = vmatprep.subr.bf16.mxu0 %v3801
        %3855 = vmatpush1.bf16.msra.mxu0 %v3800
        %3856 = vmatprep.subr.bf16.mxu0 %v3797
        %3857 = vmatpush1.bf16.msra.mxu0 %v3796
        %3858 = vmatprep.subr.bf16.mxu0 %v3793
        %3859 = vmatpush1.bf16.msra.mxu0 %v3792
        %3860 = vmatprep.subr.bf16.mxu0 %v3789
        %3861 = vmatpush1.bf16.msra.mxu0 %v3788
        %3862 = vmatprep.subr.bf16.mxu0 %v3785
        %3863 = vmatpush1.bf16.msra.mxu0 %v3784
        %3864 = vmatprep.subr.bf16.mxu0 0
        %3865 = vmatpush2.bf16.msra.mxu0 0
        %3866 = vmatprep.subr.bf16.mxu0 0
        %3867 = vmatpush2.bf16.msra.mxu0 0
        %3868 = vmatprep.subr.bf16.mxu0 0
        %3869 = vmatpush2.bf16.msra.mxu0 0
        %3870 = vmatprep.subr.bf16.mxu0 0
        %3871 = vmatpush2.bf16.msra.mxu0 0
        %3872 = vmatprep.subr.bf16.mxu0 0
        %3873 = vmatpush2.bf16.msra.mxu0 0
        %3874 = vmatprep.subr.bf16.mxu0 0
        %3875 = vmatpush2.bf16.msra.mxu0 0
        %3876 = vmatprep.subr.bf16.mxu0 0
        %3877 = vmatpush2.bf16.msra.mxu0 0
        %3878 = vmatprep.subr.bf16.mxu0 0
        %3879 = vmatpush2.bf16.msra.mxu0 0
        %3880 = vmatprep.mubr.bf16.mxu0 0
        %3881 = vmatmul.mubr.bf16.gmra.mxu0 %v2353
        %v3882 = vpop.f32.mrf.mxu0
        %v3883 = vadd.f32 %v3671, %v3882
        %v3884 = vpop.f32.mrf.mxu0
        %v3885 = vadd.f32 %v3675, %v3884
        %v3886 = vpop.f32.mrf.mxu0
        %v3887 = vpop.f32.mrf.mxu0
        %3888 = vdwg.mxu0
        %3889 = vmatprep.subr.bf16.mxu0 %v3815
        %3890 = vmatpush1.bf16.msra.mxu0 %v3814
        %3891 = vmatprep.subr.bf16.mxu0 %v3811
        %3892 = vmatpush1.bf16.msra.mxu0 %v3810
        %3893 = vmatprep.subr.bf16.mxu0 %v3807
        %3894 = vmatpush1.bf16.msra.mxu0 %v3806
        %3895 = vmatprep.subr.bf16.mxu0 %v3803
        %3896 = vmatpush1.bf16.msra.mxu0 %v3802
        %3897 = vmatprep.subr.bf16.mxu0 %v3799
        %3898 = vmatpush1.bf16.msra.mxu0 %v3798
        %3899 = vmatprep.subr.bf16.mxu0 %v3795
        %3900 = vmatpush1.bf16.msra.mxu0 %v3794
        %3901 = vmatprep.subr.bf16.mxu0 %v3791
        %3902 = vmatpush1.bf16.msra.mxu0 %v3790
        %3903 = vmatprep.subr.bf16.mxu0 %v3787
        %3904 = vmatpush1.bf16.msra.mxu0 %v3786
        %3905 = vmatprep.subr.bf16.mxu0 0
        %3906 = vmatpush2.bf16.msra.mxu0 0
        %3907 = vmatprep.subr.bf16.mxu0 0
        %3908 = vmatpush2.bf16.msra.mxu0 0
        %3909 = vmatprep.subr.bf16.mxu0 0
        %3910 = vmatpush2.bf16.msra.mxu0 0
        %3911 = vmatprep.subr.bf16.mxu0 0
        %3912 = vmatpush2.bf16.msra.mxu0 0
        %3913 = vmatprep.subr.bf16.mxu0 0
        %3914 = vmatpush2.bf16.msra.mxu0 0
        %3915 = vmatprep.subr.bf16.mxu0 0
        %3916 = vmatpush2.bf16.msra.mxu0 0
        %3917 = vmatprep.subr.bf16.mxu0 0
        %3918 = vmatpush2.bf16.msra.mxu0 0
        %3919 = vmatprep.subr.bf16.mxu0 0
        %3920 = vmatpush2.bf16.msra.mxu0 0
        %3921 = vmatprep.mubr.bf16.mxu0 0
        %3922 = vmatmul.mubr.bf16.gmra.mxu0 %v2353
        %v3923 = vpop.f32.mrf.mxu0
        %v3924 = vadd.f32 %v3679, %v3923
        %v3925 = vpop.f32.mrf.mxu0
        %v3926 = vadd.f32 %v3683, %v3925
        %v3927 = vpop.f32.mrf.mxu0
        %v3928 = vpop.f32.mrf.mxu0
        %3929 = vdwg.mxu0
        %v3930 = vmax.f32 %v3883, 0.0
        %v3931 = vmax.f32 %v3885, 0.0
        %v3932 = vmax.f32 %v3924, 0.0
        %v3933 = vmax.f32 %v3926, 0.0
        %v3934 = vpack.c.bf16 %v3930, %v3930
        %v3935 = vpack.c.bf16 %v3931, %v3931
        %v3936 = vpack.c.bf16 %v3932, %v3932
        %v3937 = vpack.c.bf16 %v3933, %v3933
        %v3938 = vld [vmem:[%s833 + $0x200] sm:$0xf]
        %v3939 = vld [vmem:[%s833 + $0x204] sm:$0xf]
        %v3940 = vld [vmem:[%s833 + $0x208] sm:$0xf]
        %v3941 = vld [vmem:[%s833 + $0x20c] sm:$0xf]
        %v3942 = vld [vmem:[%s833 + $0x210] sm:$0xf]
        %v3943 = vld [vmem:[%s833 + $0x214] sm:$0xf]
        %v3944 = vld [vmem:[%s833 + $0x218] sm:$0xf]
        %v3945 = vld [vmem:[%s833 + $0x21c] sm:$0xf]
        %v3946 = vld [vmem:[%s833 + $0x220] sm:$0xf]
        %v3947 = vld [vmem:[%s833 + $0x224] sm:$0xf]
        %v3948 = vld [vmem:[%s833 + $0x228] sm:$0xf]
        %v3949 = vld [vmem:[%s833 + $0x22c] sm:$0xf]
        %v3950 = vld [vmem:[%s833 + $0x230] sm:$0xf]
        %v3951 = vld [vmem:[%s833 + $0x234] sm:$0xf]
        %v3952 = vld [vmem:[%s833 + $0x238] sm:$0xf]
        %v3953 = vld [vmem:[%s833 + $0x23c] sm:$0xf]
        %v3954 = vld [vmem:[%s833 + $0x240] sm:$0xf]
        %v3955 = vld [vmem:[%s833 + $0x244] sm:$0xf]
        %v3956 = vld [vmem:[%s833 + $0x248] sm:$0xf]
        %v3957 = vld [vmem:[%s833 + $0x24c] sm:$0xf]
        %v3958 = vld [vmem:[%s833 + $0x250] sm:$0xf]
        %v3959 = vld [vmem:[%s833 + $0x254] sm:$0xf]
        %v3960 = vld [vmem:[%s833 + $0x258] sm:$0xf]
        %v3961 = vld [vmem:[%s833 + $0x25c] sm:$0xf]
        %v3962 = vld [vmem:[%s833 + $0x260] sm:$0xf]
        %v3963 = vld [vmem:[%s833 + $0x264] sm:$0xf]
        %v3964 = vld [vmem:[%s833 + $0x268] sm:$0xf]
        %v3965 = vld [vmem:[%s833 + $0x26c] sm:$0xf]
        %v3966 = vld [vmem:[%s833 + $0x270] sm:$0xf]
        %v3967 = vld [vmem:[%s833 + $0x274] sm:$0xf]
        %v3968 = vld [vmem:[%s833 + $0x278] sm:$0xf]
        %v3969 = vld [vmem:[%s833 + $0x27c] sm:$0xf]
        %v3970 = vld [vmem:[%s833 + $0x280] sm:$0xf]
        %v3971 = vld [vmem:[%s833 + $0x284] sm:$0xf]
        %v3972 = vld [vmem:[%s833 + $0x288] sm:$0xf]
        %v3973 = vld [vmem:[%s833 + $0x28c] sm:$0xf]
        %v3974 = vld [vmem:[%s833 + $0x290] sm:$0xf]
        %v3975 = vld [vmem:[%s833 + $0x294] sm:$0xf]
        %v3976 = vld [vmem:[%s833 + $0x298] sm:$0xf]
        %v3977 = vld [vmem:[%s833 + $0x29c] sm:$0xf]
        %v3978 = vld [vmem:[%s833 + $0x2a0] sm:$0xf]
        %v3979 = vld [vmem:[%s833 + $0x2a4] sm:$0xf]
        %v3980 = vld [vmem:[%s833 + $0x2a8] sm:$0xf]
        %v3981 = vld [vmem:[%s833 + $0x2ac] sm:$0xf]
        %v3982 = vld [vmem:[%s833 + $0x2b0] sm:$0xf]
        %v3983 = vld [vmem:[%s833 + $0x2b4] sm:$0xf]
        %v3984 = vld [vmem:[%s833 + $0x2b8] sm:$0xf]
        %v3985 = vld [vmem:[%s833 + $0x2bc] sm:$0xf]
        %v3986 = vld [vmem:[%s833 + $0x2c0] sm:$0xf]
        %v3987 = vld [vmem:[%s833 + $0x2c4] sm:$0xf]
        %v3988 = vld [vmem:[%s833 + $0x2c8] sm:$0xf]
        %v3989 = vld [vmem:[%s833 + $0x2cc] sm:$0xf]
        %v3990 = vld [vmem:[%s833 + $0x2d0] sm:$0xf]
        %v3991 = vld [vmem:[%s833 + $0x2d4] sm:$0xf]
        %v3992 = vld [vmem:[%s833 + $0x2d8] sm:$0xf]
        %v3993 = vld [vmem:[%s833 + $0x2dc] sm:$0xf]
        %v3994 = vld [vmem:[%s833 + $0x2e0] sm:$0xf]
        %v3995 = vld [vmem:[%s833 + $0x2e4] sm:$0xf]
        %v3996 = vld [vmem:[%s833 + $0x2e8] sm:$0xf]
        %v3997 = vld [vmem:[%s833 + $0x2ec] sm:$0xf]
        %v3998 = vld [vmem:[%s833 + $0x2f0] sm:$0xf]
        %v3999 = vld [vmem:[%s833 + $0x2f4] sm:$0xf]
        %v4000 = vld [vmem:[%s833 + $0x2f8] sm:$0xf]
        %v4001 = vld [vmem:[%s833 + $0x2fc] sm:$0xf]
        %v4066 = vunpack.c.l.b16 %v3938
        %v4067 = vunpack.c.l.b16 %v3939
        %v4068 = vunpack.c.l.b16 %v3940
        %v4069 = vunpack.c.l.b16 %v3941
        %v4070 = vunpack.c.l.b16 %v3942
        %v4071 = vunpack.c.l.b16 %v3943
        %v4072 = vunpack.c.l.b16 %v3944
        %v4073 = vunpack.c.l.b16 %v3945
        %v4074 = vunpack.c.l.b16 %v3946
        %v4075 = vunpack.c.l.b16 %v3947
        %v4076 = vunpack.c.l.b16 %v3948
        %v4077 = vunpack.c.l.b16 %v3949
        %v4078 = vunpack.c.l.b16 %v3950
        %v4079 = vunpack.c.l.b16 %v3951
        %v4080 = vunpack.c.l.b16 %v3952
        %v4081 = vunpack.c.l.b16 %v3953
        %v4082 = vunpack.c.l.b16 %v3954
        %v4083 = vunpack.c.l.b16 %v3955
        %v4084 = vunpack.c.l.b16 %v3956
        %v4085 = vunpack.c.l.b16 %v3957
        %v4086 = vunpack.c.l.b16 %v3958
        %v4087 = vunpack.c.l.b16 %v3959
        %v4088 = vunpack.c.l.b16 %v3960
        %v4089 = vunpack.c.l.b16 %v3961
        %v4090 = vunpack.c.l.b16 %v3962
        %v4091 = vunpack.c.l.b16 %v3963
        %v4092 = vunpack.c.l.b16 %v3964
        %v4093 = vunpack.c.l.b16 %v3965
        %v4094 = vunpack.c.l.b16 %v3966
        %v4095 = vunpack.c.l.b16 %v3967
        %v4096 = vunpack.c.l.b16 %v3968
        %v4097 = vunpack.c.l.b16 %v3969
        %v4098 = vunpack.c.l.b16 %v3970
        %v4099 = vunpack.c.l.b16 %v3971
        %v4100 = vunpack.c.l.b16 %v3972
        %v4101 = vunpack.c.l.b16 %v3973
        %v4102 = vunpack.c.l.b16 %v3974
        %v4103 = vunpack.c.l.b16 %v3975
        %v4104 = vunpack.c.l.b16 %v3976
        %v4105 = vunpack.c.l.b16 %v3977
        %v4106 = vunpack.c.l.b16 %v3978
        %v4107 = vunpack.c.l.b16 %v3979
        %v4108 = vunpack.c.l.b16 %v3980
        %v4109 = vunpack.c.l.b16 %v3981
        %v4110 = vunpack.c.l.b16 %v3982
        %v4111 = vunpack.c.l.b16 %v3983
        %v4112 = vunpack.c.l.b16 %v3984
        %v4113 = vunpack.c.l.b16 %v3985
        %v4114 = vunpack.c.l.b16 %v3986
        %v4115 = vunpack.c.l.b16 %v3987
        %v4116 = vunpack.c.l.b16 %v3988
        %v4117 = vunpack.c.l.b16 %v3989
        %v4118 = vunpack.c.l.b16 %v3990
        %v4119 = vunpack.c.l.b16 %v3991
        %v4120 = vunpack.c.l.b16 %v3992
        %v4121 = vunpack.c.l.b16 %v3993
        %v4122 = vunpack.c.l.b16 %v3994
        %v4123 = vunpack.c.l.b16 %v3995
        %v4124 = vunpack.c.l.b16 %v3996
        %v4125 = vunpack.c.l.b16 %v3997
        %v4126 = vunpack.c.l.b16 %v3998
        %v4127 = vunpack.c.l.b16 %v3999
        %v4128 = vunpack.c.l.b16 %v4000
        %v4129 = vunpack.c.l.b16 %v4001
        %v4130 = vpack.c.b16 %v4067, %v4066
        %v4131 = vpack.c.b16 %v4069, %v4068
        %v4132 = vpack.c.b16 %v4071, %v4070
        %v4133 = vpack.c.b16 %v4073, %v4072
        %v4134 = vpack.c.b16 %v4075, %v4074
        %v4135 = vpack.c.b16 %v4077, %v4076
        %v4136 = vpack.c.b16 %v4079, %v4078
        %v4137 = vpack.c.b16 %v4081, %v4080
        %v4138 = vpack.c.b16 %v4083, %v4082
        %v4139 = vpack.c.b16 %v4085, %v4084
        %v4140 = vpack.c.b16 %v4087, %v4086
        %v4141 = vpack.c.b16 %v4089, %v4088
        %v4142 = vpack.c.b16 %v4091, %v4090
        %v4143 = vpack.c.b16 %v4093, %v4092
        %v4144 = vpack.c.b16 %v4095, %v4094
        %v4145 = vpack.c.b16 %v4097, %v4096
        %v4146 = vpack.c.b16 %v4099, %v4098
        %v4147 = vpack.c.b16 %v4101, %v4100
        %v4148 = vpack.c.b16 %v4103, %v4102
        %v4149 = vpack.c.b16 %v4105, %v4104
        %v4150 = vpack.c.b16 %v4107, %v4106
        %v4151 = vpack.c.b16 %v4109, %v4108
        %v4152 = vpack.c.b16 %v4111, %v4110
        %v4153 = vpack.c.b16 %v4113, %v4112
        %v4154 = vpack.c.b16 %v4115, %v4114
        %v4155 = vpack.c.b16 %v4117, %v4116
        %v4156 = vpack.c.b16 %v4119, %v4118
        %v4157 = vpack.c.b16 %v4121, %v4120
        %v4158 = vpack.c.b16 %v4123, %v4122
        %v4159 = vpack.c.b16 %v4125, %v4124
        %v4160 = vpack.c.b16 %v4127, %v4126
        %v4161 = vpack.c.b16 %v4129, %v4128
        %4194 = vmatprep.subr.bf16.mxu0 0
        %4195 = vmatpush1.bf16.msra.mxu0 %v4137
        %4196 = vmatprep.subr.bf16.mxu0 0
        %4197 = vmatpush1.bf16.msra.mxu0 %v4136
        %4198 = vmatprep.subr.bf16.mxu0 0
        %4199 = vmatpush1.bf16.msra.mxu0 %v4135
        %4200 = vmatprep.subr.bf16.mxu0 0
        %4201 = vmatpush1.bf16.msra.mxu0 %v4134
        %4202 = vmatprep.subr.bf16.mxu0 0
        %4203 = vmatpush1.bf16.msra.mxu0 %v4133
        %4204 = vmatprep.subr.bf16.mxu0 0
        %4205 = vmatpush1.bf16.msra.mxu0 %v4132
        %4206 = vmatprep.subr.bf16.mxu0 0
        %4207 = vmatpush1.bf16.msra.mxu0 %v4131
        %4208 = vmatprep.subr.bf16.mxu0 0
        %4209 = vmatpush1.bf16.msra.mxu0 %v4130
        %4210 = vmatprep.subr.bf16.mxu0 0
        %4211 = vmatpush2.bf16.msra.mxu0 %v4145
        %4212 = vmatprep.subr.bf16.mxu0 0
        %4213 = vmatpush2.bf16.msra.mxu0 %v4144
        %4214 = vmatprep.subr.bf16.mxu0 0
        %4215 = vmatpush2.bf16.msra.mxu0 %v4143
        %4216 = vmatprep.subr.bf16.mxu0 0
        %4217 = vmatpush2.bf16.msra.mxu0 %v4142
        %4218 = vmatprep.subr.bf16.mxu0 0
        %4219 = vmatpush2.bf16.msra.mxu0 %v4141
        %4220 = vmatprep.subr.bf16.mxu0 0
        %4221 = vmatpush2.bf16.msra.mxu0 %v4140
        %4222 = vmatprep.subr.bf16.mxu0 0
        %4223 = vmatpush2.bf16.msra.mxu0 %v4139
        %4224 = vmatprep.subr.bf16.mxu0 0
        %4225 = vmatpush2.bf16.msra.mxu0 %v4138
        %4226 = vmatprep.mubr.bf16.mxu0 %v3935
        %4227 = vmatmul.mubr.bf16.gmra.mxu0 %v3934
        %v4228 = vpop.f32.mrf.mxu0
        %v4229 = vadd.f32 0.0, %v4228
        %v4230 = vpop.f32.mrf.mxu0
        %v4231 = vpop.f32.mrf.mxu0
        %v4232 = vpop.f32.mrf.mxu0
        %4233 = vdwg.mxu0
        %4234 = vmatprep.subr.bf16.mxu0 0
        %4235 = vmatpush1.bf16.msra.mxu0 %v4153
        %4236 = vmatprep.subr.bf16.mxu0 0
        %4237 = vmatpush1.bf16.msra.mxu0 %v4152
        %4238 = vmatprep.subr.bf16.mxu0 0
        %4239 = vmatpush1.bf16.msra.mxu0 %v4151
        %4240 = vmatprep.subr.bf16.mxu0 0
        %4241 = vmatpush1.bf16.msra.mxu0 %v4150
        %4242 = vmatprep.subr.bf16.mxu0 0
        %4243 = vmatpush1.bf16.msra.mxu0 %v4149
        %4244 = vmatprep.subr.bf16.mxu0 0
        %4245 = vmatpush1.bf16.msra.mxu0 %v4148
        %4246 = vmatprep.subr.bf16.mxu0 0
        %4247 = vmatpush1.bf16.msra.mxu0 %v4147
        %4248 = vmatprep.subr.bf16.mxu0 0
        %4249 = vmatpush1.bf16.msra.mxu0 %v4146
        %4250 = vmatprep.subr.bf16.mxu0 0
        %4251 = vmatpush2.bf16.msra.mxu0 %v4161
        %4252 = vmatprep.subr.bf16.mxu0 0
        %4253 = vmatpush2.bf16.msra.mxu0 %v4160
        %4254 = vmatprep.subr.bf16.mxu0 0
        %4255 = vmatpush2.bf16.msra.mxu0 %v4159
        %4256 = vmatprep.subr.bf16.mxu0 0
        %4257 = vmatpush2.bf16.msra.mxu0 %v4158
        %4258 = vmatprep.subr.bf16.mxu0 0
        %4259 = vmatpush2.bf16.msra.mxu0 %v4157
        %4260 = vmatprep.subr.bf16.mxu0 0
        %4261 = vmatpush2.bf16.msra.mxu0 %v4156
        %4262 = vmatprep.subr.bf16.mxu0 0
        %4263 = vmatpush2.bf16.msra.mxu0 %v4155
        %4264 = vmatprep.subr.bf16.mxu0 0
        %4265 = vmatpush2.bf16.msra.mxu0 %v4154
        %4266 = vmatprep.mubr.bf16.mxu0 %v3937
        %4267 = vmatmul.mubr.bf16.gmra.mxu0 %v3936
        %v4268 = vpop.f32.mrf.mxu0
        %v4269 = vadd.f32 %v4229, %v4268
        %v4270 = vpop.f32.mrf.mxu0
        %v4271 = vpop.f32.mrf.mxu0
        %v4272 = vpop.f32.mrf.mxu0
        %4273 = vdwg.mxu0
        %v4274 = vadd.f32 %v3629, %v4269
        %v4275 = vld [vmem:[%s815 + $0x30] sm:$0xff]
        %v4276 = vld [vmem:[%s815 + $0x38] sm:$0xff]
        %v4277 = vld [vmem:[%s815 + $0x70] sm:$0xff]
        %v4278 = vld [vmem:[%s815 + $0x78] sm:$0xff]
        %v4279 = vld [vmem:[%s815 + $0xb0] sm:$0xff]
        %v4280 = vld [vmem:[%s815 + $0xb8] sm:$0xff]
        %v4281 = vld [vmem:[%s815 + $0xf0] sm:$0xff]
        %v4282 = vld [vmem:[%s815 + $0xf8] sm:$0xff]
        %v4283 = vld [vmem:[%s815 + $0x130] sm:$0xff]
        %v4284 = vld [vmem:[%s815 + $0x138] sm:$0xff]
        %v4285 = vld [vmem:[%s815 + $0x170] sm:$0xff]
        %v4286 = vld [vmem:[%s815 + $0x178] sm:$0xff]
        %v4287 = vld [vmem:[%s815 + $0x1b0] sm:$0xff]
        %v4288 = vld [vmem:[%s815 + $0x1b8] sm:$0xff]
        %v4289 = vld [vmem:[%s815 + $0x1f0] sm:$0xff]
        %v4290 = vld [vmem:[%s815 + $0x1f8] sm:$0xff]
        %v4291 = vld [vmem:[%s815 + $0x230] sm:$0xff]
        %v4292 = vld [vmem:[%s815 + $0x238] sm:$0xff]
        %v4293 = vld [vmem:[%s815 + $0x270] sm:$0xff]
        %v4294 = vld [vmem:[%s815 + $0x278] sm:$0xff]
        %v4295 = vld [vmem:[%s815 + $0x2b0] sm:$0xff]
        %v4296 = vld [vmem:[%s815 + $0x2b8] sm:$0xff]
        %v4297 = vld [vmem:[%s815 + $0x2f0] sm:$0xff]
        %v4298 = vld [vmem:[%s815 + $0x2f8] sm:$0xff]
        %v4299 = vld [vmem:[%s815 + $0x330] sm:$0xff]
        %v4300 = vld [vmem:[%s815 + $0x338] sm:$0xff]
        %v4301 = vld [vmem:[%s815 + $0x370] sm:$0xff]
        %v4302 = vld [vmem:[%s815 + $0x378] sm:$0xff]
        %v4303 = vld [vmem:[%s815 + $0x3b0] sm:$0xff]
        %v4304 = vld [vmem:[%s815 + $0x3b8] sm:$0xff]
        %v4305 = vld [vmem:[%s815 + $0x3f0] sm:$0xff]
        %v4306 = vld [vmem:[%s815 + $0x3f8] sm:$0xff]
        %v4307 = vld [vmem:[%s824 + $0xc] sm:$0xf]
        %v4309 = vlaneseq
        %v4310 = vshrl.u32 %v4309, 7
        %v4311 = vsub.s32 0, %v4310
        %v4312 = vrot.slane %v4307, %v4311
        %v4313 = vlaneseq
        %v4314 = vshrl.u32 %v4313, 7
        %v4315 = vsub.s32 1, %v4314
        %v4316 = vrot.slane %v4307, %v4315
        %v4317 = vlaneseq
        %v4318 = vshrl.u32 %v4317, 7
        %v4319 = vsub.s32 2, %v4318
        %v4320 = vrot.slane %v4307, %v4319
        %v4321 = vlaneseq
        %v4322 = vshrl.u32 %v4321, 7
        %v4323 = vsub.s32 3, %v4322
        %v4324 = vrot.slane %v4307, %v4323
        %v4361 = vunpack.c.l.b16 %v4275
        %v4362 = vunpack.c.h.b16 %v4275
        %v4363 = vunpack.c.l.b16 %v4276
        %v4364 = vunpack.c.h.b16 %v4276
        %v4365 = vunpack.c.l.b16 %v4277
        %v4366 = vunpack.c.h.b16 %v4277
        %v4367 = vunpack.c.l.b16 %v4278
        %v4368 = vunpack.c.h.b16 %v4278
        %v4369 = vunpack.c.l.b16 %v4279
        %v4370 = vunpack.c.h.b16 %v4279
        %v4371 = vunpack.c.l.b16 %v4280
        %v4372 = vunpack.c.h.b16 %v4280
        %v4373 = vunpack.c.l.b16 %v4281
        %v4374 = vunpack.c.h.b16 %v4281
        %v4375 = vunpack.c.l.b16 %v4282
        %v4376 = vunpack.c.h.b16 %v4282
        %v4377 = vunpack.c.l.b16 %v4283
        %v4378 = vunpack.c.h.b16 %v4283
        %v4379 = vunpack.c.l.b16 %v4284
        %v4380 = vunpack.c.h.b16 %v4284
        %v4381 = vunpack.c.l.b16 %v4285
        %v4382 = vunpack.c.h.b16 %v4285
        %v4383 = vunpack.c.l.b16 %v4286
        %v4384 = vunpack.c.h.b16 %v4286
        %v4385 = vunpack.c.l.b16 %v4287
        %v4386 = vunpack.c.h.b16 %v4287
        %v4387 = vunpack.c.l.b16 %v4288
        %v4388 = vunpack.c.h.b16 %v4288
        %v4389 = vunpack.c.l.b16 %v4289
        %v4390 = vunpack.c.h.b16 %v4289
        %v4391 = vunpack.c.l.b16 %v4290
        %v4392 = vunpack.c.h.b16 %v4290
        %v4393 = vunpack.c.l.b16 %v4291
        %v4394 = vunpack.c.h.b16 %v4291
        %v4395 = vunpack.c.l.b16 %v4292
        %v4396 = vunpack.c.h.b16 %v4292
        %v4397 = vunpack.c.l.b16 %v4293
        %v4398 = vunpack.c.h.b16 %v4293
        %v4399 = vunpack.c.l.b16 %v4294
        %v4400 = vunpack.c.h.b16 %v4294
        %v4401 = vunpack.c.l.b16 %v4295
        %v4402 = vunpack.c.h.b16 %v4295
        %v4403 = vunpack.c.l.b16 %v4296
        %v4404 = vunpack.c.h.b16 %v4296
        %v4405 = vunpack.c.l.b16 %v4297
        %v4406 = vunpack.c.h.b16 %v4297
        %v4407 = vunpack.c.l.b16 %v4298
        %v4408 = vunpack.c.h.b16 %v4298
        %v4409 = vunpack.c.l.b16 %v4299
        %v4410 = vunpack.c.h.b16 %v4299
        %v4411 = vunpack.c.l.b16 %v4300
        %v4412 = vunpack.c.h.b16 %v4300
        %v4413 = vunpack.c.l.b16 %v4301
        %v4414 = vunpack.c.h.b16 %v4301
        %v4415 = vunpack.c.l.b16 %v4302
        %v4416 = vunpack.c.h.b16 %v4302
        %v4417 = vunpack.c.l.b16 %v4303
        %v4418 = vunpack.c.h.b16 %v4303
        %v4419 = vunpack.c.l.b16 %v4304
        %v4420 = vunpack.c.h.b16 %v4304
        %v4421 = vunpack.c.l.b16 %v4305
        %v4422 = vunpack.c.h.b16 %v4305
        %v4423 = vunpack.c.l.b16 %v4306
        %v4424 = vunpack.c.h.b16 %v4306
        %v4425 = vpack.c.b16 %v4365, %v4361
        %v4426 = vpack.c.b16 %v4366, %v4362
        %v4427 = vpack.c.b16 %v4367, %v4363
        %v4428 = vpack.c.b16 %v4368, %v4364
        %v4429 = vpack.c.b16 %v4373, %v4369
        %v4430 = vpack.c.b16 %v4374, %v4370
        %v4431 = vpack.c.b16 %v4375, %v4371
        %v4432 = vpack.c.b16 %v4376, %v4372
        %v4433 = vpack.c.b16 %v4381, %v4377
        %v4434 = vpack.c.b16 %v4382, %v4378
        %v4435 = vpack.c.b16 %v4383, %v4379
        %v4436 = vpack.c.b16 %v4384, %v4380
        %v4437 = vpack.c.b16 %v4389, %v4385
        %v4438 = vpack.c.b16 %v4390, %v4386
        %v4439 = vpack.c.b16 %v4391, %v4387
        %v4440 = vpack.c.b16 %v4392, %v4388
        %v4441 = vpack.c.b16 %v4397, %v4393
        %v4442 = vpack.c.b16 %v4398, %v4394
        %v4443 = vpack.c.b16 %v4399, %v4395
        %v4444 = vpack.c.b16 %v4400, %v4396
        %v4445 = vpack.c.b16 %v4405, %v4401
        %v4446 = vpack.c.b16 %v4406, %v4402
        %v4447 = vpack.c.b16 %v4407, %v4403
        %v4448 = vpack.c.b16 %v4408, %v4404
        %v4449 = vpack.c.b16 %v4413, %v4409
        %v4450 = vpack.c.b16 %v4414, %v4410
        %v4451 = vpack.c.b16 %v4415, %v4411
        %v4452 = vpack.c.b16 %v4416, %v4412
        %v4453 = vpack.c.b16 %v4421, %v4417
        %v4454 = vpack.c.b16 %v4422, %v4418
        %v4455 = vpack.c.b16 %v4423, %v4419
        %v4456 = vpack.c.b16 %v4424, %v4420
        %4489 = vmatprep.subr.bf16.mxu0 %v4454
        %4490 = vmatpush1.bf16.msra.mxu0 %v4453
        %4491 = vmatprep.subr.bf16.mxu0 %v4450
        %4492 = vmatpush1.bf16.msra.mxu0 %v4449
        %4493 = vmatprep.subr.bf16.mxu0 %v4446
        %4494 = vmatpush1.bf16.msra.mxu0 %v4445
        %4495 = vmatprep.subr.bf16.mxu0 %v4442
        %4496 = vmatpush1.bf16.msra.mxu0 %v4441
        %4497 = vmatprep.subr.bf16.mxu0 %v4438
        %4498 = vmatpush1.bf16.msra.mxu0 %v4437
        %4499 = vmatprep.subr.bf16.mxu0 %v4434
        %4500 = vmatpush1.bf16.msra.mxu0 %v4433
        %4501 = vmatprep.subr.bf16.mxu0 %v4430
        %4502 = vmatpush1.bf16.msra.mxu0 %v4429
        %4503 = vmatprep.subr.bf16.mxu0 %v4426
        %4504 = vmatpush1.bf16.msra.mxu0 %v4425
        %4505 = vmatprep.subr.bf16.mxu0 0
        %4506 = vmatpush2.bf16.msra.mxu0 0
        %4507 = vmatprep.subr.bf16.mxu0 0
        %4508 = vmatpush2.bf16.msra.mxu0 0
        %4509 = vmatprep.subr.bf16.mxu0 0
        %4510 = vmatpush2.bf16.msra.mxu0 0
        %4511 = vmatprep.subr.bf16.mxu0 0
        %4512 = vmatpush2.bf16.msra.mxu0 0
        %4513 = vmatprep.subr.bf16.mxu0 0
        %4514 = vmatpush2.bf16.msra.mxu0 0
        %4515 = vmatprep.subr.bf16.mxu0 0
        %4516 = vmatpush2.bf16.msra.mxu0 0
        %4517 = vmatprep.subr.bf16.mxu0 0
        %4518 = vmatpush2.bf16.msra.mxu0 0
        %4519 = vmatprep.subr.bf16.mxu0 0
        %4520 = vmatpush2.bf16.msra.mxu0 0
        %4521 = vmatprep.mubr.bf16.mxu0 0
        %4522 = vmatmul.mubr.bf16.gmra.mxu0 %v2353
        %v4523 = vpop.f32.mrf.mxu0
        %v4524 = vadd.f32 %v4312, %v4523
        %v4525 = vpop.f32.mrf.mxu0
        %v4526 = vadd.f32 %v4316, %v4525
        %v4527 = vpop.f32.mrf.mxu0
        %v4528 = vpop.f32.mrf.mxu0
        %4529 = vdwg.mxu0
        %4530 = vmatprep.subr.bf16.mxu0 %v4456
        %4531 = vmatpush1.bf16.msra.mxu0 %v4455
        %4532 = vmatprep.subr.bf16.mxu0 %v4452
        %4533 = vmatpush1.bf16.msra.mxu0 %v4451
        %4534 = vmatprep.subr.bf16.mxu0 %v4448
        %4535 = vmatpush1.bf16.msra.mxu0 %v4447
        %4536 = vmatprep.subr.bf16.mxu0 %v4444
        %4537 = vmatpush1.bf16.msra.mxu0 %v4443
        %4538 = vmatprep.subr.bf16.mxu0 %v4440
        %4539 = vmatpush1.bf16.msra.mxu0 %v4439
        %4540 = vmatprep.subr.bf16.mxu0 %v4436
        %4541 = vmatpush1.bf16.msra.mxu0 %v4435
        %4542 = vmatprep.subr.bf16.mxu0 %v4432
        %4543 = vmatpush1.bf16.msra.mxu0 %v4431
        %4544 = vmatprep.subr.bf16.mxu0 %v4428
        %4545 = vmatpush1.bf16.msra.mxu0 %v4427
        %4546 = vmatprep.subr.bf16.mxu0 0
        %4547 = vmatpush2.bf16.msra.mxu0 0
        %4548 = vmatprep.subr.bf16.mxu0 0
        %4549 = vmatpush2.bf16.msra.mxu0 0
        %4550 = vmatprep.subr.bf16.mxu0 0
        %4551 = vmatpush2.bf16.msra.mxu0 0
        %4552 = vmatprep.subr.bf16.mxu0 0
        %4553 = vmatpush2.bf16.msra.mxu0 0
        %4554 = vmatprep.subr.bf16.mxu0 0
        %4555 = vmatpush2.bf16.msra.mxu0 0
        %4556 = vmatprep.subr.bf16.mxu0 0
        %4557 = vmatpush2.bf16.msra.mxu0 0
        %4558 = vmatprep.subr.bf16.mxu0 0
        %4559 = vmatpush2.bf16.msra.mxu0 0
        %4560 = vmatprep.subr.bf16.mxu0 0
        %4561 = vmatpush2.bf16.msra.mxu0 0
        %4562 = vmatprep.mubr.bf16.mxu0 0
        %4563 = vmatmul.mubr.bf16.gmra.mxu0 %v2353
        %v4564 = vpop.f32.mrf.mxu0
        %v4565 = vadd.f32 %v4320, %v4564
        %v4566 = vpop.f32.mrf.mxu0
        %v4567 = vadd.f32 %v4324, %v4566
        %v4568 = vpop.f32.mrf.mxu0
        %v4569 = vpop.f32.mrf.mxu0
        %4570 = vdwg.mxu0
        %v4571 = vmax.f32 %v4524, 0.0
        %v4572 = vmax.f32 %v4526, 0.0
        %v4573 = vmax.f32 %v4565, 0.0
        %v4574 = vmax.f32 %v4567, 0.0
        %v4575 = vpack.c.bf16 %v4571, %v4571
        %v4576 = vpack.c.bf16 %v4572, %v4572
        %v4577 = vpack.c.bf16 %v4573, %v4573
        %v4578 = vpack.c.bf16 %v4574, %v4574
        %v4579 = vld [vmem:[%s833 + $0x300] sm:$0xf]
        %v4580 = vld [vmem:[%s833 + $0x304] sm:$0xf]
        %v4581 = vld [vmem:[%s833 + $0x308] sm:$0xf]
        %v4582 = vld [vmem:[%s833 + $0x30c] sm:$0xf]
        %v4583 = vld [vmem:[%s833 + $0x310] sm:$0xf]
        %v4584 = vld [vmem:[%s833 + $0x314] sm:$0xf]
        %v4585 = vld [vmem:[%s833 + $0x318] sm:$0xf]
        %v4586 = vld [vmem:[%s833 + $0x31c] sm:$0xf]
        %v4587 = vld [vmem:[%s833 + $0x320] sm:$0xf]
        %v4588 = vld [vmem:[%s833 + $0x324] sm:$0xf]
        %v4589 = vld [vmem:[%s833 + $0x328] sm:$0xf]
        %v4590 = vld [vmem:[%s833 + $0x32c] sm:$0xf]
        %v4591 = vld [vmem:[%s833 + $0x330] sm:$0xf]
        %v4592 = vld [vmem:[%s833 + $0x334] sm:$0xf]
        %v4593 = vld [vmem:[%s833 + $0x338] sm:$0xf]
        %v4594 = vld [vmem:[%s833 + $0x33c] sm:$0xf]
        %v4595 = vld [vmem:[%s833 + $0x340] sm:$0xf]
        %v4596 = vld [vmem:[%s833 + $0x344] sm:$0xf]
        %v4597 = vld [vmem:[%s833 + $0x348] sm:$0xf]
        %v4598 = vld [vmem:[%s833 + $0x34c] sm:$0xf]
        %v4599 = vld [vmem:[%s833 + $0x350] sm:$0xf]
        %v4600 = vld [vmem:[%s833 + $0x354] sm:$0xf]
        %v4601 = vld [vmem:[%s833 + $0x358] sm:$0xf]
        %v4602 = vld [vmem:[%s833 + $0x35c] sm:$0xf]
        %v4603 = vld [vmem:[%s833 + $0x360] sm:$0xf]
        %v4604 = vld [vmem:[%s833 + $0x364] sm:$0xf]
        %v4605 = vld [vmem:[%s833 + $0x368] sm:$0xf]
        %v4606 = vld [vmem:[%s833 + $0x36c] sm:$0xf]
        %v4607 = vld [vmem:[%s833 + $0x370] sm:$0xf]
        %v4608 = vld [vmem:[%s833 + $0x374] sm:$0xf]
        %v4609 = vld [vmem:[%s833 + $0x378] sm:$0xf]
        %v4610 = vld [vmem:[%s833 + $0x37c] sm:$0xf]
        %v4611 = vld [vmem:[%s833 + $0x380] sm:$0xf]
        %v4612 = vld [vmem:[%s833 + $0x384] sm:$0xf]
        %v4613 = vld [vmem:[%s833 + $0x388] sm:$0xf]
        %v4614 = vld [vmem:[%s833 + $0x38c] sm:$0xf]
        %v4615 = vld [vmem:[%s833 + $0x390] sm:$0xf]
        %v4616 = vld [vmem:[%s833 + $0x394] sm:$0xf]
        %v4617 = vld [vmem:[%s833 + $0x398] sm:$0xf]
        %v4618 = vld [vmem:[%s833 + $0x39c] sm:$0xf]
        %v4619 = vld [vmem:[%s833 + $0x3a0] sm:$0xf]
        %v4620 = vld [vmem:[%s833 + $0x3a4] sm:$0xf]
        %v4621 = vld [vmem:[%s833 + $0x3a8] sm:$0xf]
        %v4622 = vld [vmem:[%s833 + $0x3ac] sm:$0xf]
        %v4623 = vld [vmem:[%s833 + $0x3b0] sm:$0xf]
        %v4624 = vld [vmem:[%s833 + $0x3b4] sm:$0xf]
        %v4625 = vld [vmem:[%s833 + $0x3b8] sm:$0xf]
        %v4626 = vld [vmem:[%s833 + $0x3bc] sm:$0xf]
        %v4627 = vld [vmem:[%s833 + $0x3c0] sm:$0xf]
        %v4628 = vld [vmem:[%s833 + $0x3c4] sm:$0xf]
        %v4629 = vld [vmem:[%s833 + $0x3c8] sm:$0xf]
        %v4630 = vld [vmem:[%s833 + $0x3cc] sm:$0xf]
        %v4631 = vld [vmem:[%s833 + $0x3d0] sm:$0xf]
        %v4632 = vld [vmem:[%s833 + $0x3d4] sm:$0xf]
        %v4633 = vld [vmem:[%s833 + $0x3d8] sm:$0xf]
        %v4634 = vld [vmem:[%s833 + $0x3dc] sm:$0xf]
        %v4635 = vld [vmem:[%s833 + $0x3e0] sm:$0xf]
        %v4636 = vld [vmem:[%s833 + $0x3e4] sm:$0xf]
        %v4637 = vld [vmem:[%s833 + $0x3e8] sm:$0xf]
        %v4638 = vld [vmem:[%s833 + $0x3ec] sm:$0xf]
        %v4639 = vld [vmem:[%s833 + $0x3f0] sm:$0xf]
        %v4640 = vld [vmem:[%s833 + $0x3f4] sm:$0xf]
        %v4641 = vld [vmem:[%s833 + $0x3f8] sm:$0xf]
        %v4642 = vld [vmem:[%s833 + $0x3fc] sm:$0xf]
        %v4707 = vunpack.c.l.b16 %v4579
        %v4708 = vunpack.c.l.b16 %v4580
        %v4709 = vunpack.c.l.b16 %v4581
        %v4710 = vunpack.c.l.b16 %v4582
        %v4711 = vunpack.c.l.b16 %v4583
        %v4712 = vunpack.c.l.b16 %v4584
        %v4713 = vunpack.c.l.b16 %v4585
        %v4714 = vunpack.c.l.b16 %v4586
        %v4715 = vunpack.c.l.b16 %v4587
        %v4716 = vunpack.c.l.b16 %v4588
        %v4717 = vunpack.c.l.b16 %v4589
        %v4718 = vunpack.c.l.b16 %v4590
        %v4719 = vunpack.c.l.b16 %v4591
        %v4720 = vunpack.c.l.b16 %v4592
        %v4721 = vunpack.c.l.b16 %v4593
        %v4722 = vunpack.c.l.b16 %v4594
        %v4723 = vunpack.c.l.b16 %v4595
        %v4724 = vunpack.c.l.b16 %v4596
        %v4725 = vunpack.c.l.b16 %v4597
        %v4726 = vunpack.c.l.b16 %v4598
        %v4727 = vunpack.c.l.b16 %v4599
        %v4728 = vunpack.c.l.b16 %v4600
        %v4729 = vunpack.c.l.b16 %v4601
        %v4730 = vunpack.c.l.b16 %v4602
        %v4731 = vunpack.c.l.b16 %v4603
        %v4732 = vunpack.c.l.b16 %v4604
        %v4733 = vunpack.c.l.b16 %v4605
        %v4734 = vunpack.c.l.b16 %v4606
        %v4735 = vunpack.c.l.b16 %v4607
        %v4736 = vunpack.c.l.b16 %v4608
        %v4737 = vunpack.c.l.b16 %v4609
        %v4738 = vunpack.c.l.b16 %v4610
        %v4739 = vunpack.c.l.b16 %v4611
        %v4740 = vunpack.c.l.b16 %v4612
        %v4741 = vunpack.c.l.b16 %v4613
        %v4742 = vunpack.c.l.b16 %v4614
        %v4743 = vunpack.c.l.b16 %v4615
        %v4744 = vunpack.c.l.b16 %v4616
        %v4745 = vunpack.c.l.b16 %v4617
        %v4746 = vunpack.c.l.b16 %v4618
        %v4747 = vunpack.c.l.b16 %v4619
        %v4748 = vunpack.c.l.b16 %v4620
        %v4749 = vunpack.c.l.b16 %v4621
        %v4750 = vunpack.c.l.b16 %v4622
        %v4751 = vunpack.c.l.b16 %v4623
        %v4752 = vunpack.c.l.b16 %v4624
        %v4753 = vunpack.c.l.b16 %v4625
        %v4754 = vunpack.c.l.b16 %v4626
        %v4755 = vunpack.c.l.b16 %v4627
        %v4756 = vunpack.c.l.b16 %v4628
        %v4757 = vunpack.c.l.b16 %v4629
        %v4758 = vunpack.c.l.b16 %v4630
        %v4759 = vunpack.c.l.b16 %v4631
        %v4760 = vunpack.c.l.b16 %v4632
        %v4761 = vunpack.c.l.b16 %v4633
        %v4762 = vunpack.c.l.b16 %v4634
        %v4763 = vunpack.c.l.b16 %v4635
        %v4764 = vunpack.c.l.b16 %v4636
        %v4765 = vunpack.c.l.b16 %v4637
        %v4766 = vunpack.c.l.b16 %v4638
        %v4767 = vunpack.c.l.b16 %v4639
        %v4768 = vunpack.c.l.b16 %v4640
        %v4769 = vunpack.c.l.b16 %v4641
        %v4770 = vunpack.c.l.b16 %v4642
        %v4771 = vpack.c.b16 %v4708, %v4707
        %v4772 = vpack.c.b16 %v4710, %v4709
        %v4773 = vpack.c.b16 %v4712, %v4711
        %v4774 = vpack.c.b16 %v4714, %v4713
        %v4775 = vpack.c.b16 %v4716, %v4715
        %v4776 = vpack.c.b16 %v4718, %v4717
        %v4777 = vpack.c.b16 %v4720, %v4719
        %v4778 = vpack.c.b16 %v4722, %v4721
        %v4779 = vpack.c.b16 %v4724, %v4723
        %v4780 = vpack.c.b16 %v4726, %v4725
        %v4781 = vpack.c.b16 %v4728, %v4727
        %v4782 = vpack.c.b16 %v4730, %v4729
        %v4783 = vpack.c.b16 %v4732, %v4731
        %v4784 = vpack.c.b16 %v4734, %v4733
        %v4785 = vpack.c.b16 %v4736, %v4735
        %v4786 = vpack.c.b16 %v4738, %v4737
        %v4787 = vpack.c.b16 %v4740, %v4739
        %v4788 = vpack.c.b16 %v4742, %v4741
        %v4789 = vpack.c.b16 %v4744, %v4743
        %v4790 = vpack.c.b16 %v4746, %v4745
        %v4791 = vpack.c.b16 %v4748, %v4747
        %v4792 = vpack.c.b16 %v4750, %v4749
        %v4793 = vpack.c.b16 %v4752, %v4751
        %v4794 = vpack.c.b16 %v4754, %v4753
        %v4795 = vpack.c.b16 %v4756, %v4755
        %v4796 = vpack.c.b16 %v4758, %v4757
        %v4797 = vpack.c.b16 %v4760, %v4759
        %v4798 = vpack.c.b16 %v4762, %v4761
        %v4799 = vpack.c.b16 %v4764, %v4763
        %v4800 = vpack.c.b16 %v4766, %v4765
        %v4801 = vpack.c.b16 %v4768, %v4767
        %v4802 = vpack.c.b16 %v4770, %v4769
        %4835 = vmatprep.subr.bf16.mxu0 0
        %4836 = vmatpush1.bf16.msra.mxu0 %v4778
        %4837 = vmatprep.subr.bf16.mxu0 0
        %4838 = vmatpush1.bf16.msra.mxu0 %v4777
        %4839 = vmatprep.subr.bf16.mxu0 0
        %4840 = vmatpush1.bf16.msra.mxu0 %v4776
        %4841 = vmatprep.subr.bf16.mxu0 0
        %4842 = vmatpush1.bf16.msra.mxu0 %v4775
        %4843 = vmatprep.subr.bf16.mxu0 0
        %4844 = vmatpush1.bf16.msra.mxu0 %v4774
        %4845 = vmatprep.subr.bf16.mxu0 0
        %4846 = vmatpush1.bf16.msra.mxu0 %v4773
        %4847 = vmatprep.subr.bf16.mxu0 0
        %4848 = vmatpush1.bf16.msra.mxu0 %v4772
        %4849 = vmatprep.subr.bf16.mxu0 0
        %4850 = vmatpush1.bf16.msra.mxu0 %v4771
        %4851 = vmatprep.subr.bf16.mxu0 0
        %4852 = vmatpush2.bf16.msra.mxu0 %v4786
        %4853 = vmatprep.subr.bf16.mxu0 0
        %4854 = vmatpush2.bf16.msra.mxu0 %v4785
        %4855 = vmatprep.subr.bf16.mxu0 0
        %4856 = vmatpush2.bf16.msra.mxu0 %v4784
        %4857 = vmatprep.subr.bf16.mxu0 0
        %4858 = vmatpush2.bf16.msra.mxu0 %v4783
        %4859 = vmatprep.subr.bf16.mxu0 0
        %4860 = vmatpush2.bf16.msra.mxu0 %v4782
        %4861 = vmatprep.subr.bf16.mxu0 0
        %4862 = vmatpush2.bf16.msra.mxu0 %v4781
        %4863 = vmatprep.subr.bf16.mxu0 0
        %4864 = vmatpush2.bf16.msra.mxu0 %v4780
        %4865 = vmatprep.subr.bf16.mxu0 0
        %4866 = vmatpush2.bf16.msra.mxu0 %v4779
        %4867 = vmatprep.mubr.bf16.mxu0 %v4576
        %4868 = vmatmul.mubr.bf16.gmra.mxu0 %v4575
        %v4869 = vpop.f32.mrf.mxu0
        %v4870 = vadd.f32 0.0, %v4869
        %v4871 = vpop.f32.mrf.mxu0
        %v4872 = vpop.f32.mrf.mxu0
        %v4873 = vpop.f32.mrf.mxu0
        %4874 = vdwg.mxu0
        %4875 = vmatprep.subr.bf16.mxu0 0
        %4876 = vmatpush1.bf16.msra.mxu0 %v4794
        %4877 = vmatprep.subr.bf16.mxu0 0
        %4878 = vmatpush1.bf16.msra.mxu0 %v4793
        %4879 = vmatprep.subr.bf16.mxu0 0
        %4880 = vmatpush1.bf16.msra.mxu0 %v4792
        %4881 = vmatprep.subr.bf16.mxu0 0
        %4882 = vmatpush1.bf16.msra.mxu0 %v4791
        %4883 = vmatprep.subr.bf16.mxu0 0
        %4884 = vmatpush1.bf16.msra.mxu0 %v4790
        %4885 = vmatprep.subr.bf16.mxu0 0
        %4886 = vmatpush1.bf16.msra.mxu0 %v4789
        %4887 = vmatprep.subr.bf16.mxu0 0
        %4888 = vmatpush1.bf16.msra.mxu0 %v4788
        %4889 = vmatprep.subr.bf16.mxu0 0
        %4890 = vmatpush1.bf16.msra.mxu0 %v4787
        %4891 = vmatprep.subr.bf16.mxu0 0
        %4892 = vmatpush2.bf16.msra.mxu0 %v4802
        %4893 = vmatprep.subr.bf16.mxu0 0
        %4894 = vmatpush2.bf16.msra.mxu0 %v4801
        %4895 = vmatprep.subr.bf16.mxu0 0
        %4896 = vmatpush2.bf16.msra.mxu0 %v4800
        %4897 = vmatprep.subr.bf16.mxu0 0
        %4898 = vmatpush2.bf16.msra.mxu0 %v4799
        %4899 = vmatprep.subr.bf16.mxu0 0
        %4900 = vmatpush2.bf16.msra.mxu0 %v4798
        %4901 = vmatprep.subr.bf16.mxu0 0
        %4902 = vmatpush2.bf16.msra.mxu0 %v4797
        %4903 = vmatprep.subr.bf16.mxu0 0
        %4904 = vmatpush2.bf16.msra.mxu0 %v4796
        %4905 = vmatprep.subr.bf16.mxu0 0
        %4906 = vmatpush2.bf16.msra.mxu0 %v4795
        %4907 = vmatprep.mubr.bf16.mxu0 %v4578
        %4908 = vmatmul.mubr.bf16.gmra.mxu0 %v4577
        %v4909 = vpop.f32.mrf.mxu0
        %v4910 = vadd.f32 %v4870, %v4909
        %v4911 = vpop.f32.mrf.mxu0
        %v4912 = vpop.f32.mrf.mxu0
        %v4913 = vpop.f32.mrf.mxu0
        %4914 = vdwg.mxu0
        %v4915 = vadd.f32 %v4274, %v4910
        %v4916 = vld [vmem:[%s841] sm:$0x1]
        %v4918 = vlaneseq
        %v4919 = vshrl.u32 %v4918, 7
        %v4920 = vsub.s32 0, %v4919
        %v4921 = vrot.slane %v4916, %v4920
        %v4923 = vadd.f32 %v4915, %v4921
        %v4924 = vadd.f32 %v2352, %v4923
        %v4925 = vld [vmem:[%s849] sm:$0x1]
        %v4926 = vld [vmem:[%s857] sm:$0x1]
        %4927 = vadd.xlane.f32.xlu0 %v4924
        %v4928 = vpop.xlane.xlu0 %4927
        %v4929 = vmul.f32 %v4928, %v2329
        %v4930 = vsub.f32 %v4924, %v4929
        %v4931 = vmul.f32 %v4930, %v4930
        %4932 = vadd.xlane.f32.xlu0 %v4931
        %v4933 = vpop.xlane.xlu0 %4932
        %v4934 = vmul.f32 %v4933, %v2329
        %v4935 = vadd.f32 %v4934, 1e-05
        %v4936 = vrsqrt.pop %v4935
        %v4937 = vmul.f32 %v4930, %v4936
        %v4939 = vlaneseq
        %v4940 = vshrl.u32 %v4939, 7
        %v4941 = vsub.s32 0, %v4940
        %v4942 = vrot.slane %v4925, %v4941
        %v4944 = vmul.f32 %v4937, %v4942
        %v4946 = vlaneseq
        %v4947 = vshrl.u32 %v4946, 7
        %v4948 = vsub.s32 0, %v4947
        %v4949 = vrot.slane %v4926, %v4948
        %v4951 = vadd.f32 %v4944, %v4949
        %4952 = vst [vmem:[#allocation2] sm:$0xff] %v4951
        %p4953 = scmp.eq.s32.totalorder %s53, 1
        // Predicated region
        $region137: #{transformer_recognizer_forward.5} parent=83 // pred_check
          %p4954 = pneg %p4953
        $region138: #{transformer_recognizer_forward.5} parent=83 // pred_check_branch
          %4956 = sbr.rel (%p4954) target = $region140
        $region139: #{transformer_recognizer_forward.5} parent=83 // pred_region
          %v4957 = vpack.c.bf16 %v4951, %v4951
          %v4958 = vld [vmem:[%s14] sm:$0xf]
          %v4959 = vld [vmem:[%s14 + $0x4] sm:$0xf]
          %v4960 = vld [vmem:[%s14 + $0x8] sm:$0xf]
          %v4961 = vld [vmem:[%s14 + $0xc] sm:$0xf]
          %v4962 = vld [vmem:[%s14 + $0x10] sm:$0xf]
          %v4963 = vld [vmem:[%s14 + $0x14] sm:$0xf]
          %v4964 = vld [vmem:[%s14 + $0x18] sm:$0xf]
          %v4965 = vld [vmem:[%s14 + $0x1c] sm:$0xf]
          %v4966 = vld [vmem:[%s14 + $0x20] sm:$0xf]
          %v4967 = vld [vmem:[%s14 + $0x24] sm:$0xf]
          %v4968 = vld [vmem:[%s14 + $0x28] sm:$0xf]
          %v4969 = vld [vmem:[%s14 + $0x2c] sm:$0xf]
          %v4970 = vld [vmem:[%s14 + $0x30] sm:$0xf]
          %v4971 = vld [vmem:[%s14 + $0x34] sm:$0xf]
          %v4972 = vld [vmem:[%s14 + $0x38] sm:$0xf]
          %v4973 = vld [vmem:[%s14 + $0x3c] sm:$0xf]
          %v4974 = vld [vmem:[%s15] sm:$0x1]
          %v4976 = vlaneseq
          %v4977 = vshrl.u32 %v4976, 7
          %v4978 = vsub.s32 0, %v4977
          %v4979 = vrot.slane %v4974, %v4978
          %v4997 = vunpack.c.l.b16 %v4958
          %v4998 = vunpack.c.l.b16 %v4959
          %v4999 = vunpack.c.l.b16 %v4960
          %v5000 = vunpack.c.l.b16 %v4961
          %v5001 = vunpack.c.l.b16 %v4962
          %v5002 = vunpack.c.l.b16 %v4963
          %v5003 = vunpack.c.l.b16 %v4964
          %v5004 = vunpack.c.l.b16 %v4965
          %v5005 = vunpack.c.l.b16 %v4966
          %v5006 = vunpack.c.l.b16 %v4967
          %v5007 = vunpack.c.l.b16 %v4968
          %v5008 = vunpack.c.l.b16 %v4969
          %v5009 = vunpack.c.l.b16 %v4970
          %v5010 = vunpack.c.l.b16 %v4971
          %v5011 = vunpack.c.l.b16 %v4972
          %v5012 = vunpack.c.l.b16 %v4973
          %v5013 = vpack.c.b16 %v4998, %v4997
          %v5014 = vpack.c.b16 %v5000, %v4999
          %v5015 = vpack.c.b16 %v5002, %v5001
          %v5016 = vpack.c.b16 %v5004, %v5003
          %v5017 = vpack.c.b16 %v5006, %v5005
          %v5018 = vpack.c.b16 %v5008, %v5007
          %v5019 = vpack.c.b16 %v5010, %v5009
          %v5020 = vpack.c.b16 %v5012, %v5011
          %5029 = vmatprep.subr.bf16.mxu0 0
          %5030 = vmatpush1.bf16.msra.mxu0 %v5020
          %5031 = vmatprep.subr.bf16.mxu0 0
          %5032 = vmatpush1.bf16.msra.mxu0 %v5019
          %5033 = vmatprep.subr.bf16.mxu0 0
          %5034 = vmatpush1.bf16.msra.mxu0 %v5018
          %5035 = vmatprep.subr.bf16.mxu0 0
          %5036 = vmatpush1.bf16.msra.mxu0 %v5017
          %5037 = vmatprep.subr.bf16.mxu0 0
          %5038 = vmatpush1.bf16.msra.mxu0 %v5016
          %5039 = vmatprep.subr.bf16.mxu0 0
          %5040 = vmatpush1.bf16.msra.mxu0 %v5015
          %5041 = vmatprep.subr.bf16.mxu0 0
          %5042 = vmatpush1.bf16.msra.mxu0 %v5014
          %5043 = vmatprep.subr.bf16.mxu0 0
          %5044 = vmatpush1.bf16.msra.mxu0 %v5013
          %5045 = vmatprep.subr.bf16.mxu0 0
          %5046 = vmatpush2.bf16.msra.mxu0 0
          %5047 = vmatprep.subr.bf16.mxu0 0
          %5048 = vmatpush2.bf16.msra.mxu0 0
          %5049 = vmatprep.subr.bf16.mxu0 0
          %5050 = vmatpush2.bf16.msra.mxu0 0
          %5051 = vmatprep.subr.bf16.mxu0 0
          %5052 = vmatpush2.bf16.msra.mxu0 0
          %5053 = vmatprep.subr.bf16.mxu0 0
          %5054 = vmatpush2.bf16.msra.mxu0 0
          %5055 = vmatprep.subr.bf16.mxu0 0
          %5056 = vmatpush2.bf16.msra.mxu0 0
          %5057 = vmatprep.subr.bf16.mxu0 0
          %5058 = vmatpush2.bf16.msra.mxu0 0
          %5059 = vmatprep.subr.bf16.mxu0 0
          %5060 = vmatpush2.bf16.msra.mxu0 0
          %5061 = vmatprep.mubr.bf16.mxu0 0
          %5062 = vmatmul.mubr.bf16.gmra.mxu0 %v4957
          %v5063 = vpop.f32.mrf.mxu0
          %v5064 = vadd.f32 %v4979, %v5063
          %v5065 = vpop.f32.mrf.mxu0
          %v5066 = vpop.f32.mrf.mxu0
          %v5067 = vpop.f32.mrf.mxu0
          %5068 = vdwg.mxu0
          %v5070 = vcombine.high %v5064, %v5064
          %5072 = vst [vmem:[%s979] sm:$0xf] %v5064
          %5073 = vst [vmem:[%s979 + $0x4] sm:$0xf] %v5070
        $region140: #{transformer_recognizer_forward.5} parent=83 // pred_fallthru
          _
        %s5074 = smul.u32 2, %s52
        %p5075 = scmp.lt.s32.totalorder %s5074, 3
        %s5076 = scalar_select %p5075, %s5074, 3
        %s5077 = smul.addr %s5076, 4
        %s5078 = scalar_lea.vmem %s16, %s5077
        // Predicated region
        $region141: #{transformer_recognizer_forward.5} parent=83 // pred_check
          %p5079 = pneg %p484
        $region142: #{transformer_recognizer_forward.5} parent=83 // pred_check_branch
          %5081 = sbr.rel (%p5079) target = $region144
        $region143: #{transformer_recognizer_forward.5} parent=83 // pred_region
          %s5082 = smul.u32 2, %s52
        $region144: #{transformer_recognizer_forward.5} parent=83 // pred_fallthru
          _
      $region84: #{transformer_recognizer_forward.5} parent=5 // pred_fallthru
        _
      %p5083 = scmp.le.s32.totalorder 2, %s43
      // Predicated region
      $region145: #{transformer_recognizer_forward.5} parent=5 // pred_check
        %p5084 = pneg %p5083
      $region146: #{transformer_recognizer_forward.5} parent=5 // pred_check_branch
        %5086 = sbr.rel (%p5084) target = $region148
      $region147: #{transformer_recognizer_forward.5} parent=5 // pred_region
        %s5087 = ssub.s32 %s43, 2
        // Predicated region
        $region149: #{transformer_recognizer_forward.5} parent=147 // pred_check
          %p5088 = pneg %p490
        $region150: #{transformer_recognizer_forward.5} parent=147 // pred_check_branch
          %5090 = sbr.rel (%p5088) target = $region152
        $region151: #{transformer_recognizer_forward.5} parent=147 // pred_region
          %s5091 = smul.u32 2, %s54
          %p5092 = scmp.lt.s32.totalorder %s5091, 3
          %s5093 = scalar_select %p5092, %s5091, 3
          %s5094 = smul.addr %s5093, 4
          %s5095 = scalar_lea.vmem %s16, %s5094
        $region152: #{transformer_recognizer_forward.5} parent=147 // pred_fallthru
          _
      $region148: #{transformer_recognizer_forward.5} parent=5 // pred_fallthru
        _
    $region6: #{transformer_recognizer_forward.5} parent=1 // loop_footer
      %s47 = sadd.s32 1, %s43
    $region7: #{transformer_recognizer_forward.5} parent=1 // loop_footer_branch
      %42 = sbr.rel target = $region3
    $region8: #{transformer_recognizer_forward.5} parent=1 // loop_exit
      _
    %5096 = vsyncpa [#allocation4], 1
    %s5097 = scalar_lea.sflag [#allocation4], 1
    %5098 = vsyncpa %s5097, 1
    %5099 = vsyncpa [#allocation6], 1
    %s5100 = scalar_lea.sflag [#allocation6], 1
    %5101 = vsyncpa %s5100, 1
    %5102 = vsyncpa [#allocation9], 1
    %s5103 = scalar_lea.sflag [#allocation9], 1
    %5104 = vsyncpa %s5103, 1
    %5105 = vsyncpa [#allocation12], 1
    %s5106 = scalar_lea.sflag [#allocation12], 1
    %5107 = vsyncpa %s5106, 1
    %5108 = vsyncpa [#allocation15], 1
    %s5109 = scalar_lea.sflag [#allocation15], 1
    %5110 = vsyncpa %s5109, 1
    %5111 = vsyncpa [#allocation18], 1
    %s5112 = scalar_lea.sflag [#allocation18], 1
    %5113 = vsyncpa %s5112, 1
    %5114 = vsyncpa [#allocation21], 1
    %s5115 = scalar_lea.sflag [#allocation21], 1
    %5116 = vsyncpa %s5115, 1

</llo_original>
